<compile_context>
chip_gen: v7x
topology: tpu7x:2x2x1
jax: 0.10.0
libtpu: 0.0.40
codegen_flags: <defaults>
</compile_context>

<pallas_src>
import functools

import jax
import jax.numpy as jnp
import numpy as np
from jax.experimental import pallas as pl
from jax.experimental.pallas import tpu as pltpu

BN_EPS = 1e-5


def _round_up(x, m):
    return (x + m - 1) // m * m


# --------------------------------------------------------------------------
# Kernel
# --------------------------------------------------------------------------
def decoder_block_kernel(x_ref, c_ref, place_ref, w1_ref, t1_ref, w2_ref,
                         t2_ref, o_ref, pad_ref, *, w_valid):
    """One batch element per grid step (space-to-depth layout).

    x_ref    : (1, H, WP, Cin)   pooled values, bf16
    c_ref    : (1, H, WP, Cin)   int8 window-local argmax codes (0..3)
    place_ref: (4*Cin, C4)       block-one-hot unpool placement matrix, bf16
    w1/w2    : (3, 3*C4, C4)     s2d conv weights (BN scale folded), bf16
    t1/t2    : (1, C4)           folded conv-bias + BN shift, f32
    o_ref    : (1, H, WP, C4)    s2d output, bf16 (wrapper does depth-to-space)
    pad_ref  : (H+2, WP+9, C4)   bf16 scratch shared by both convs; the interior
                                 starts at W-offset 8 so its stores are aligned.
    """
    H, WP, Cin = x_ref.shape[1], x_ref.shape[2], x_ref.shape[3]
    C4 = pad_ref.shape[2]            # 4 * Cpad, a multiple of 128 (lane-dense)
    HW = H * WP
    bt = pad_ref.dtype

    # ---- zero only the border actually read by the conv window --------------
    pad_ref[0:1, :, :] = jnp.zeros((1, WP + 9, C4), bt)
    pad_ref[H + 1:H + 2, :, :] = jnp.zeros((1, WP + 9, C4), bt)
    pad_ref[:, 7:8, :] = jnp.zeros((H + 2, 1, C4), bt)
    pad_ref[:, WP + 8:WP + 9, :] = jnp.zeros((H + 2, 1, C4), bt)

    # ---- MaxUnpool2d(2, 2) as one block-one-hot placement matmul ------------
    # value (i, j, c) with argmax code s goes to lane s*Cpad + c of s2d pixel
    # (i, j).  The four code-masked copies are lane-concatenated and multiplied
    # by a constant (4*Cin, C4) placement matrix built in the wrapper.
    x2 = x_ref[0].reshape(HW, Cin)                                   # bf16
    code = c_ref[0].astype(jnp.int32).reshape(HW, Cin)
    sels = [jnp.where(code == s, x2, jnp.zeros_like(x2)) for s in range(4)]
    lhs0 = jnp.concatenate(sels, axis=-1)                            # (HW, 4Cin)
    u = jnp.dot(lhs0, place_ref[...], preferred_element_type=jnp.float32)
    pad_ref[1:H + 1, 8:8 + WP, :] = u.reshape(H, WP, C4).astype(bt)

    # ---- 3x3 conv (BN scale folded in weights) + shift + ReLU, in s2d space.
    # Taps are grouped along the H direction: per W-tap tj we do ONE windowed
    # read of the scratch, three free outer-dim slices, a 128-aligned lane
    # concat, and a single K=3*C4 MXU matmul.  The three tap matmuls are one
    # expression so no f32 accumulator round-trips through VMEM between taps.
    def conv_bn_relu(w_ref, t_ref):
        def tap(tj):
            slab = pad_ref[:, 7 + tj:7 + tj + WP, :]                 # (H+2,WP,C4)
            l = jnp.concatenate([slab[0:H], slab[1:H + 1], slab[2:H + 2]],
                                axis=-1)                             # (H,WP,3C4)
            return jnp.dot(l.reshape(HW, 3 * C4), w_ref[tj],
                           preferred_element_type=jnp.float32)
        acc = tap(0) + tap(1) + tap(2)                               # (HW, C4)
        return jnp.maximum(acc + t_ref[...], 0.0)                    # f32

    h1 = conv_bn_relu(w1_ref, t1_ref)
    # reuse the same padded scratch for conv2 (border is still zero: only the
    # interior is overwritten here).
    pad_ref[1:H + 1, 8:8 + WP, :] = h1.reshape(H, WP, C4).astype(bt)
    if w_valid < WP:
        # W was padded to a multiple of 8 in the wrapper; re-zero the padded
        # columns so the real right edge still sees a zero border for conv2.
        pad_ref[1:H + 1, 8 + w_valid:8 + WP, :] = jnp.zeros(
            (H, WP - w_valid, C4), bt)

    h2 = conv_bn_relu(w2_ref, t2_ref)
    o_ref[0] = h2.reshape(H, WP, C4).astype(o_ref.dtype)             # bf16


# --------------------------------------------------------------------------
# Wrapper (layout / parameter glue only)
# --------------------------------------------------------------------------
def _fold_bn(bias, gamma, beta, mean, var):
    scale = gamma / jnp.sqrt(var + BN_EPS)
    shift = beta + (bias - mean) * scale
    return scale.astype(jnp.float32), shift.astype(jnp.float32)


def _s2d_conv_weights(w_oihw, scale, cpad):
    """PyTorch OIHW 3x3 weight (with per-output-channel BN scale folded in) ->
    space-to-depth weights of shape (3, 3*4*cpad, 4*cpad)."""
    co_n, ci_n = w_oihw.shape[0], w_oihw.shape[1]
    w = jnp.transpose(w_oihw.astype(jnp.float32) * scale[:, None, None, None],
                      (2, 3, 1, 0))                                  # (3,3,ci,co)
    w = jnp.pad(w, ((0, 0), (0, 0), (0, cpad - ci_n), (0, cpad - co_n)))
    di = np.arange(3)[:, None, None, None]      # s2d H-tap
    dj = np.arange(3)[None, :, None, None]      # s2d W-tap
    si = np.arange(4)[None, None, :, None]      # input slot  (ri*2 + rj)
    so = np.arange(4)[None, None, None, :]      # output slot (pa*2 + pb)
    kh = 2 * (di - 1) + (si // 2) - (so // 2) + 1
    kw = 2 * (dj - 1) + (si % 2) - (so % 2) + 1
    valid = (kh >= 0) & (kh < 3) & (kw >= 0) & (kw < 3)
    blocks = w[np.clip(kh, 0, 2), np.clip(kw, 0, 2)]     # (3,3,4,4,cpad,cpad)
    blocks = jnp.where(jnp.asarray(valid)[..., None, None], blocks, 0.0)
    blocks = jnp.transpose(blocks, (1, 0, 2, 4, 3, 5))   # (dj,di,si,ci,so,co)
    return blocks.reshape(3, 3 * 4 * cpad, 4 * cpad).astype(jnp.bfloat16)


def _unpool_placement(cin, cpad):
    """(4*cin, 4*cpad) block-one-hot matrix: row s*cin+c -> column s*cpad+c."""
    place = np.zeros((4 * cin, 4 * cpad), np.float32)
    s = np.repeat(np.arange(4), cin)
    c = np.tile(np.arange(cin), 4)
    place[np.arange(4 * cin), s * cpad + c] = 1.0
    return jnp.asarray(place, jnp.bfloat16)


def decoder_block_forward(x_nchw, ind_nchw, params):
    """DecoderBlock(in_c, out_c, depth=2, classification=False) forward.

    x_nchw, ind_nchw: (N, Cin, H, W) pooled values / MaxPool2d flat indices.
    Returns (N, Cout, 2H, 2W) float32.
    """
    N, Cin, H, W = x_nchw.shape
    H2, W2 = 2 * H, 2 * W
    Cout = params["w2"].shape[0]
    Cpad = _round_up(max(Cin, Cout), 32)        # 4*Cpad is a multiple of 128
    C4 = 4 * Cpad
    WP = _round_up(W, 8)                        # keep reshapes tile-aligned

    # layout glue: NCHW -> NHWC, bf16 pooled values, int8 window-local codes.
    x_nhwc = jnp.transpose(x_nchw, (0, 2, 3, 1)).astype(jnp.bfloat16)
    ind = jnp.transpose(ind_nchw, (0, 2, 3, 1)).astype(jnp.int32)
    code = (((ind // W2) % 2) * 2 + (ind % W2) % 2).astype(jnp.int8)
    if WP != W:
        x_nhwc = jnp.pad(x_nhwc, ((0, 0), (0, 0), (0, WP - W), (0, 0)))
        code = jnp.pad(code, ((0, 0), (0, 0), (0, WP - W), (0, 0)))

    # parameter glue: fold conv bias + inference BN into the weights / shifts.
    s1, t1 = _fold_bn(params["b1"], params["g1"], params["beta1"],
                      params["m1"], params["v1"])
    s2, t2 = _fold_bn(params["b2"], params["g2"], params["beta2"],
                      params["m2"], params["v2"])
    w1k = _s2d_conv_weights(params["w1"], s1, Cpad)
    w2k = _s2d_conv_weights(params["w2"], s2, Cpad)
    t1k = jnp.tile(jnp.pad(t1, (0, Cpad - Cin)), 4).reshape(1, C4)
    t2k = jnp.tile(jnp.pad(t2, (0, Cpad - Cout)), 4).reshape(1, C4)
    placek = _unpool_placement(Cin, Cpad)

    # VMEM budget: weights single-buffered, I/O double-buffered, pad scratch,
    # and headroom for the f32 matmul temporaries.
    w_bytes = 2 * (9 * C4 * C4 * 2) + 2 * (C4 * 4) + 4 * Cin * C4 * 2
    io_bytes = 2 * (H * WP * Cin * 3) + 2 * (H * WP * C4 * 2)
    pad_bytes = (H + 2) * (WP + 9) * C4 * 2
    tmp_bytes = 8 * H * WP * C4 * 4
    need = int(1.5 * (w_bytes + io_bytes + pad_bytes + tmp_bytes))
    try:
        cap = int(pltpu.get_tpu_info().vmem_capacity_bytes) * 3 // 4
    except Exception:
        cap = 48 * 1024 * 1024
    vmem_limit = max(32 * 1024 * 1024, min(need, max(cap, 32 * 1024 * 1024)))

    kernel = functools.partial(decoder_block_kernel, w_valid=W)

    def run(const_mode):
        def const_spec(shape, imap):
            if const_mode is None:
                return pl.BlockSpec(shape, imap)
            return pl.BlockSpec(shape, imap, pipeline_mode=const_mode)

        return pl.pallas_call(
            kernel,
            out_shape=jax.ShapeDtypeStruct((N, H, WP, C4), jnp.bfloat16),
            grid_spec=pltpu.PrefetchScalarGridSpec(
                num_scalar_prefetch=0,
                grid=(N,),
                in_specs=[
                    pl.BlockSpec((1, H, WP, Cin), lambda n: (n, 0, 0, 0)),
                    pl.BlockSpec((1, H, WP, Cin), lambda n: (n, 0, 0, 0)),
                    const_spec((4 * Cin, C4), lambda n: (0, 0)),
                    const_spec((3, 3 * C4, C4), lambda n: (0, 0, 0)),
                    const_spec((1, C4), lambda n: (0, 0)),
                    const_spec((3, 3 * C4, C4), lambda n: (0, 0, 0)),
                    const_spec((1, C4), lambda n: (0, 0)),
                ],
                out_specs=pl.BlockSpec((1, H, WP, C4), lambda n: (n, 0, 0, 0)),
                scratch_shapes=[
                    pltpu.VMEM((H + 2, WP + 9, C4), jnp.bfloat16),  # shared pad
                ],
            ),
            compiler_params=pltpu.CompilerParams(
                dimension_semantics=("parallel",),
                vmem_limit_bytes=vmem_limit),
        )(x_nhwc, code, placek, w1k, t1k, w2k, t2k)

    try:
        # constant-index inputs single-buffered: DMA'd once, half the VMEM.
        out_s2d = jax.block_until_ready(run(pl.Buffered(1)))
    except Exception:
        out_s2d = run(None)

    # output glue (bf16): depth-to-space, channel/width slice, NHWC -> NCHW.
    out = out_s2d.reshape(N, H, WP, 2, 2, Cpad)
    out = jnp.transpose(out, (0, 1, 3, 2, 4, 5)).reshape(N, H2, 2 * WP, Cpad)
    out = out[:, :, :W2, :Cout]
    return jnp.transpose(out, (0, 3, 1, 2)).astype(jnp.float32)


# --------------------------------------------------------------------------
# Test helpers
# --------------------------------------------------------------------------
def init_params(key, in_c, out_c):
    ks = jax.random.split(key, 12)

    def conv_w(k, o, i):
        return jax.random.normal(k, (o, i, 3, 3), jnp.float32) / np.sqrt(i * 9)

    return {
        "w1": conv_w(ks[0], in_c, in_c),
        "b1": 0.1 * jax.random.normal(ks[1], (in_c,), jnp.float32),
        "g1": 0.5 + jax.random.uniform(ks[2], (in_c,), jnp.float32),
        "beta1": 0.1 * jax.random.normal(ks[3], (in_c,), jnp.float32),
        "m1": 0.1 * jax.random.normal(ks[4], (in_c,), jnp.float32),
        "v1": 0.5 + jax.random.uniform(ks[5], (in_c,), jnp.float32),
        "w2": conv_w(ks[6], out_c, in_c),
        "b2": 0.1 * jax.random.normal(ks[7], (out_c,), jnp.float32),
        "g2": 0.5 + jax.random.uniform(ks[8], (out_c,), jnp.float32),
        "beta2": 0.1 * jax.random.normal(ks[9], (out_c,), jnp.float32),
        "m2": 0.1 * jax.random.normal(ks[10], (out_c,), jnp.float32),
        "v2": 0.5 + jax.random.uniform(ks[11], (out_c,), jnp.float32),
    }


def maxpool2x2_with_indices(x):
    """Emulate nn.MaxPool2d(2, 2, return_indices=True) on NCHW input."""
    N, C, H2, W2 = x.shape
    H, W = H2 // 2, W2 // 2
    xw = x.reshape(N, C, H, 2, W, 2)
    xw = jnp.transpose(xw, (0, 1, 2, 4, 3, 5)).reshape(N, C, H, W, 4)
    k = jnp.argmax(xw, axis=-1)
    vals = jnp.max(xw, axis=-1)
    di, dj = k // 2, k % 2
    ii = jnp.arange(H)[None, None, :, None]
    jj = jnp.arange(W)[None, None, None, :]
    ind = (2 * ii + di) * W2 + (2 * jj + dj)
    return vals.astype(jnp.float32), ind.astype(jnp.int32)


def reference_forward(x_nchw, ind_nchw, params):
    """Pure-JAX reference (unpool scatter + lax.conv + BN + ReLU)."""
    N, Cin, H, W = x_nchw.shape
    H2, W2 = 2 * H, 2 * W
    n_idx = jnp.arange(N)[:, None, None]
    c_idx = jnp.arange(Cin)[None, :, None]
    u = jnp.zeros((N, Cin, H2 * W2), jnp.float32)
    u = u.at[n_idx, c_idx, ind_nchw.reshape(N, Cin, -1)].set(
        x_nchw.reshape(N, Cin, -1))
    h = u.reshape(N, Cin, H2, W2)

    def conv_bn_relu(h, w, b, g, beta, m, v):
        y = jax.lax.conv_general_dilated(
            h, w, window_strides=(1, 1), padding=((1, 1), (1, 1)),
            dimension_numbers=("NCHW", "OIHW", "NCHW"),
            precision=jax.lax.Precision.HIGHEST)
        y = y + b[None, :, None, None]
        y = (y - m[None, :, None, None]) / jnp.sqrt(v[None, :, None, None] + BN_EPS)
        y = y * g[None, :, None, None] + beta[None, :, None, None]
        return jnp.maximum(y, 0.0)

    h = conv_bn_relu(h, params["w1"], params["b1"], params["g1"],
                     params["beta1"], params["m1"], params["v1"])
    h = conv_bn_relu(h, params["w2"], params["b2"], params["g2"],
                     params["beta2"], params["m2"], params["v2"])
    return h


if __name__ == "__main__":
    key = jax.random.PRNGKey(0)
    k_in, k_par = jax.random.split(key)

    N, in_c, out_c = 2, 8, 4
    H, W = 8, 8  # pooled spatial size; unpooled output is 16x16

    pre = jax.random.normal(k_in, (N, in_c, 2 * H, 2 * W), jnp.float32)
    x, ind = maxpool2x2_with_indices(pre)      # x, ind: (2, 8, 8, 8)
    params = init_params(k_par, in_c, out_c)

    out = decoder_block_forward(x, ind, params)
    out = jax.block_until_ready(out)
    assert out.shape == (N, out_c, 2 * H, 2 * W)

    ref = reference_forward(x, ind, params)
    err = float(jnp.max(jnp.abs(out - ref)))
    assert np.allclose(np.asarray(out), np.asarray(ref), atol=5e-2, rtol=5e-2), \
        f"mismatch vs reference, max abs err = {err}"

    print("KERNEL_OK")
</pallas_src>

<mosaic_0001>
module attributes {stable_mosaic.version = 11 : i64} {
  func.func @decoder_block_kernel(%arg0: i32, %arg1: memref<1x8x8x8xbf16, #tpu.memory_space<vmem>>, %arg2: memref<1x8x8x8xi8, #tpu.memory_space<vmem>>, %arg3: memref<32x128xbf16, #tpu.memory_space<vmem>>, %arg4: memref<3x384x128xbf16, #tpu.memory_space<vmem>>, %arg5: memref<1x128xf32, #tpu.memory_space<vmem>>, %arg6: memref<3x384x128xbf16, #tpu.memory_space<vmem>>, %arg7: memref<1x128xf32, #tpu.memory_space<vmem>>, %arg8: memref<1x8x8x128xbf16, #tpu.memory_space<vmem>>, %arg9: memref<10x17x128xbf16, #tpu.memory_space<vmem>>) attributes {dimension_semantics = [#tpu.dimension_semantics<parallel>], iteration_bounds = array<i64: 2>, scalar_prefetch = 0 : i64, scratch_operands = 1 : i64, tpu.core_type = #tpu.core_type<tc>, window_params = [{transform_indices = @transform_0, window_bounds = array<i64: 1, 8, 8, 8>}, {transform_indices = @transform_1, window_bounds = array<i64: 1, 8, 8, 8>}, {pipeline_mode = #tpu.pipeline_mode<synchronous>, transform_indices = @transform_2, window_bounds = array<i64: 32, 128>}, {pipeline_mode = #tpu.pipeline_mode<synchronous>, transform_indices = @transform_3, window_bounds = array<i64: 3, 384, 128>}, {pipeline_mode = #tpu.pipeline_mode<synchronous>, transform_indices = @transform_4, window_bounds = array<i64: 1, 128>}, {pipeline_mode = #tpu.pipeline_mode<synchronous>, transform_indices = @transform_5, window_bounds = array<i64: 3, 384, 128>}, {pipeline_mode = #tpu.pipeline_mode<synchronous>, transform_indices = @transform_6, window_bounds = array<i64: 1, 128>}, {transform_indices = @transform_7, window_bounds = array<i64: 1, 8, 8, 128>}]} {
    %cst = arith.constant 0.000000e+00 : bf16
    %0 = vector.broadcast %cst : bf16 to vector<1x17x128xbf16>
    %c0 = arith.constant 0 : index
    %c0_0 = arith.constant 0 : index
    %c0_1 = arith.constant 0 : index
    %1 = vector.load %arg9[%c0, %c0_0, %c0_1] : memref<10x17x128xbf16, #tpu.memory_space<vmem>>, vector<1x17x128xbf16>
    tpu.vector_store %arg9[%c0, %c0_0, %c0_1], %0 {strides = array<i32>} : memref<10x17x128xbf16, #tpu.memory_space<vmem>>, vector<1x17x128xbf16>,
    %cst_2 = arith.constant 0.000000e+00 : bf16
    %2 = vector.broadcast %cst_2 : bf16 to vector<1x17x128xbf16>
    %c9 = arith.constant 9 : index
    %c0_3 = arith.constant 0 : index
    %c0_4 = arith.constant 0 : index
    %3 = vector.load %arg9[%c9, %c0_3, %c0_4] : memref<10x17x128xbf16, #tpu.memory_space<vmem>>, vector<1x17x128xbf16>
    tpu.vector_store %arg9[%c9, %c0_3, %c0_4], %2 {strides = array<i32>} : memref<10x17x128xbf16, #tpu.memory_space<vmem>>, vector<1x17x128xbf16>,
    %cst_5 = arith.constant 0.000000e+00 : bf16
    %4 = vector.broadcast %cst_5 : bf16 to vector<10x1x128xbf16>
    %c0_6 = arith.constant 0 : index
    %c7 = arith.constant 7 : index
    %c0_7 = arith.constant 0 : index
    %5 = vector.load %arg9[%c0_6, %c7, %c0_7] : memref<10x17x128xbf16, #tpu.memory_space<vmem>>, vector<10x1x128xbf16>
    tpu.vector_store %arg9[%c0_6, %c7, %c0_7], %4 {strides = array<i32>} : memref<10x17x128xbf16, #tpu.memory_space<vmem>>, vector<10x1x128xbf16>,
    %cst_8 = arith.constant 0.000000e+00 : bf16
    %6 = vector.broadcast %cst_8 : bf16 to vector<10x1x128xbf16>
    %c0_9 = arith.constant 0 : index
    %c16 = arith.constant 16 : index
    %c0_10 = arith.constant 0 : index
    %7 = vector.load %arg9[%c0_9, %c16, %c0_10] : memref<10x17x128xbf16, #tpu.memory_space<vmem>>, vector<10x1x128xbf16>
    tpu.vector_store %arg9[%c0_9, %c16, %c0_10], %6 {strides = array<i32>} : memref<10x17x128xbf16, #tpu.memory_space<vmem>>, vector<10x1x128xbf16>,
    %c0_11 = arith.constant 0 : index
    %c0_12 = arith.constant 0 : index
    %c0_13 = arith.constant 0 : index
    %c0_14 = arith.constant 0 : index
    %8 = vector.load %arg1[%c0_11, %c0_12, %c0_13, %c0_14] : memref<1x8x8x8xbf16, #tpu.memory_space<vmem>>, vector<1x8x8x8xbf16>
    %9 = vector.shape_cast %8 : vector<1x8x8x8xbf16> to vector<8x8x8xbf16>
    %10 = vector.shape_cast %9 : vector<8x8x8xbf16> to vector<64x8xbf16>
    %c0_15 = arith.constant 0 : index
    %c0_16 = arith.constant 0 : index
    %c0_17 = arith.constant 0 : index
    %c0_18 = arith.constant 0 : index
    %11 = vector.load %arg2[%c0_15, %c0_16, %c0_17, %c0_18] : memref<1x8x8x8xi8, #tpu.memory_space<vmem>>, vector<1x8x8x8xi8>
    %12 = vector.shape_cast %11 : vector<1x8x8x8xi8> to vector<8x8x8xi8>
    %13 = arith.extsi %12 : vector<8x8x8xi8> to vector<8x8x8xi32>
    %14 = vector.shape_cast %13 : vector<8x8x8xi32> to vector<64x8xi32>
    %c0_i32 = arith.constant 0 : i32
    %15 = vector.broadcast %c0_i32 : i32 to vector<64x8xi32>
    %16 = arith.cmpi eq, %14, %15 : vector<64x8xi32>
    %cst_19 = arith.constant 0.000000e+00 : bf16
    %17 = vector.broadcast %cst_19 : bf16 to vector<64x8xbf16>
    %18 = arith.select %16, %10, %17 : vector<64x8xi1>, vector<64x8xbf16>
    %c1_i32 = arith.constant 1 : i32
    %19 = vector.broadcast %c1_i32 : i32 to vector<64x8xi32>
    %20 = arith.cmpi eq, %14, %19 : vector<64x8xi32>
    %cst_20 = arith.constant 0.000000e+00 : bf16
    %21 = vector.broadcast %cst_20 : bf16 to vector<64x8xbf16>
    %22 = arith.select %20, %10, %21 : vector<64x8xi1>, vector<64x8xbf16>
    %c2_i32 = arith.constant 2 : i32
    %23 = vector.broadcast %c2_i32 : i32 to vector<64x8xi32>
    %24 = arith.cmpi eq, %14, %23 : vector<64x8xi32>
    %cst_21 = arith.constant 0.000000e+00 : bf16
    %25 = vector.broadcast %cst_21 : bf16 to vector<64x8xbf16>
    %26 = arith.select %24, %10, %25 : vector<64x8xi1>, vector<64x8xbf16>
    %c3_i32 = arith.constant 3 : i32
    %27 = vector.broadcast %c3_i32 : i32 to vector<64x8xi32>
    %28 = arith.cmpi eq, %14, %27 : vector<64x8xi32>
    %cst_22 = arith.constant 0.000000e+00 : bf16
    %29 = vector.broadcast %cst_22 : bf16 to vector<64x8xbf16>
    %30 = arith.select %28, %10, %29 : vector<64x8xi1>, vector<64x8xbf16>
    %31 = tpu.concatenate %18, %22, %26, %30 in 1 : vector<64x8xbf16>, vector<64x8xbf16>, vector<64x8xbf16>, vector<64x8xbf16> -> vector<64x32xbf16>
    %c0_23 = arith.constant 0 : index
    %c0_24 = arith.constant 0 : index
    %32 = vector.load %arg3[%c0_23, %c0_24] : memref<32x128xbf16, #tpu.memory_space<vmem>>, vector<32x128xbf16>
    %cst_25 = arith.constant dense<0.000000e+00> : vector<64x128xf32>
    %33 = tpu.matmul %31, %32, %cst_25 {dimension_numbers = #tpu.dot_dimension_numbers<[1], [0], [0], [1], [0, 0, 1, 1], [], []>} : vector<64x32xbf16>, vector<32x128xbf16>, vector<64x128xf32> -> vector<64x128xf32>
    %34 = vector.shape_cast %33 : vector<64x128xf32> to vector<8x8x128xf32>
    %35 = arith.truncf %34 : vector<8x8x128xf32> to vector<8x8x128xbf16>
    %c1 = arith.constant 1 : index
    %c8 = arith.constant 8 : index
    %c0_26 = arith.constant 0 : index
    %36 = vector.load %arg9[%c1, %c8, %c0_26] : memref<10x17x128xbf16, #tpu.memory_space<vmem>>, vector<8x8x128xbf16>
    tpu.vector_store %arg9[%c1, %c8, %c0_26], %35 {strides = array<i32>} : memref<10x17x128xbf16, #tpu.memory_space<vmem>>, vector<8x8x128xbf16>,
    %c0_27 = arith.constant 0 : index
    %c7_28 = arith.constant 7 : index
    %c0_29 = arith.constant 0 : index
    %37 = vector.load %arg9[%c0_27, %c7_28, %c0_29] : memref<10x17x128xbf16, #tpu.memory_space<vmem>>, vector<10x8x128xbf16>
    %38 = vector.extract_strided_slice %37 {offsets = [0, 0, 0], sizes = [8, 8, 128], strides = [1, 1, 1]} : vector<10x8x128xbf16> to vector<8x8x128xbf16>
    %39 = vector.extract_strided_slice %37 {offsets = [1, 0, 0], sizes = [8, 8, 128], strides = [1, 1, 1]} : vector<10x8x128xbf16> to vector<8x8x128xbf16>
    %40 = vector.extract_strided_slice %37 {offsets = [2, 0, 0], sizes = [8, 8, 128], strides = [1, 1, 1]} : vector<10x8x128xbf16> to vector<8x8x128xbf16>
    %41 = tpu.concatenate %38, %39, %40 in 2 : vector<8x8x128xbf16>, vector<8x8x128xbf16>, vector<8x8x128xbf16> -> vector<8x8x384xbf16>
    %42 = vector.shape_cast %41 : vector<8x8x384xbf16> to vector<64x384xbf16>
    %c0_30 = arith.constant 0 : index
    %c0_31 = arith.constant 0 : index
    %c0_32 = arith.constant 0 : index
    %43 = vector.load %arg4[%c0_30, %c0_31, %c0_32] : memref<3x384x128xbf16, #tpu.memory_space<vmem>>, vector<1x384x128xbf16>
    %44 = vector.shape_cast %43 : vector<1x384x128xbf16> to vector<384x128xbf16>
    %cst_33 = arith.constant dense<0.000000e+00> : vector<64x128xf32>
    %45 = tpu.matmul %42, %44, %cst_33 {dimension_numbers = #tpu.dot_dimension_numbers<[1], [0], [0], [1], [0, 0, 1, 1], [], []>} : vector<64x384xbf16>, vector<384x128xbf16>, vector<64x128xf32> -> vector<64x128xf32>
    %c0_34 = arith.constant 0 : index
    %c8_35 = arith.constant 8 : index
    %c0_36 = arith.constant 0 : index
    %46 = vector.load %arg9[%c0_34, %c8_35, %c0_36] : memref<10x17x128xbf16, #tpu.memory_space<vmem>>, vector<10x8x128xbf16>
    %47 = vector.extract_strided_slice %46 {offsets = [0, 0, 0], sizes = [8, 8, 128], strides = [1, 1, 1]} : vector<10x8x128xbf16> to vector<8x8x128xbf16>
    %48 = vector.extract_strided_slice %46 {offsets = [1, 0, 0], sizes = [8, 8, 128], strides = [1, 1, 1]} : vector<10x8x128xbf16> to vector<8x8x128xbf16>
    %49 = vector.extract_strided_slice %46 {offsets = [2, 0, 0], sizes = [8, 8, 128], strides = [1, 1, 1]} : vector<10x8x128xbf16> to vector<8x8x128xbf16>
    %50 = tpu.concatenate %47, %48, %49 in 2 : vector<8x8x128xbf16>, vector<8x8x128xbf16>, vector<8x8x128xbf16> -> vector<8x8x384xbf16>
    %51 = vector.shape_cast %50 : vector<8x8x384xbf16> to vector<64x384xbf16>
    %c1_37 = arith.constant 1 : index
    %c0_38 = arith.constant 0 : index
    %c0_39 = arith.constant 0 : index
    %52 = vector.load %arg4[%c1_37, %c0_38, %c0_39] : memref<3x384x128xbf16, #tpu.memory_space<vmem>>, vector<1x384x128xbf16>
    %53 = vector.shape_cast %52 : vector<1x384x128xbf16> to vector<384x128xbf16>
    %cst_40 = arith.constant dense<0.000000e+00> : vector<64x128xf32>
    %54 = tpu.matmul %51, %53, %cst_40 {dimension_numbers = #tpu.dot_dimension_numbers<[1], [0], [0], [1], [0, 0, 1, 1], [], []>} : vector<64x384xbf16>, vector<384x128xbf16>, vector<64x128xf32> -> vector<64x128xf32>
    %55 = arith.addf %45, %54 : vector<64x128xf32>
    %c0_41 = arith.constant 0 : index
    %c9_42 = arith.constant 9 : index
    %c0_43 = arith.constant 0 : index
    %56 = vector.load %arg9[%c0_41, %c9_42, %c0_43] : memref<10x17x128xbf16, #tpu.memory_space<vmem>>, vector<10x8x128xbf16>
    %57 = vector.extract_strided_slice %56 {offsets = [0, 0, 0], sizes = [8, 8, 128], strides = [1, 1, 1]} : vector<10x8x128xbf16> to vector<8x8x128xbf16>
    %58 = vector.extract_strided_slice %56 {offsets = [1, 0, 0], sizes = [8, 8, 128], strides = [1, 1, 1]} : vector<10x8x128xbf16> to vector<8x8x128xbf16>
    %59 = vector.extract_strided_slice %56 {offsets = [2, 0, 0], sizes = [8, 8, 128], strides = [1, 1, 1]} : vector<10x8x128xbf16> to vector<8x8x128xbf16>
    %60 = tpu.concatenate %57, %58, %59 in 2 : vector<8x8x128xbf16>, vector<8x8x128xbf16>, vector<8x8x128xbf16> -> vector<8x8x384xbf16>
    %61 = vector.shape_cast %60 : vector<8x8x384xbf16> to vector<64x384xbf16>
    %c2 = arith.constant 2 : index
    %c0_44 = arith.constant 0 : index
    %c0_45 = arith.constant 0 : index
    %62 = vector.load %arg4[%c2, %c0_44, %c0_45] : memref<3x384x128xbf16, #tpu.memory_space<vmem>>, vector<1x384x128xbf16>
    %63 = vector.shape_cast %62 : vector<1x384x128xbf16> to vector<384x128xbf16>
    %cst_46 = arith.constant dense<0.000000e+00> : vector<64x128xf32>
    %64 = tpu.matmul %61, %63, %cst_46 {dimension_numbers = #tpu.dot_dimension_numbers<[1], [0], [0], [1], [0, 0, 1, 1], [], []>} : vector<64x384xbf16>, vector<384x128xbf16>, vector<64x128xf32> -> vector<64x128xf32>
    %65 = arith.addf %55, %64 : vector<64x128xf32>
    %c0_47 = arith.constant 0 : index
    %c0_48 = arith.constant 0 : index
    %66 = vector.load %arg5[%c0_47, %c0_48] : memref<1x128xf32, #tpu.memory_space<vmem>>, vector<1x128xf32>
    %67 = vector.broadcast %66 : vector<1x128xf32> to vector<64x128xf32>
    %68 = arith.addf %65, %67 : vector<64x128xf32>
    %cst_49 = arith.constant 0.000000e+00 : f32
    %69 = vector.broadcast %cst_49 : f32 to vector<64x128xf32>
    %70 = arith.maximumf %68, %69 : vector<64x128xf32>
    %71 = vector.shape_cast %70 : vector<64x128xf32> to vector<8x8x128xf32>
    %72 = arith.truncf %71 : vector<8x8x128xf32> to vector<8x8x128xbf16>
    %c1_50 = arith.constant 1 : index
    %c8_51 = arith.constant 8 : index
    %c0_52 = arith.constant 0 : index
    %73 = vector.load %arg9[%c1_50, %c8_51, %c0_52] : memref<10x17x128xbf16, #tpu.memory_space<vmem>>, vector<8x8x128xbf16>
    tpu.vector_store %arg9[%c1_50, %c8_51, %c0_52], %72 {strides = array<i32>} : memref<10x17x128xbf16, #tpu.memory_space<vmem>>, vector<8x8x128xbf16>,
    %c0_53 = arith.constant 0 : index
    %c7_54 = arith.constant 7 : index
    %c0_55 = arith.constant 0 : index
    %74 = vector.load %arg9[%c0_53, %c7_54, %c0_55] : memref<10x17x128xbf16, #tpu.memory_space<vmem>>, vector<10x8x128xbf16>
    %75 = vector.extract_strided_slice %74 {offsets = [0, 0, 0], sizes = [8, 8, 128], strides = [1, 1, 1]} : vector<10x8x128xbf16> to vector<8x8x128xbf16>
    %76 = vector.extract_strided_slice %74 {offsets = [1, 0, 0], sizes = [8, 8, 128], strides = [1, 1, 1]} : vector<10x8x128xbf16> to vector<8x8x128xbf16>
    %77 = vector.extract_strided_slice %74 {offsets = [2, 0, 0], sizes = [8, 8, 128], strides = [1, 1, 1]} : vector<10x8x128xbf16> to vector<8x8x128xbf16>
    %78 = tpu.concatenate %75, %76, %77 in 2 : vector<8x8x128xbf16>, vector<8x8x128xbf16>, vector<8x8x128xbf16> -> vector<8x8x384xbf16>
    %79 = vector.shape_cast %78 : vector<8x8x384xbf16> to vector<64x384xbf16>
    %c0_56 = arith.constant 0 : index
    %c0_57 = arith.constant 0 : index
    %c0_58 = arith.constant 0 : index
    %80 = vector.load %arg6[%c0_56, %c0_57, %c0_58] : memref<3x384x128xbf16, #tpu.memory_space<vmem>>, vector<1x384x128xbf16>
    %81 = vector.shape_cast %80 : vector<1x384x128xbf16> to vector<384x128xbf16>
    %cst_59 = arith.constant dense<0.000000e+00> : vector<64x128xf32>
    %82 = tpu.matmul %79, %81, %cst_59 {dimension_numbers = #tpu.dot_dimension_numbers<[1], [0], [0], [1], [0, 0, 1, 1], [], []>} : vector<64x384xbf16>, vector<384x128xbf16>, vector<64x128xf32> -> vector<64x128xf32>
    %c0_60 = arith.constant 0 : index
    %c8_61 = arith.constant 8 : index
    %c0_62 = arith.constant 0 : index
    %83 = vector.load %arg9[%c0_60, %c8_61, %c0_62] : memref<10x17x128xbf16, #tpu.memory_space<vmem>>, vector<10x8x128xbf16>
    %84 = vector.extract_strided_slice %83 {offsets = [0, 0, 0], sizes = [8, 8, 128], strides = [1, 1, 1]} : vector<10x8x128xbf16> to vector<8x8x128xbf16>
    %85 = vector.extract_strided_slice %83 {offsets = [1, 0, 0], sizes = [8, 8, 128], strides = [1, 1, 1]} : vector<10x8x128xbf16> to vector<8x8x128xbf16>
    %86 = vector.extract_strided_slice %83 {offsets = [2, 0, 0], sizes = [8, 8, 128], strides = [1, 1, 1]} : vector<10x8x128xbf16> to vector<8x8x128xbf16>
    %87 = tpu.concatenate %84, %85, %86 in 2 : vector<8x8x128xbf16>, vector<8x8x128xbf16>, vector<8x8x128xbf16> -> vector<8x8x384xbf16>
    %88 = vector.shape_cast %87 : vector<8x8x384xbf16> to vector<64x384xbf16>
    %c1_63 = arith.constant 1 : index
    %c0_64 = arith.constant 0 : index
    %c0_65 = arith.constant 0 : index
    %89 = vector.load %arg6[%c1_63, %c0_64, %c0_65] : memref<3x384x128xbf16, #tpu.memory_space<vmem>>, vector<1x384x128xbf16>
    %90 = vector.shape_cast %89 : vector<1x384x128xbf16> to vector<384x128xbf16>
    %cst_66 = arith.constant dense<0.000000e+00> : vector<64x128xf32>
    %91 = tpu.matmul %88, %90, %cst_66 {dimension_numbers = #tpu.dot_dimension_numbers<[1], [0], [0], [1], [0, 0, 1, 1], [], []>} : vector<64x384xbf16>, vector<384x128xbf16>, vector<64x128xf32> -> vector<64x128xf32>
    %92 = arith.addf %82, %91 : vector<64x128xf32>
    %c0_67 = arith.constant 0 : index
    %c9_68 = arith.constant 9 : index
    %c0_69 = arith.constant 0 : index
    %93 = vector.load %arg9[%c0_67, %c9_68, %c0_69] : memref<10x17x128xbf16, #tpu.memory_space<vmem>>, vector<10x8x128xbf16>
    %94 = vector.extract_strided_slice %93 {offsets = [0, 0, 0], sizes = [8, 8, 128], strides = [1, 1, 1]} : vector<10x8x128xbf16> to vector<8x8x128xbf16>
    %95 = vector.extract_strided_slice %93 {offsets = [1, 0, 0], sizes = [8, 8, 128], strides = [1, 1, 1]} : vector<10x8x128xbf16> to vector<8x8x128xbf16>
    %96 = vector.extract_strided_slice %93 {offsets = [2, 0, 0], sizes = [8, 8, 128], strides = [1, 1, 1]} : vector<10x8x128xbf16> to vector<8x8x128xbf16>
    %97 = tpu.concatenate %94, %95, %96 in 2 : vector<8x8x128xbf16>, vector<8x8x128xbf16>, vector<8x8x128xbf16> -> vector<8x8x384xbf16>
    %98 = vector.shape_cast %97 : vector<8x8x384xbf16> to vector<64x384xbf16>
    %c2_70 = arith.constant 2 : index
    %c0_71 = arith.constant 0 : index
    %c0_72 = arith.constant 0 : index
    %99 = vector.load %arg6[%c2_70, %c0_71, %c0_72] : memref<3x384x128xbf16, #tpu.memory_space<vmem>>, vector<1x384x128xbf16>
    %100 = vector.shape_cast %99 : vector<1x384x128xbf16> to vector<384x128xbf16>
    %cst_73 = arith.constant dense<0.000000e+00> : vector<64x128xf32>
    %101 = tpu.matmul %98, %100, %cst_73 {dimension_numbers = #tpu.dot_dimension_numbers<[1], [0], [0], [1], [0, 0, 1, 1], [], []>} : vector<64x384xbf16>, vector<384x128xbf16>, vector<64x128xf32> -> vector<64x128xf32>
    %102 = arith.addf %92, %101 : vector<64x128xf32>
    %c0_74 = arith.constant 0 : index
    %c0_75 = arith.constant 0 : index
    %103 = vector.load %arg7[%c0_74, %c0_75] : memref<1x128xf32, #tpu.memory_space<vmem>>, vector<1x128xf32>
    %104 = vector.broadcast %103 : vector<1x128xf32> to vector<64x128xf32>
    %105 = arith.addf %102, %104 : vector<64x128xf32>
    %cst_76 = arith.constant 0.000000e+00 : f32
    %106 = vector.broadcast %cst_76 : f32 to vector<64x128xf32>
    %107 = arith.maximumf %105, %106 : vector<64x128xf32>
    %108 = vector.shape_cast %107 : vector<64x128xf32> to vector<8x8x128xf32>
    %109 = arith.truncf %108 : vector<8x8x128xf32> to vector<8x8x128xbf16>
    %c0_77 = arith.constant 0 : index
    %c0_78 = arith.constant 0 : index
    %c0_79 = arith.constant 0 : index
    %c0_80 = arith.constant 0 : index
    %110 = vector.load %arg8[%c0_77, %c0_78, %c0_79, %c0_80] : memref<1x8x8x128xbf16, #tpu.memory_space<vmem>>, vector<1x8x8x128xbf16>
    %111 = vector.shape_cast %110 : vector<1x8x8x128xbf16> to vector<8x8x128xbf16>
    %112 = vector.shape_cast %109 : vector<8x8x128xbf16> to vector<1x8x8x128xbf16>
    tpu.vector_store %arg8[%c0_77, %c0_78, %c0_79, %c0_80], %112 {strides = array<i32>} : memref<1x8x8x128xbf16, #tpu.memory_space<vmem>>, vector<1x8x8x128xbf16>,
    return
  }
  func.func @transform_0(%arg0: i32) -> (i32, i32, i32, i32) {
    %c0_i32 = arith.constant 0 : i32
    %c0_i32_0 = arith.constant 0 : i32
    %c0_i32_1 = arith.constant 0 : i32
    %c0_i32_2 = arith.constant 0 : i32
    return %arg0, %c0_i32, %c0_i32_0, %c0_i32_1 : i32, i32, i32, i32
  }
  func.func @transform_1(%arg0: i32) -> (i32, i32, i32, i32) {
    %c0_i32 = arith.constant 0 : i32
    %c0_i32_0 = arith.constant 0 : i32
    %c0_i32_1 = arith.constant 0 : i32
    %c0_i32_2 = arith.constant 0 : i32
    return %arg0, %c0_i32, %c0_i32_0, %c0_i32_1 : i32, i32, i32, i32
  }
  func.func @transform_2(%arg0: i32) -> (i32, i32) {
    %c0_i32 = arith.constant 0 : i32
    %c0_i32_0 = arith.constant 0 : i32
    %c0_i32_1 = arith.constant 0 : i32
    return %c0_i32, %c0_i32_0 : i32, i32
  }
  func.func @transform_3(%arg0: i32) -> (i32, i32, i32) {
    %c0_i32 = arith.constant 0 : i32
    %c0_i32_0 = arith.constant 0 : i32
    %c0_i32_1 = arith.constant 0 : i32
    %c0_i32_2 = arith.constant 0 : i32
    return %c0_i32, %c0_i32_0, %c0_i32_1 : i32, i32, i32
  }
  func.func @transform_4(%arg0: i32) -> (i32, i32) {
    %c0_i32 = arith.constant 0 : i32
    %c0_i32_0 = arith.constant 0 : i32
    %c0_i32_1 = arith.constant 0 : i32
    return %c0_i32, %c0_i32_0 : i32, i32
  }
  func.func @transform_5(%arg0: i32) -> (i32, i32, i32) {
    %c0_i32 = arith.constant 0 : i32
    %c0_i32_0 = arith.constant 0 : i32
    %c0_i32_1 = arith.constant 0 : i32
    %c0_i32_2 = arith.constant 0 : i32
    return %c0_i32, %c0_i32_0, %c0_i32_1 : i32, i32, i32
  }
  func.func @transform_6(%arg0: i32) -> (i32, i32) {
    %c0_i32 = arith.constant 0 : i32
    %c0_i32_0 = arith.constant 0 : i32
    %c0_i32_1 = arith.constant 0 : i32
    return %c0_i32, %c0_i32_0 : i32, i32
  }
  func.func @transform_7(%arg0: i32) -> (i32, i32, i32, i32) {
    %c0_i32 = arith.constant 0 : i32
    %c0_i32_0 = arith.constant 0 : i32
    %c0_i32_1 = arith.constant 0 : i32
    %c0_i32_2 = arith.constant 0 : i32
    return %arg0, %c0_i32, %c0_i32_0, %c0_i32_1 : i32, i32, i32, i32
  }
}

module attributes {stable_mosaic.version = 11 : i64} {
  func.func @decoder_block_kernel(%arg0: i32, %arg1: memref<1x8x8x8xbf16, #tpu.memory_space<vmem>>, %arg2: memref<1x8x8x8xi8, #tpu.memory_space<vmem>>, %arg3: memref<32x128xbf16, #tpu.memory_space<vmem>>, %arg4: memref<3x384x128xbf16, #tpu.memory_space<vmem>>, %arg5: memref<1x128xf32, #tpu.memory_space<vmem>>, %arg6: memref<3x384x128xbf16, #tpu.memory_space<vmem>>, %arg7: memref<1x128xf32, #tpu.memory_space<vmem>>, %arg8: memref<1x8x8x128xbf16, #tpu.memory_space<vmem>>, %arg9: memref<10x17x128xbf16, #tpu.memory_space<vmem>>) attributes {dimension_semantics = [#tpu.dimension_semantics<parallel>], iteration_bounds = array<i64: 2>, scalar_prefetch = 0 : i64, scratch_operands = 1 : i64, tpu.core_type = #tpu.core_type<tc>, window_params = [{transform_indices = @transform_0, window_bounds = array<i64: 1, 8, 8, 8>}, {transform_indices = @transform_1, window_bounds = array<i64: 1, 8, 8, 8>}, {pipeline_mode = #tpu.pipeline_mode<synchronous>, transform_indices = @transform_2, window_bounds = array<i64: 32, 128>}, {pipeline_mode = #tpu.pipeline_mode<synchronous>, transform_indices = @transform_3, window_bounds = array<i64: 3, 384, 128>}, {pipeline_mode = #tpu.pipeline_mode<synchronous>, transform_indices = @transform_4, window_bounds = array<i64: 1, 128>}, {pipeline_mode = #tpu.pipeline_mode<synchronous>, transform_indices = @transform_5, window_bounds = array<i64: 3, 384, 128>}, {pipeline_mode = #tpu.pipeline_mode<synchronous>, transform_indices = @transform_6, window_bounds = array<i64: 1, 128>}, {transform_indices = @transform_7, window_bounds = array<i64: 1, 8, 8, 128>}]} {
    %cst = arith.constant 0.000000e+00 : bf16
    %0 = vector.broadcast %cst : bf16 to vector<1x17x128xbf16>
    %c0 = arith.constant 0 : index
    %c0_0 = arith.constant 0 : index
    %c0_1 = arith.constant 0 : index
    %1 = vector.load %arg9[%c0, %c0_0, %c0_1] : memref<10x17x128xbf16, #tpu.memory_space<vmem>>, vector<1x17x128xbf16>
    tpu.vector_store %arg9[%c0, %c0_0, %c0_1], %0 {strides = array<i32>} : memref<10x17x128xbf16, #tpu.memory_space<vmem>>, vector<1x17x128xbf16>,
    %cst_2 = arith.constant 0.000000e+00 : bf16
    %2 = vector.broadcast %cst_2 : bf16 to vector<1x17x128xbf16>
    %c9 = arith.constant 9 : index
    %c0_3 = arith.constant 0 : index
    %c0_4 = arith.constant 0 : index
    %3 = vector.load %arg9[%c9, %c0_3, %c0_4] : memref<10x17x128xbf16, #tpu.memory_space<vmem>>, vector<1x17x128xbf16>
    tpu.vector_store %arg9[%c9, %c0_3, %c0_4], %2 {strides = array<i32>} : memref<10x17x128xbf16, #tpu.memory_space<vmem>>, vector<1x17x128xbf16>,
    %cst_5 = arith.constant 0.000000e+00 : bf16
    %4 = vector.broadcast %cst_5 : bf16 to vector<10x1x128xbf16>
    %c0_6 = arith.constant 0 : index
    %c7 = arith.constant 7 : index
    %c0_7 = arith.constant 0 : index
    %5 = vector.load %arg9[%c0_6, %c7, %c0_7] : memref<10x17x128xbf16, #tpu.memory_space<vmem>>, vector<10x1x128xbf16>
    tpu.vector_store %arg9[%c0_6, %c7, %c0_7], %4 {strides = array<i32>} : memref<10x17x128xbf16, #tpu.memory_space<vmem>>, vector<10x1x128xbf16>,
    %cst_8 = arith.constant 0.000000e+00 : bf16
    %6 = vector.broadcast %cst_8 : bf16 to vector<10x1x128xbf16>
    %c0_9 = arith.constant 0 : index
    %c16 = arith.constant 16 : index
    %c0_10 = arith.constant 0 : index
    %7 = vector.load %arg9[%c0_9, %c16, %c0_10] : memref<10x17x128xbf16, #tpu.memory_space<vmem>>, vector<10x1x128xbf16>
    tpu.vector_store %arg9[%c0_9, %c16, %c0_10], %6 {strides = array<i32>} : memref<10x17x128xbf16, #tpu.memory_space<vmem>>, vector<10x1x128xbf16>,
    %c0_11 = arith.constant 0 : index
    %c0_12 = arith.constant 0 : index
    %c0_13 = arith.constant 0 : index
    %c0_14 = arith.constant 0 : index
    %8 = vector.load %arg1[%c0_11, %c0_12, %c0_13, %c0_14] : memref<1x8x8x8xbf16, #tpu.memory_space<vmem>>, vector<1x8x8x8xbf16>
    %9 = vector.shape_cast %8 : vector<1x8x8x8xbf16> to vector<8x8x8xbf16>
    %10 = vector.shape_cast %9 : vector<8x8x8xbf16> to vector<64x8xbf16>
    %c0_15 = arith.constant 0 : index
    %c0_16 = arith.constant 0 : index
    %c0_17 = arith.constant 0 : index
    %c0_18 = arith.constant 0 : index
    %11 = vector.load %arg2[%c0_15, %c0_16, %c0_17, %c0_18] : memref<1x8x8x8xi8, #tpu.memory_space<vmem>>, vector<1x8x8x8xi8>
    %12 = vector.shape_cast %11 : vector<1x8x8x8xi8> to vector<8x8x8xi8>
    %13 = arith.extsi %12 : vector<8x8x8xi8> to vector<8x8x8xi32>
    %14 = vector.shape_cast %13 : vector<8x8x8xi32> to vector<64x8xi32>
    %c0_i32 = arith.constant 0 : i32
    %15 = vector.broadcast %c0_i32 : i32 to vector<64x8xi32>
    %16 = arith.cmpi eq, %14, %15 : vector<64x8xi32>
    %cst_19 = arith.constant 0.000000e+00 : bf16
    %17 = vector.broadcast %cst_19 : bf16 to vector<64x8xbf16>
    %18 = arith.select %16, %10, %17 : vector<64x8xi1>, vector<64x8xbf16>
    %c1_i32 = arith.constant 1 : i32
    %19 = vector.broadcast %c1_i32 : i32 to vector<64x8xi32>
    %20 = arith.cmpi eq, %14, %19 : vector<64x8xi32>
    %cst_20 = arith.constant 0.000000e+00 : bf16
    %21 = vector.broadcast %cst_20 : bf16 to vector<64x8xbf16>
    %22 = arith.select %20, %10, %21 : vector<64x8xi1>, vector<64x8xbf16>
    %c2_i32 = arith.constant 2 : i32
    %23 = vector.broadcast %c2_i32 : i32 to vector<64x8xi32>
    %24 = arith.cmpi eq, %14, %23 : vector<64x8xi32>
    %cst_21 = arith.constant 0.000000e+00 : bf16
    %25 = vector.broadcast %cst_21 : bf16 to vector<64x8xbf16>
    %26 = arith.select %24, %10, %25 : vector<64x8xi1>, vector<64x8xbf16>
    %c3_i32 = arith.constant 3 : i32
    %27 = vector.broadcast %c3_i32 : i32 to vector<64x8xi32>
    %28 = arith.cmpi eq, %14, %27 : vector<64x8xi32>
    %cst_22 = arith.constant 0.000000e+00 : bf16
    %29 = vector.broadcast %cst_22 : bf16 to vector<64x8xbf16>
    %30 = arith.select %28, %10, %29 : vector<64x8xi1>, vector<64x8xbf16>
    %31 = tpu.concatenate %18, %22, %26, %30 in 1 : vector<64x8xbf16>, vector<64x8xbf16>, vector<64x8xbf16>, vector<64x8xbf16> -> vector<64x32xbf16>
    %c0_23 = arith.constant 0 : index
    %c0_24 = arith.constant 0 : index
    %32 = vector.load %arg3[%c0_23, %c0_24] : memref<32x128xbf16, #tpu.memory_space<vmem>>, vector<32x128xbf16>
    %cst_25 = arith.constant dense<0.000000e+00> : vector<64x128xf32>
    %33 = tpu.matmul %31, %32, %cst_25 {dimension_numbers = #tpu.dot_dimension_numbers<[1], [0], [0], [1], [0, 0, 1, 1], [], []>} : vector<64x32xbf16>, vector<32x128xbf16>, vector<64x128xf32> -> vector<64x128xf32>
    %34 = vector.shape_cast %33 : vector<64x128xf32> to vector<8x8x128xf32>
    %35 = arith.truncf %34 : vector<8x8x128xf32> to vector<8x8x128xbf16>
    %c1 = arith.constant 1 : index
    %c8 = arith.constant 8 : index
    %c0_26 = arith.constant 0 : index
    %36 = vector.load %arg9[%c1, %c8, %c0_26] : memref<10x17x128xbf16, #tpu.memory_space<vmem>>, vector<8x8x128xbf16>
    tpu.vector_store %arg9[%c1, %c8, %c0_26], %35 {strides = array<i32>} : memref<10x17x128xbf16, #tpu.memory_space<vmem>>, vector<8x8x128xbf16>,
    %c0_27 = arith.constant 0 : index
    %c7_28 = arith.constant 7 : index
    %c0_29 = arith.constant 0 : index
    %37 = vector.load %arg9[%c0_27, %c7_28, %c0_29] : memref<10x17x128xbf16, #tpu.memory_space<vmem>>, vector<10x8x128xbf16>
    %38 = vector.extract_strided_slice %37 {offsets = [0, 0, 0], sizes = [8, 8, 128], strides = [1, 1, 1]} : vector<10x8x128xbf16> to vector<8x8x128xbf16>
    %39 = vector.extract_strided_slice %37 {offsets = [1, 0, 0], sizes = [8, 8, 128], strides = [1, 1, 1]} : vector<10x8x128xbf16> to vector<8x8x128xbf16>
    %40 = vector.extract_strided_slice %37 {offsets = [2, 0, 0], sizes = [8, 8, 128], strides = [1, 1, 1]} : vector<10x8x128xbf16> to vector<8x8x128xbf16>
    %41 = tpu.concatenate %38, %39, %40 in 2 : vector<8x8x128xbf16>, vector<8x8x128xbf16>, vector<8x8x128xbf16> -> vector<8x8x384xbf16>
    %42 = vector.shape_cast %41 : vector<8x8x384xbf16> to vector<64x384xbf16>
    %c0_30 = arith.constant 0 : index
    %c0_31 = arith.constant 0 : index
    %c0_32 = arith.constant 0 : index
    %43 = vector.load %arg4[%c0_30, %c0_31, %c0_32] : memref<3x384x128xbf16, #tpu.memory_space<vmem>>, vector<1x384x128xbf16>
    %44 = vector.shape_cast %43 : vector<1x384x128xbf16> to vector<384x128xbf16>
    %cst_33 = arith.constant dense<0.000000e+00> : vector<64x128xf32>
    %45 = tpu.matmul %42, %44, %cst_33 {dimension_numbers = #tpu.dot_dimension_numbers<[1], [0], [0], [1], [0, 0, 1, 1], [], []>} : vector<64x384xbf16>, vector<384x128xbf16>, vector<64x128xf32> -> vector<64x128xf32>
    %c0_34 = arith.constant 0 : index
    %c8_35 = arith.constant 8 : index
    %c0_36 = arith.constant 0 : index
    %46 = vector.load %arg9[%c0_34, %c8_35, %c0_36] : memref<10x17x128xbf16, #tpu.memory_space<vmem>>, vector<10x8x128xbf16>
    %47 = vector.extract_strided_slice %46 {offsets = [0, 0, 0], sizes = [8, 8, 128], strides = [1, 1, 1]} : vector<10x8x128xbf16> to vector<8x8x128xbf16>
    %48 = vector.extract_strided_slice %46 {offsets = [1, 0, 0], sizes = [8, 8, 128], strides = [1, 1, 1]} : vector<10x8x128xbf16> to vector<8x8x128xbf16>
    %49 = vector.extract_strided_slice %46 {offsets = [2, 0, 0], sizes = [8, 8, 128], strides = [1, 1, 1]} : vector<10x8x128xbf16> to vector<8x8x128xbf16>
    %50 = tpu.concatenate %47, %48, %49 in 2 : vector<8x8x128xbf16>, vector<8x8x128xbf16>, vector<8x8x128xbf16> -> vector<8x8x384xbf16>
    %51 = vector.shape_cast %50 : vector<8x8x384xbf16> to vector<64x384xbf16>
    %c1_37 = arith.constant 1 : index
    %c0_38 = arith.constant 0 : index
    %c0_39 = arith.constant 0 : index
    %52 = vector.load %arg4[%c1_37, %c0_38, %c0_39] : memref<3x384x128xbf16, #tpu.memory_space<vmem>>, vector<1x384x128xbf16>
    %53 = vector.shape_cast %52 : vector<1x384x128xbf16> to vector<384x128xbf16>
    %cst_40 = arith.constant dense<0.000000e+00> : vector<64x128xf32>
    %54 = tpu.matmul %51, %53, %cst_40 {dimension_numbers = #tpu.dot_dimension_numbers<[1], [0], [0], [1], [0, 0, 1, 1], [], []>} : vector<64x384xbf16>, vector<384x128xbf16>, vector<64x128xf32> -> vector<64x128xf32>
    %55 = arith.addf %45, %54 : vector<64x128xf32>
    %c0_41 = arith.constant 0 : index
    %c9_42 = arith.constant 9 : index
    %c0_43 = arith.constant 0 : index
    %56 = vector.load %arg9[%c0_41, %c9_42, %c0_43] : memref<10x17x128xbf16, #tpu.memory_space<vmem>>, vector<10x8x128xbf16>
    %57 = vector.extract_strided_slice %56 {offsets = [0, 0, 0], sizes = [8, 8, 128], strides = [1, 1, 1]} : vector<10x8x128xbf16> to vector<8x8x128xbf16>
    %58 = vector.extract_strided_slice %56 {offsets = [1, 0, 0], sizes = [8, 8, 128], strides = [1, 1, 1]} : vector<10x8x128xbf16> to vector<8x8x128xbf16>
    %59 = vector.extract_strided_slice %56 {offsets = [2, 0, 0], sizes = [8, 8, 128], strides = [1, 1, 1]} : vector<10x8x128xbf16> to vector<8x8x128xbf16>
    %60 = tpu.concatenate %57, %58, %59 in 2 : vector<8x8x128xbf16>, vector<8x8x128xbf16>, vector<8x8x128xbf16> -> vector<8x8x384xbf16>
    %61 = vector.shape_cast %60 : vector<8x8x384xbf16> to vector<64x384xbf16>
    %c2 = arith.constant 2 : index
    %c0_44 = arith.constant 0 : index
    %c0_45 = arith.constant 0 : index
    %62 = vector.load %arg4[%c2, %c0_44, %c0_45] : memref<3x384x128xbf16, #tpu.memory_space<vmem>>, vector<1x384x128xbf16>
    %63 = vector.shape_cast %62 : vector<1x384x128xbf16> to vector<384x128xbf16>
    %cst_46 = arith.constant dense<0.000000e+00> : vector<64x128xf32>
    %64 = tpu.matmul %61, %63, %cst_46 {dimension_numbers = #tpu.dot_dimension_numbers<[1], [0], [0], [1], [0, 0, 1, 1], [], []>} : vector<64x384xbf16>, vector<384x128xbf16>, vector<64x128xf32> -> vector<64x128xf32>
    %65 = arith.addf %55, %64 : vector<64x128xf32>
    %c0_47 = arith.constant 0 : index
    %c0_48 = arith.constant 0 : index
    %66 = vector.load %arg5[%c0_47, %c0_48] : memref<1x128xf32, #tpu.memory_space<vmem>>, vector<1x128xf32>
    %67 = vector.broadcast %66 : vector<1x128xf32> to vector<64x128xf32>
    %68 = arith.addf %65, %67 : vector<64x128xf32>
    %cst_49 = arith.constant 0.000000e+00 : f32
    %69 = vector.broadcast %cst_49 : f32 to vector<64x128xf32>
    %70 = arith.maximumf %68, %69 : vector<64x128xf32>
    %71 = vector.shape_cast %70 : vector<64x128xf32> to vector<8x8x128xf32>
    %72 = arith.truncf %71 : vector<8x8x128xf32> to vector<8x8x128xbf16>
    %c1_50 = arith.constant 1 : index
    %c8_51 = arith.constant 8 : index
    %c0_52 = arith.constant 0 : index
    %73 = vector.load %arg9[%c1_50, %c8_51, %c0_52] : memref<10x17x128xbf16, #tpu.memory_space<vmem>>, vector<8x8x128xbf16>
    tpu.vector_store %arg9[%c1_50, %c8_51, %c0_52], %72 {strides = array<i32>} : memref<10x17x128xbf16, #tpu.memory_space<vmem>>, vector<8x8x128xbf16>,
    %c0_53 = arith.constant 0 : index
    %c7_54 = arith.constant 7 : index
    %c0_55 = arith.constant 0 : index
    %74 = vector.load %arg9[%c0_53, %c7_54, %c0_55] : memref<10x17x128xbf16, #tpu.memory_space<vmem>>, vector<10x8x128xbf16>
    %75 = vector.extract_strided_slice %74 {offsets = [0, 0, 0], sizes = [8, 8, 128], strides = [1, 1, 1]} : vector<10x8x128xbf16> to vector<8x8x128xbf16>
    %76 = vector.extract_strided_slice %74 {offsets = [1, 0, 0], sizes = [8, 8, 128], strides = [1, 1, 1]} : vector<10x8x128xbf16> to vector<8x8x128xbf16>
    %77 = vector.extract_strided_slice %74 {offsets = [2, 0, 0], sizes = [8, 8, 128], strides = [1, 1, 1]} : vector<10x8x128xbf16> to vector<8x8x128xbf16>
    %78 = tpu.concatenate %75, %76, %77 in 2 : vector<8x8x128xbf16>, vector<8x8x128xbf16>, vector<8x8x128xbf16> -> vector<8x8x384xbf16>
    %79 = vector.shape_cast %78 : vector<8x8x384xbf16> to vector<64x384xbf16>
    %c0_56 = arith.constant 0 : index
    %c0_57 = arith.constant 0 : index
    %c0_58 = arith.constant 0 : index
    %80 = vector.load %arg6[%c0_56, %c0_57, %c0_58] : memref<3x384x128xbf16, #tpu.memory_space<vmem>>, vector<1x384x128xbf16>
    %81 = vector.shape_cast %80 : vector<1x384x128xbf16> to vector<384x128xbf16>
    %cst_59 = arith.constant dense<0.000000e+00> : vector<64x128xf32>
    %82 = tpu.matmul %79, %81, %cst_59 {dimension_numbers = #tpu.dot_dimension_numbers<[1], [0], [0], [1], [0, 0, 1, 1], [], []>} : vector<64x384xbf16>, vector<384x128xbf16>, vector<64x128xf32> -> vector<64x128xf32>
    %c0_60 = arith.constant 0 : index
    %c8_61 = arith.constant 8 : index
    %c0_62 = arith.constant 0 : index
    %83 = vector.load %arg9[%c0_60, %c8_61, %c0_62] : memref<10x17x128xbf16, #tpu.memory_space<vmem>>, vector<10x8x128xbf16>
    %84 = vector.extract_strided_slice %83 {offsets = [0, 0, 0], sizes = [8, 8, 128], strides = [1, 1, 1]} : vector<10x8x128xbf16> to vector<8x8x128xbf16>
    %85 = vector.extract_strided_slice %83 {offsets = [1, 0, 0], sizes = [8, 8, 128], strides = [1, 1, 1]} : vector<10x8x128xbf16> to vector<8x8x128xbf16>
    %86 = vector.extract_strided_slice %83 {offsets = [2, 0, 0], sizes = [8, 8, 128], strides = [1, 1, 1]} : vector<10x8x128xbf16> to vector<8x8x128xbf16>
    %87 = tpu.concatenate %84, %85, %86 in 2 : vector<8x8x128xbf16>, vector<8x8x128xbf16>, vector<8x8x128xbf16> -> vector<8x8x384xbf16>
    %88 = vector.shape_cast %87 : vector<8x8x384xbf16> to vector<64x384xbf16>
    %c1_63 = arith.constant 1 : index
    %c0_64 = arith.constant 0 : index
    %c0_65 = arith.constant 0 : index
    %89 = vector.load %arg6[%c1_63, %c0_64, %c0_65] : memref<3x384x128xbf16, #tpu.memory_space<vmem>>, vector<1x384x128xbf16>
    %90 = vector.shape_cast %89 : vector<1x384x128xbf16> to vector<384x128xbf16>
    %cst_66 = arith.constant dense<0.000000e+00> : vector<64x128xf32>
    %91 = tpu.matmul %88, %90, %cst_66 {dimension_numbers = #tpu.dot_dimension_numbers<[1], [0], [0], [1], [0, 0, 1, 1], [], []>} : vector<64x384xbf16>, vector<384x128xbf16>, vector<64x128xf32> -> vector<64x128xf32>
    %92 = arith.addf %82, %91 : vector<64x128xf32>
    %c0_67 = arith.constant 0 : index
    %c9_68 = arith.constant 9 : index
    %c0_69 = arith.constant 0 : index
    %93 = vector.load %arg9[%c0_67, %c9_68, %c0_69] : memref<10x17x128xbf16, #tpu.memory_space<vmem>>, vector<10x8x128xbf16>
    %94 = vector.extract_strided_slice %93 {offsets = [0, 0, 0], sizes = [8, 8, 128], strides = [1, 1, 1]} : vector<10x8x128xbf16> to vector<8x8x128xbf16>
    %95 = vector.extract_strided_slice %93 {offsets = [1, 0, 0], sizes = [8, 8, 128], strides = [1, 1, 1]} : vector<10x8x128xbf16> to vector<8x8x128xbf16>
    %96 = vector.extract_strided_slice %93 {offsets = [2, 0, 0], sizes = [8, 8, 128], strides = [1, 1, 1]} : vector<10x8x128xbf16> to vector<8x8x128xbf16>
    %97 = tpu.concatenate %94, %95, %96 in 2 : vector<8x8x128xbf16>, vector<8x8x128xbf16>, vector<8x8x128xbf16> -> vector<8x8x384xbf16>
    %98 = vector.shape_cast %97 : vector<8x8x384xbf16> to vector<64x384xbf16>
    %c2_70 = arith.constant 2 : index
    %c0_71 = arith.constant 0 : index
    %c0_72 = arith.constant 0 : index
    %99 = vector.load %arg6[%c2_70, %c0_71, %c0_72] : memref<3x384x128xbf16, #tpu.memory_space<vmem>>, vector<1x384x128xbf16>
    %100 = vector.shape_cast %99 : vector<1x384x128xbf16> to vector<384x128xbf16>
    %cst_73 = arith.constant dense<0.000000e+00> : vector<64x128xf32>
    %101 = tpu.matmul %98, %100, %cst_73 {dimension_numbers = #tpu.dot_dimension_numbers<[1], [0], [0], [1], [0, 0, 1, 1], [], []>} : vector<64x384xbf16>, vector<384x128xbf16>, vector<64x128xf32> -> vector<64x128xf32>
    %102 = arith.addf %92, %101 : vector<64x128xf32>
    %c0_74 = arith.constant 0 : index
    %c0_75 = arith.constant 0 : index
    %103 = vector.load %arg7[%c0_74, %c0_75] : memref<1x128xf32, #tpu.memory_space<vmem>>, vector<1x128xf32>
    %104 = vector.broadcast %103 : vector<1x128xf32> to vector<64x128xf32>
    %105 = arith.addf %102, %104 : vector<64x128xf32>
    %cst_76 = arith.constant 0.000000e+00 : f32
    %106 = vector.broadcast %cst_76 : f32 to vector<64x128xf32>
    %107 = arith.maximumf %105, %106 : vector<64x128xf32>
    %108 = vector.shape_cast %107 : vector<64x128xf32> to vector<8x8x128xf32>
    %109 = arith.truncf %108 : vector<8x8x128xf32> to vector<8x8x128xbf16>
    %c0_77 = arith.constant 0 : index
    %c0_78 = arith.constant 0 : index
    %c0_79 = arith.constant 0 : index
    %c0_80 = arith.constant 0 : index
    %110 = vector.load %arg8[%c0_77, %c0_78, %c0_79, %c0_80] : memref<1x8x8x128xbf16, #tpu.memory_space<vmem>>, vector<1x8x8x128xbf16>
    %111 = vector.shape_cast %110 : vector<1x8x8x128xbf16> to vector<8x8x128xbf16>
    %112 = vector.shape_cast %109 : vector<8x8x128xbf16> to vector<1x8x8x128xbf16>
    tpu.vector_store %arg8[%c0_77, %c0_78, %c0_79, %c0_80], %112 {strides = array<i32>} : memref<1x8x8x128xbf16, #tpu.memory_space<vmem>>, vector<1x8x8x128xbf16>,
    return
  }
  func.func @transform_0(%arg0: i32) -> (i32, i32, i32, i32) {
    %c0_i32 = arith.constant 0 : i32
    %c0_i32_0 = arith.constant 0 : i32
    %c0_i32_1 = arith.constant 0 : i32
    %c0_i32_2 = arith.constant 0 : i32
    return %arg0, %c0_i32, %c0_i32_0, %c0_i32_1 : i32, i32, i32, i32
  }
  func.func @transform_1(%arg0: i32) -> (i32, i32, i32, i32) {
    %c0_i32 = arith.constant 0 : i32
    %c0_i32_0 = arith.constant 0 : i32
    %c0_i32_1 = arith.constant 0 : i32
    %c0_i32_2 = arith.constant 0 : i32
    return %arg0, %c0_i32, %c0_i32_0, %c0_i32_1 : i32, i32, i32, i32
  }
  func.func @transform_2(%arg0: i32) -> (i32, i32) {
    %c0_i32 = arith.constant 0 : i32
    %c0_i32_0 = arith.constant 0 : i32
    %c0_i32_1 = arith.constant 0 : i32
    return %c0_i32, %c0_i32_0 : i32, i32
  }
  func.func @transform_3(%arg0: i32) -> (i32, i32, i32) {
    %c0_i32 = arith.constant 0 : i32
    %c0_i32_0 = arith.constant 0 : i32
    %c0_i32_1 = arith.constant 0 : i32
    %c0_i32_2 = arith.constant 0 : i32
    return %c0_i32, %c0_i32_0, %c0_i32_1 : i32, i32, i32
  }
  func.func @transform_4(%arg0: i32) -> (i32, i32) {
    %c0_i32 = arith.constant 0 : i32
    %c0_i32_0 = arith.constant 0 : i32
    %c0_i32_1 = arith.constant 0 : i32
    return %c0_i32, %c0_i32_0 : i32, i32
  }
  func.func @transform_5(%arg0: i32) -> (i32, i32, i32) {
    %c0_i32 = arith.constant 0 : i32
    %c0_i32_0 = arith.constant 0 : i32
    %c0_i32_1 = arith.constant 0 : i32
    %c0_i32_2 = arith.constant 0 : i32
    return %c0_i32, %c0_i32_0, %c0_i32_1 : i32, i32, i32
  }
  func.func @transform_6(%arg0: i32) -> (i32, i32) {
    %c0_i32 = arith.constant 0 : i32
    %c0_i32_0 = arith.constant 0 : i32
    %c0_i32_1 = arith.constant 0 : i32
    return %c0_i32, %c0_i32_0 : i32, i32
  }
  func.func @transform_7(%arg0: i32) -> (i32, i32, i32, i32) {
    %c0_i32 = arith.constant 0 : i32
    %c0_i32_0 = arith.constant 0 : i32
    %c0_i32_1 = arith.constant 0 : i32
    %c0_i32_2 = arith.constant 0 : i32
    return %arg0, %c0_i32, %c0_i32_0, %c0_i32_1 : i32, i32, i32, i32
  }
}

</mosaic_0001>

<llo_original>
// kernel: tpu_custom_call.1
$region0: #{tpu_custom_call.1}
  #allocation0 [shape = 'u32[]', space=smem, size = 0x4, offset = 0x4, fixed_abs, tag = 'smem constant byte address 0x4 - core index']
  #allocation1 [shape = 'u32[144,128]{1,0:T(1,128)}', space=vmem, size = 0x12000, scoped, tag = 'internal scratch']
  #allocation2 [shape = 'bf16[10,17,128]{2,1,0:T(8,128)(2,1)}', space=vmem, size = 0xf000, scoped, tag = 'scratch operand']
  %s0 = inlined_call_operand.hbm [shape: bf16[2,8,8,8], index: 0, kind: input, shape index: {}]
  %s1 = inlined_call_operand.hbm [shape: s8[2,8,8,8], index: 1, kind: input, shape index: {}]
  %s2 = inlined_call_operand.hbm [shape: bf16[32,128], index: 2, kind: input, shape index: {}]
  %s3 = inlined_call_operand.hbm [shape: bf16[3,384,128], index: 3, kind: input, shape index: {}]
  %s4 = inlined_call_operand.vmem [shape: f32[1,128], index: 4, kind: input, shape index: {}]
  %s5 = inlined_call_operand.hbm [shape: bf16[3,384,128], index: 5, kind: input, shape index: {}]
  %s6 = inlined_call_operand.vmem [shape: f32[1,128], index: 6, kind: input, shape index: {}]
  %s7 = inlined_call_operand.hbm [shape: bf16[2,8,8,128], index: 7, kind: output, shape index: {}]
  %s8 = sld [smem:[#allocation0]]
  $region81: #{tpu_custom_call.1} parent=0
    _
  %s10 = ssub.s32 1, %s8
  %s11 = scalar_select 0, %s10, %s8
  $region1: #{tpu_custom_call.1} parent=0
    #allocation3 [shape = 'u8[32768]{0}', space=vmem, size = 0x8000, scoped, tag = 'input window, operand 0']
    #allocation4 [shape = 's32[2]{0}', space=sflag, size = 0x8, scoped, tag = 'scoped memory for tpu_custom_call.1']
    #allocation5 [shape = 's32[2]{0}', space=sflag, size = 0x8, scoped, tag = 'scoped memory for tpu_custom_call.1']
    #allocation6 [shape = 'u8[16384]{0}', space=vmem, size = 0x4000, scoped, tag = 'input window, operand 1']
    #allocation7 [shape = 's32[2]{0}', space=sflag, size = 0x8, scoped, tag = 'scoped memory for tpu_custom_call.1']
    #allocation8 [shape = 'u8[8192]{0}', space=vmem, size = 0x2000, scoped, tag = 'input window, operand 2, single buffered']
    #allocation9 [shape = 'u8[294912]{0}', space=vmem, size = 0x48000, scoped, tag = 'input window, operand 3, single buffered']
    #allocation10 [shape = 's32[1]{0}', space=sflag, size = 0x4, scoped, tag = 'scoped memory for tpu_custom_call.1']
    #allocation11 [shape = 'u8[294912]{0}', space=vmem, size = 0x48000, scoped, tag = 'input window, operand 5, single buffered']
    #allocation12 [shape = 'u8[32768]{0}', space=vmem, size = 0x8000, scoped, tag = 'output window, operand 0']
    %12 = vsyncpa [#allocation4], 0
    %s13 = scalar_lea.sflag [#allocation4], 1
    %14 = vsyncpa %s13, 0
    %15 = vsyncpa [#allocation7], 0
    %s16 = scalar_lea.sflag [#allocation7], 1
    %17 = vsyncpa %s16, 0
    %18 = vsyncpa [#allocation10], 0
    %19 = vsyncpa [#allocation5], 0
    %s20 = scalar_lea.sflag [#allocation5], 1
    %21 = vsyncpa %s20, 0
    loop: start=0, step=1, limit=4
    $region2: #{tpu_custom_call.1} parent=1 // loop_pre_header
      _
    $region3: #{tpu_custom_call.1} parent=1 // loop_header
      %s23 = sphi 0, %s27
      %p24 = scmp.ge.s32.totalorder %s23, 4
      %s33 = sphi 0, %s35
      %s36 = sphi 0, %s33
      %s37 = sphi 0, %s36
      %s53 = sphi 0, %s37
      %s59 = sphi 0, %s61
      %s62 = sphi 0, %s59
      %s63 = sphi 0, %s62
      %s79 = sphi 0, %s63
      %s83 = sphi 0, %s83
      %s85 = sphi 0, %s83
      %s86 = sphi 0, %s85
      %s100 = sphi 0, %s86
      %s104 = sphi 0, %s104
      %s106 = sphi 0, %s104
      %s107 = sphi 0, %s106
      %s121 = sphi 0, %s107
      %s125 = sphi 0, %s125
      %s127 = sphi 0, %s125
      %s128 = sphi 0, %s127
      %s142 = sphi 0, %s128
      %s146 = sphi 0, %s146
      %s148 = sphi 0, %s146
      %s149 = sphi 0, %s148
      %s163 = sphi 0, %s149
      %s167 = sphi 0, %s167
      %s169 = sphi 0, %s167
      %s170 = sphi 0, %s169
      %s184 = sphi 0, %s170
      %s190 = sphi 0, %s192
      %s193 = sphi 0, %s190
      %s194 = sphi 0, %s193
      %s210 = sphi 0, %s194
    $region4: #{tpu_custom_call.1} parent=1 // loop_header_branch
      %26 = sbr.rel (%p24) target = $region8
    $region5: #{tpu_custom_call.1} parent=1 // loop_body
      %s28 = ssub.s32 %s23, 1
      %s29 = ssub.s32 %s23, 2
      %s30 = sadd.s32 %s23, 1
      %s31 = ssub.s32 %s23, %s30
      %p32 = scmp.eq.s32.totalorder %s31, 0
      %s34 = sadd.s32 %s33, 1
      %s35 = scalar_select %p32, %s33, %s34
      %p38 = pneg %p32
      %p39 = scmp.eq.s32.totalorder %s23, 1
      %p40 = por %p38, %p39
      %p41 = scmp.ne.s32.totalorder %s33, %s36
      %p42 = scmp.eq.s32.totalorder %s23, 0
      %p43 = por %p41, %p42
      %p44 = scmp.ne.s32.totalorder %s33, %s36
      %p45 = scmp.eq.s32.totalorder %s28, 1
      %p46 = por %p44, %p45
      %p47 = scmp.ne.s32.totalorder %s36, %s37
      %p48 = scmp.eq.s32.totalorder %s28, 0
      %p49 = por %p47, %p48
      %p50 = scmp.ne.s32.totalorder %s36, %s37
      %p51 = scmp.eq.s32.totalorder %s29, 1
      %p52 = por %p50, %p51
      %p54 = scmp.ne.s32.totalorder %s37, %s53
      %p55 = scmp.eq.s32.totalorder %s29, 0
      %p56 = por %p54, %p55
      %s57 = ssub.s32 %s23, %s30
      %p58 = scmp.eq.s32.totalorder %s57, 0
      %s60 = sadd.s32 %s59, 1
      %s61 = scalar_select %p58, %s59, %s60
      %p64 = pneg %p58
      %p65 = scmp.eq.s32.totalorder %s23, 1
      %p66 = por %p64, %p65
      %p67 = scmp.ne.s32.totalorder %s59, %s62
      %p68 = scmp.eq.s32.totalorder %s23, 0
      %p69 = por %p67, %p68
      %p70 = scmp.ne.s32.totalorder %s59, %s62
      %p71 = scmp.eq.s32.totalorder %s28, 1
      %p72 = por %p70, %p71
      %p73 = scmp.ne.s32.totalorder %s62, %s63
      %p74 = scmp.eq.s32.totalorder %s28, 0
      %p75 = por %p73, %p74
      %p76 = scmp.ne.s32.totalorder %s62, %s63
      %p77 = scmp.eq.s32.totalorder %s29, 1
      %p78 = por %p76, %p77
      %p80 = scmp.ne.s32.totalorder %s63, %s79
      %p81 = scmp.eq.s32.totalorder %s29, 0
      %p82 = por %p80, %p81
      %s84 = sadd.s32 %s83, 1
      %p87 = scmp.eq.s32.totalorder %s23, 1
      %p88 = scmp.ne.s32.totalorder %s83, %s85
      %p89 = scmp.eq.s32.totalorder %s23, 0
      %p90 = por %p88, %p89
      %p91 = scmp.ne.s32.totalorder %s83, %s85
      %p92 = scmp.eq.s32.totalorder %s28, 1
      %p93 = por %p91, %p92
      %p94 = scmp.ne.s32.totalorder %s85, %s86
      %p95 = scmp.eq.s32.totalorder %s28, 0
      %p96 = por %p94, %p95
      %p97 = scmp.ne.s32.totalorder %s85, %s86
      %p98 = scmp.eq.s32.totalorder %s29, 1
      %p99 = por %p97, %p98
      %p101 = scmp.ne.s32.totalorder %s86, %s100
      %p102 = scmp.eq.s32.totalorder %s29, 0
      %p103 = por %p101, %p102
      %s105 = sadd.s32 %s104, 1
      %p108 = scmp.eq.s32.totalorder %s23, 1
      %p109 = scmp.ne.s32.totalorder %s104, %s106
      %p110 = scmp.eq.s32.totalorder %s23, 0
      %p111 = por %p109, %p110
      %p112 = scmp.ne.s32.totalorder %s104, %s106
      %p113 = scmp.eq.s32.totalorder %s28, 1
      %p114 = por %p112, %p113
      %p115 = scmp.ne.s32.totalorder %s106, %s107
      %p116 = scmp.eq.s32.totalorder %s28, 0
      %p117 = por %p115, %p116
      %p118 = scmp.ne.s32.totalorder %s106, %s107
      %p119 = scmp.eq.s32.totalorder %s29, 1
      %p120 = por %p118, %p119
      %p122 = scmp.ne.s32.totalorder %s107, %s121
      %p123 = scmp.eq.s32.totalorder %s29, 0
      %p124 = por %p122, %p123
      %s126 = sadd.s32 %s125, 1
      %p129 = scmp.eq.s32.totalorder %s23, 1
      %p130 = scmp.ne.s32.totalorder %s125, %s127
      %p131 = scmp.eq.s32.totalorder %s23, 0
      %p132 = por %p130, %p131
      %p133 = scmp.ne.s32.totalorder %s125, %s127
      %p134 = scmp.eq.s32.totalorder %s28, 1
      %p135 = por %p133, %p134
      %p136 = scmp.ne.s32.totalorder %s127, %s128
      %p137 = scmp.eq.s32.totalorder %s28, 0
      %p138 = por %p136, %p137
      %p139 = scmp.ne.s32.totalorder %s127, %s128
      %p140 = scmp.eq.s32.totalorder %s29, 1
      %p141 = por %p139, %p140
      %p143 = scmp.ne.s32.totalorder %s128, %s142
      %p144 = scmp.eq.s32.totalorder %s29, 0
      %p145 = por %p143, %p144
      %s147 = sadd.s32 %s146, 1
      %p150 = scmp.eq.s32.totalorder %s23, 1
      %p151 = scmp.ne.s32.totalorder %s146, %s148
      %p152 = scmp.eq.s32.totalorder %s23, 0
      %p153 = por %p151, %p152
      %p154 = scmp.ne.s32.totalorder %s146, %s148
      %p155 = scmp.eq.s32.totalorder %s28, 1
      %p156 = por %p154, %p155
      %p157 = scmp.ne.s32.totalorder %s148, %s149
      %p158 = scmp.eq.s32.totalorder %s28, 0
      %p159 = por %p157, %p158
      %p160 = scmp.ne.s32.totalorder %s148, %s149
      %p161 = scmp.eq.s32.totalorder %s29, 1
      %p162 = por %p160, %p161
      %p164 = scmp.ne.s32.totalorder %s149, %s163
      %p165 = scmp.eq.s32.totalorder %s29, 0
      %p166 = por %p164, %p165
      %s168 = sadd.s32 %s167, 1
      %p171 = scmp.eq.s32.totalorder %s23, 1
      %p172 = scmp.ne.s32.totalorder %s167, %s169
      %p173 = scmp.eq.s32.totalorder %s23, 0
      %p174 = por %p172, %p173
      %p175 = scmp.ne.s32.totalorder %s167, %s169
      %p176 = scmp.eq.s32.totalorder %s28, 1
      %p177 = por %p175, %p176
      %p178 = scmp.ne.s32.totalorder %s169, %s170
      %p179 = scmp.eq.s32.totalorder %s28, 0
      %p180 = por %p178, %p179
      %p181 = scmp.ne.s32.totalorder %s169, %s170
      %p182 = scmp.eq.s32.totalorder %s29, 1
      %p183 = por %p181, %p182
      %p185 = scmp.ne.s32.totalorder %s170, %s184
      %p186 = scmp.eq.s32.totalorder %s29, 0
      %p187 = por %p185, %p186
      %s188 = ssub.s32 %s23, %s30
      %p189 = scmp.eq.s32.totalorder %s188, 0
      %s191 = sadd.s32 %s190, 1
      %s192 = scalar_select %p189, %s190, %s191
      %p195 = pneg %p189
      %p196 = scmp.eq.s32.totalorder %s23, 1
      %p197 = por %p195, %p196
      %p198 = scmp.ne.s32.totalorder %s190, %s193
      %p199 = scmp.eq.s32.totalorder %s23, 0
      %p200 = por %p198, %p199
      %p201 = scmp.ne.s32.totalorder %s190, %s193
      %p202 = scmp.eq.s32.totalorder %s28, 1
      %p203 = por %p201, %p202
      %p204 = scmp.ne.s32.totalorder %s193, %s194
      %p205 = scmp.eq.s32.totalorder %s28, 0
      %p206 = por %p204, %p205
      %p207 = scmp.ne.s32.totalorder %s193, %s194
      %p208 = scmp.eq.s32.totalorder %s29, 1
      %p209 = por %p207, %p208
      %p211 = scmp.ne.s32.totalorder %s194, %s210
      %p212 = scmp.eq.s32.totalorder %s29, 0
      %p213 = por %p211, %p212
      %p214 = scmp.le.s32.totalorder 1, %s23
      %p215 = scmp.lt.s32.totalorder %s23, 3
      %p216 = pnand %p214, %p215
      %p217 = pneg %p216
      // Predicated region
      $region9: #{tpu_custom_call.1} parent=5 // pred_check
        _
      $region10: #{tpu_custom_call.1} parent=5 // pred_check_branch
        %219 = sbr.rel (%p216) target = $region12
      $region11: #{tpu_custom_call.1} parent=5 // pred_region
        %s220 = ssub.s32 %s23, 1
        // Predicated region
        $region13: #{tpu_custom_call.1} parent=11 // pred_check
          %p221 = pneg %p96
        $region14: #{tpu_custom_call.1} parent=11 // pred_check_branch
          %223 = sbr.rel (%p221) target = $region16
        $region15: #{tpu_custom_call.1} parent=11 // pred_region
          %s225 = ssub.s32 256, 256
          %226 = vsyncadd [#allocation7], %s225
          %s227 = sshll.u32 [#allocation8], 4
          %s228 = int_to_ptr.vmem [resolvable:$true] %s227
          %233 = dma.hbm_to_vmem [thread:$0]  %s2, 256, %s228, [#allocation7], 64, 64, 4
        $region16: #{tpu_custom_call.1} parent=11 // pred_fallthru
          _
        // Predicated region
        $region17: #{tpu_custom_call.1} parent=11 // pred_check
          %p234 = pneg %p117
        $region18: #{tpu_custom_call.1} parent=11 // pred_check_branch
          %236 = sbr.rel (%p234) target = $region20
        $region19: #{tpu_custom_call.1} parent=11 // pred_region
          %s238 = ssub.s32 9216, 9216
          %239 = vsyncadd [#allocation10], %s238
          %s240 = sshll.u32 [#allocation9], 4
          %s241 = int_to_ptr.vmem [resolvable:$true] %s240
          %246 = dma.hbm_to_vmem [thread:$0]  %s3, 9216, %s241, [#allocation10], 64, 64, 4
        $region20: #{tpu_custom_call.1} parent=11 // pred_fallthru
          _
        // Predicated region
        $region21: #{tpu_custom_call.1} parent=11 // pred_check
          %p247 = pneg %p138
        $region22: #{tpu_custom_call.1} parent=11 // pred_check_branch
          %249 = sbr.rel (%p247) target = $region24
        $region23: #{tpu_custom_call.1} parent=11 // pred_region
          _
        $region24: #{tpu_custom_call.1} parent=11 // pred_fallthru
          _
        // Predicated region
        $region25: #{tpu_custom_call.1} parent=11 // pred_check
          %p250 = pneg %p159
        $region26: #{tpu_custom_call.1} parent=11 // pred_check_branch
          %252 = sbr.rel (%p250) target = $region28
        $region27: #{tpu_custom_call.1} parent=11 // pred_region
          %s254 = ssub.s32 9216, 9216
          %255 = vsyncadd [#allocation10], %s254
          %s256 = sshll.u32 [#allocation11], 4
          %s257 = int_to_ptr.vmem [resolvable:$true] %s256
          %262 = dma.hbm_to_vmem [thread:$0]  %s5, 9216, %s257, [#allocation10], 64, 64, 4
        $region28: #{tpu_custom_call.1} parent=11 // pred_fallthru
          _
        // Predicated region
        $region29: #{tpu_custom_call.1} parent=11 // pred_check
          %p263 = pneg %p180
        $region30: #{tpu_custom_call.1} parent=11 // pred_check_branch
          %265 = sbr.rel (%p263) target = $region32
        $region31: #{tpu_custom_call.1} parent=11 // pred_region
          _
        $region32: #{tpu_custom_call.1} parent=11 // pred_fallthru
          _
      $region12: #{tpu_custom_call.1} parent=5 // pred_fallthru
        _
      %p266 = scmp.lt.s32.totalorder %s23, 2
      // Predicated region
      $region33: #{tpu_custom_call.1} parent=5 // pred_check
        %p267 = pneg %p266
      $region34: #{tpu_custom_call.1} parent=5 // pred_check_branch
        %269 = sbr.rel (%p267) target = $region36
      $region35: #{tpu_custom_call.1} parent=5 // pred_region
        // Predicated region
        $region37: #{tpu_custom_call.1} parent=35 // pred_check
          %p270 = pneg %p43
        $region38: #{tpu_custom_call.1} parent=35 // pred_check_branch
          %272 = sbr.rel (%p270) target = $region40
        $region39: #{tpu_custom_call.1} parent=35 // pred_region
          %s273 = sand.u32 %s33, 1
          %s274 = scalar_lea.sflag [#allocation4], %s273
          %s275 = sand.u32 %s33, 1
          %s276 = smul.addr %s275, 32
          %s277 = scalar_lea.vmem [#allocation3], %s276
          %s279 = ssub.s32 512, 512
          %280 = vsyncadd %s274, %s279
          %s281 = smul.addr %s23, 8
          %s282 = smul.addr %s281, 64
          %s283 = scalar_lea.hbm %s0, %s282
          %s284 = sshll.u32 %s277, 4
          %s285 = int_to_ptr.vmem [resolvable:$true] %s284
          %290 = dma.hbm_to_vmem [thread:$0]  %s283, 512, %s285, %s274, 64, 64, 4
        $region40: #{tpu_custom_call.1} parent=35 // pred_fallthru
          _
        // Predicated region
        $region41: #{tpu_custom_call.1} parent=35 // pred_check
          %p291 = pneg %p69
        $region42: #{tpu_custom_call.1} parent=35 // pred_check_branch
          %293 = sbr.rel (%p291) target = $region44
        $region43: #{tpu_custom_call.1} parent=35 // pred_region
          %s294 = sand.u32 %s23, 1
          %s295 = scalar_lea.sflag [#allocation7], %s294
          %s296 = sand.u32 %s59, 1
          %s297 = smul.addr %s296, 16
          %s298 = scalar_lea.vmem [#allocation6], %s297
          %s300 = ssub.s32 256, 256
          %301 = vsyncadd %s295, %s300
          %s302 = smul.addr %s23, 8
          %s303 = smul.addr %s302, 32
          %s304 = scalar_lea.hbm %s1, %s303
          %s305 = sshll.u32 %s298, 4
          %s306 = int_to_ptr.vmem [resolvable:$true] %s305
          %311 = dma.hbm_to_vmem [thread:$0]  %s304, 256, %s306, %s295, 32, 32, 2
        $region44: #{tpu_custom_call.1} parent=35 // pred_fallthru
          _
      $region36: #{tpu_custom_call.1} parent=5 // pred_fallthru
        _
      %p312 = scmp.le.s32.totalorder 1, %s23
      %p313 = scmp.lt.s32.totalorder %s23, 3
      %p314 = pnand %p312, %p313
      %p315 = pneg %p314
      // Predicated region
      $region45: #{tpu_custom_call.1} parent=5 // pred_check
        _
      $region46: #{tpu_custom_call.1} parent=5 // pred_check_branch
        %317 = sbr.rel (%p314) target = $region48
      $region47: #{tpu_custom_call.1} parent=5 // pred_region
        %s318 = ssub.s32 %s23, 1
        %s319 = sand.u32 %s36, 1
        %s320 = scalar_lea.sflag [#allocation4], %s319
        %s321 = sand.u32 %s36, 1
        %s322 = smul.addr %s321, 32
        %s323 = scalar_lea.vmem [#allocation3], %s322
        // Predicated region
        $region49: #{tpu_custom_call.1} parent=47 // pred_check
          %p324 = pneg %p49
        $region50: #{tpu_custom_call.1} parent=47 // pred_check_branch
          %326 = sbr.rel (%p324) target = $region52
        $region51: #{tpu_custom_call.1} parent=47 // pred_region
          %327 = dma.done %s320, 512
        $region52: #{tpu_custom_call.1} parent=47 // pred_fallthru
          _
        %s328 = sand.u32 %s28, 1
        %s329 = scalar_lea.sflag [#allocation7], %s328
        %s330 = sand.u32 %s62, 1
        %s331 = smul.addr %s330, 16
        %s332 = scalar_lea.vmem [#allocation6], %s331
        // Predicated region
        $region53: #{tpu_custom_call.1} parent=47 // pred_check
          %p333 = pneg %p75
        $region54: #{tpu_custom_call.1} parent=47 // pred_check_branch
          %335 = sbr.rel (%p333) target = $region56
        $region55: #{tpu_custom_call.1} parent=47 // pred_region
          %336 = dma.done %s329, 256
        $region56: #{tpu_custom_call.1} parent=47 // pred_fallthru
          _
        // Predicated region
        $region57: #{tpu_custom_call.1} parent=47 // pred_check
          %p337 = pneg %p96
        $region58: #{tpu_custom_call.1} parent=47 // pred_check_branch
          %339 = sbr.rel (%p337) target = $region60
        $region59: #{tpu_custom_call.1} parent=47 // pred_region
          %340 = dma.done [#allocation7], 256
        $region60: #{tpu_custom_call.1} parent=47 // pred_fallthru
          _
        // Predicated region
        $region61: #{tpu_custom_call.1} parent=47 // pred_check
          %p341 = pneg %p117
        $region62: #{tpu_custom_call.1} parent=47 // pred_check_branch
          %343 = sbr.rel (%p341) target = $region64
        $region63: #{tpu_custom_call.1} parent=47 // pred_region
          %344 = dma.done [#allocation10], 9216
        $region64: #{tpu_custom_call.1} parent=47 // pred_fallthru
          _
        // Predicated region
        $region65: #{tpu_custom_call.1} parent=47 // pred_check
          %p345 = pneg %p159
        $region66: #{tpu_custom_call.1} parent=47 // pred_check_branch
          %347 = sbr.rel (%p345) target = $region68
        $region67: #{tpu_custom_call.1} parent=47 // pred_region
          %348 = dma.done [#allocation10], 9216
        $region68: #{tpu_custom_call.1} parent=47 // pred_fallthru
          _
        %s349 = sand.u32 %s36, 1
        %s350 = scalar_lea.sflag [#allocation4], %s349
        %s351 = sand.u32 %s36, 1
        %s352 = smul.addr %s351, 32
        %s353 = scalar_lea.vmem [#allocation3], %s352
        %p354 = pneg %p49
        %p355 = pneg %p46
        %s356 = sand.u32 %s28, 1
        %s357 = scalar_lea.sflag [#allocation7], %s356
        %s358 = sand.u32 %s62, 1
        %s359 = smul.addr %s358, 16
        %s360 = scalar_lea.vmem [#allocation6], %s359
        %p361 = pneg %p75
        %p362 = pneg %p72
        %p363 = pneg %p96
        %p364 = pneg %p93
        %p365 = pneg %p117
        %p366 = pneg %p114
        %p367 = pneg %p138
        %p368 = pneg %p135
        %p369 = pneg %p159
        %p370 = pneg %p156
        %p371 = pneg %p180
        %p372 = pneg %p177
        %p373 = pneg %p206
        %p374 = pneg %p203
        %s375 = sand.u32 %s193, 1
        %s376 = scalar_lea.sflag [#allocation5], %s375
        %s377 = sand.u32 %s193, 1
        %s378 = smul.addr %s377, 32
        %s379 = scalar_lea.vmem [#allocation12], %s378
        %381 = vst [vmem:[#allocation2] sm:$0xf] 0
        %382 = vst [vmem:[#allocation2 + $0x4] sm:$0xf] 0
        %vm383 = vcmask 1040384
        %vm384 = vsmask.f32 256
        %vm385 = vmand %vm383, %vm384
        %v386 = vld [vmem:[#allocation2 + $0x8] sm:$0x1]
        %v387 = vsel %vm385, 0, %v386
        %388 = vst [vmem:[#allocation2 + $0x8] sm:$0x1] %v387
        %s389 = scalar_lea.vmem [#allocation2], 108
        %390 = vst [vmem:[%s389] sm:$0xf] 0
        %391 = vst [vmem:[%s389 + $0x4] sm:$0xf] 0
        %v392 = vld [vmem:[%s389 + $0x8] sm:$0x1]
        %v393 = vsel %vm385, 0, %v392
        %394 = vst [vmem:[%s389 + $0x8] sm:$0x1] %v393
        %vm395 = vcmask 1043459
        %vm396 = vsmask.f32 7950
        %vm397 = vmand %vm395, %vm396
        %v398 = vld [vmem:[#allocation2] sm:$0x8]
        %v399 = vsel %vm397, 0, %v398
        %400 = vst [vmem:[#allocation2] sm:$0x8] %v399
        %v401 = vld [vmem:[#allocation2 + $0xc] sm:$0x8]
        %v402 = vsel %vm397, 0, %v401
        %403 = vst [vmem:[#allocation2 + $0xc] sm:$0x8] %v402
        %v404 = vld [vmem:[#allocation2 + $0x18] sm:$0x8]
        %v405 = vsel %vm397, 0, %v404
        %406 = vst [vmem:[#allocation2 + $0x18] sm:$0x8] %v405
        %v407 = vld [vmem:[#allocation2 + $0x24] sm:$0x8]
        %v408 = vsel %vm397, 0, %v407
        %409 = vst [vmem:[#allocation2 + $0x24] sm:$0x8] %v408
        %v410 = vld [vmem:[#allocation2 + $0x30] sm:$0x8]
        %v411 = vsel %vm397, 0, %v410
        %412 = vst [vmem:[#allocation2 + $0x30] sm:$0x8] %v411
        %v413 = vld [vmem:[#allocation2 + $0x3c] sm:$0x8]
        %v414 = vsel %vm397, 0, %v413
        %415 = vst [vmem:[#allocation2 + $0x3c] sm:$0x8] %v414
        %v416 = vld [vmem:[#allocation2 + $0x48] sm:$0x8]
        %v417 = vsel %vm397, 0, %v416
        %418 = vst [vmem:[#allocation2 + $0x48] sm:$0x8] %v417
        %v419 = vld [vmem:[#allocation2 + $0x54] sm:$0x8]
        %v420 = vsel %vm397, 0, %v419
        %421 = vst [vmem:[#allocation2 + $0x54] sm:$0x8] %v420
        %v422 = vld [vmem:[#allocation2 + $0x60] sm:$0x8]
        %v423 = vsel %vm397, 0, %v422
        %424 = vst [vmem:[#allocation2 + $0x60] sm:$0x8] %v423
        %v425 = vld [vmem:[#allocation2 + $0x6c] sm:$0x8]
        %v426 = vsel %vm397, 0, %v425
        %427 = vst [vmem:[#allocation2 + $0x6c] sm:$0x8] %v426
        %v428 = vld [vmem:[#allocation2 + $0x8] sm:$0x1]
        %v429 = vsel %vm385, 0, %v428
        %430 = vst [vmem:[#allocation2 + $0x8] sm:$0x1] %v429
        %v431 = vld [vmem:[#allocation2 + $0x14] sm:$0x1]
        %v432 = vsel %vm385, 0, %v431
        %433 = vst [vmem:[#allocation2 + $0x14] sm:$0x1] %v432
        %v434 = vld [vmem:[#allocation2 + $0x20] sm:$0x1]
        %v435 = vsel %vm385, 0, %v434
        %436 = vst [vmem:[#allocation2 + $0x20] sm:$0x1] %v435
        %v437 = vld [vmem:[#allocation2 + $0x2c] sm:$0x1]
        %v438 = vsel %vm385, 0, %v437
        %439 = vst [vmem:[#allocation2 + $0x2c] sm:$0x1] %v438
        %v440 = vld [vmem:[#allocation2 + $0x38] sm:$0x1]
        %v441 = vsel %vm385, 0, %v440
        %442 = vst [vmem:[#allocation2 + $0x38] sm:$0x1] %v441
        %v443 = vld [vmem:[#allocation2 + $0x44] sm:$0x1]
        %v444 = vsel %vm385, 0, %v443
        %445 = vst [vmem:[#allocation2 + $0x44] sm:$0x1] %v444
        %v446 = vld [vmem:[#allocation2 + $0x50] sm:$0x1]
        %v447 = vsel %vm385, 0, %v446
        %448 = vst [vmem:[#allocation2 + $0x50] sm:$0x1] %v447
        %v449 = vld [vmem:[#allocation2 + $0x5c] sm:$0x1]
        %v450 = vsel %vm385, 0, %v449
        %451 = vst [vmem:[#allocation2 + $0x5c] sm:$0x1] %v450
        %v452 = vld [vmem:[#allocation2 + $0x68] sm:$0x1]
        %v453 = vsel %vm385, 0, %v452
        %454 = vst [vmem:[#allocation2 + $0x68] sm:$0x1] %v453
        %v455 = vld [vmem:[#allocation2 + $0x74] sm:$0x1]
        %v456 = vsel %vm385, 0, %v455
        %457 = vst [vmem:[#allocation2 + $0x74] sm:$0x1] %v456
        %v458 = vld [vmem:[%s323] sm:$0xf]
        %v459 = vld [vmem:[%s323 + $0x4] sm:$0xf]
        %v460 = vld [vmem:[%s323 + $0x8] sm:$0xf]
        %v461 = vld [vmem:[%s323 + $0xc] sm:$0xf]
        %v462 = vld [vmem:[%s323 + $0x10] sm:$0xf]
        %v463 = vld [vmem:[%s323 + $0x14] sm:$0xf]
        %v464 = vld [vmem:[%s323 + $0x18] sm:$0xf]
        %v465 = vld [vmem:[%s323 + $0x1c] sm:$0xf]
        %v466 = vld [vmem:[%s332] sm:$0x3]
        %v467 = vld [vmem:[%s332 + $0x2] sm:$0x3]
        %v468 = vld [vmem:[%s332 + $0x4] sm:$0x3]
        %v469 = vld [vmem:[%s332 + $0x6] sm:$0x3]
        %v470 = vld [vmem:[%s332 + $0x8] sm:$0x3]
        %v471 = vld [vmem:[%s332 + $0xa] sm:$0x3]
        %v472 = vld [vmem:[%s332 + $0xc] sm:$0x3]
        %v473 = vld [vmem:[%s332 + $0xe] sm:$0x3]
        %v474 = vunpack.c.0.s8 %v466
        %v475 = vunpack.c.0.s8 %v467
        %v476 = vunpack.c.0.s8 %v468
        %v477 = vunpack.c.0.s8 %v469
        %v478 = vunpack.c.0.s8 %v470
        %v479 = vunpack.c.0.s8 %v471
        %v480 = vunpack.c.0.s8 %v472
        %v481 = vunpack.c.0.s8 %v473
        %vm482 = vcmp.eq.s32.totalorder %v474, 0
        %vm483 = vcmp.eq.s32.totalorder %v475, 0
        %vm484 = vcmp.eq.s32.totalorder %v476, 0
        %vm485 = vcmp.eq.s32.totalorder %v477, 0
        %vm486 = vcmp.eq.s32.totalorder %v478, 0
        %vm487 = vcmp.eq.s32.totalorder %v479, 0
        %vm488 = vcmp.eq.s32.totalorder %v480, 0
        %vm489 = vcmp.eq.s32.totalorder %v481, 0
        %vm490 = vmpackc.low %vm482, %vm482
        %vm491 = vmpackc.low %vm483, %vm483
        %vm492 = vmpackc.low %vm484, %vm484
        %vm493 = vmpackc.low %vm485, %vm485
        %vm494 = vmpackc.low %vm486, %vm486
        %vm495 = vmpackc.low %vm487, %vm487
        %vm496 = vmpackc.low %vm488, %vm488
        %vm497 = vmpackc.low %vm489, %vm489
        %v498 = vsel %vm490, %v458, 0
        %v499 = vsel %vm491, %v459, 0
        %v500 = vsel %vm492, %v460, 0
        %v501 = vsel %vm493, %v461, 0
        %v502 = vsel %vm494, %v462, 0
        %v503 = vsel %vm495, %v463, 0
        %v504 = vsel %vm496, %v464, 0
        %v505 = vsel %vm497, %v465, 0
        %vm506 = vcmp.eq.s32.totalorder %v474, 1
        %vm507 = vcmp.eq.s32.totalorder %v475, 1
        %vm508 = vcmp.eq.s32.totalorder %v476, 1
        %vm509 = vcmp.eq.s32.totalorder %v477, 1
        %vm510 = vcmp.eq.s32.totalorder %v478, 1
        %vm511 = vcmp.eq.s32.totalorder %v479, 1
        %vm512 = vcmp.eq.s32.totalorder %v480, 1
        %vm513 = vcmp.eq.s32.totalorder %v481, 1
        %vm514 = vmpackc.low %vm506, %vm506
        %vm515 = vmpackc.low %vm507, %vm507
        %vm516 = vmpackc.low %vm508, %vm508
        %vm517 = vmpackc.low %vm509, %vm509
        %vm518 = vmpackc.low %vm510, %vm510
        %vm519 = vmpackc.low %vm511, %vm511
        %vm520 = vmpackc.low %vm512, %vm512
        %vm521 = vmpackc.low %vm513, %vm513
        %v522 = vsel %vm514, %v458, 0
        %v523 = vsel %vm515, %v459, 0
        %v524 = vsel %vm516, %v460, 0
        %v525 = vsel %vm517, %v461, 0
        %v526 = vsel %vm518, %v462, 0
        %v527 = vsel %vm519, %v463, 0
        %v528 = vsel %vm520, %v464, 0
        %v529 = vsel %vm521, %v465, 0
        %vm530 = vcmp.eq.s32.totalorder %v474, 2
        %vm531 = vcmp.eq.s32.totalorder %v475, 2
        %vm532 = vcmp.eq.s32.totalorder %v476, 2
        %vm533 = vcmp.eq.s32.totalorder %v477, 2
        %vm534 = vcmp.eq.s32.totalorder %v478, 2
        %vm535 = vcmp.eq.s32.totalorder %v479, 2
        %vm536 = vcmp.eq.s32.totalorder %v480, 2
        %vm537 = vcmp.eq.s32.totalorder %v481, 2
        %vm538 = vmpackc.low %vm530, %vm530
        %vm539 = vmpackc.low %vm531, %vm531
        %vm540 = vmpackc.low %vm532, %vm532
        %vm541 = vmpackc.low %vm533, %vm533
        %vm542 = vmpackc.low %vm534, %vm534
        %vm543 = vmpackc.low %vm535, %vm535
        %vm544 = vmpackc.low %vm536, %vm536
        %vm545 = vmpackc.low %vm537, %vm537
        %v546 = vsel %vm538, %v458, 0
        %v547 = vsel %vm539, %v459, 0
        %v548 = vsel %vm540, %v460, 0
        %v549 = vsel %vm541, %v461, 0
        %v550 = vsel %vm542, %v462, 0
        %v551 = vsel %vm543, %v463, 0
        %v552 = vsel %vm544, %v464, 0
        %v553 = vsel %vm545, %v465, 0
        %vm554 = vcmp.eq.s32.totalorder %v474, 3
        %vm555 = vcmp.eq.s32.totalorder %v475, 3
        %vm556 = vcmp.eq.s32.totalorder %v476, 3
        %vm557 = vcmp.eq.s32.totalorder %v477, 3
        %vm558 = vcmp.eq.s32.totalorder %v478, 3
        %vm559 = vcmp.eq.s32.totalorder %v479, 3
        %vm560 = vcmp.eq.s32.totalorder %v480, 3
        %vm561 = vcmp.eq.s32.totalorder %v481, 3
        %vm562 = vmpackc.low %vm554, %vm554
        %vm563 = vmpackc.low %vm555, %vm555
        %vm564 = vmpackc.low %vm556, %vm556
        %vm565 = vmpackc.low %vm557, %vm557
        %vm566 = vmpackc.low %vm558, %vm558
        %vm567 = vmpackc.low %vm559, %vm559
        %vm568 = vmpackc.low %vm560, %vm560
        %vm569 = vmpackc.low %vm561, %vm561
        %v570 = vsel %vm562, %v458, 0
        %v571 = vsel %vm563, %v459, 0
        %v572 = vsel %vm564, %v460, 0
        %v573 = vsel %vm565, %v461, 0
        %v574 = vsel %vm566, %v462, 0
        %v575 = vsel %vm567, %v463, 0
        %v576 = vsel %vm568, %v464, 0
        %v577 = vsel %vm569, %v465, 0
        %v586 = vunpack.c.l.b16 %v498
        %v587 = vunpack.c.l.b16 %v499
        %v588 = vunpack.c.l.b16 %v500
        %v589 = vunpack.c.l.b16 %v501
        %v590 = vunpack.c.l.b16 %v502
        %v591 = vunpack.c.l.b16 %v503
        %v592 = vunpack.c.l.b16 %v504
        %v593 = vunpack.c.l.b16 %v505
        %v594 = vpack.c.b16 %v587, %v586
        %v595 = vpack.c.b16 %v589, %v588
        %v596 = vpack.c.b16 %v591, %v590
        %v597 = vpack.c.b16 %v593, %v592
        %v606 = vunpack.c.l.b16 %v522
        %v607 = vunpack.c.l.b16 %v523
        %v608 = vunpack.c.l.b16 %v524
        %v609 = vunpack.c.l.b16 %v525
        %v610 = vunpack.c.l.b16 %v526
        %v611 = vunpack.c.l.b16 %v527
        %v612 = vunpack.c.l.b16 %v528
        %v613 = vunpack.c.l.b16 %v529
        %v614 = vpack.c.b16 %v607, %v606
        %v615 = vpack.c.b16 %v609, %v608
        %v616 = vpack.c.b16 %v611, %v610
        %v617 = vpack.c.b16 %v613, %v612
        %618 = vrot.lane.b32.xlu0 %v614, 8
        %v619 = vpop.permute.xlu0 %618
        %620 = vrot.lane.b32.xlu0 %v615, 8
        %v621 = vpop.permute.xlu0 %620
        %622 = vrot.lane.b32.xlu0 %v616, 8
        %v623 = vpop.permute.xlu0 %622
        %624 = vrot.lane.b32.xlu0 %v617, 8
        %v625 = vpop.permute.xlu0 %624
        %v634 = vunpack.c.l.b16 %v546
        %v635 = vunpack.c.l.b16 %v547
        %v636 = vunpack.c.l.b16 %v548
        %v637 = vunpack.c.l.b16 %v549
        %v638 = vunpack.c.l.b16 %v550
        %v639 = vunpack.c.l.b16 %v551
        %v640 = vunpack.c.l.b16 %v552
        %v641 = vunpack.c.l.b16 %v553
        %v642 = vpack.c.b16 %v635, %v634
        %v643 = vpack.c.b16 %v637, %v636
        %v644 = vpack.c.b16 %v639, %v638
        %v645 = vpack.c.b16 %v641, %v640
        %646 = vrot.lane.b32.xlu0 %v642, 16
        %v647 = vpop.permute.xlu0 %646
        %648 = vrot.lane.b32.xlu0 %v643, 16
        %v649 = vpop.permute.xlu0 %648
        %650 = vrot.lane.b32.xlu0 %v644, 16
        %v651 = vpop.permute.xlu0 %650
        %652 = vrot.lane.b32.xlu0 %v645, 16
        %v653 = vpop.permute.xlu0 %652
        %v662 = vunpack.c.l.b16 %v570
        %v663 = vunpack.c.l.b16 %v571
        %v664 = vunpack.c.l.b16 %v572
        %v665 = vunpack.c.l.b16 %v573
        %v666 = vunpack.c.l.b16 %v574
        %v667 = vunpack.c.l.b16 %v575
        %v668 = vunpack.c.l.b16 %v576
        %v669 = vunpack.c.l.b16 %v577
        %v670 = vpack.c.b16 %v663, %v662
        %v671 = vpack.c.b16 %v665, %v664
        %v672 = vpack.c.b16 %v667, %v666
        %v673 = vpack.c.b16 %v669, %v668
        %674 = vrot.lane.b32.xlu0 %v670, 24
        %v675 = vpop.permute.xlu0 %674
        %676 = vrot.lane.b32.xlu0 %v671, 24
        %v677 = vpop.permute.xlu0 %676
        %678 = vrot.lane.b32.xlu0 %v672, 24
        %v679 = vpop.permute.xlu0 %678
        %680 = vrot.lane.b32.xlu0 %v673, 24
        %v681 = vpop.permute.xlu0 %680
        %vm682 = vcmask 64512
        %v685 = vsel %vm682, %v594, %v619
        %v688 = vsel %vm682, %v595, %v621
        %v691 = vsel %vm682, %v596, %v623
        %v694 = vsel %vm682, %v597, %v625
        %vm695 = vcmask 130048
        %v697 = vsel %vm695, %v685, %v647
        %v699 = vsel %vm695, %v688, %v649
        %v701 = vsel %vm695, %v691, %v651
        %v703 = vsel %vm695, %v694, %v653
        %vm704 = vcmask 195584
        %v706 = vsel %vm704, %v697, %v675
        %v708 = vsel %vm704, %v699, %v677
        %v710 = vsel %vm704, %v701, %v679
        %v712 = vsel %vm704, %v703, %v681
        %v713 = vld [vmem:[#allocation8] sm:$0xf]
        %v714 = vld [vmem:[#allocation8 + $0x4] sm:$0xf]
        %v715 = vld [vmem:[#allocation8 + $0x8] sm:$0xf]
        %v716 = vld [vmem:[#allocation8 + $0xc] sm:$0xf]
        %v721 = vunpack.c.l.b16 %v713
        %v722 = vunpack.c.l.b16 %v714
        %v723 = vunpack.c.l.b16 %v715
        %v724 = vunpack.c.l.b16 %v716
        %v725 = vpack.c.b16 %v722, %v721
        %v726 = vpack.c.b16 %v724, %v723
        %vm729 = vcmask 261120
        %v730 = vsel %vm729, %v706, 0
        %v732 = vsel %vm729, %v708, 0
        %v734 = vsel %vm729, %v710, 0
        %v736 = vsel %vm729, %v712, 0
        %738 = vmatprep.subr.bf16.mxu0 0
        %739 = vmatpush1.bf16.msra.mxu0 %v725
        %740 = vmatprep.subr.bf16.mxu0 0
        %741 = vmatpush1.bf16.msra.mxu0 %v726
        %742 = vmatprep.subr.bf16.mxu0 0
        %743 = vmatpush1.bf16.msra.mxu0 0
        %744 = vmatprep.subr.bf16.mxu0 0
        %745 = vmatpush1.bf16.msra.mxu0 0
        %746 = vmatprep.subr.bf16.mxu0 0
        %747 = vmatpush1.bf16.msra.mxu0 0
        %748 = vmatprep.subr.bf16.mxu0 0
        %749 = vmatpush1.bf16.msra.mxu0 0
        %750 = vmatprep.subr.bf16.mxu0 0
        %751 = vmatpush1.bf16.msra.mxu0 0
        %752 = vmatprep.subr.bf16.mxu0 0
        %753 = vmatpush1.bf16.msra.mxu0 0
        %754 = vmatprep.subr.bf16.mxu0 0
        %755 = vmatpush1.bf16.msra.mxu0 0
        %756 = vmatprep.subr.bf16.mxu0 0
        %757 = vmatpush1.bf16.msra.mxu0 0
        %758 = vmatprep.subr.bf16.mxu0 0
        %759 = vmatpush1.bf16.msra.mxu0 0
        %760 = vmatprep.subr.bf16.mxu0 0
        %761 = vmatpush1.bf16.msra.mxu0 0
        %762 = vmatprep.subr.bf16.mxu0 0
        %763 = vmatpush1.bf16.msra.mxu0 0
        %764 = vmatprep.subr.bf16.mxu0 0
        %765 = vmatpush1.bf16.msra.mxu0 0
        %766 = vmatprep.subr.bf16.mxu0 0
        %767 = vmatpush1.bf16.msra.mxu0 0
        %768 = vmatprep.subr.bf16.mxu0 0
        %769 = vmatpush1.bf16.msra.mxu0 0
        %770 = vmatprep.mubr.bf16.mxu0 0
        %771 = vmatmul.mubr.bf16.gmra.mrb[0].mxu0 %v730
        %v772 = vpop.f32.mrb[0].mxu0
        %v773 = vadd.f32 0.0, %v772
        %v774 = vpop.f32.mrb[0].mxu0
        %v775 = vpop.f32.mrb[0].mxu0
        %v776 = vadd.f32 0.0, %v775
        %v777 = vpop.f32.mrb[0].mxu0
        %778 = vmatprep.mubr.bf16.mxu0 0
        %779 = vmatmul.mubr.bf16.gmra.mrb[0].mxu0 %v732
        %v780 = vpop.f32.mrb[0].mxu0
        %v781 = vadd.f32 0.0, %v780
        %v782 = vpop.f32.mrb[0].mxu0
        %v783 = vpop.f32.mrb[0].mxu0
        %v784 = vadd.f32 0.0, %v783
        %v785 = vpop.f32.mrb[0].mxu0
        %786 = vmatprep.mubr.bf16.mxu0 0
        %787 = vmatmul.mubr.bf16.gmra.mrb[0].mxu0 %v734
        %v788 = vpop.f32.mrb[0].mxu0
        %v789 = vadd.f32 0.0, %v788
        %v790 = vpop.f32.mrb[0].mxu0
        %v791 = vpop.f32.mrb[0].mxu0
        %v792 = vadd.f32 0.0, %v791
        %v793 = vpop.f32.mrb[0].mxu0
        %794 = vmatprep.mubr.bf16.mxu0 0
        %795 = vmatmul.mubr.bf16.gmra.mrb[0].mxu0 %v736
        %v796 = vpop.f32.mrb[0].mxu0
        %v797 = vadd.f32 0.0, %v796
        %v798 = vpop.f32.mrb[0].mxu0
        %v799 = vpop.f32.mrb[0].mxu0
        %v800 = vadd.f32 0.0, %v799
        %v801 = vpop.f32.mrb[0].mxu0
        %802 = vdwg.mxu0
        %v803 = vpack.c.bf16 %v773, %v773
        %v804 = vpack.c.bf16 %v776, %v776
        %v805 = vpack.c.bf16 %v781, %v781
        %v806 = vpack.c.bf16 %v784, %v784
        %v807 = vpack.c.bf16 %v789, %v789
        %v808 = vpack.c.bf16 %v792, %v792
        %v809 = vpack.c.bf16 %v797, %v797
        %v810 = vpack.c.bf16 %v800, %v800
        %s811 = scalar_lea.vmem [#allocation2], 12
        %812 = vst [vmem:[%s811 + $0x4] sm:$0xf] %v803
        %813 = vst [vmem:[%s811 + $0x10] sm:$0xf] %v804
        %814 = vst [vmem:[%s811 + $0x1c] sm:$0xf] %v805
        %815 = vst [vmem:[%s811 + $0x28] sm:$0xf] %v806
        %816 = vst [vmem:[%s811 + $0x34] sm:$0xf] %v807
        %817 = vst [vmem:[%s811 + $0x40] sm:$0xf] %v808
        %818 = vst [vmem:[%s811 + $0x4c] sm:$0xf] %v809
        %819 = vst [vmem:[%s811 + $0x58] sm:$0xf] %v810
        %v820 = vld [vmem:[#allocation2] sm:$0x8]
        %v821 = vld [vmem:[#allocation2 + $0x4] sm:$0xf]
        %v822 = vld [vmem:[#allocation2 + $0xc] sm:$0x8]
        %v823 = vld [vmem:[#allocation2 + $0x10] sm:$0xf]
        %v824 = vld [vmem:[#allocation2 + $0x18] sm:$0x8]
        %v825 = vld [vmem:[#allocation2 + $0x1c] sm:$0xf]
        %v826 = vld [vmem:[#allocation2 + $0x24] sm:$0x8]
        %v827 = vld [vmem:[#allocation2 + $0x28] sm:$0xf]
        %v828 = vld [vmem:[#allocation2 + $0x30] sm:$0x8]
        %v829 = vld [vmem:[#allocation2 + $0x34] sm:$0xf]
        %v830 = vld [vmem:[#allocation2 + $0x3c] sm:$0x8]
        %v831 = vld [vmem:[#allocation2 + $0x40] sm:$0xf]
        %v832 = vld [vmem:[#allocation2 + $0x48] sm:$0x8]
        %v833 = vld [vmem:[#allocation2 + $0x4c] sm:$0xf]
        %v834 = vld [vmem:[#allocation2 + $0x54] sm:$0x8]
        %v835 = vld [vmem:[#allocation2 + $0x58] sm:$0xf]
        %v836 = vld [vmem:[#allocation2 + $0x60] sm:$0x8]
        %v837 = vld [vmem:[#allocation2 + $0x64] sm:$0xf]
        %v838 = vld [vmem:[#allocation2 + $0x6c] sm:$0x8]
        %v839 = vld [vmem:[#allocation2 + $0x70] sm:$0xf]
        %v856 = vunpack.c.l.b16 %v820
        %v857 = vunpack.c.l.b16 %v821
        %v858 = vunpack.c.l.b16 %v822
        %v859 = vunpack.c.l.b16 %v823
        %v860 = vunpack.c.l.b16 %v824
        %v861 = vunpack.c.l.b16 %v825
        %v862 = vunpack.c.l.b16 %v826
        %v863 = vunpack.c.l.b16 %v827
        %v864 = vunpack.c.l.b16 %v828
        %v865 = vunpack.c.l.b16 %v829
        %v866 = vunpack.c.l.b16 %v830
        %v867 = vunpack.c.l.b16 %v831
        %v868 = vunpack.c.l.b16 %v832
        %v869 = vunpack.c.l.b16 %v833
        %v870 = vunpack.c.l.b16 %v834
        %v871 = vunpack.c.l.b16 %v835
        %v874 = vunpack.c.l.b16 %v836
        %v875 = vunpack.c.l.b16 %v837
        %v878 = vunpack.c.l.b16 %v838
        %v879 = vunpack.c.l.b16 %v839
        %v880 = vpack.c.b16 %v858, %v856
        %v881 = vpack.c.b16 %v860, %v860
        %v882 = vpack.c.b16 %v859, %v857
        %v883 = vpack.c.b16 %v861, %v861
        %v884 = vpack.c.b16 %v860, %v858
        %v885 = vpack.c.b16 %v862, %v862
        %v886 = vpack.c.b16 %v861, %v859
        %v887 = vpack.c.b16 %v863, %v863
        %v888 = vpack.c.b16 %v862, %v860
        %v889 = vpack.c.b16 %v864, %v864
        %v890 = vpack.c.b16 %v863, %v861
        %v891 = vpack.c.b16 %v865, %v865
        %v892 = vpack.c.b16 %v864, %v862
        %v893 = vpack.c.b16 %v866, %v866
        %v894 = vpack.c.b16 %v865, %v863
        %v895 = vpack.c.b16 %v867, %v867
        %v896 = vpack.c.b16 %v866, %v864
        %v897 = vpack.c.b16 %v868, %v868
        %v898 = vpack.c.b16 %v867, %v865
        %v899 = vpack.c.b16 %v869, %v869
        %v900 = vpack.c.b16 %v868, %v866
        %v901 = vpack.c.b16 %v870, %v870
        %v902 = vpack.c.b16 %v869, %v867
        %v903 = vpack.c.b16 %v871, %v871
        %v904 = vpack.c.b16 %v870, %v868
        %v905 = vpack.c.b16 %v874, %v874
        %v906 = vpack.c.b16 %v871, %v869
        %v907 = vpack.c.b16 %v875, %v875
        %v908 = vpack.c.b16 %v874, %v870
        %v909 = vpack.c.b16 %v878, %v878
        %v910 = vpack.c.b16 %v875, %v871
        %v911 = vpack.c.b16 %v879, %v879
        %vm912 = vsmask.f32 4368
        %vm913 = vmor %vm384, %vm912
        %v915 = vshrl.u32 %v880, 16
        %v917 = vrot.slane %v915, 7
        %v918 = vrot.slane %v917, 4
        %v920 = vshrl.u32 %v882, 16
        %v922 = vrot.slane %v920, 7
        %v923 = vshll.u32 %v882, 16
        %v925 = vor.u32 %v922, %v923
        %v926 = vsel %vm913, %v918, %v925
        %v928 = vshrl.u32 %v881, 16
        %v930 = vrot.slane %v928, 7
        %v931 = vrot.slane %v930, 4
        %v933 = vshrl.u32 %v883, 16
        %v935 = vrot.slane %v933, 7
        %v936 = vshll.u32 %v883, 16
        %v938 = vor.u32 %v935, %v936
        %v939 = vsel %vm913, %v931, %v938
        %v941 = vshrl.u32 %v884, 16
        %v943 = vrot.slane %v941, 7
        %v944 = vrot.slane %v943, 4
        %v946 = vshrl.u32 %v886, 16
        %v948 = vrot.slane %v946, 7
        %v949 = vshll.u32 %v886, 16
        %v951 = vor.u32 %v948, %v949
        %v952 = vsel %vm913, %v944, %v951
        %v954 = vshrl.u32 %v885, 16
        %v956 = vrot.slane %v954, 7
        %v957 = vrot.slane %v956, 4
        %v959 = vshrl.u32 %v887, 16
        %v961 = vrot.slane %v959, 7
        %v962 = vshll.u32 %v887, 16
        %v964 = vor.u32 %v961, %v962
        %v965 = vsel %vm913, %v957, %v964
        %v967 = vshrl.u32 %v888, 16
        %v969 = vrot.slane %v967, 7
        %v970 = vrot.slane %v969, 4
        %v972 = vshrl.u32 %v890, 16
        %v974 = vrot.slane %v972, 7
        %v975 = vshll.u32 %v890, 16
        %v977 = vor.u32 %v974, %v975
        %v978 = vsel %vm913, %v970, %v977
        %v980 = vshrl.u32 %v889, 16
        %v982 = vrot.slane %v980, 7
        %v983 = vrot.slane %v982, 4
        %v985 = vshrl.u32 %v891, 16
        %v987 = vrot.slane %v985, 7
        %v988 = vshll.u32 %v891, 16
        %v990 = vor.u32 %v987, %v988
        %v991 = vsel %vm913, %v983, %v990
        %v993 = vshrl.u32 %v892, 16
        %v995 = vrot.slane %v993, 7
        %v996 = vrot.slane %v995, 4
        %v998 = vshrl.u32 %v894, 16
        %v1000 = vrot.slane %v998, 7
        %v1001 = vshll.u32 %v894, 16
        %v1003 = vor.u32 %v1000, %v1001
        %v1004 = vsel %vm913, %v996, %v1003
        %v1006 = vshrl.u32 %v893, 16
        %v1008 = vrot.slane %v1006, 7
        %v1009 = vrot.slane %v1008, 4
        %v1011 = vshrl.u32 %v895, 16
        %v1013 = vrot.slane %v1011, 7
        %v1014 = vshll.u32 %v895, 16
        %v1016 = vor.u32 %v1013, %v1014
        %v1017 = vsel %vm913, %v1009, %v1016
        %v1019 = vshrl.u32 %v896, 16
        %v1021 = vrot.slane %v1019, 7
        %v1022 = vrot.slane %v1021, 4
        %v1024 = vshrl.u32 %v898, 16
        %v1026 = vrot.slane %v1024, 7
        %v1027 = vshll.u32 %v898, 16
        %v1029 = vor.u32 %v1026, %v1027
        %v1030 = vsel %vm913, %v1022, %v1029
        %v1032 = vshrl.u32 %v897, 16
        %v1034 = vrot.slane %v1032, 7
        %v1035 = vrot.slane %v1034, 4
        %v1037 = vshrl.u32 %v899, 16
        %v1039 = vrot.slane %v1037, 7
        %v1040 = vshll.u32 %v899, 16
        %v1042 = vor.u32 %v1039, %v1040
        %v1043 = vsel %vm913, %v1035, %v1042
        %v1045 = vshrl.u32 %v900, 16
        %v1047 = vrot.slane %v1045, 7
        %v1048 = vrot.slane %v1047, 4
        %v1050 = vshrl.u32 %v902, 16
        %v1052 = vrot.slane %v1050, 7
        %v1053 = vshll.u32 %v902, 16
        %v1055 = vor.u32 %v1052, %v1053
        %v1056 = vsel %vm913, %v1048, %v1055
        %v1058 = vshrl.u32 %v901, 16
        %v1060 = vrot.slane %v1058, 7
        %v1061 = vrot.slane %v1060, 4
        %v1063 = vshrl.u32 %v903, 16
        %v1065 = vrot.slane %v1063, 7
        %v1066 = vshll.u32 %v903, 16
        %v1068 = vor.u32 %v1065, %v1066
        %v1069 = vsel %vm913, %v1061, %v1068
        %v1071 = vshrl.u32 %v904, 16
        %v1073 = vrot.slane %v1071, 7
        %v1074 = vrot.slane %v1073, 4
        %v1076 = vshrl.u32 %v906, 16
        %v1078 = vrot.slane %v1076, 7
        %v1079 = vshll.u32 %v906, 16
        %v1081 = vor.u32 %v1078, %v1079
        %v1082 = vsel %vm913, %v1074, %v1081
        %v1084 = vshrl.u32 %v905, 16
        %v1086 = vrot.slane %v1084, 7
        %v1087 = vrot.slane %v1086, 4
        %v1089 = vshrl.u32 %v907, 16
        %v1091 = vrot.slane %v1089, 7
        %v1092 = vshll.u32 %v907, 16
        %v1094 = vor.u32 %v1091, %v1092
        %v1095 = vsel %vm913, %v1087, %v1094
        %v1097 = vshrl.u32 %v908, 16
        %v1099 = vrot.slane %v1097, 7
        %v1100 = vrot.slane %v1099, 4
        %v1102 = vshrl.u32 %v910, 16
        %v1104 = vrot.slane %v1102, 7
        %v1105 = vshll.u32 %v910, 16
        %v1107 = vor.u32 %v1104, %v1105
        %v1108 = vsel %vm913, %v1100, %v1107
        %v1110 = vshrl.u32 %v909, 16
        %v1112 = vrot.slane %v1110, 7
        %v1113 = vrot.slane %v1112, 4
        %v1115 = vshrl.u32 %v911, 16
        %v1117 = vrot.slane %v1115, 7
        %v1118 = vshll.u32 %v911, 16
        %v1120 = vor.u32 %v1117, %v1118
        %v1121 = vsel %vm913, %v1113, %v1120
        %v1122 = vld [vmem:[#allocation9] sm:$0xf]
        %v1123 = vld [vmem:[#allocation9 + $0x4] sm:$0xf]
        %v1124 = vld [vmem:[#allocation9 + $0x8] sm:$0xf]
        %v1125 = vld [vmem:[#allocation9 + $0xc] sm:$0xf]
        %v1126 = vld [vmem:[#allocation9 + $0x10] sm:$0xf]
        %v1127 = vld [vmem:[#allocation9 + $0x14] sm:$0xf]
        %v1128 = vld [vmem:[#allocation9 + $0x18] sm:$0xf]
        %v1129 = vld [vmem:[#allocation9 + $0x1c] sm:$0xf]
        %v1130 = vld [vmem:[#allocation9 + $0x20] sm:$0xf]
        %v1131 = vld [vmem:[#allocation9 + $0x24] sm:$0xf]
        %v1132 = vld [vmem:[#allocation9 + $0x28] sm:$0xf]
        %v1133 = vld [vmem:[#allocation9 + $0x2c] sm:$0xf]
        %v1134 = vld [vmem:[#allocation9 + $0x30] sm:$0xf]
        %v1135 = vld [vmem:[#allocation9 + $0x34] sm:$0xf]
        %v1136 = vld [vmem:[#allocation9 + $0x38] sm:$0xf]
        %v1137 = vld [vmem:[#allocation9 + $0x3c] sm:$0xf]
        %v1138 = vld [vmem:[#allocation9 + $0x40] sm:$0xf]
        %v1139 = vld [vmem:[#allocation9 + $0x44] sm:$0xf]
        %v1140 = vld [vmem:[#allocation9 + $0x48] sm:$0xf]
        %v1141 = vld [vmem:[#allocation9 + $0x4c] sm:$0xf]
        %v1142 = vld [vmem:[#allocation9 + $0x50] sm:$0xf]
        %v1143 = vld [vmem:[#allocation9 + $0x54] sm:$0xf]
        %v1144 = vld [vmem:[#allocation9 + $0x58] sm:$0xf]
        %v1145 = vld [vmem:[#allocation9 + $0x5c] sm:$0xf]
        %v1146 = vld [vmem:[#allocation9 + $0x60] sm:$0xf]
        %v1147 = vld [vmem:[#allocation9 + $0x64] sm:$0xf]
        %v1148 = vld [vmem:[#allocation9 + $0x68] sm:$0xf]
        %v1149 = vld [vmem:[#allocation9 + $0x6c] sm:$0xf]
        %v1150 = vld [vmem:[#allocation9 + $0x70] sm:$0xf]
        %v1151 = vld [vmem:[#allocation9 + $0x74] sm:$0xf]
        %v1152 = vld [vmem:[#allocation9 + $0x78] sm:$0xf]
        %v1153 = vld [vmem:[#allocation9 + $0x7c] sm:$0xf]
        %v1154 = vld [vmem:[#allocation9 + $0x80] sm:$0xf]
        %v1155 = vld [vmem:[#allocation9 + $0x84] sm:$0xf]
        %v1156 = vld [vmem:[#allocation9 + $0x88] sm:$0xf]
        %v1157 = vld [vmem:[#allocation9 + $0x8c] sm:$0xf]
        %v1158 = vld [vmem:[#allocation9 + $0x90] sm:$0xf]
        %v1159 = vld [vmem:[#allocation9 + $0x94] sm:$0xf]
        %v1160 = vld [vmem:[#allocation9 + $0x98] sm:$0xf]
        %v1161 = vld [vmem:[#allocation9 + $0x9c] sm:$0xf]
        %v1162 = vld [vmem:[#allocation9 + $0xa0] sm:$0xf]
        %v1163 = vld [vmem:[#allocation9 + $0xa4] sm:$0xf]
        %v1164 = vld [vmem:[#allocation9 + $0xa8] sm:$0xf]
        %v1165 = vld [vmem:[#allocation9 + $0xac] sm:$0xf]
        %v1166 = vld [vmem:[#allocation9 + $0xb0] sm:$0xf]
        %v1167 = vld [vmem:[#allocation9 + $0xb4] sm:$0xf]
        %v1168 = vld [vmem:[#allocation9 + $0xb8] sm:$0xf]
        %v1169 = vld [vmem:[#allocation9 + $0xbc] sm:$0xf]
        %s1170 = scalar_lea.vmem [#allocation9], 192
        %v1171 = vld [vmem:[%s1170] sm:$0xf]
        %v1172 = vld [vmem:[%s1170 + $0x4] sm:$0xf]
        %v1173 = vld [vmem:[%s1170 + $0x8] sm:$0xf]
        %v1174 = vld [vmem:[%s1170 + $0xc] sm:$0xf]
        %v1175 = vld [vmem:[%s1170 + $0x10] sm:$0xf]
        %v1176 = vld [vmem:[%s1170 + $0x14] sm:$0xf]
        %v1177 = vld [vmem:[%s1170 + $0x18] sm:$0xf]
        %v1178 = vld [vmem:[%s1170 + $0x1c] sm:$0xf]
        %v1179 = vld [vmem:[%s1170 + $0x20] sm:$0xf]
        %v1180 = vld [vmem:[%s1170 + $0x24] sm:$0xf]
        %v1181 = vld [vmem:[%s1170 + $0x28] sm:$0xf]
        %v1182 = vld [vmem:[%s1170 + $0x2c] sm:$0xf]
        %v1183 = vld [vmem:[%s1170 + $0x30] sm:$0xf]
        %v1184 = vld [vmem:[%s1170 + $0x34] sm:$0xf]
        %v1185 = vld [vmem:[%s1170 + $0x38] sm:$0xf]
        %v1186 = vld [vmem:[%s1170 + $0x3c] sm:$0xf]
        %v1187 = vld [vmem:[%s1170 + $0x40] sm:$0xf]
        %v1188 = vld [vmem:[%s1170 + $0x44] sm:$0xf]
        %v1189 = vld [vmem:[%s1170 + $0x48] sm:$0xf]
        %v1190 = vld [vmem:[%s1170 + $0x4c] sm:$0xf]
        %v1191 = vld [vmem:[%s1170 + $0x50] sm:$0xf]
        %v1192 = vld [vmem:[%s1170 + $0x54] sm:$0xf]
        %v1193 = vld [vmem:[%s1170 + $0x58] sm:$0xf]
        %v1194 = vld [vmem:[%s1170 + $0x5c] sm:$0xf]
        %v1195 = vld [vmem:[%s1170 + $0x60] sm:$0xf]
        %v1196 = vld [vmem:[%s1170 + $0x64] sm:$0xf]
        %v1197 = vld [vmem:[%s1170 + $0x68] sm:$0xf]
        %v1198 = vld [vmem:[%s1170 + $0x6c] sm:$0xf]
        %v1199 = vld [vmem:[%s1170 + $0x70] sm:$0xf]
        %v1200 = vld [vmem:[%s1170 + $0x74] sm:$0xf]
        %v1201 = vld [vmem:[%s1170 + $0x78] sm:$0xf]
        %v1202 = vld [vmem:[%s1170 + $0x7c] sm:$0xf]
        %v1203 = vld [vmem:[%s1170 + $0x80] sm:$0xf]
        %v1204 = vld [vmem:[%s1170 + $0x84] sm:$0xf]
        %v1205 = vld [vmem:[%s1170 + $0x88] sm:$0xf]
        %v1206 = vld [vmem:[%s1170 + $0x8c] sm:$0xf]
        %v1207 = vld [vmem:[%s1170 + $0x90] sm:$0xf]
        %v1208 = vld [vmem:[%s1170 + $0x94] sm:$0xf]
        %v1209 = vld [vmem:[%s1170 + $0x98] sm:$0xf]
        %v1210 = vld [vmem:[%s1170 + $0x9c] sm:$0xf]
        %v1211 = vld [vmem:[%s1170 + $0xa0] sm:$0xf]
        %v1212 = vld [vmem:[%s1170 + $0xa4] sm:$0xf]
        %v1213 = vld [vmem:[%s1170 + $0xa8] sm:$0xf]
        %v1214 = vld [vmem:[%s1170 + $0xac] sm:$0xf]
        %v1215 = vld [vmem:[%s1170 + $0xb0] sm:$0xf]
        %v1216 = vld [vmem:[%s1170 + $0xb4] sm:$0xf]
        %v1217 = vld [vmem:[%s1170 + $0xb8] sm:$0xf]
        %v1218 = vld [vmem:[%s1170 + $0xbc] sm:$0xf]
        %v1219 = vpack.c.b16 %v879, %v875
        %v1277 = vunpack.c.l.b16 %v1171
        %v1278 = vunpack.c.l.b16 %v1172
        %v1279 = vunpack.c.l.b16 %v1173
        %v1280 = vunpack.c.l.b16 %v1174
        %v1281 = vunpack.c.l.b16 %v1175
        %v1282 = vunpack.c.l.b16 %v1176
        %v1283 = vunpack.c.l.b16 %v1177
        %v1284 = vunpack.c.l.b16 %v1178
        %v1285 = vunpack.c.l.b16 %v1179
        %v1286 = vunpack.c.l.b16 %v1180
        %v1287 = vunpack.c.l.b16 %v1181
        %v1288 = vunpack.c.l.b16 %v1182
        %v1289 = vunpack.c.l.b16 %v1183
        %v1290 = vunpack.c.l.b16 %v1184
        %v1291 = vunpack.c.l.b16 %v1185
        %v1292 = vunpack.c.l.b16 %v1186
        %v1293 = vunpack.c.l.b16 %v1187
        %v1294 = vunpack.c.l.b16 %v1188
        %v1295 = vunpack.c.l.b16 %v1189
        %v1296 = vunpack.c.l.b16 %v1190
        %v1297 = vunpack.c.l.b16 %v1191
        %v1298 = vunpack.c.l.b16 %v1192
        %v1299 = vunpack.c.l.b16 %v1193
        %v1300 = vunpack.c.l.b16 %v1194
        %v1301 = vunpack.c.l.b16 %v1195
        %v1302 = vunpack.c.l.b16 %v1196
        %v1303 = vunpack.c.l.b16 %v1197
        %v1304 = vunpack.c.l.b16 %v1198
        %v1305 = vunpack.c.l.b16 %v1199
        %v1306 = vunpack.c.l.b16 %v1200
        %v1307 = vunpack.c.l.b16 %v1201
        %v1308 = vunpack.c.l.b16 %v1202
        %v1309 = vunpack.c.l.b16 %v1203
        %v1310 = vunpack.c.l.b16 %v1204
        %v1311 = vunpack.c.l.b16 %v1205
        %v1312 = vunpack.c.l.b16 %v1206
        %v1313 = vunpack.c.l.b16 %v1207
        %v1314 = vunpack.c.l.b16 %v1208
        %v1315 = vunpack.c.l.b16 %v1209
        %v1316 = vunpack.c.l.b16 %v1210
        %v1317 = vunpack.c.l.b16 %v1211
        %v1318 = vunpack.c.l.b16 %v1212
        %v1319 = vunpack.c.l.b16 %v1213
        %v1320 = vunpack.c.l.b16 %v1214
        %v1321 = vunpack.c.l.b16 %v1215
        %v1322 = vunpack.c.l.b16 %v1216
        %v1323 = vunpack.c.l.b16 %v1217
        %v1324 = vunpack.c.l.b16 %v1218
        %v1325 = vpack.c.b16 %v1278, %v1277
        %v1326 = vpack.c.b16 %v1280, %v1279
        %v1327 = vpack.c.b16 %v1282, %v1281
        %v1328 = vpack.c.b16 %v1284, %v1283
        %v1329 = vpack.c.b16 %v1286, %v1285
        %v1330 = vpack.c.b16 %v1288, %v1287
        %v1331 = vpack.c.b16 %v1290, %v1289
        %v1332 = vpack.c.b16 %v1292, %v1291
        %v1333 = vpack.c.b16 %v1294, %v1293
        %v1334 = vpack.c.b16 %v1296, %v1295
        %v1335 = vpack.c.b16 %v1298, %v1297
        %v1336 = vpack.c.b16 %v1300, %v1299
        %v1337 = vpack.c.b16 %v1302, %v1301
        %v1338 = vpack.c.b16 %v1304, %v1303
        %v1339 = vpack.c.b16 %v1306, %v1305
        %v1340 = vpack.c.b16 %v1308, %v1307
        %v1341 = vpack.c.b16 %v1310, %v1309
        %v1342 = vpack.c.b16 %v1312, %v1311
        %v1343 = vpack.c.b16 %v1314, %v1313
        %v1344 = vpack.c.b16 %v1316, %v1315
        %v1345 = vpack.c.b16 %v1318, %v1317
        %v1346 = vpack.c.b16 %v1320, %v1319
        %v1347 = vpack.c.b16 %v1322, %v1321
        %v1348 = vpack.c.b16 %v1324, %v1323
        %1373 = vmatprep.subr.bf16.mxu0 0
        %1374 = vmatpush1.bf16.msra.mxu0 %v1325
        %1375 = vmatprep.subr.bf16.mxu0 0
        %1376 = vmatpush1.bf16.msra.mxu0 %v1326
        %1377 = vmatprep.subr.bf16.mxu0 0
        %1378 = vmatpush1.bf16.msra.mxu0 %v1327
        %1379 = vmatprep.subr.bf16.mxu0 0
        %1380 = vmatpush1.bf16.msra.mxu0 %v1328
        %1381 = vmatprep.subr.bf16.mxu0 0
        %1382 = vmatpush1.bf16.msra.mxu0 %v1329
        %1383 = vmatprep.subr.bf16.mxu0 0
        %1384 = vmatpush1.bf16.msra.mxu0 %v1330
        %1385 = vmatprep.subr.bf16.mxu0 0
        %1386 = vmatpush1.bf16.msra.mxu0 %v1331
        %1387 = vmatprep.subr.bf16.mxu0 0
        %1388 = vmatpush1.bf16.msra.mxu0 %v1332
        %1389 = vmatprep.subr.bf16.mxu0 0
        %1390 = vmatpush1.bf16.msra.mxu0 %v1333
        %1391 = vmatprep.subr.bf16.mxu0 0
        %1392 = vmatpush1.bf16.msra.mxu0 %v1334
        %1393 = vmatprep.subr.bf16.mxu0 0
        %1394 = vmatpush1.bf16.msra.mxu0 %v1335
        %1395 = vmatprep.subr.bf16.mxu0 0
        %1396 = vmatpush1.bf16.msra.mxu0 %v1336
        %1397 = vmatprep.subr.bf16.mxu0 0
        %1398 = vmatpush1.bf16.msra.mxu0 %v1337
        %1399 = vmatprep.subr.bf16.mxu0 0
        %1400 = vmatpush1.bf16.msra.mxu0 %v1338
        %1401 = vmatprep.subr.bf16.mxu0 0
        %1402 = vmatpush1.bf16.msra.mxu0 %v1339
        %1403 = vmatprep.subr.bf16.mxu0 0
        %1404 = vmatpush1.bf16.msra.mxu0 %v1340
        %1405 = vmatprep.mubr.bf16.mxu0 %v886
        %1406 = vmatmul.mubr.bf16.gmra.mrb[0].mxu0 %v882
        %v1407 = vpop.f32.mrb[0].mxu0
        %v1408 = vadd.f32 0.0, %v1407
        %v1409 = vpop.f32.mrb[0].mxu0
        %v1410 = vpop.f32.mrb[0].mxu0
        %v1411 = vadd.f32 0.0, %v1410
        %v1412 = vpop.f32.mrb[0].mxu0
        %1413 = vmatprep.mubr.bf16.mxu0 %v894
        %1414 = vmatmul.mubr.bf16.gmra.mrb[0].mxu0 %v890
        %v1415 = vpop.f32.mrb[0].mxu0
        %v1416 = vadd.f32 0.0, %v1415
        %v1417 = vpop.f32.mrb[0].mxu0
        %v1418 = vpop.f32.mrb[0].mxu0
        %v1419 = vadd.f32 0.0, %v1418
        %v1420 = vpop.f32.mrb[0].mxu0
        %1421 = vmatprep.mubr.bf16.mxu0 %v902
        %1422 = vmatmul.mubr.bf16.gmra.mrb[0].mxu0 %v898
        %v1423 = vpop.f32.mrb[0].mxu0
        %v1424 = vadd.f32 0.0, %v1423
        %v1425 = vpop.f32.mrb[0].mxu0
        %v1426 = vpop.f32.mrb[0].mxu0
        %v1427 = vadd.f32 0.0, %v1426
        %v1428 = vpop.f32.mrb[0].mxu0
        %1429 = vmatprep.mubr.bf16.mxu0 %v910
        %1430 = vmatmul.mubr.bf16.gmra.mrb[0].mxu0 %v906
        %v1431 = vpop.f32.mrb[0].mxu0
        %v1432 = vadd.f32 0.0, %v1431
        %v1433 = vpop.f32.mrb[0].mxu0
        %v1434 = vpop.f32.mrb[0].mxu0
        %v1435 = vadd.f32 0.0, %v1434
        %v1436 = vpop.f32.mrb[0].mxu0
        %1437 = vdwg.mxu0
        %1438 = vmatprep.subr.bf16.mxu0 0
        %1439 = vmatpush1.bf16.msra.mxu0 %v1341
        %1440 = vmatprep.subr.bf16.mxu0 0
        %1441 = vmatpush1.bf16.msra.mxu0 %v1342
        %1442 = vmatprep.subr.bf16.mxu0 0
        %1443 = vmatpush1.bf16.msra.mxu0 %v1343
        %1444 = vmatprep.subr.bf16.mxu0 0
        %1445 = vmatpush1.bf16.msra.mxu0 %v1344
        %1446 = vmatprep.subr.bf16.mxu0 0
        %1447 = vmatpush1.bf16.msra.mxu0 %v1345
        %1448 = vmatprep.subr.bf16.mxu0 0
        %1449 = vmatpush1.bf16.msra.mxu0 %v1346
        %1450 = vmatprep.subr.bf16.mxu0 0
        %1451 = vmatpush1.bf16.msra.mxu0 %v1347
        %1452 = vmatprep.subr.bf16.mxu0 0
        %1453 = vmatpush1.bf16.msra.mxu0 %v1348
        %1454 = vmatprep.subr.bf16.mxu0 0
        %1455 = vmatpush1.bf16.msra.mxu0 0
        %1456 = vmatprep.subr.bf16.mxu0 0
        %1457 = vmatpush1.bf16.msra.mxu0 0
        %1458 = vmatprep.subr.bf16.mxu0 0
        %1459 = vmatpush1.bf16.msra.mxu0 0
        %1460 = vmatprep.subr.bf16.mxu0 0
        %1461 = vmatpush1.bf16.msra.mxu0 0
        %1462 = vmatprep.subr.bf16.mxu0 0
        %1463 = vmatpush1.bf16.msra.mxu0 0
        %1464 = vmatprep.subr.bf16.mxu0 0
        %1465 = vmatpush1.bf16.msra.mxu0 0
        %1466 = vmatprep.subr.bf16.mxu0 0
        %1467 = vmatpush1.bf16.msra.mxu0 0
        %1468 = vmatprep.subr.bf16.mxu0 0
        %1469 = vmatpush1.bf16.msra.mxu0 0
        %1470 = vmatprep.mubr.bf16.mxu0 0
        %1471 = vmatmul.mubr.bf16.gmra.mrb[0].mxu0 %v890
        %v1472 = vpop.f32.mrb[0].mxu0
        %v1473 = vadd.f32 %v1408, %v1472
        %v1474 = vpop.f32.mrb[0].mxu0
        %v1475 = vpop.f32.mrb[0].mxu0
        %v1476 = vadd.f32 %v1411, %v1475
        %v1477 = vpop.f32.mrb[0].mxu0
        %1478 = vmatprep.mubr.bf16.mxu0 0
        %1479 = vmatmul.mubr.bf16.gmra.mrb[0].mxu0 %v898
        %v1480 = vpop.f32.mrb[0].mxu0
        %v1481 = vadd.f32 %v1416, %v1480
        %v1482 = vpop.f32.mrb[0].mxu0
        %v1483 = vpop.f32.mrb[0].mxu0
        %v1484 = vadd.f32 %v1419, %v1483
        %v1485 = vpop.f32.mrb[0].mxu0
        %1486 = vmatprep.mubr.bf16.mxu0 0
        %1487 = vmatmul.mubr.bf16.gmra.mrb[0].mxu0 %v906
        %v1488 = vpop.f32.mrb[0].mxu0
        %v1489 = vadd.f32 %v1424, %v1488
        %v1490 = vpop.f32.mrb[0].mxu0
        %v1491 = vpop.f32.mrb[0].mxu0
        %v1492 = vadd.f32 %v1427, %v1491
        %v1493 = vpop.f32.mrb[0].mxu0
        %1494 = vmatprep.mubr.bf16.mxu0 0
        %1495 = vmatmul.mubr.bf16.gmra.mrb[0].mxu0 %v1219
        %v1496 = vpop.f32.mrb[0].mxu0
        %v1497 = vadd.f32 %v1432, %v1496
        %v1498 = vpop.f32.mrb[0].mxu0
        %v1499 = vpop.f32.mrb[0].mxu0
        %v1500 = vadd.f32 %v1435, %v1499
        %v1501 = vpop.f32.mrb[0].mxu0
        %1502 = vdwg.mxu0
        %v1503 = vunpack.c.l.b16 %v926
        %v1504 = vunpack.c.h.b16 %v926
        %v1505 = vunpack.c.l.b16 %v939
        %v1506 = vunpack.c.l.b16 %v952
        %v1507 = vunpack.c.h.b16 %v952
        %v1508 = vunpack.c.l.b16 %v965
        %v1509 = vunpack.c.l.b16 %v978
        %v1510 = vunpack.c.h.b16 %v978
        %v1511 = vunpack.c.l.b16 %v991
        %v1512 = vunpack.c.l.b16 %v1004
        %v1513 = vunpack.c.h.b16 %v1004
        %v1514 = vunpack.c.l.b16 %v1017
        %v1515 = vunpack.c.l.b16 %v1030
        %v1516 = vunpack.c.h.b16 %v1030
        %v1517 = vunpack.c.l.b16 %v1043
        %v1518 = vunpack.c.l.b16 %v1056
        %v1519 = vunpack.c.h.b16 %v1056
        %v1520 = vunpack.c.l.b16 %v1069
        %v1521 = vunpack.c.l.b16 %v1082
        %v1522 = vunpack.c.h.b16 %v1082
        %v1523 = vunpack.c.l.b16 %v1095
        %v1524 = vunpack.c.l.b16 %v1108
        %v1525 = vunpack.c.h.b16 %v1108
        %v1526 = vunpack.c.l.b16 %v1121
        %v1527 = vpack.c.b16 %v1506, %v1503
        %v1528 = vpack.c.b16 %v1507, %v1504
        %v1529 = vpack.c.b16 %v1508, %v1505
        %v1530 = vpack.c.b16 %v1512, %v1509
        %v1531 = vpack.c.b16 %v1513, %v1510
        %v1532 = vpack.c.b16 %v1514, %v1511
        %v1533 = vpack.c.b16 %v1518, %v1515
        %v1534 = vpack.c.b16 %v1519, %v1516
        %v1535 = vpack.c.b16 %v1520, %v1517
        %v1536 = vpack.c.b16 %v1524, %v1521
        %v1537 = vpack.c.b16 %v1525, %v1522
        %v1538 = vpack.c.b16 %v1526, %v1523
        %v1599 = vunpack.c.l.b16 %v1122
        %v1600 = vunpack.c.l.b16 %v1123
        %v1601 = vunpack.c.l.b16 %v1124
        %v1602 = vunpack.c.l.b16 %v1125
        %v1603 = vunpack.c.l.b16 %v1126
        %v1604 = vunpack.c.l.b16 %v1127
        %v1605 = vunpack.c.l.b16 %v1128
        %v1606 = vunpack.c.l.b16 %v1129
        %v1607 = vunpack.c.l.b16 %v1130
        %v1608 = vunpack.c.l.b16 %v1131
        %v1609 = vunpack.c.l.b16 %v1132
        %v1610 = vunpack.c.l.b16 %v1133
        %v1611 = vunpack.c.l.b16 %v1134
        %v1612 = vunpack.c.l.b16 %v1135
        %v1613 = vunpack.c.l.b16 %v1136
        %v1614 = vunpack.c.l.b16 %v1137
        %v1615 = vunpack.c.l.b16 %v1138
        %v1616 = vunpack.c.l.b16 %v1139
        %v1617 = vunpack.c.l.b16 %v1140
        %v1618 = vunpack.c.l.b16 %v1141
        %v1619 = vunpack.c.l.b16 %v1142
        %v1620 = vunpack.c.l.b16 %v1143
        %v1621 = vunpack.c.l.b16 %v1144
        %v1622 = vunpack.c.l.b16 %v1145
        %v1623 = vunpack.c.l.b16 %v1146
        %v1624 = vunpack.c.l.b16 %v1147
        %v1625 = vunpack.c.l.b16 %v1148
        %v1626 = vunpack.c.l.b16 %v1149
        %v1627 = vunpack.c.l.b16 %v1150
        %v1628 = vunpack.c.l.b16 %v1151
        %v1629 = vunpack.c.l.b16 %v1152
        %v1630 = vunpack.c.l.b16 %v1153
        %v1631 = vunpack.c.l.b16 %v1154
        %v1632 = vunpack.c.l.b16 %v1155
        %v1633 = vunpack.c.l.b16 %v1156
        %v1634 = vunpack.c.l.b16 %v1157
        %v1635 = vunpack.c.l.b16 %v1158
        %v1636 = vunpack.c.l.b16 %v1159
        %v1637 = vunpack.c.l.b16 %v1160
        %v1638 = vunpack.c.l.b16 %v1161
        %v1639 = vunpack.c.l.b16 %v1162
        %v1640 = vunpack.c.l.b16 %v1163
        %v1641 = vunpack.c.l.b16 %v1164
        %v1642 = vunpack.c.l.b16 %v1165
        %v1643 = vunpack.c.l.b16 %v1166
        %v1644 = vunpack.c.l.b16 %v1167
        %v1645 = vunpack.c.l.b16 %v1168
        %v1646 = vunpack.c.l.b16 %v1169
        %v1647 = vpack.c.b16 %v1600, %v1599
        %v1648 = vpack.c.b16 %v1602, %v1601
        %v1649 = vpack.c.b16 %v1604, %v1603
        %v1650 = vpack.c.b16 %v1606, %v1605
        %v1651 = vpack.c.b16 %v1608, %v1607
        %v1652 = vpack.c.b16 %v1610, %v1609
        %v1653 = vpack.c.b16 %v1612, %v1611
        %v1654 = vpack.c.b16 %v1614, %v1613
        %v1655 = vpack.c.b16 %v1616, %v1615
        %v1656 = vpack.c.b16 %v1618, %v1617
        %v1657 = vpack.c.b16 %v1620, %v1619
        %v1658 = vpack.c.b16 %v1622, %v1621
        %v1659 = vpack.c.b16 %v1624, %v1623
        %v1660 = vpack.c.b16 %v1626, %v1625
        %v1661 = vpack.c.b16 %v1628, %v1627
        %v1662 = vpack.c.b16 %v1630, %v1629
        %v1663 = vpack.c.b16 %v1632, %v1631
        %v1664 = vpack.c.b16 %v1634, %v1633
        %v1665 = vpack.c.b16 %v1636, %v1635
        %v1666 = vpack.c.b16 %v1638, %v1637
        %v1667 = vpack.c.b16 %v1640, %v1639
        %v1668 = vpack.c.b16 %v1642, %v1641
        %v1669 = vpack.c.b16 %v1644, %v1643
        %v1670 = vpack.c.b16 %v1646, %v1645
        %1695 = vmatprep.subr.bf16.mxu0 0
        %1696 = vmatpush1.bf16.msra.mxu0 %v1647
        %1697 = vmatprep.subr.bf16.mxu0 0
        %1698 = vmatpush1.bf16.msra.mxu0 %v1648
        %1699 = vmatprep.subr.bf16.mxu0 0
        %1700 = vmatpush1.bf16.msra.mxu0 %v1649
        %1701 = vmatprep.subr.bf16.mxu0 0
        %1702 = vmatpush1.bf16.msra.mxu0 %v1650
        %1703 = vmatprep.subr.bf16.mxu0 0
        %1704 = vmatpush1.bf16.msra.mxu0 %v1651
        %1705 = vmatprep.subr.bf16.mxu0 0
        %1706 = vmatpush1.bf16.msra.mxu0 %v1652
        %1707 = vmatprep.subr.bf16.mxu0 0
        %1708 = vmatpush1.bf16.msra.mxu0 %v1653
        %1709 = vmatprep.subr.bf16.mxu0 0
        %1710 = vmatpush1.bf16.msra.mxu0 %v1654
        %1711 = vmatprep.subr.bf16.mxu0 0
        %1712 = vmatpush1.bf16.msra.mxu0 %v1655
        %1713 = vmatprep.subr.bf16.mxu0 0
        %1714 = vmatpush1.bf16.msra.mxu0 %v1656
        %1715 = vmatprep.subr.bf16.mxu0 0
        %1716 = vmatpush1.bf16.msra.mxu0 %v1657
        %1717 = vmatprep.subr.bf16.mxu0 0
        %1718 = vmatpush1.bf16.msra.mxu0 %v1658
        %1719 = vmatprep.subr.bf16.mxu0 0
        %1720 = vmatpush1.bf16.msra.mxu0 %v1659
        %1721 = vmatprep.subr.bf16.mxu0 0
        %1722 = vmatpush1.bf16.msra.mxu0 %v1660
        %1723 = vmatprep.subr.bf16.mxu0 0
        %1724 = vmatpush1.bf16.msra.mxu0 %v1661
        %1725 = vmatprep.subr.bf16.mxu0 0
        %1726 = vmatpush1.bf16.msra.mxu0 %v1662
        %1727 = vmatprep.mubr.bf16.mxu0 %v1528
        %1728 = vmatmul.mubr.bf16.gmra.mrb[0].mxu0 %v1527
        %v1729 = vpop.f32.mrb[0].mxu0
        %v1730 = vadd.f32 %v1473, %v1729
        %v1731 = vpop.f32.mrb[0].mxu0
        %v1732 = vpop.f32.mrb[0].mxu0
        %v1733 = vadd.f32 %v1476, %v1732
        %v1734 = vpop.f32.mrb[0].mxu0
        %1735 = vmatprep.mubr.bf16.mxu0 %v1531
        %1736 = vmatmul.mubr.bf16.gmra.mrb[0].mxu0 %v1530
        %v1737 = vpop.f32.mrb[0].mxu0
        %v1738 = vadd.f32 %v1481, %v1737
        %v1739 = vpop.f32.mrb[0].mxu0
        %v1740 = vpop.f32.mrb[0].mxu0
        %v1741 = vadd.f32 %v1484, %v1740
        %v1742 = vpop.f32.mrb[0].mxu0
        %1743 = vmatprep.mubr.bf16.mxu0 %v1534
        %1744 = vmatmul.mubr.bf16.gmra.mrb[0].mxu0 %v1533
        %v1745 = vpop.f32.mrb[0].mxu0
        %v1746 = vadd.f32 %v1489, %v1745
        %v1747 = vpop.f32.mrb[0].mxu0
        %v1748 = vpop.f32.mrb[0].mxu0
        %v1749 = vadd.f32 %v1492, %v1748
        %v1750 = vpop.f32.mrb[0].mxu0
        %1751 = vmatprep.mubr.bf16.mxu0 %v1537
        %1752 = vmatmul.mubr.bf16.gmra.mrb[0].mxu0 %v1536
        %v1753 = vpop.f32.mrb[0].mxu0
        %v1754 = vadd.f32 %v1497, %v1753
        %v1755 = vpop.f32.mrb[0].mxu0
        %v1756 = vpop.f32.mrb[0].mxu0
        %v1757 = vadd.f32 %v1500, %v1756
        %v1758 = vpop.f32.mrb[0].mxu0
        %1759 = vdwg.mxu0
        %1760 = vmatprep.subr.bf16.mxu0 0
        %1761 = vmatpush1.bf16.msra.mxu0 %v1663
        %1762 = vmatprep.subr.bf16.mxu0 0
        %1763 = vmatpush1.bf16.msra.mxu0 %v1664
        %1764 = vmatprep.subr.bf16.mxu0 0
        %1765 = vmatpush1.bf16.msra.mxu0 %v1665
        %1766 = vmatprep.subr.bf16.mxu0 0
        %1767 = vmatpush1.bf16.msra.mxu0 %v1666
        %1768 = vmatprep.subr.bf16.mxu0 0
        %1769 = vmatpush1.bf16.msra.mxu0 %v1667
        %1770 = vmatprep.subr.bf16.mxu0 0
        %1771 = vmatpush1.bf16.msra.mxu0 %v1668
        %1772 = vmatprep.subr.bf16.mxu0 0
        %1773 = vmatpush1.bf16.msra.mxu0 %v1669
        %1774 = vmatprep.subr.bf16.mxu0 0
        %1775 = vmatpush1.bf16.msra.mxu0 %v1670
        %1776 = vmatprep.subr.bf16.mxu0 0
        %1777 = vmatpush1.bf16.msra.mxu0 0
        %1778 = vmatprep.subr.bf16.mxu0 0
        %1779 = vmatpush1.bf16.msra.mxu0 0
        %1780 = vmatprep.subr.bf16.mxu0 0
        %1781 = vmatpush1.bf16.msra.mxu0 0
        %1782 = vmatprep.subr.bf16.mxu0 0
        %1783 = vmatpush1.bf16.msra.mxu0 0
        %1784 = vmatprep.subr.bf16.mxu0 0
        %1785 = vmatpush1.bf16.msra.mxu0 0
        %1786 = vmatprep.subr.bf16.mxu0 0
        %1787 = vmatpush1.bf16.msra.mxu0 0
        %1788 = vmatprep.subr.bf16.mxu0 0
        %1789 = vmatpush1.bf16.msra.mxu0 0
        %1790 = vmatprep.subr.bf16.mxu0 0
        %1791 = vmatpush1.bf16.msra.mxu0 0
        %1792 = vmatprep.mubr.bf16.mxu0 0
        %1793 = vmatmul.mubr.bf16.gmra.mrb[0].mxu0 %v1529
        %v1794 = vpop.f32.mrb[0].mxu0
        %v1795 = vadd.f32 %v1730, %v1794
        %v1796 = vpop.f32.mrb[0].mxu0
        %v1797 = vpop.f32.mrb[0].mxu0
        %v1798 = vadd.f32 %v1733, %v1797
        %v1799 = vpop.f32.mrb[0].mxu0
        %1800 = vmatprep.mubr.bf16.mxu0 0
        %1801 = vmatmul.mubr.bf16.gmra.mrb[0].mxu0 %v1532
        %v1802 = vpop.f32.mrb[0].mxu0
        %v1803 = vadd.f32 %v1738, %v1802
        %v1804 = vpop.f32.mrb[0].mxu0
        %v1805 = vpop.f32.mrb[0].mxu0
        %v1806 = vadd.f32 %v1741, %v1805
        %v1807 = vpop.f32.mrb[0].mxu0
        %1808 = vmatprep.mubr.bf16.mxu0 0
        %1809 = vmatmul.mubr.bf16.gmra.mrb[0].mxu0 %v1535
        %v1810 = vpop.f32.mrb[0].mxu0
        %v1811 = vadd.f32 %v1746, %v1810
        %v1812 = vpop.f32.mrb[0].mxu0
        %v1813 = vpop.f32.mrb[0].mxu0
        %v1814 = vadd.f32 %v1749, %v1813
        %v1815 = vpop.f32.mrb[0].mxu0
        %1816 = vmatprep.mubr.bf16.mxu0 0
        %1817 = vmatmul.mubr.bf16.gmra.mrb[0].mxu0 %v1538
        %v1818 = vpop.f32.mrb[0].mxu0
        %v1819 = vadd.f32 %v1754, %v1818
        %v1820 = vpop.f32.mrb[0].mxu0
        %v1821 = vpop.f32.mrb[0].mxu0
        %v1822 = vadd.f32 %v1757, %v1821
        %v1823 = vpop.f32.mrb[0].mxu0
        %1824 = vdwg.mxu0
        %v1825 = vld [vmem:[#allocation2 + $0x4] sm:$0xf]
        %v1826 = vld [vmem:[#allocation2 + $0x8] sm:$0x1]
        %v1827 = vld [vmem:[#allocation2 + $0x10] sm:$0xf]
        %v1828 = vld [vmem:[#allocation2 + $0x14] sm:$0x1]
        %v1829 = vld [vmem:[#allocation2 + $0x1c] sm:$0xf]
        %v1830 = vld [vmem:[#allocation2 + $0x20] sm:$0x1]
        %v1831 = vld [vmem:[#allocation2 + $0x28] sm:$0xf]
        %v1832 = vld [vmem:[#allocation2 + $0x2c] sm:$0x1]
        %v1833 = vld [vmem:[#allocation2 + $0x34] sm:$0xf]
        %v1834 = vld [vmem:[#allocation2 + $0x38] sm:$0x1]
        %v1835 = vld [vmem:[#allocation2 + $0x40] sm:$0xf]
        %v1836 = vld [vmem:[#allocation2 + $0x44] sm:$0x1]
        %v1837 = vld [vmem:[#allocation2 + $0x4c] sm:$0xf]
        %v1838 = vld [vmem:[#allocation2 + $0x50] sm:$0x1]
        %v1839 = vld [vmem:[#allocation2 + $0x58] sm:$0xf]
        %v1840 = vld [vmem:[#allocation2 + $0x5c] sm:$0x1]
        %v1841 = vld [vmem:[#allocation2 + $0x64] sm:$0xf]
        %v1842 = vld [vmem:[#allocation2 + $0x68] sm:$0x1]
        %v1843 = vld [vmem:[#allocation2 + $0x70] sm:$0xf]
        %v1844 = vld [vmem:[#allocation2 + $0x74] sm:$0x1]
        %v1861 = vunpack.c.l.b16 %v1825
        %v1862 = vunpack.c.l.b16 %v1826
        %v1863 = vunpack.c.l.b16 %v1827
        %v1864 = vunpack.c.l.b16 %v1828
        %v1865 = vunpack.c.l.b16 %v1829
        %v1866 = vunpack.c.l.b16 %v1830
        %v1867 = vunpack.c.l.b16 %v1831
        %v1868 = vunpack.c.l.b16 %v1832
        %v1869 = vunpack.c.l.b16 %v1833
        %v1870 = vunpack.c.l.b16 %v1834
        %v1871 = vunpack.c.l.b16 %v1835
        %v1872 = vunpack.c.l.b16 %v1836
        %v1873 = vunpack.c.l.b16 %v1837
        %v1874 = vunpack.c.l.b16 %v1838
        %v1875 = vunpack.c.l.b16 %v1839
        %v1876 = vunpack.c.l.b16 %v1840
        %v1879 = vunpack.c.l.b16 %v1841
        %v1880 = vunpack.c.l.b16 %v1842
        %v1883 = vunpack.c.l.b16 %v1843
        %v1884 = vunpack.c.l.b16 %v1844
        %v1885 = vpack.c.b16 %v1863, %v1861
        %v1886 = vpack.c.b16 %v1865, %v1865
        %v1887 = vpack.c.b16 %v1864, %v1862
        %v1888 = vpack.c.b16 %v1866, %v1866
        %v1889 = vpack.c.b16 %v1865, %v1863
        %v1890 = vpack.c.b16 %v1867, %v1867
        %v1891 = vpack.c.b16 %v1866, %v1864
        %v1892 = vpack.c.b16 %v1868, %v1868
        %v1893 = vpack.c.b16 %v1867, %v1865
        %v1894 = vpack.c.b16 %v1869, %v1869
        %v1895 = vpack.c.b16 %v1868, %v1866
        %v1896 = vpack.c.b16 %v1870, %v1870
        %v1897 = vpack.c.b16 %v1869, %v1867
        %v1898 = vpack.c.b16 %v1871, %v1871
        %v1899 = vpack.c.b16 %v1870, %v1868
        %v1900 = vpack.c.b16 %v1872, %v1872
        %v1901 = vpack.c.b16 %v1871, %v1869
        %v1902 = vpack.c.b16 %v1873, %v1873
        %v1903 = vpack.c.b16 %v1872, %v1870
        %v1904 = vpack.c.b16 %v1874, %v1874
        %v1905 = vpack.c.b16 %v1873, %v1871
        %v1906 = vpack.c.b16 %v1875, %v1875
        %v1907 = vpack.c.b16 %v1874, %v1872
        %v1908 = vpack.c.b16 %v1876, %v1876
        %v1909 = vpack.c.b16 %v1875, %v1873
        %v1910 = vpack.c.b16 %v1879, %v1879
        %v1911 = vpack.c.b16 %v1876, %v1874
        %v1912 = vpack.c.b16 %v1880, %v1880
        %v1913 = vpack.c.b16 %v1879, %v1875
        %v1914 = vpack.c.b16 %v1883, %v1883
        %v1915 = vpack.c.b16 %v1880, %v1876
        %v1916 = vpack.c.b16 %v1884, %v1884
        %vm1917 = vsmask.f32 3328
        %vm1918 = vsmask.f32 7440
        %vm1919 = vmor %vm1917, %vm1918
        %v1921 = vshrl.u32 %v1885, 16
        %v1923 = vrot.slane %v1921, 4
        %v1924 = vshll.u32 %v1885, 16
        %v1926 = vrot.slane %v1924, 5
        %v1927 = vor.u32 %v1923, %v1926
        %v1928 = vrot.slane %v1927, 4
        %v1930 = vshll.u32 %v1887, 16
        %v1932 = vrot.slane %v1930, 5
        %v1933 = vsel %vm1919, %v1928, %v1932
        %v1935 = vshrl.u32 %v1886, 16
        %v1937 = vrot.slane %v1935, 4
        %v1938 = vshll.u32 %v1886, 16
        %v1940 = vrot.slane %v1938, 5
        %v1941 = vor.u32 %v1937, %v1940
        %v1942 = vrot.slane %v1941, 4
        %v1944 = vshll.u32 %v1888, 16
        %v1946 = vrot.slane %v1944, 5
        %v1947 = vsel %vm1919, %v1942, %v1946
        %v1949 = vshrl.u32 %v1889, 16
        %v1951 = vrot.slane %v1949, 4
        %v1952 = vshll.u32 %v1889, 16
        %v1954 = vrot.slane %v1952, 5
        %v1955 = vor.u32 %v1951, %v1954
        %v1956 = vrot.slane %v1955, 4
        %v1958 = vshll.u32 %v1891, 16
        %v1960 = vrot.slane %v1958, 5
        %v1961 = vsel %vm1919, %v1956, %v1960
        %v1963 = vshrl.u32 %v1890, 16
        %v1965 = vrot.slane %v1963, 4
        %v1966 = vshll.u32 %v1890, 16
        %v1968 = vrot.slane %v1966, 5
        %v1969 = vor.u32 %v1965, %v1968
        %v1970 = vrot.slane %v1969, 4
        %v1972 = vshll.u32 %v1892, 16
        %v1974 = vrot.slane %v1972, 5
        %v1975 = vsel %vm1919, %v1970, %v1974
        %v1977 = vshrl.u32 %v1893, 16
        %v1979 = vrot.slane %v1977, 4
        %v1980 = vshll.u32 %v1893, 16
        %v1982 = vrot.slane %v1980, 5
        %v1983 = vor.u32 %v1979, %v1982
        %v1984 = vrot.slane %v1983, 4
        %v1986 = vshll.u32 %v1895, 16
        %v1988 = vrot.slane %v1986, 5
        %v1989 = vsel %vm1919, %v1984, %v1988
        %v1991 = vshrl.u32 %v1894, 16
        %v1993 = vrot.slane %v1991, 4
        %v1994 = vshll.u32 %v1894, 16
        %v1996 = vrot.slane %v1994, 5
        %v1997 = vor.u32 %v1993, %v1996
        %v1998 = vrot.slane %v1997, 4
        %v2000 = vshll.u32 %v1896, 16
        %v2002 = vrot.slane %v2000, 5
        %v2003 = vsel %vm1919, %v1998, %v2002
        %v2005 = vshrl.u32 %v1897, 16
        %v2007 = vrot.slane %v2005, 4
        %v2008 = vshll.u32 %v1897, 16
        %v2010 = vrot.slane %v2008, 5
        %v2011 = vor.u32 %v2007, %v2010
        %v2012 = vrot.slane %v2011, 4
        %v2014 = vshll.u32 %v1899, 16
        %v2016 = vrot.slane %v2014, 5
        %v2017 = vsel %vm1919, %v2012, %v2016
        %v2019 = vshrl.u32 %v1898, 16
        %v2021 = vrot.slane %v2019, 4
        %v2022 = vshll.u32 %v1898, 16
        %v2024 = vrot.slane %v2022, 5
        %v2025 = vor.u32 %v2021, %v2024
        %v2026 = vrot.slane %v2025, 4
        %v2028 = vshll.u32 %v1900, 16
        %v2030 = vrot.slane %v2028, 5
        %v2031 = vsel %vm1919, %v2026, %v2030
        %v2033 = vshrl.u32 %v1901, 16
        %v2035 = vrot.slane %v2033, 4
        %v2036 = vshll.u32 %v1901, 16
        %v2038 = vrot.slane %v2036, 5
        %v2039 = vor.u32 %v2035, %v2038
        %v2040 = vrot.slane %v2039, 4
        %v2042 = vshll.u32 %v1903, 16
        %v2044 = vrot.slane %v2042, 5
        %v2045 = vsel %vm1919, %v2040, %v2044
        %v2047 = vshrl.u32 %v1902, 16
        %v2049 = vrot.slane %v2047, 4
        %v2050 = vshll.u32 %v1902, 16
        %v2052 = vrot.slane %v2050, 5
        %v2053 = vor.u32 %v2049, %v2052
        %v2054 = vrot.slane %v2053, 4
        %v2056 = vshll.u32 %v1904, 16
        %v2058 = vrot.slane %v2056, 5
        %v2059 = vsel %vm1919, %v2054, %v2058
        %v2061 = vshrl.u32 %v1905, 16
        %v2063 = vrot.slane %v2061, 4
        %v2064 = vshll.u32 %v1905, 16
        %v2066 = vrot.slane %v2064, 5
        %v2067 = vor.u32 %v2063, %v2066
        %v2068 = vrot.slane %v2067, 4
        %v2070 = vshll.u32 %v1907, 16
        %v2072 = vrot.slane %v2070, 5
        %v2073 = vsel %vm1919, %v2068, %v2072
        %v2075 = vshrl.u32 %v1906, 16
        %v2077 = vrot.slane %v2075, 4
        %v2078 = vshll.u32 %v1906, 16
        %v2080 = vrot.slane %v2078, 5
        %v2081 = vor.u32 %v2077, %v2080
        %v2082 = vrot.slane %v2081, 4
        %v2084 = vshll.u32 %v1908, 16
        %v2086 = vrot.slane %v2084, 5
        %v2087 = vsel %vm1919, %v2082, %v2086
        %v2089 = vshrl.u32 %v1909, 16
        %v2091 = vrot.slane %v2089, 4
        %v2092 = vshll.u32 %v1909, 16
        %v2094 = vrot.slane %v2092, 5
        %v2095 = vor.u32 %v2091, %v2094
        %v2096 = vrot.slane %v2095, 4
        %v2098 = vshll.u32 %v1911, 16
        %v2100 = vrot.slane %v2098, 5
        %v2101 = vsel %vm1919, %v2096, %v2100
        %v2103 = vshrl.u32 %v1910, 16
        %v2105 = vrot.slane %v2103, 4
        %v2106 = vshll.u32 %v1910, 16
        %v2108 = vrot.slane %v2106, 5
        %v2109 = vor.u32 %v2105, %v2108
        %v2110 = vrot.slane %v2109, 4
        %v2112 = vshll.u32 %v1912, 16
        %v2114 = vrot.slane %v2112, 5
        %v2115 = vsel %vm1919, %v2110, %v2114
        %v2117 = vshrl.u32 %v1913, 16
        %v2119 = vrot.slane %v2117, 4
        %v2120 = vshll.u32 %v1913, 16
        %v2122 = vrot.slane %v2120, 5
        %v2123 = vor.u32 %v2119, %v2122
        %v2124 = vrot.slane %v2123, 4
        %v2126 = vshll.u32 %v1915, 16
        %v2128 = vrot.slane %v2126, 5
        %v2129 = vsel %vm1919, %v2124, %v2128
        %v2131 = vshrl.u32 %v1914, 16
        %v2133 = vrot.slane %v2131, 4
        %v2134 = vshll.u32 %v1914, 16
        %v2136 = vrot.slane %v2134, 5
        %v2137 = vor.u32 %v2133, %v2136
        %v2138 = vrot.slane %v2137, 4
        %v2140 = vshll.u32 %v1916, 16
        %v2142 = vrot.slane %v2140, 5
        %v2143 = vsel %vm1919, %v2138, %v2142
        %s2144 = scalar_lea.vmem [#allocation9], 384
        %v2145 = vld [vmem:[%s2144] sm:$0xf]
        %v2146 = vld [vmem:[%s2144 + $0x4] sm:$0xf]
        %v2147 = vld [vmem:[%s2144 + $0x8] sm:$0xf]
        %v2148 = vld [vmem:[%s2144 + $0xc] sm:$0xf]
        %v2149 = vld [vmem:[%s2144 + $0x10] sm:$0xf]
        %v2150 = vld [vmem:[%s2144 + $0x14] sm:$0xf]
        %v2151 = vld [vmem:[%s2144 + $0x18] sm:$0xf]
        %v2152 = vld [vmem:[%s2144 + $0x1c] sm:$0xf]
        %v2153 = vld [vmem:[%s2144 + $0x20] sm:$0xf]
        %v2154 = vld [vmem:[%s2144 + $0x24] sm:$0xf]
        %v2155 = vld [vmem:[%s2144 + $0x28] sm:$0xf]
        %v2156 = vld [vmem:[%s2144 + $0x2c] sm:$0xf]
        %v2157 = vld [vmem:[%s2144 + $0x30] sm:$0xf]
        %v2158 = vld [vmem:[%s2144 + $0x34] sm:$0xf]
        %v2159 = vld [vmem:[%s2144 + $0x38] sm:$0xf]
        %v2160 = vld [vmem:[%s2144 + $0x3c] sm:$0xf]
        %v2161 = vld [vmem:[%s2144 + $0x40] sm:$0xf]
        %v2162 = vld [vmem:[%s2144 + $0x44] sm:$0xf]
        %v2163 = vld [vmem:[%s2144 + $0x48] sm:$0xf]
        %v2164 = vld [vmem:[%s2144 + $0x4c] sm:$0xf]
        %v2165 = vld [vmem:[%s2144 + $0x50] sm:$0xf]
        %v2166 = vld [vmem:[%s2144 + $0x54] sm:$0xf]
        %v2167 = vld [vmem:[%s2144 + $0x58] sm:$0xf]
        %v2168 = vld [vmem:[%s2144 + $0x5c] sm:$0xf]
        %v2169 = vld [vmem:[%s2144 + $0x60] sm:$0xf]
        %v2170 = vld [vmem:[%s2144 + $0x64] sm:$0xf]
        %v2171 = vld [vmem:[%s2144 + $0x68] sm:$0xf]
        %v2172 = vld [vmem:[%s2144 + $0x6c] sm:$0xf]
        %v2173 = vld [vmem:[%s2144 + $0x70] sm:$0xf]
        %v2174 = vld [vmem:[%s2144 + $0x74] sm:$0xf]
        %v2175 = vld [vmem:[%s2144 + $0x78] sm:$0xf]
        %v2176 = vld [vmem:[%s2144 + $0x7c] sm:$0xf]
        %v2177 = vld [vmem:[%s2144 + $0x80] sm:$0xf]
        %v2178 = vld [vmem:[%s2144 + $0x84] sm:$0xf]
        %v2179 = vld [vmem:[%s2144 + $0x88] sm:$0xf]
        %v2180 = vld [vmem:[%s2144 + $0x8c] sm:$0xf]
        %v2181 = vld [vmem:[%s2144 + $0x90] sm:$0xf]
        %v2182 = vld [vmem:[%s2144 + $0x94] sm:$0xf]
        %v2183 = vld [vmem:[%s2144 + $0x98] sm:$0xf]
        %v2184 = vld [vmem:[%s2144 + $0x9c] sm:$0xf]
        %v2185 = vld [vmem:[%s2144 + $0xa0] sm:$0xf]
        %v2186 = vld [vmem:[%s2144 + $0xa4] sm:$0xf]
        %v2187 = vld [vmem:[%s2144 + $0xa8] sm:$0xf]
        %v2188 = vld [vmem:[%s2144 + $0xac] sm:$0xf]
        %v2189 = vld [vmem:[%s2144 + $0xb0] sm:$0xf]
        %v2190 = vld [vmem:[%s2144 + $0xb4] sm:$0xf]
        %v2191 = vld [vmem:[%s2144 + $0xb8] sm:$0xf]
        %v2192 = vld [vmem:[%s2144 + $0xbc] sm:$0xf]
        %v2193 = vunpack.c.l.b16 %v1933
        %v2194 = vunpack.c.h.b16 %v1933
        %v2195 = vunpack.c.l.b16 %v1947
        %v2196 = vunpack.c.l.b16 %v1961
        %v2197 = vunpack.c.h.b16 %v1961
        %v2198 = vunpack.c.l.b16 %v1975
        %v2199 = vunpack.c.l.b16 %v1989
        %v2200 = vunpack.c.h.b16 %v1989
        %v2201 = vunpack.c.l.b16 %v2003
        %v2202 = vunpack.c.l.b16 %v2017
        %v2203 = vunpack.c.h.b16 %v2017
        %v2204 = vunpack.c.l.b16 %v2031
        %v2205 = vunpack.c.l.b16 %v2045
        %v2206 = vunpack.c.h.b16 %v2045
        %v2207 = vunpack.c.l.b16 %v2059
        %v2208 = vunpack.c.l.b16 %v2073
        %v2209 = vunpack.c.h.b16 %v2073
        %v2210 = vunpack.c.l.b16 %v2087
        %v2211 = vunpack.c.l.b16 %v2101
        %v2212 = vunpack.c.h.b16 %v2101
        %v2213 = vunpack.c.l.b16 %v2115
        %v2214 = vunpack.c.l.b16 %v2129
        %v2215 = vunpack.c.h.b16 %v2129
        %v2216 = vunpack.c.l.b16 %v2143
        %v2217 = vpack.c.b16 %v2196, %v2193
        %v2218 = vpack.c.b16 %v2197, %v2194
        %v2219 = vpack.c.b16 %v2198, %v2195
        %v2220 = vpack.c.b16 %v2202, %v2199
        %v2221 = vpack.c.b16 %v2203, %v2200
        %v2222 = vpack.c.b16 %v2204, %v2201
        %v2223 = vpack.c.b16 %v2208, %v2205
        %v2224 = vpack.c.b16 %v2209, %v2206
        %v2225 = vpack.c.b16 %v2210, %v2207
        %v2226 = vpack.c.b16 %v2214, %v2211
        %v2227 = vpack.c.b16 %v2215, %v2212
        %v2228 = vpack.c.b16 %v2216, %v2213
        %v2289 = vunpack.c.l.b16 %v2145
        %v2290 = vunpack.c.l.b16 %v2146
        %v2291 = vunpack.c.l.b16 %v2147
        %v2292 = vunpack.c.l.b16 %v2148
        %v2293 = vunpack.c.l.b16 %v2149
        %v2294 = vunpack.c.l.b16 %v2150
        %v2295 = vunpack.c.l.b16 %v2151
        %v2296 = vunpack.c.l.b16 %v2152
        %v2297 = vunpack.c.l.b16 %v2153
        %v2298 = vunpack.c.l.b16 %v2154
        %v2299 = vunpack.c.l.b16 %v2155
        %v2300 = vunpack.c.l.b16 %v2156
        %v2301 = vunpack.c.l.b16 %v2157
        %v2302 = vunpack.c.l.b16 %v2158
        %v2303 = vunpack.c.l.b16 %v2159
        %v2304 = vunpack.c.l.b16 %v2160
        %v2305 = vunpack.c.l.b16 %v2161
        %v2306 = vunpack.c.l.b16 %v2162
        %v2307 = vunpack.c.l.b16 %v2163
        %v2308 = vunpack.c.l.b16 %v2164
        %v2309 = vunpack.c.l.b16 %v2165
        %v2310 = vunpack.c.l.b16 %v2166
        %v2311 = vunpack.c.l.b16 %v2167
        %v2312 = vunpack.c.l.b16 %v2168
        %v2313 = vunpack.c.l.b16 %v2169
        %v2314 = vunpack.c.l.b16 %v2170
        %v2315 = vunpack.c.l.b16 %v2171
        %v2316 = vunpack.c.l.b16 %v2172
        %v2317 = vunpack.c.l.b16 %v2173
        %v2318 = vunpack.c.l.b16 %v2174
        %v2319 = vunpack.c.l.b16 %v2175
        %v2320 = vunpack.c.l.b16 %v2176
        %v2321 = vunpack.c.l.b16 %v2177
        %v2322 = vunpack.c.l.b16 %v2178
        %v2323 = vunpack.c.l.b16 %v2179
        %v2324 = vunpack.c.l.b16 %v2180
        %v2325 = vunpack.c.l.b16 %v2181
        %v2326 = vunpack.c.l.b16 %v2182
        %v2327 = vunpack.c.l.b16 %v2183
        %v2328 = vunpack.c.l.b16 %v2184
        %v2329 = vunpack.c.l.b16 %v2185
        %v2330 = vunpack.c.l.b16 %v2186
        %v2331 = vunpack.c.l.b16 %v2187
        %v2332 = vunpack.c.l.b16 %v2188
        %v2333 = vunpack.c.l.b16 %v2189
        %v2334 = vunpack.c.l.b16 %v2190
        %v2335 = vunpack.c.l.b16 %v2191
        %v2336 = vunpack.c.l.b16 %v2192
        %v2337 = vpack.c.b16 %v2290, %v2289
        %v2338 = vpack.c.b16 %v2292, %v2291
        %v2339 = vpack.c.b16 %v2294, %v2293
        %v2340 = vpack.c.b16 %v2296, %v2295
        %v2341 = vpack.c.b16 %v2298, %v2297
        %v2342 = vpack.c.b16 %v2300, %v2299
        %v2343 = vpack.c.b16 %v2302, %v2301
        %v2344 = vpack.c.b16 %v2304, %v2303
        %v2345 = vpack.c.b16 %v2306, %v2305
        %v2346 = vpack.c.b16 %v2308, %v2307
        %v2347 = vpack.c.b16 %v2310, %v2309
        %v2348 = vpack.c.b16 %v2312, %v2311
        %v2349 = vpack.c.b16 %v2314, %v2313
        %v2350 = vpack.c.b16 %v2316, %v2315
        %v2351 = vpack.c.b16 %v2318, %v2317
        %v2352 = vpack.c.b16 %v2320, %v2319
        %v2353 = vpack.c.b16 %v2322, %v2321
        %v2354 = vpack.c.b16 %v2324, %v2323
        %v2355 = vpack.c.b16 %v2326, %v2325
        %v2356 = vpack.c.b16 %v2328, %v2327
        %v2357 = vpack.c.b16 %v2330, %v2329
        %v2358 = vpack.c.b16 %v2332, %v2331
        %v2359 = vpack.c.b16 %v2334, %v2333
        %v2360 = vpack.c.b16 %v2336, %v2335
        %2385 = vmatprep.subr.bf16.mxu0 0
        %2386 = vmatpush1.bf16.msra.mxu0 %v2337
        %2387 = vmatprep.subr.bf16.mxu0 0
        %2388 = vmatpush1.bf16.msra.mxu0 %v2338
        %2389 = vmatprep.subr.bf16.mxu0 0
        %2390 = vmatpush1.bf16.msra.mxu0 %v2339
        %2391 = vmatprep.subr.bf16.mxu0 0
        %2392 = vmatpush1.bf16.msra.mxu0 %v2340
        %2393 = vmatprep.subr.bf16.mxu0 0
        %2394 = vmatpush1.bf16.msra.mxu0 %v2341
        %2395 = vmatprep.subr.bf16.mxu0 0
        %2396 = vmatpush1.bf16.msra.mxu0 %v2342
        %2397 = vmatprep.subr.bf16.mxu0 0
        %2398 = vmatpush1.bf16.msra.mxu0 %v2343
        %2399 = vmatprep.subr.bf16.mxu0 0
        %2400 = vmatpush1.bf16.msra.mxu0 %v2344
        %2401 = vmatprep.subr.bf16.mxu0 0
        %2402 = vmatpush1.bf16.msra.mxu0 %v2345
        %2403 = vmatprep.subr.bf16.mxu0 0
        %2404 = vmatpush1.bf16.msra.mxu0 %v2346
        %2405 = vmatprep.subr.bf16.mxu0 0
        %2406 = vmatpush1.bf16.msra.mxu0 %v2347
        %2407 = vmatprep.subr.bf16.mxu0 0
        %2408 = vmatpush1.bf16.msra.mxu0 %v2348
        %2409 = vmatprep.subr.bf16.mxu0 0
        %2410 = vmatpush1.bf16.msra.mxu0 %v2349
        %2411 = vmatprep.subr.bf16.mxu0 0
        %2412 = vmatpush1.bf16.msra.mxu0 %v2350
        %2413 = vmatprep.subr.bf16.mxu0 0
        %2414 = vmatpush1.bf16.msra.mxu0 %v2351
        %2415 = vmatprep.subr.bf16.mxu0 0
        %2416 = vmatpush1.bf16.msra.mxu0 %v2352
        %2417 = vmatprep.mubr.bf16.mxu0 %v2218
        %2418 = vmatmul.mubr.bf16.gmra.mrb[0].mxu0 %v2217
        %v2419 = vpop.f32.mrb[0].mxu0
        %v2420 = vadd.f32 0.0, %v2419
        %v2421 = vpop.f32.mrb[0].mxu0
        %v2422 = vpop.f32.mrb[0].mxu0
        %v2423 = vadd.f32 0.0, %v2422
        %v2424 = vpop.f32.mrb[0].mxu0
        %2425 = vmatprep.mubr.bf16.mxu0 %v2221
        %2426 = vmatmul.mubr.bf16.gmra.mrb[0].mxu0 %v2220
        %v2427 = vpop.f32.mrb[0].mxu0
        %v2428 = vadd.f32 0.0, %v2427
        %v2429 = vpop.f32.mrb[0].mxu0
        %v2430 = vpop.f32.mrb[0].mxu0
        %v2431 = vadd.f32 0.0, %v2430
        %v2432 = vpop.f32.mrb[0].mxu0
        %2433 = vmatprep.mubr.bf16.mxu0 %v2224
        %2434 = vmatmul.mubr.bf16.gmra.mrb[0].mxu0 %v2223
        %v2435 = vpop.f32.mrb[0].mxu0
        %v2436 = vadd.f32 0.0, %v2435
        %v2437 = vpop.f32.mrb[0].mxu0
        %v2438 = vpop.f32.mrb[0].mxu0
        %v2439 = vadd.f32 0.0, %v2438
        %v2440 = vpop.f32.mrb[0].mxu0
        %2441 = vmatprep.mubr.bf16.mxu0 %v2227
        %2442 = vmatmul.mubr.bf16.gmra.mrb[0].mxu0 %v2226
        %v2443 = vpop.f32.mrb[0].mxu0
        %v2444 = vadd.f32 0.0, %v2443
        %v2445 = vpop.f32.mrb[0].mxu0
        %v2446 = vpop.f32.mrb[0].mxu0
        %v2447 = vadd.f32 0.0, %v2446
        %v2448 = vpop.f32.mrb[0].mxu0
        %2449 = vdwg.mxu0
        %2450 = vmatprep.subr.bf16.mxu0 0
        %2451 = vmatpush1.bf16.msra.mxu0 %v2353
        %2452 = vmatprep.subr.bf16.mxu0 0
        %2453 = vmatpush1.bf16.msra.mxu0 %v2354
        %2454 = vmatprep.subr.bf16.mxu0 0
        %2455 = vmatpush1.bf16.msra.mxu0 %v2355
        %2456 = vmatprep.subr.bf16.mxu0 0
        %2457 = vmatpush1.bf16.msra.mxu0 %v2356
        %2458 = vmatprep.subr.bf16.mxu0 0
        %2459 = vmatpush1.bf16.msra.mxu0 %v2357
        %2460 = vmatprep.subr.bf16.mxu0 0
        %2461 = vmatpush1.bf16.msra.mxu0 %v2358
        %2462 = vmatprep.subr.bf16.mxu0 0
        %2463 = vmatpush1.bf16.msra.mxu0 %v2359
        %2464 = vmatprep.subr.bf16.mxu0 0
        %2465 = vmatpush1.bf16.msra.mxu0 %v2360
        %2466 = vmatprep.subr.bf16.mxu0 0
        %2467 = vmatpush1.bf16.msra.mxu0 0
        %2468 = vmatprep.subr.bf16.mxu0 0
        %2469 = vmatpush1.bf16.msra.mxu0 0
        %2470 = vmatprep.subr.bf16.mxu0 0
        %2471 = vmatpush1.bf16.msra.mxu0 0
        %2472 = vmatprep.subr.bf16.mxu0 0
        %2473 = vmatpush1.bf16.msra.mxu0 0
        %2474 = vmatprep.subr.bf16.mxu0 0
        %2475 = vmatpush1.bf16.msra.mxu0 0
        %2476 = vmatprep.subr.bf16.mxu0 0
        %2477 = vmatpush1.bf16.msra.mxu0 0
        %2478 = vmatprep.subr.bf16.mxu0 0
        %2479 = vmatpush1.bf16.msra.mxu0 0
        %2480 = vmatprep.subr.bf16.mxu0 0
        %2481 = vmatpush1.bf16.msra.mxu0 0
        %2482 = vmatprep.mubr.bf16.mxu0 0
        %2483 = vmatmul.mubr.bf16.gmra.mrb[0].mxu0 %v2219
        %v2484 = vpop.f32.mrb[0].mxu0
        %v2485 = vadd.f32 %v2420, %v2484
        %v2486 = vpop.f32.mrb[0].mxu0
        %v2487 = vpop.f32.mrb[0].mxu0
        %v2488 = vadd.f32 %v2423, %v2487
        %v2489 = vpop.f32.mrb[0].mxu0
        %2490 = vmatprep.mubr.bf16.mxu0 0
        %2491 = vmatmul.mubr.bf16.gmra.mrb[0].mxu0 %v2222
        %v2492 = vpop.f32.mrb[0].mxu0
        %v2493 = vadd.f32 %v2428, %v2492
        %v2494 = vpop.f32.mrb[0].mxu0
        %v2495 = vpop.f32.mrb[0].mxu0
        %v2496 = vadd.f32 %v2431, %v2495
        %v2497 = vpop.f32.mrb[0].mxu0
        %2498 = vmatprep.mubr.bf16.mxu0 0
        %2499 = vmatmul.mubr.bf16.gmra.mrb[0].mxu0 %v2225
        %v2500 = vpop.f32.mrb[0].mxu0
        %v2501 = vadd.f32 %v2436, %v2500
        %v2502 = vpop.f32.mrb[0].mxu0
        %v2503 = vpop.f32.mrb[0].mxu0
        %v2504 = vadd.f32 %v2439, %v2503
        %v2505 = vpop.f32.mrb[0].mxu0
        %2506 = vmatprep.mubr.bf16.mxu0 0
        %2507 = vmatmul.mubr.bf16.gmra.mrb[0].mxu0 %v2228
        %v2508 = vpop.f32.mrb[0].mxu0
        %v2509 = vadd.f32 %v2444, %v2508
        %v2510 = vpop.f32.mrb[0].mxu0
        %v2511 = vpop.f32.mrb[0].mxu0
        %v2512 = vadd.f32 %v2447, %v2511
        %v2513 = vpop.f32.mrb[0].mxu0
        %2514 = vdwg.mxu0
        %v2515 = vadd.f32 %v1795, %v2485
        %v2516 = vadd.f32 %v1798, %v2488
        %v2517 = vadd.f32 %v1803, %v2493
        %v2518 = vadd.f32 %v1806, %v2496
        %v2519 = vadd.f32 %v1811, %v2501
        %v2520 = vadd.f32 %v1814, %v2504
        %v2521 = vadd.f32 %v1819, %v2509
        %v2522 = vadd.f32 %v1822, %v2512
        %v2523 = vld [vmem:[%s4] sm:$0x1]
        %v2525 = vlaneseq
        %v2526 = vshrl.u32 %v2525, 7
        %v2527 = vsub.s32 0, %v2526
        %v2528 = vrot.slane %v2523, %v2527
        %v2530 = vadd.f32 %v2515, %v2528
        %v2531 = vadd.f32 %v2516, %v2528
        %v2532 = vadd.f32 %v2517, %v2528
        %v2533 = vadd.f32 %v2518, %v2528
        %v2534 = vadd.f32 %v2519, %v2528
        %v2535 = vadd.f32 %v2520, %v2528
        %v2536 = vadd.f32 %v2521, %v2528
        %v2537 = vadd.f32 %v2522, %v2528
        %v2538 = vmax.f32 %v2530, 0.0
        %v2539 = vmax.f32 %v2531, 0.0
        %v2540 = vmax.f32 %v2532, 0.0
        %v2541 = vmax.f32 %v2533, 0.0
        %v2542 = vmax.f32 %v2534, 0.0
        %v2543 = vmax.f32 %v2535, 0.0
        %v2544 = vmax.f32 %v2536, 0.0
        %v2545 = vmax.f32 %v2537, 0.0
        %v2546 = vpack.c.bf16 %v2538, %v2538
        %v2547 = vpack.c.bf16 %v2539, %v2539
        %v2548 = vpack.c.bf16 %v2540, %v2540
        %v2549 = vpack.c.bf16 %v2541, %v2541
        %v2550 = vpack.c.bf16 %v2542, %v2542
        %v2551 = vpack.c.bf16 %v2543, %v2543
        %v2552 = vpack.c.bf16 %v2544, %v2544
        %v2553 = vpack.c.bf16 %v2545, %v2545
        %2554 = vst [vmem:[%s811 + $0x4] sm:$0xf] %v2546
        %2555 = vst [vmem:[%s811 + $0x10] sm:$0xf] %v2547
        %2556 = vst [vmem:[%s811 + $0x1c] sm:$0xf] %v2548
        %2557 = vst [vmem:[%s811 + $0x28] sm:$0xf] %v2549
        %2558 = vst [vmem:[%s811 + $0x34] sm:$0xf] %v2550
        %2559 = vst [vmem:[%s811 + $0x40] sm:$0xf] %v2551
        %2560 = vst [vmem:[%s811 + $0x4c] sm:$0xf] %v2552
        %2561 = vst [vmem:[%s811 + $0x58] sm:$0xf] %v2553
        %v2562 = vld [vmem:[#allocation2] sm:$0x8]
        %v2563 = vld [vmem:[#allocation2 + $0x4] sm:$0xf]
        %v2564 = vld [vmem:[#allocation2 + $0xc] sm:$0x8]
        %v2565 = vld [vmem:[#allocation2 + $0x10] sm:$0xf]
        %v2566 = vld [vmem:[#allocation2 + $0x18] sm:$0x8]
        %v2567 = vld [vmem:[#allocation2 + $0x1c] sm:$0xf]
        %v2568 = vld [vmem:[#allocation2 + $0x24] sm:$0x8]
        %v2569 = vld [vmem:[#allocation2 + $0x28] sm:$0xf]
        %v2570 = vld [vmem:[#allocation2 + $0x30] sm:$0x8]
        %v2571 = vld [vmem:[#allocation2 + $0x34] sm:$0xf]
        %v2572 = vld [vmem:[#allocation2 + $0x3c] sm:$0x8]
        %v2573 = vld [vmem:[#allocation2 + $0x40] sm:$0xf]
        %v2574 = vld [vmem:[#allocation2 + $0x48] sm:$0x8]
        %v2575 = vld [vmem:[#allocation2 + $0x4c] sm:$0xf]
        %v2576 = vld [vmem:[#allocation2 + $0x54] sm:$0x8]
        %v2577 = vld [vmem:[#allocation2 + $0x58] sm:$0xf]
        %v2578 = vld [vmem:[#allocation2 + $0x60] sm:$0x8]
        %v2579 = vld [vmem:[#allocation2 + $0x64] sm:$0xf]
        %v2580 = vld [vmem:[#allocation2 + $0x6c] sm:$0x8]
        %v2581 = vld [vmem:[#allocation2 + $0x70] sm:$0xf]
        %v2598 = vunpack.c.l.b16 %v2562
        %v2599 = vunpack.c.l.b16 %v2563
        %v2600 = vunpack.c.l.b16 %v2564
        %v2601 = vunpack.c.l.b16 %v2565
        %v2602 = vunpack.c.l.b16 %v2566
        %v2603 = vunpack.c.l.b16 %v2567
        %v2604 = vunpack.c.l.b16 %v2568
        %v2605 = vunpack.c.l.b16 %v2569
        %v2606 = vunpack.c.l.b16 %v2570
        %v2607 = vunpack.c.l.b16 %v2571
        %v2608 = vunpack.c.l.b16 %v2572
        %v2609 = vunpack.c.l.b16 %v2573
        %v2610 = vunpack.c.l.b16 %v2574
        %v2611 = vunpack.c.l.b16 %v2575
        %v2612 = vunpack.c.l.b16 %v2576
        %v2613 = vunpack.c.l.b16 %v2577
        %v2616 = vunpack.c.l.b16 %v2578
        %v2617 = vunpack.c.l.b16 %v2579
        %v2620 = vunpack.c.l.b16 %v2580
        %v2621 = vunpack.c.l.b16 %v2581
        %v2622 = vpack.c.b16 %v2600, %v2598
        %v2623 = vpack.c.b16 %v2602, %v2602
        %v2624 = vpack.c.b16 %v2601, %v2599
        %v2625 = vpack.c.b16 %v2603, %v2603
        %v2626 = vpack.c.b16 %v2602, %v2600
        %v2627 = vpack.c.b16 %v2604, %v2604
        %v2628 = vpack.c.b16 %v2603, %v2601
        %v2629 = vpack.c.b16 %v2605, %v2605
        %v2630 = vpack.c.b16 %v2604, %v2602
        %v2631 = vpack.c.b16 %v2606, %v2606
        %v2632 = vpack.c.b16 %v2605, %v2603
        %v2633 = vpack.c.b16 %v2607, %v2607
        %v2634 = vpack.c.b16 %v2606, %v2604
        %v2635 = vpack.c.b16 %v2608, %v2608
        %v2636 = vpack.c.b16 %v2607, %v2605
        %v2637 = vpack.c.b16 %v2609, %v2609
        %v2638 = vpack.c.b16 %v2608, %v2606
        %v2639 = vpack.c.b16 %v2610, %v2610
        %v2640 = vpack.c.b16 %v2609, %v2607
        %v2641 = vpack.c.b16 %v2611, %v2611
        %v2642 = vpack.c.b16 %v2610, %v2608
        %v2643 = vpack.c.b16 %v2612, %v2612
        %v2644 = vpack.c.b16 %v2611, %v2609
        %v2645 = vpack.c.b16 %v2613, %v2613
        %v2646 = vpack.c.b16 %v2612, %v2610
        %v2647 = vpack.c.b16 %v2616, %v2616
        %v2648 = vpack.c.b16 %v2613, %v2611
        %v2649 = vpack.c.b16 %v2617, %v2617
        %v2650 = vpack.c.b16 %v2616, %v2612
        %v2651 = vpack.c.b16 %v2620, %v2620
        %v2652 = vpack.c.b16 %v2617, %v2613
        %v2653 = vpack.c.b16 %v2621, %v2621
        %v2655 = vshrl.u32 %v2622, 16
        %v2657 = vrot.slane %v2655, 7
        %v2658 = vrot.slane %v2657, 4
        %v2660 = vshrl.u32 %v2624, 16
        %v2662 = vrot.slane %v2660, 7
        %v2663 = vshll.u32 %v2624, 16
        %v2665 = vor.u32 %v2662, %v2663
        %v2666 = vsel %vm913, %v2658, %v2665
        %v2668 = vshrl.u32 %v2623, 16
        %v2670 = vrot.slane %v2668, 7
        %v2671 = vrot.slane %v2670, 4
        %v2673 = vshrl.u32 %v2625, 16
        %v2675 = vrot.slane %v2673, 7
        %v2676 = vshll.u32 %v2625, 16
        %v2678 = vor.u32 %v2675, %v2676
        %v2679 = vsel %vm913, %v2671, %v2678
        %v2681 = vshrl.u32 %v2626, 16
        %v2683 = vrot.slane %v2681, 7
        %v2684 = vrot.slane %v2683, 4
        %v2686 = vshrl.u32 %v2628, 16
        %v2688 = vrot.slane %v2686, 7
        %v2689 = vshll.u32 %v2628, 16
        %v2691 = vor.u32 %v2688, %v2689
        %v2692 = vsel %vm913, %v2684, %v2691
        %v2694 = vshrl.u32 %v2627, 16
        %v2696 = vrot.slane %v2694, 7
        %v2697 = vrot.slane %v2696, 4
        %v2699 = vshrl.u32 %v2629, 16
        %v2701 = vrot.slane %v2699, 7
        %v2702 = vshll.u32 %v2629, 16
        %v2704 = vor.u32 %v2701, %v2702
        %v2705 = vsel %vm913, %v2697, %v2704
        %v2707 = vshrl.u32 %v2630, 16
        %v2709 = vrot.slane %v2707, 7
        %v2710 = vrot.slane %v2709, 4
        %v2712 = vshrl.u32 %v2632, 16
        %v2714 = vrot.slane %v2712, 7
        %v2715 = vshll.u32 %v2632, 16
        %v2717 = vor.u32 %v2714, %v2715
        %v2718 = vsel %vm913, %v2710, %v2717
        %v2720 = vshrl.u32 %v2631, 16
        %v2722 = vrot.slane %v2720, 7
        %v2723 = vrot.slane %v2722, 4
        %v2725 = vshrl.u32 %v2633, 16
        %v2727 = vrot.slane %v2725, 7
        %v2728 = vshll.u32 %v2633, 16
        %v2730 = vor.u32 %v2727, %v2728
        %v2731 = vsel %vm913, %v2723, %v2730
        %v2733 = vshrl.u32 %v2634, 16
        %v2735 = vrot.slane %v2733, 7
        %v2736 = vrot.slane %v2735, 4
        %v2738 = vshrl.u32 %v2636, 16
        %v2740 = vrot.slane %v2738, 7
        %v2741 = vshll.u32 %v2636, 16
        %v2743 = vor.u32 %v2740, %v2741
        %v2744 = vsel %vm913, %v2736, %v2743
        %v2746 = vshrl.u32 %v2635, 16
        %v2748 = vrot.slane %v2746, 7
        %v2749 = vrot.slane %v2748, 4
        %v2751 = vshrl.u32 %v2637, 16
        %v2753 = vrot.slane %v2751, 7
        %v2754 = vshll.u32 %v2637, 16
        %v2756 = vor.u32 %v2753, %v2754
        %v2757 = vsel %vm913, %v2749, %v2756
        %v2759 = vshrl.u32 %v2638, 16
        %v2761 = vrot.slane %v2759, 7
        %v2762 = vrot.slane %v2761, 4
        %v2764 = vshrl.u32 %v2640, 16
        %v2766 = vrot.slane %v2764, 7
        %v2767 = vshll.u32 %v2640, 16
        %v2769 = vor.u32 %v2766, %v2767
        %v2770 = vsel %vm913, %v2762, %v2769
        %v2772 = vshrl.u32 %v2639, 16
        %v2774 = vrot.slane %v2772, 7
        %v2775 = vrot.slane %v2774, 4
        %v2777 = vshrl.u32 %v2641, 16
        %v2779 = vrot.slane %v2777, 7
        %v2780 = vshll.u32 %v2641, 16
        %v2782 = vor.u32 %v2779, %v2780
        %v2783 = vsel %vm913, %v2775, %v2782
        %v2785 = vshrl.u32 %v2642, 16
        %v2787 = vrot.slane %v2785, 7
        %v2788 = vrot.slane %v2787, 4
        %v2790 = vshrl.u32 %v2644, 16
        %v2792 = vrot.slane %v2790, 7
        %v2793 = vshll.u32 %v2644, 16
        %v2795 = vor.u32 %v2792, %v2793
        %v2796 = vsel %vm913, %v2788, %v2795
        %v2798 = vshrl.u32 %v2643, 16
        %v2800 = vrot.slane %v2798, 7
        %v2801 = vrot.slane %v2800, 4
        %v2803 = vshrl.u32 %v2645, 16
        %v2805 = vrot.slane %v2803, 7
        %v2806 = vshll.u32 %v2645, 16
        %v2808 = vor.u32 %v2805, %v2806
        %v2809 = vsel %vm913, %v2801, %v2808
        %v2811 = vshrl.u32 %v2646, 16
        %v2813 = vrot.slane %v2811, 7
        %v2814 = vrot.slane %v2813, 4
        %v2816 = vshrl.u32 %v2648, 16
        %v2818 = vrot.slane %v2816, 7
        %v2819 = vshll.u32 %v2648, 16
        %v2821 = vor.u32 %v2818, %v2819
        %v2822 = vsel %vm913, %v2814, %v2821
        %v2824 = vshrl.u32 %v2647, 16
        %v2826 = vrot.slane %v2824, 7
        %v2827 = vrot.slane %v2826, 4
        %v2829 = vshrl.u32 %v2649, 16
        %v2831 = vrot.slane %v2829, 7
        %v2832 = vshll.u32 %v2649, 16
        %v2834 = vor.u32 %v2831, %v2832
        %v2835 = vsel %vm913, %v2827, %v2834
        %v2837 = vshrl.u32 %v2650, 16
        %v2839 = vrot.slane %v2837, 7
        %v2840 = vrot.slane %v2839, 4
        %v2842 = vshrl.u32 %v2652, 16
        %v2844 = vrot.slane %v2842, 7
        %v2845 = vshll.u32 %v2652, 16
        %v2847 = vor.u32 %v2844, %v2845
        %v2848 = vsel %vm913, %v2840, %v2847
        %v2850 = vshrl.u32 %v2651, 16
        %v2852 = vrot.slane %v2850, 7
        %v2853 = vrot.slane %v2852, 4
        %v2855 = vshrl.u32 %v2653, 16
        %v2857 = vrot.slane %v2855, 7
        %v2858 = vshll.u32 %v2653, 16
        %v2860 = vor.u32 %v2857, %v2858
        %v2861 = vsel %vm913, %v2853, %v2860
        %v2862 = vld [vmem:[#allocation11] sm:$0xf]
        %v2863 = vld [vmem:[#allocation11 + $0x4] sm:$0xf]
        %v2864 = vld [vmem:[#allocation11 + $0x8] sm:$0xf]
        %v2865 = vld [vmem:[#allocation11 + $0xc] sm:$0xf]
        %v2866 = vld [vmem:[#allocation11 + $0x10] sm:$0xf]
        %v2867 = vld [vmem:[#allocation11 + $0x14] sm:$0xf]
        %v2868 = vld [vmem:[#allocation11 + $0x18] sm:$0xf]
        %v2869 = vld [vmem:[#allocation11 + $0x1c] sm:$0xf]
        %v2870 = vld [vmem:[#allocation11 + $0x20] sm:$0xf]
        %v2871 = vld [vmem:[#allocation11 + $0x24] sm:$0xf]
        %v2872 = vld [vmem:[#allocation11 + $0x28] sm:$0xf]
        %v2873 = vld [vmem:[#allocation11 + $0x2c] sm:$0xf]
        %v2874 = vld [vmem:[#allocation11 + $0x30] sm:$0xf]
        %v2875 = vld [vmem:[#allocation11 + $0x34] sm:$0xf]
        %v2876 = vld [vmem:[#allocation11 + $0x38] sm:$0xf]
        %v2877 = vld [vmem:[#allocation11 + $0x3c] sm:$0xf]
        %v2878 = vld [vmem:[#allocation11 + $0x40] sm:$0xf]
        %v2879 = vld [vmem:[#allocation11 + $0x44] sm:$0xf]
        %v2880 = vld [vmem:[#allocation11 + $0x48] sm:$0xf]
        %v2881 = vld [vmem:[#allocation11 + $0x4c] sm:$0xf]
        %v2882 = vld [vmem:[#allocation11 + $0x50] sm:$0xf]
        %v2883 = vld [vmem:[#allocation11 + $0x54] sm:$0xf]
        %v2884 = vld [vmem:[#allocation11 + $0x58] sm:$0xf]
        %v2885 = vld [vmem:[#allocation11 + $0x5c] sm:$0xf]
        %v2886 = vld [vmem:[#allocation11 + $0x60] sm:$0xf]
        %v2887 = vld [vmem:[#allocation11 + $0x64] sm:$0xf]
        %v2888 = vld [vmem:[#allocation11 + $0x68] sm:$0xf]
        %v2889 = vld [vmem:[#allocation11 + $0x6c] sm:$0xf]
        %v2890 = vld [vmem:[#allocation11 + $0x70] sm:$0xf]
        %v2891 = vld [vmem:[#allocation11 + $0x74] sm:$0xf]
        %v2892 = vld [vmem:[#allocation11 + $0x78] sm:$0xf]
        %v2893 = vld [vmem:[#allocation11 + $0x7c] sm:$0xf]
        %v2894 = vld [vmem:[#allocation11 + $0x80] sm:$0xf]
        %v2895 = vld [vmem:[#allocation11 + $0x84] sm:$0xf]
        %v2896 = vld [vmem:[#allocation11 + $0x88] sm:$0xf]
        %v2897 = vld [vmem:[#allocation11 + $0x8c] sm:$0xf]
        %v2898 = vld [vmem:[#allocation11 + $0x90] sm:$0xf]
        %v2899 = vld [vmem:[#allocation11 + $0x94] sm:$0xf]
        %v2900 = vld [vmem:[#allocation11 + $0x98] sm:$0xf]
        %v2901 = vld [vmem:[#allocation11 + $0x9c] sm:$0xf]
        %v2902 = vld [vmem:[#allocation11 + $0xa0] sm:$0xf]
        %v2903 = vld [vmem:[#allocation11 + $0xa4] sm:$0xf]
        %v2904 = vld [vmem:[#allocation11 + $0xa8] sm:$0xf]
        %v2905 = vld [vmem:[#allocation11 + $0xac] sm:$0xf]
        %v2906 = vld [vmem:[#allocation11 + $0xb0] sm:$0xf]
        %v2907 = vld [vmem:[#allocation11 + $0xb4] sm:$0xf]
        %v2908 = vld [vmem:[#allocation11 + $0xb8] sm:$0xf]
        %v2909 = vld [vmem:[#allocation11 + $0xbc] sm:$0xf]
        %s2910 = scalar_lea.vmem [#allocation11], 192
        %v2911 = vld [vmem:[%s2910] sm:$0xf]
        %v2912 = vld [vmem:[%s2910 + $0x4] sm:$0xf]
        %v2913 = vld [vmem:[%s2910 + $0x8] sm:$0xf]
        %v2914 = vld [vmem:[%s2910 + $0xc] sm:$0xf]
        %v2915 = vld [vmem:[%s2910 + $0x10] sm:$0xf]
        %v2916 = vld [vmem:[%s2910 + $0x14] sm:$0xf]
        %v2917 = vld [vmem:[%s2910 + $0x18] sm:$0xf]
        %v2918 = vld [vmem:[%s2910 + $0x1c] sm:$0xf]
        %v2919 = vld [vmem:[%s2910 + $0x20] sm:$0xf]
        %v2920 = vld [vmem:[%s2910 + $0x24] sm:$0xf]
        %v2921 = vld [vmem:[%s2910 + $0x28] sm:$0xf]
        %v2922 = vld [vmem:[%s2910 + $0x2c] sm:$0xf]
        %v2923 = vld [vmem:[%s2910 + $0x30] sm:$0xf]
        %v2924 = vld [vmem:[%s2910 + $0x34] sm:$0xf]
        %v2925 = vld [vmem:[%s2910 + $0x38] sm:$0xf]
        %v2926 = vld [vmem:[%s2910 + $0x3c] sm:$0xf]
        %v2927 = vld [vmem:[%s2910 + $0x40] sm:$0xf]
        %v2928 = vld [vmem:[%s2910 + $0x44] sm:$0xf]
        %v2929 = vld [vmem:[%s2910 + $0x48] sm:$0xf]
        %v2930 = vld [vmem:[%s2910 + $0x4c] sm:$0xf]
        %v2931 = vld [vmem:[%s2910 + $0x50] sm:$0xf]
        %v2932 = vld [vmem:[%s2910 + $0x54] sm:$0xf]
        %v2933 = vld [vmem:[%s2910 + $0x58] sm:$0xf]
        %v2934 = vld [vmem:[%s2910 + $0x5c] sm:$0xf]
        %v2935 = vld [vmem:[%s2910 + $0x60] sm:$0xf]
        %v2936 = vld [vmem:[%s2910 + $0x64] sm:$0xf]
        %v2937 = vld [vmem:[%s2910 + $0x68] sm:$0xf]
        %v2938 = vld [vmem:[%s2910 + $0x6c] sm:$0xf]
        %v2939 = vld [vmem:[%s2910 + $0x70] sm:$0xf]
        %v2940 = vld [vmem:[%s2910 + $0x74] sm:$0xf]
        %v2941 = vld [vmem:[%s2910 + $0x78] sm:$0xf]
        %v2942 = vld [vmem:[%s2910 + $0x7c] sm:$0xf]
        %v2943 = vld [vmem:[%s2910 + $0x80] sm:$0xf]
        %v2944 = vld [vmem:[%s2910 + $0x84] sm:$0xf]
        %v2945 = vld [vmem:[%s2910 + $0x88] sm:$0xf]
        %v2946 = vld [vmem:[%s2910 + $0x8c] sm:$0xf]
        %v2947 = vld [vmem:[%s2910 + $0x90] sm:$0xf]
        %v2948 = vld [vmem:[%s2910 + $0x94] sm:$0xf]
        %v2949 = vld [vmem:[%s2910 + $0x98] sm:$0xf]
        %v2950 = vld [vmem:[%s2910 + $0x9c] sm:$0xf]
        %v2951 = vld [vmem:[%s2910 + $0xa0] sm:$0xf]
        %v2952 = vld [vmem:[%s2910 + $0xa4] sm:$0xf]
        %v2953 = vld [vmem:[%s2910 + $0xa8] sm:$0xf]
        %v2954 = vld [vmem:[%s2910 + $0xac] sm:$0xf]
        %v2955 = vld [vmem:[%s2910 + $0xb0] sm:$0xf]
        %v2956 = vld [vmem:[%s2910 + $0xb4] sm:$0xf]
        %v2957 = vld [vmem:[%s2910 + $0xb8] sm:$0xf]
        %v2958 = vld [vmem:[%s2910 + $0xbc] sm:$0xf]
        %v2959 = vpack.c.b16 %v2621, %v2617
        %v3017 = vunpack.c.l.b16 %v2911
        %v3018 = vunpack.c.l.b16 %v2912
        %v3019 = vunpack.c.l.b16 %v2913
        %v3020 = vunpack.c.l.b16 %v2914
        %v3021 = vunpack.c.l.b16 %v2915
        %v3022 = vunpack.c.l.b16 %v2916
        %v3023 = vunpack.c.l.b16 %v2917
        %v3024 = vunpack.c.l.b16 %v2918
        %v3025 = vunpack.c.l.b16 %v2919
        %v3026 = vunpack.c.l.b16 %v2920
        %v3027 = vunpack.c.l.b16 %v2921
        %v3028 = vunpack.c.l.b16 %v2922
        %v3029 = vunpack.c.l.b16 %v2923
        %v3030 = vunpack.c.l.b16 %v2924
        %v3031 = vunpack.c.l.b16 %v2925
        %v3032 = vunpack.c.l.b16 %v2926
        %v3033 = vunpack.c.l.b16 %v2927
        %v3034 = vunpack.c.l.b16 %v2928
        %v3035 = vunpack.c.l.b16 %v2929
        %v3036 = vunpack.c.l.b16 %v2930
        %v3037 = vunpack.c.l.b16 %v2931
        %v3038 = vunpack.c.l.b16 %v2932
        %v3039 = vunpack.c.l.b16 %v2933
        %v3040 = vunpack.c.l.b16 %v2934
        %v3041 = vunpack.c.l.b16 %v2935
        %v3042 = vunpack.c.l.b16 %v2936
        %v3043 = vunpack.c.l.b16 %v2937
        %v3044 = vunpack.c.l.b16 %v2938
        %v3045 = vunpack.c.l.b16 %v2939
        %v3046 = vunpack.c.l.b16 %v2940
        %v3047 = vunpack.c.l.b16 %v2941
        %v3048 = vunpack.c.l.b16 %v2942
        %v3049 = vunpack.c.l.b16 %v2943
        %v3050 = vunpack.c.l.b16 %v2944
        %v3051 = vunpack.c.l.b16 %v2945
        %v3052 = vunpack.c.l.b16 %v2946
        %v3053 = vunpack.c.l.b16 %v2947
        %v3054 = vunpack.c.l.b16 %v2948
        %v3055 = vunpack.c.l.b16 %v2949
        %v3056 = vunpack.c.l.b16 %v2950
        %v3057 = vunpack.c.l.b16 %v2951
        %v3058 = vunpack.c.l.b16 %v2952
        %v3059 = vunpack.c.l.b16 %v2953
        %v3060 = vunpack.c.l.b16 %v2954
        %v3061 = vunpack.c.l.b16 %v2955
        %v3062 = vunpack.c.l.b16 %v2956
        %v3063 = vunpack.c.l.b16 %v2957
        %v3064 = vunpack.c.l.b16 %v2958
        %v3065 = vpack.c.b16 %v3018, %v3017
        %v3066 = vpack.c.b16 %v3020, %v3019
        %v3067 = vpack.c.b16 %v3022, %v3021
        %v3068 = vpack.c.b16 %v3024, %v3023
        %v3069 = vpack.c.b16 %v3026, %v3025
        %v3070 = vpack.c.b16 %v3028, %v3027
        %v3071 = vpack.c.b16 %v3030, %v3029
        %v3072 = vpack.c.b16 %v3032, %v3031
        %v3073 = vpack.c.b16 %v3034, %v3033
        %v3074 = vpack.c.b16 %v3036, %v3035
        %v3075 = vpack.c.b16 %v3038, %v3037
        %v3076 = vpack.c.b16 %v3040, %v3039
        %v3077 = vpack.c.b16 %v3042, %v3041
        %v3078 = vpack.c.b16 %v3044, %v3043
        %v3079 = vpack.c.b16 %v3046, %v3045
        %v3080 = vpack.c.b16 %v3048, %v3047
        %v3081 = vpack.c.b16 %v3050, %v3049
        %v3082 = vpack.c.b16 %v3052, %v3051
        %v3083 = vpack.c.b16 %v3054, %v3053
        %v3084 = vpack.c.b16 %v3056, %v3055
        %v3085 = vpack.c.b16 %v3058, %v3057
        %v3086 = vpack.c.b16 %v3060, %v3059
        %v3087 = vpack.c.b16 %v3062, %v3061
        %v3088 = vpack.c.b16 %v3064, %v3063
        %3113 = vmatprep.subr.bf16.mxu0 0
        %3114 = vmatpush1.bf16.msra.mxu0 %v3065
        %3115 = vmatprep.subr.bf16.mxu0 0
        %3116 = vmatpush1.bf16.msra.mxu0 %v3066
        %3117 = vmatprep.subr.bf16.mxu0 0
        %3118 = vmatpush1.bf16.msra.mxu0 %v3067
        %3119 = vmatprep.subr.bf16.mxu0 0
        %3120 = vmatpush1.bf16.msra.mxu0 %v3068
        %3121 = vmatprep.subr.bf16.mxu0 0
        %3122 = vmatpush1.bf16.msra.mxu0 %v3069
        %3123 = vmatprep.subr.bf16.mxu0 0
        %3124 = vmatpush1.bf16.msra.mxu0 %v3070
        %3125 = vmatprep.subr.bf16.mxu0 0
        %3126 = vmatpush1.bf16.msra.mxu0 %v3071
        %3127 = vmatprep.subr.bf16.mxu0 0
        %3128 = vmatpush1.bf16.msra.mxu0 %v3072
        %3129 = vmatprep.subr.bf16.mxu0 0
        %3130 = vmatpush1.bf16.msra.mxu0 %v3073
        %3131 = vmatprep.subr.bf16.mxu0 0
        %3132 = vmatpush1.bf16.msra.mxu0 %v3074
        %3133 = vmatprep.subr.bf16.mxu0 0
        %3134 = vmatpush1.bf16.msra.mxu0 %v3075
        %3135 = vmatprep.subr.bf16.mxu0 0
        %3136 = vmatpush1.bf16.msra.mxu0 %v3076
        %3137 = vmatprep.subr.bf16.mxu0 0
        %3138 = vmatpush1.bf16.msra.mxu0 %v3077
        %3139 = vmatprep.subr.bf16.mxu0 0
        %3140 = vmatpush1.bf16.msra.mxu0 %v3078
        %3141 = vmatprep.subr.bf16.mxu0 0
        %3142 = vmatpush1.bf16.msra.mxu0 %v3079
        %3143 = vmatprep.subr.bf16.mxu0 0
        %3144 = vmatpush1.bf16.msra.mxu0 %v3080
        %3145 = vmatprep.mubr.bf16.mxu0 %v2628
        %3146 = vmatmul.mubr.bf16.gmra.mrb[0].mxu0 %v2624
        %v3147 = vpop.f32.mrb[0].mxu0
        %v3148 = vadd.f32 0.0, %v3147
        %v3149 = vpop.f32.mrb[0].mxu0
        %v3150 = vpop.f32.mrb[0].mxu0
        %v3151 = vadd.f32 0.0, %v3150
        %v3152 = vpop.f32.mrb[0].mxu0
        %3153 = vmatprep.mubr.bf16.mxu0 %v2636
        %3154 = vmatmul.mubr.bf16.gmra.mrb[0].mxu0 %v2632
        %v3155 = vpop.f32.mrb[0].mxu0
        %v3156 = vadd.f32 0.0, %v3155
        %v3157 = vpop.f32.mrb[0].mxu0
        %v3158 = vpop.f32.mrb[0].mxu0
        %v3159 = vadd.f32 0.0, %v3158
        %v3160 = vpop.f32.mrb[0].mxu0
        %3161 = vmatprep.mubr.bf16.mxu0 %v2644
        %3162 = vmatmul.mubr.bf16.gmra.mrb[0].mxu0 %v2640
        %v3163 = vpop.f32.mrb[0].mxu0
        %v3164 = vadd.f32 0.0, %v3163
        %v3165 = vpop.f32.mrb[0].mxu0
        %v3166 = vpop.f32.mrb[0].mxu0
        %v3167 = vadd.f32 0.0, %v3166
        %v3168 = vpop.f32.mrb[0].mxu0
        %3169 = vmatprep.mubr.bf16.mxu0 %v2652
        %3170 = vmatmul.mubr.bf16.gmra.mrb[0].mxu0 %v2648
        %v3171 = vpop.f32.mrb[0].mxu0
        %v3172 = vadd.f32 0.0, %v3171
        %v3173 = vpop.f32.mrb[0].mxu0
        %v3174 = vpop.f32.mrb[0].mxu0
        %v3175 = vadd.f32 0.0, %v3174
        %v3176 = vpop.f32.mrb[0].mxu0
        %3177 = vdwg.mxu0
        %3178 = vmatprep.subr.bf16.mxu0 0
        %3179 = vmatpush1.bf16.msra.mxu0 %v3081
        %3180 = vmatprep.subr.bf16.mxu0 0
        %3181 = vmatpush1.bf16.msra.mxu0 %v3082
        %3182 = vmatprep.subr.bf16.mxu0 0
        %3183 = vmatpush1.bf16.msra.mxu0 %v3083
        %3184 = vmatprep.subr.bf16.mxu0 0
        %3185 = vmatpush1.bf16.msra.mxu0 %v3084
        %3186 = vmatprep.subr.bf16.mxu0 0
        %3187 = vmatpush1.bf16.msra.mxu0 %v3085
        %3188 = vmatprep.subr.bf16.mxu0 0
        %3189 = vmatpush1.bf16.msra.mxu0 %v3086
        %3190 = vmatprep.subr.bf16.mxu0 0
        %3191 = vmatpush1.bf16.msra.mxu0 %v3087
        %3192 = vmatprep.subr.bf16.mxu0 0
        %3193 = vmatpush1.bf16.msra.mxu0 %v3088
        %3194 = vmatprep.subr.bf16.mxu0 0
        %3195 = vmatpush1.bf16.msra.mxu0 0
        %3196 = vmatprep.subr.bf16.mxu0 0
        %3197 = vmatpush1.bf16.msra.mxu0 0
        %3198 = vmatprep.subr.bf16.mxu0 0
        %3199 = vmatpush1.bf16.msra.mxu0 0
        %3200 = vmatprep.subr.bf16.mxu0 0
        %3201 = vmatpush1.bf16.msra.mxu0 0
        %3202 = vmatprep.subr.bf16.mxu0 0
        %3203 = vmatpush1.bf16.msra.mxu0 0
        %3204 = vmatprep.subr.bf16.mxu0 0
        %3205 = vmatpush1.bf16.msra.mxu0 0
        %3206 = vmatprep.subr.bf16.mxu0 0
        %3207 = vmatpush1.bf16.msra.mxu0 0
        %3208 = vmatprep.subr.bf16.mxu0 0
        %3209 = vmatpush1.bf16.msra.mxu0 0
        %3210 = vmatprep.mubr.bf16.mxu0 0
        %3211 = vmatmul.mubr.bf16.gmra.mrb[0].mxu0 %v2632
        %v3212 = vpop.f32.mrb[0].mxu0
        %v3213 = vadd.f32 %v3148, %v3212
        %v3214 = vpop.f32.mrb[0].mxu0
        %v3215 = vpop.f32.mrb[0].mxu0
        %v3216 = vadd.f32 %v3151, %v3215
        %v3217 = vpop.f32.mrb[0].mxu0
        %3218 = vmatprep.mubr.bf16.mxu0 0
        %3219 = vmatmul.mubr.bf16.gmra.mrb[0].mxu0 %v2640
        %v3220 = vpop.f32.mrb[0].mxu0
        %v3221 = vadd.f32 %v3156, %v3220
        %v3222 = vpop.f32.mrb[0].mxu0
        %v3223 = vpop.f32.mrb[0].mxu0
        %v3224 = vadd.f32 %v3159, %v3223
        %v3225 = vpop.f32.mrb[0].mxu0
        %3226 = vmatprep.mubr.bf16.mxu0 0
        %3227 = vmatmul.mubr.bf16.gmra.mrb[0].mxu0 %v2648
        %v3228 = vpop.f32.mrb[0].mxu0
        %v3229 = vadd.f32 %v3164, %v3228
        %v3230 = vpop.f32.mrb[0].mxu0
        %v3231 = vpop.f32.mrb[0].mxu0
        %v3232 = vadd.f32 %v3167, %v3231
        %v3233 = vpop.f32.mrb[0].mxu0
        %3234 = vmatprep.mubr.bf16.mxu0 0
        %3235 = vmatmul.mubr.bf16.gmra.mrb[0].mxu0 %v2959
        %v3236 = vpop.f32.mrb[0].mxu0
        %v3237 = vadd.f32 %v3172, %v3236
        %v3238 = vpop.f32.mrb[0].mxu0
        %v3239 = vpop.f32.mrb[0].mxu0
        %v3240 = vadd.f32 %v3175, %v3239
        %v3241 = vpop.f32.mrb[0].mxu0
        %3242 = vdwg.mxu0
        %v3243 = vunpack.c.l.b16 %v2666
        %v3244 = vunpack.c.h.b16 %v2666
        %v3245 = vunpack.c.l.b16 %v2679
        %v3246 = vunpack.c.l.b16 %v2692
        %v3247 = vunpack.c.h.b16 %v2692
        %v3248 = vunpack.c.l.b16 %v2705
        %v3249 = vunpack.c.l.b16 %v2718
        %v3250 = vunpack.c.h.b16 %v2718
        %v3251 = vunpack.c.l.b16 %v2731
        %v3252 = vunpack.c.l.b16 %v2744
        %v3253 = vunpack.c.h.b16 %v2744
        %v3254 = vunpack.c.l.b16 %v2757
        %v3255 = vunpack.c.l.b16 %v2770
        %v3256 = vunpack.c.h.b16 %v2770
        %v3257 = vunpack.c.l.b16 %v2783
        %v3258 = vunpack.c.l.b16 %v2796
        %v3259 = vunpack.c.h.b16 %v2796
        %v3260 = vunpack.c.l.b16 %v2809
        %v3261 = vunpack.c.l.b16 %v2822
        %v3262 = vunpack.c.h.b16 %v2822
        %v3263 = vunpack.c.l.b16 %v2835
        %v3264 = vunpack.c.l.b16 %v2848
        %v3265 = vunpack.c.h.b16 %v2848
        %v3266 = vunpack.c.l.b16 %v2861
        %v3267 = vpack.c.b16 %v3246, %v3243
        %v3268 = vpack.c.b16 %v3247, %v3244
        %v3269 = vpack.c.b16 %v3248, %v3245
        %v3270 = vpack.c.b16 %v3252, %v3249
        %v3271 = vpack.c.b16 %v3253, %v3250
        %v3272 = vpack.c.b16 %v3254, %v3251
        %v3273 = vpack.c.b16 %v3258, %v3255
        %v3274 = vpack.c.b16 %v3259, %v3256
        %v3275 = vpack.c.b16 %v3260, %v3257
        %v3276 = vpack.c.b16 %v3264, %v3261
        %v3277 = vpack.c.b16 %v3265, %v3262
        %v3278 = vpack.c.b16 %v3266, %v3263
        %v3339 = vunpack.c.l.b16 %v2862
        %v3340 = vunpack.c.l.b16 %v2863
        %v3341 = vunpack.c.l.b16 %v2864
        %v3342 = vunpack.c.l.b16 %v2865
        %v3343 = vunpack.c.l.b16 %v2866
        %v3344 = vunpack.c.l.b16 %v2867
        %v3345 = vunpack.c.l.b16 %v2868
        %v3346 = vunpack.c.l.b16 %v2869
        %v3347 = vunpack.c.l.b16 %v2870
        %v3348 = vunpack.c.l.b16 %v2871
        %v3349 = vunpack.c.l.b16 %v2872
        %v3350 = vunpack.c.l.b16 %v2873
        %v3351 = vunpack.c.l.b16 %v2874
        %v3352 = vunpack.c.l.b16 %v2875
        %v3353 = vunpack.c.l.b16 %v2876
        %v3354 = vunpack.c.l.b16 %v2877
        %v3355 = vunpack.c.l.b16 %v2878
        %v3356 = vunpack.c.l.b16 %v2879
        %v3357 = vunpack.c.l.b16 %v2880
        %v3358 = vunpack.c.l.b16 %v2881
        %v3359 = vunpack.c.l.b16 %v2882
        %v3360 = vunpack.c.l.b16 %v2883
        %v3361 = vunpack.c.l.b16 %v2884
        %v3362 = vunpack.c.l.b16 %v2885
        %v3363 = vunpack.c.l.b16 %v2886
        %v3364 = vunpack.c.l.b16 %v2887
        %v3365 = vunpack.c.l.b16 %v2888
        %v3366 = vunpack.c.l.b16 %v2889
        %v3367 = vunpack.c.l.b16 %v2890
        %v3368 = vunpack.c.l.b16 %v2891
        %v3369 = vunpack.c.l.b16 %v2892
        %v3370 = vunpack.c.l.b16 %v2893
        %v3371 = vunpack.c.l.b16 %v2894
        %v3372 = vunpack.c.l.b16 %v2895
        %v3373 = vunpack.c.l.b16 %v2896
        %v3374 = vunpack.c.l.b16 %v2897
        %v3375 = vunpack.c.l.b16 %v2898
        %v3376 = vunpack.c.l.b16 %v2899
        %v3377 = vunpack.c.l.b16 %v2900
        %v3378 = vunpack.c.l.b16 %v2901
        %v3379 = vunpack.c.l.b16 %v2902
        %v3380 = vunpack.c.l.b16 %v2903
        %v3381 = vunpack.c.l.b16 %v2904
        %v3382 = vunpack.c.l.b16 %v2905
        %v3383 = vunpack.c.l.b16 %v2906
        %v3384 = vunpack.c.l.b16 %v2907
        %v3385 = vunpack.c.l.b16 %v2908
        %v3386 = vunpack.c.l.b16 %v2909
        %v3387 = vpack.c.b16 %v3340, %v3339
        %v3388 = vpack.c.b16 %v3342, %v3341
        %v3389 = vpack.c.b16 %v3344, %v3343
        %v3390 = vpack.c.b16 %v3346, %v3345
        %v3391 = vpack.c.b16 %v3348, %v3347
        %v3392 = vpack.c.b16 %v3350, %v3349
        %v3393 = vpack.c.b16 %v3352, %v3351
        %v3394 = vpack.c.b16 %v3354, %v3353
        %v3395 = vpack.c.b16 %v3356, %v3355
        %v3396 = vpack.c.b16 %v3358, %v3357
        %v3397 = vpack.c.b16 %v3360, %v3359
        %v3398 = vpack.c.b16 %v3362, %v3361
        %v3399 = vpack.c.b16 %v3364, %v3363
        %v3400 = vpack.c.b16 %v3366, %v3365
        %v3401 = vpack.c.b16 %v3368, %v3367
        %v3402 = vpack.c.b16 %v3370, %v3369
        %v3403 = vpack.c.b16 %v3372, %v3371
        %v3404 = vpack.c.b16 %v3374, %v3373
        %v3405 = vpack.c.b16 %v3376, %v3375
        %v3406 = vpack.c.b16 %v3378, %v3377
        %v3407 = vpack.c.b16 %v3380, %v3379
        %v3408 = vpack.c.b16 %v3382, %v3381
        %v3409 = vpack.c.b16 %v3384, %v3383
        %v3410 = vpack.c.b16 %v3386, %v3385
        %3435 = vmatprep.subr.bf16.mxu0 0
        %3436 = vmatpush1.bf16.msra.mxu0 %v3387
        %3437 = vmatprep.subr.bf16.mxu0 0
        %3438 = vmatpush1.bf16.msra.mxu0 %v3388
        %3439 = vmatprep.subr.bf16.mxu0 0
        %3440 = vmatpush1.bf16.msra.mxu0 %v3389
        %3441 = vmatprep.subr.bf16.mxu0 0
        %3442 = vmatpush1.bf16.msra.mxu0 %v3390
        %3443 = vmatprep.subr.bf16.mxu0 0
        %3444 = vmatpush1.bf16.msra.mxu0 %v3391
        %3445 = vmatprep.subr.bf16.mxu0 0
        %3446 = vmatpush1.bf16.msra.mxu0 %v3392
        %3447 = vmatprep.subr.bf16.mxu0 0
        %3448 = vmatpush1.bf16.msra.mxu0 %v3393
        %3449 = vmatprep.subr.bf16.mxu0 0
        %3450 = vmatpush1.bf16.msra.mxu0 %v3394
        %3451 = vmatprep.subr.bf16.mxu0 0
        %3452 = vmatpush1.bf16.msra.mxu0 %v3395
        %3453 = vmatprep.subr.bf16.mxu0 0
        %3454 = vmatpush1.bf16.msra.mxu0 %v3396
        %3455 = vmatprep.subr.bf16.mxu0 0
        %3456 = vmatpush1.bf16.msra.mxu0 %v3397
        %3457 = vmatprep.subr.bf16.mxu0 0
        %3458 = vmatpush1.bf16.msra.mxu0 %v3398
        %3459 = vmatprep.subr.bf16.mxu0 0
        %3460 = vmatpush1.bf16.msra.mxu0 %v3399
        %3461 = vmatprep.subr.bf16.mxu0 0
        %3462 = vmatpush1.bf16.msra.mxu0 %v3400
        %3463 = vmatprep.subr.bf16.mxu0 0
        %3464 = vmatpush1.bf16.msra.mxu0 %v3401
        %3465 = vmatprep.subr.bf16.mxu0 0
        %3466 = vmatpush1.bf16.msra.mxu0 %v3402
        %3467 = vmatprep.mubr.bf16.mxu0 %v3268
        %3468 = vmatmul.mubr.bf16.gmra.mrb[0].mxu0 %v3267
        %v3469 = vpop.f32.mrb[0].mxu0
        %v3470 = vadd.f32 %v3213, %v3469
        %v3471 = vpop.f32.mrb[0].mxu0
        %v3472 = vpop.f32.mrb[0].mxu0
        %v3473 = vadd.f32 %v3216, %v3472
        %v3474 = vpop.f32.mrb[0].mxu0
        %3475 = vmatprep.mubr.bf16.mxu0 %v3271
        %3476 = vmatmul.mubr.bf16.gmra.mrb[0].mxu0 %v3270
        %v3477 = vpop.f32.mrb[0].mxu0
        %v3478 = vadd.f32 %v3221, %v3477
        %v3479 = vpop.f32.mrb[0].mxu0
        %v3480 = vpop.f32.mrb[0].mxu0
        %v3481 = vadd.f32 %v3224, %v3480
        %v3482 = vpop.f32.mrb[0].mxu0
        %3483 = vmatprep.mubr.bf16.mxu0 %v3274
        %3484 = vmatmul.mubr.bf16.gmra.mrb[0].mxu0 %v3273
        %v3485 = vpop.f32.mrb[0].mxu0
        %v3486 = vadd.f32 %v3229, %v3485
        %v3487 = vpop.f32.mrb[0].mxu0
        %v3488 = vpop.f32.mrb[0].mxu0
        %v3489 = vadd.f32 %v3232, %v3488
        %v3490 = vpop.f32.mrb[0].mxu0
        %3491 = vmatprep.mubr.bf16.mxu0 %v3277
        %3492 = vmatmul.mubr.bf16.gmra.mrb[0].mxu0 %v3276
        %v3493 = vpop.f32.mrb[0].mxu0
        %v3494 = vadd.f32 %v3237, %v3493
        %v3495 = vpop.f32.mrb[0].mxu0
        %v3496 = vpop.f32.mrb[0].mxu0
        %v3497 = vadd.f32 %v3240, %v3496
        %v3498 = vpop.f32.mrb[0].mxu0
        %3499 = vdwg.mxu0
        %3500 = vmatprep.subr.bf16.mxu0 0
        %3501 = vmatpush1.bf16.msra.mxu0 %v3403
        %3502 = vmatprep.subr.bf16.mxu0 0
        %3503 = vmatpush1.bf16.msra.mxu0 %v3404
        %3504 = vmatprep.subr.bf16.mxu0 0
        %3505 = vmatpush1.bf16.msra.mxu0 %v3405
        %3506 = vmatprep.subr.bf16.mxu0 0
        %3507 = vmatpush1.bf16.msra.mxu0 %v3406
        %3508 = vmatprep.subr.bf16.mxu0 0
        %3509 = vmatpush1.bf16.msra.mxu0 %v3407
        %3510 = vmatprep.subr.bf16.mxu0 0
        %3511 = vmatpush1.bf16.msra.mxu0 %v3408
        %3512 = vmatprep.subr.bf16.mxu0 0
        %3513 = vmatpush1.bf16.msra.mxu0 %v3409
        %3514 = vmatprep.subr.bf16.mxu0 0
        %3515 = vmatpush1.bf16.msra.mxu0 %v3410
        %3516 = vmatprep.subr.bf16.mxu0 0
        %3517 = vmatpush1.bf16.msra.mxu0 0
        %3518 = vmatprep.subr.bf16.mxu0 0
        %3519 = vmatpush1.bf16.msra.mxu0 0
        %3520 = vmatprep.subr.bf16.mxu0 0
        %3521 = vmatpush1.bf16.msra.mxu0 0
        %3522 = vmatprep.subr.bf16.mxu0 0
        %3523 = vmatpush1.bf16.msra.mxu0 0
        %3524 = vmatprep.subr.bf16.mxu0 0
        %3525 = vmatpush1.bf16.msra.mxu0 0
        %3526 = vmatprep.subr.bf16.mxu0 0
        %3527 = vmatpush1.bf16.msra.mxu0 0
        %3528 = vmatprep.subr.bf16.mxu0 0
        %3529 = vmatpush1.bf16.msra.mxu0 0
        %3530 = vmatprep.subr.bf16.mxu0 0
        %3531 = vmatpush1.bf16.msra.mxu0 0
        %3532 = vmatprep.mubr.bf16.mxu0 0
        %3533 = vmatmul.mubr.bf16.gmra.mrb[0].mxu0 %v3269
        %v3534 = vpop.f32.mrb[0].mxu0
        %v3535 = vadd.f32 %v3470, %v3534
        %v3536 = vpop.f32.mrb[0].mxu0
        %v3537 = vpop.f32.mrb[0].mxu0
        %v3538 = vadd.f32 %v3473, %v3537
        %v3539 = vpop.f32.mrb[0].mxu0
        %3540 = vmatprep.mubr.bf16.mxu0 0
        %3541 = vmatmul.mubr.bf16.gmra.mrb[0].mxu0 %v3272
        %v3542 = vpop.f32.mrb[0].mxu0
        %v3543 = vadd.f32 %v3478, %v3542
        %v3544 = vpop.f32.mrb[0].mxu0
        %v3545 = vpop.f32.mrb[0].mxu0
        %v3546 = vadd.f32 %v3481, %v3545
        %v3547 = vpop.f32.mrb[0].mxu0
        %3548 = vmatprep.mubr.bf16.mxu0 0
        %3549 = vmatmul.mubr.bf16.gmra.mrb[0].mxu0 %v3275
        %v3550 = vpop.f32.mrb[0].mxu0
        %v3551 = vadd.f32 %v3486, %v3550
        %v3552 = vpop.f32.mrb[0].mxu0
        %v3553 = vpop.f32.mrb[0].mxu0
        %v3554 = vadd.f32 %v3489, %v3553
        %v3555 = vpop.f32.mrb[0].mxu0
        %3556 = vmatprep.mubr.bf16.mxu0 0
        %3557 = vmatmul.mubr.bf16.gmra.mrb[0].mxu0 %v3278
        %v3558 = vpop.f32.mrb[0].mxu0
        %v3559 = vadd.f32 %v3494, %v3558
        %v3560 = vpop.f32.mrb[0].mxu0
        %v3561 = vpop.f32.mrb[0].mxu0
        %v3562 = vadd.f32 %v3497, %v3561
        %v3563 = vpop.f32.mrb[0].mxu0
        %3564 = vdwg.mxu0
        %v3565 = vld [vmem:[#allocation2 + $0x4] sm:$0xf]
        %v3566 = vld [vmem:[#allocation2 + $0x8] sm:$0x1]
        %v3567 = vld [vmem:[#allocation2 + $0x10] sm:$0xf]
        %v3568 = vld [vmem:[#allocation2 + $0x14] sm:$0x1]
        %v3569 = vld [vmem:[#allocation2 + $0x1c] sm:$0xf]
        %v3570 = vld [vmem:[#allocation2 + $0x20] sm:$0x1]
        %v3571 = vld [vmem:[#allocation2 + $0x28] sm:$0xf]
        %v3572 = vld [vmem:[#allocation2 + $0x2c] sm:$0x1]
        %v3573 = vld [vmem:[#allocation2 + $0x34] sm:$0xf]
        %v3574 = vld [vmem:[#allocation2 + $0x38] sm:$0x1]
        %v3575 = vld [vmem:[#allocation2 + $0x40] sm:$0xf]
        %v3576 = vld [vmem:[#allocation2 + $0x44] sm:$0x1]
        %v3577 = vld [vmem:[#allocation2 + $0x4c] sm:$0xf]
        %v3578 = vld [vmem:[#allocation2 + $0x50] sm:$0x1]
        %v3579 = vld [vmem:[#allocation2 + $0x58] sm:$0xf]
        %v3580 = vld [vmem:[#allocation2 + $0x5c] sm:$0x1]
        %v3581 = vld [vmem:[#allocation2 + $0x64] sm:$0xf]
        %v3582 = vld [vmem:[#allocation2 + $0x68] sm:$0x1]
        %v3583 = vld [vmem:[#allocation2 + $0x70] sm:$0xf]
        %v3584 = vld [vmem:[#allocation2 + $0x74] sm:$0x1]
        %v3601 = vunpack.c.l.b16 %v3565
        %v3602 = vunpack.c.l.b16 %v3566
        %v3603 = vunpack.c.l.b16 %v3567
        %v3604 = vunpack.c.l.b16 %v3568
        %v3605 = vunpack.c.l.b16 %v3569
        %v3606 = vunpack.c.l.b16 %v3570
        %v3607 = vunpack.c.l.b16 %v3571
        %v3608 = vunpack.c.l.b16 %v3572
        %v3609 = vunpack.c.l.b16 %v3573
        %v3610 = vunpack.c.l.b16 %v3574
        %v3611 = vunpack.c.l.b16 %v3575
        %v3612 = vunpack.c.l.b16 %v3576
        %v3613 = vunpack.c.l.b16 %v3577
        %v3614 = vunpack.c.l.b16 %v3578
        %v3615 = vunpack.c.l.b16 %v3579
        %v3616 = vunpack.c.l.b16 %v3580
        %v3619 = vunpack.c.l.b16 %v3581
        %v3620 = vunpack.c.l.b16 %v3582
        %v3623 = vunpack.c.l.b16 %v3583
        %v3624 = vunpack.c.l.b16 %v3584
        %v3625 = vpack.c.b16 %v3603, %v3601
        %v3626 = vpack.c.b16 %v3605, %v3605
        %v3627 = vpack.c.b16 %v3604, %v3602
        %v3628 = vpack.c.b16 %v3606, %v3606
        %v3629 = vpack.c.b16 %v3605, %v3603
        %v3630 = vpack.c.b16 %v3607, %v3607
        %v3631 = vpack.c.b16 %v3606, %v3604
        %v3632 = vpack.c.b16 %v3608, %v3608
        %v3633 = vpack.c.b16 %v3607, %v3605
        %v3634 = vpack.c.b16 %v3609, %v3609
        %v3635 = vpack.c.b16 %v3608, %v3606
        %v3636 = vpack.c.b16 %v3610, %v3610
        %v3637 = vpack.c.b16 %v3609, %v3607
        %v3638 = vpack.c.b16 %v3611, %v3611
        %v3639 = vpack.c.b16 %v3610, %v3608
        %v3640 = vpack.c.b16 %v3612, %v3612
        %v3641 = vpack.c.b16 %v3611, %v3609
        %v3642 = vpack.c.b16 %v3613, %v3613
        %v3643 = vpack.c.b16 %v3612, %v3610
        %v3644 = vpack.c.b16 %v3614, %v3614
        %v3645 = vpack.c.b16 %v3613, %v3611
        %v3646 = vpack.c.b16 %v3615, %v3615
        %v3647 = vpack.c.b16 %v3614, %v3612
        %v3648 = vpack.c.b16 %v3616, %v3616
        %v3649 = vpack.c.b16 %v3615, %v3613
        %v3650 = vpack.c.b16 %v3619, %v3619
        %v3651 = vpack.c.b16 %v3616, %v3614
        %v3652 = vpack.c.b16 %v3620, %v3620
        %v3653 = vpack.c.b16 %v3619, %v3615
        %v3654 = vpack.c.b16 %v3623, %v3623
        %v3655 = vpack.c.b16 %v3620, %v3616
        %v3656 = vpack.c.b16 %v3624, %v3624
        %v3658 = vshrl.u32 %v3625, 16
        %v3660 = vrot.slane %v3658, 4
        %v3661 = vshll.u32 %v3625, 16
        %v3663 = vrot.slane %v3661, 5
        %v3664 = vor.u32 %v3660, %v3663
        %v3665 = vrot.slane %v3664, 4
        %v3667 = vshll.u32 %v3627, 16
        %v3669 = vrot.slane %v3667, 5
        %v3670 = vsel %vm1919, %v3665, %v3669
        %v3672 = vshrl.u32 %v3626, 16
        %v3674 = vrot.slane %v3672, 4
        %v3675 = vshll.u32 %v3626, 16
        %v3677 = vrot.slane %v3675, 5
        %v3678 = vor.u32 %v3674, %v3677
        %v3679 = vrot.slane %v3678, 4
        %v3681 = vshll.u32 %v3628, 16
        %v3683 = vrot.slane %v3681, 5
        %v3684 = vsel %vm1919, %v3679, %v3683
        %v3686 = vshrl.u32 %v3629, 16
        %v3688 = vrot.slane %v3686, 4
        %v3689 = vshll.u32 %v3629, 16
        %v3691 = vrot.slane %v3689, 5
        %v3692 = vor.u32 %v3688, %v3691
        %v3693 = vrot.slane %v3692, 4
        %v3695 = vshll.u32 %v3631, 16
        %v3697 = vrot.slane %v3695, 5
        %v3698 = vsel %vm1919, %v3693, %v3697
        %v3700 = vshrl.u32 %v3630, 16
        %v3702 = vrot.slane %v3700, 4
        %v3703 = vshll.u32 %v3630, 16
        %v3705 = vrot.slane %v3703, 5
        %v3706 = vor.u32 %v3702, %v3705
        %v3707 = vrot.slane %v3706, 4
        %v3709 = vshll.u32 %v3632, 16
        %v3711 = vrot.slane %v3709, 5
        %v3712 = vsel %vm1919, %v3707, %v3711
        %v3714 = vshrl.u32 %v3633, 16
        %v3716 = vrot.slane %v3714, 4
        %v3717 = vshll.u32 %v3633, 16
        %v3719 = vrot.slane %v3717, 5
        %v3720 = vor.u32 %v3716, %v3719
        %v3721 = vrot.slane %v3720, 4
        %v3723 = vshll.u32 %v3635, 16
        %v3725 = vrot.slane %v3723, 5
        %v3726 = vsel %vm1919, %v3721, %v3725
        %v3728 = vshrl.u32 %v3634, 16
        %v3730 = vrot.slane %v3728, 4
        %v3731 = vshll.u32 %v3634, 16
        %v3733 = vrot.slane %v3731, 5
        %v3734 = vor.u32 %v3730, %v3733
        %v3735 = vrot.slane %v3734, 4
        %v3737 = vshll.u32 %v3636, 16
        %v3739 = vrot.slane %v3737, 5
        %v3740 = vsel %vm1919, %v3735, %v3739
        %v3742 = vshrl.u32 %v3637, 16
        %v3744 = vrot.slane %v3742, 4
        %v3745 = vshll.u32 %v3637, 16
        %v3747 = vrot.slane %v3745, 5
        %v3748 = vor.u32 %v3744, %v3747
        %v3749 = vrot.slane %v3748, 4
        %v3751 = vshll.u32 %v3639, 16
        %v3753 = vrot.slane %v3751, 5
        %v3754 = vsel %vm1919, %v3749, %v3753
        %v3756 = vshrl.u32 %v3638, 16
        %v3758 = vrot.slane %v3756, 4
        %v3759 = vshll.u32 %v3638, 16
        %v3761 = vrot.slane %v3759, 5
        %v3762 = vor.u32 %v3758, %v3761
        %v3763 = vrot.slane %v3762, 4
        %v3765 = vshll.u32 %v3640, 16
        %v3767 = vrot.slane %v3765, 5
        %v3768 = vsel %vm1919, %v3763, %v3767
        %v3770 = vshrl.u32 %v3641, 16
        %v3772 = vrot.slane %v3770, 4
        %v3773 = vshll.u32 %v3641, 16
        %v3775 = vrot.slane %v3773, 5
        %v3776 = vor.u32 %v3772, %v3775
        %v3777 = vrot.slane %v3776, 4
        %v3779 = vshll.u32 %v3643, 16
        %v3781 = vrot.slane %v3779, 5
        %v3782 = vsel %vm1919, %v3777, %v3781
        %v3784 = vshrl.u32 %v3642, 16
        %v3786 = vrot.slane %v3784, 4
        %v3787 = vshll.u32 %v3642, 16
        %v3789 = vrot.slane %v3787, 5
        %v3790 = vor.u32 %v3786, %v3789
        %v3791 = vrot.slane %v3790, 4
        %v3793 = vshll.u32 %v3644, 16
        %v3795 = vrot.slane %v3793, 5
        %v3796 = vsel %vm1919, %v3791, %v3795
        %v3798 = vshrl.u32 %v3645, 16
        %v3800 = vrot.slane %v3798, 4
        %v3801 = vshll.u32 %v3645, 16
        %v3803 = vrot.slane %v3801, 5
        %v3804 = vor.u32 %v3800, %v3803
        %v3805 = vrot.slane %v3804, 4
        %v3807 = vshll.u32 %v3647, 16
        %v3809 = vrot.slane %v3807, 5
        %v3810 = vsel %vm1919, %v3805, %v3809
        %v3812 = vshrl.u32 %v3646, 16
        %v3814 = vrot.slane %v3812, 4
        %v3815 = vshll.u32 %v3646, 16
        %v3817 = vrot.slane %v3815, 5
        %v3818 = vor.u32 %v3814, %v3817
        %v3819 = vrot.slane %v3818, 4
        %v3821 = vshll.u32 %v3648, 16
        %v3823 = vrot.slane %v3821, 5
        %v3824 = vsel %vm1919, %v3819, %v3823
        %v3826 = vshrl.u32 %v3649, 16
        %v3828 = vrot.slane %v3826, 4
        %v3829 = vshll.u32 %v3649, 16
        %v3831 = vrot.slane %v3829, 5
        %v3832 = vor.u32 %v3828, %v3831
        %v3833 = vrot.slane %v3832, 4
        %v3835 = vshll.u32 %v3651, 16
        %v3837 = vrot.slane %v3835, 5
        %v3838 = vsel %vm1919, %v3833, %v3837
        %v3840 = vshrl.u32 %v3650, 16
        %v3842 = vrot.slane %v3840, 4
        %v3843 = vshll.u32 %v3650, 16
        %v3845 = vrot.slane %v3843, 5
        %v3846 = vor.u32 %v3842, %v3845
        %v3847 = vrot.slane %v3846, 4
        %v3849 = vshll.u32 %v3652, 16
        %v3851 = vrot.slane %v3849, 5
        %v3852 = vsel %vm1919, %v3847, %v3851
        %v3854 = vshrl.u32 %v3653, 16
        %v3856 = vrot.slane %v3854, 4
        %v3857 = vshll.u32 %v3653, 16
        %v3859 = vrot.slane %v3857, 5
        %v3860 = vor.u32 %v3856, %v3859
        %v3861 = vrot.slane %v3860, 4
        %v3863 = vshll.u32 %v3655, 16
        %v3865 = vrot.slane %v3863, 5
        %v3866 = vsel %vm1919, %v3861, %v3865
        %v3868 = vshrl.u32 %v3654, 16
        %v3870 = vrot.slane %v3868, 4
        %v3871 = vshll.u32 %v3654, 16
        %v3873 = vrot.slane %v3871, 5
        %v3874 = vor.u32 %v3870, %v3873
        %v3875 = vrot.slane %v3874, 4
        %v3877 = vshll.u32 %v3656, 16
        %v3879 = vrot.slane %v3877, 5
        %v3880 = vsel %vm1919, %v3875, %v3879
        %s3881 = scalar_lea.vmem [#allocation11], 384
        %v3882 = vld [vmem:[%s3881] sm:$0xf]
        %v3883 = vld [vmem:[%s3881 + $0x4] sm:$0xf]
        %v3884 = vld [vmem:[%s3881 + $0x8] sm:$0xf]
        %v3885 = vld [vmem:[%s3881 + $0xc] sm:$0xf]
        %v3886 = vld [vmem:[%s3881 + $0x10] sm:$0xf]
        %v3887 = vld [vmem:[%s3881 + $0x14] sm:$0xf]
        %v3888 = vld [vmem:[%s3881 + $0x18] sm:$0xf]
        %v3889 = vld [vmem:[%s3881 + $0x1c] sm:$0xf]
        %v3890 = vld [vmem:[%s3881 + $0x20] sm:$0xf]
        %v3891 = vld [vmem:[%s3881 + $0x24] sm:$0xf]
        %v3892 = vld [vmem:[%s3881 + $0x28] sm:$0xf]
        %v3893 = vld [vmem:[%s3881 + $0x2c] sm:$0xf]
        %v3894 = vld [vmem:[%s3881 + $0x30] sm:$0xf]
        %v3895 = vld [vmem:[%s3881 + $0x34] sm:$0xf]
        %v3896 = vld [vmem:[%s3881 + $0x38] sm:$0xf]
        %v3897 = vld [vmem:[%s3881 + $0x3c] sm:$0xf]
        %v3898 = vld [vmem:[%s3881 + $0x40] sm:$0xf]
        %v3899 = vld [vmem:[%s3881 + $0x44] sm:$0xf]
        %v3900 = vld [vmem:[%s3881 + $0x48] sm:$0xf]
        %v3901 = vld [vmem:[%s3881 + $0x4c] sm:$0xf]
        %v3902 = vld [vmem:[%s3881 + $0x50] sm:$0xf]
        %v3903 = vld [vmem:[%s3881 + $0x54] sm:$0xf]
        %v3904 = vld [vmem:[%s3881 + $0x58] sm:$0xf]
        %v3905 = vld [vmem:[%s3881 + $0x5c] sm:$0xf]
        %v3906 = vld [vmem:[%s3881 + $0x60] sm:$0xf]
        %v3907 = vld [vmem:[%s3881 + $0x64] sm:$0xf]
        %v3908 = vld [vmem:[%s3881 + $0x68] sm:$0xf]
        %v3909 = vld [vmem:[%s3881 + $0x6c] sm:$0xf]
        %v3910 = vld [vmem:[%s3881 + $0x70] sm:$0xf]
        %v3911 = vld [vmem:[%s3881 + $0x74] sm:$0xf]
        %v3912 = vld [vmem:[%s3881 + $0x78] sm:$0xf]
        %v3913 = vld [vmem:[%s3881 + $0x7c] sm:$0xf]
        %v3914 = vld [vmem:[%s3881 + $0x80] sm:$0xf]
        %v3915 = vld [vmem:[%s3881 + $0x84] sm:$0xf]
        %v3916 = vld [vmem:[%s3881 + $0x88] sm:$0xf]
        %v3917 = vld [vmem:[%s3881 + $0x8c] sm:$0xf]
        %v3918 = vld [vmem:[%s3881 + $0x90] sm:$0xf]
        %v3919 = vld [vmem:[%s3881 + $0x94] sm:$0xf]
        %v3920 = vld [vmem:[%s3881 + $0x98] sm:$0xf]
        %v3921 = vld [vmem:[%s3881 + $0x9c] sm:$0xf]
        %v3922 = vld [vmem:[%s3881 + $0xa0] sm:$0xf]
        %v3923 = vld [vmem:[%s3881 + $0xa4] sm:$0xf]
        %v3924 = vld [vmem:[%s3881 + $0xa8] sm:$0xf]
        %v3925 = vld [vmem:[%s3881 + $0xac] sm:$0xf]
        %v3926 = vld [vmem:[%s3881 + $0xb0] sm:$0xf]
        %v3927 = vld [vmem:[%s3881 + $0xb4] sm:$0xf]
        %v3928 = vld [vmem:[%s3881 + $0xb8] sm:$0xf]
        %v3929 = vld [vmem:[%s3881 + $0xbc] sm:$0xf]
        %v3930 = vunpack.c.l.b16 %v3670
        %v3931 = vunpack.c.h.b16 %v3670
        %v3932 = vunpack.c.l.b16 %v3684
        %v3933 = vunpack.c.l.b16 %v3698
        %v3934 = vunpack.c.h.b16 %v3698
        %v3935 = vunpack.c.l.b16 %v3712
        %v3936 = vunpack.c.l.b16 %v3726
        %v3937 = vunpack.c.h.b16 %v3726
        %v3938 = vunpack.c.l.b16 %v3740
        %v3939 = vunpack.c.l.b16 %v3754
        %v3940 = vunpack.c.h.b16 %v3754
        %v3941 = vunpack.c.l.b16 %v3768
        %v3942 = vunpack.c.l.b16 %v3782
        %v3943 = vunpack.c.h.b16 %v3782
        %v3944 = vunpack.c.l.b16 %v3796
        %v3945 = vunpack.c.l.b16 %v3810
        %v3946 = vunpack.c.h.b16 %v3810
        %v3947 = vunpack.c.l.b16 %v3824
        %v3948 = vunpack.c.l.b16 %v3838
        %v3949 = vunpack.c.h.b16 %v3838
        %v3950 = vunpack.c.l.b16 %v3852
        %v3951 = vunpack.c.l.b16 %v3866
        %v3952 = vunpack.c.h.b16 %v3866
        %v3953 = vunpack.c.l.b16 %v3880
        %v3954 = vpack.c.b16 %v3933, %v3930
        %v3955 = vpack.c.b16 %v3934, %v3931
        %v3956 = vpack.c.b16 %v3935, %v3932
        %v3957 = vpack.c.b16 %v3939, %v3936
        %v3958 = vpack.c.b16 %v3940, %v3937
        %v3959 = vpack.c.b16 %v3941, %v3938
        %v3960 = vpack.c.b16 %v3945, %v3942
        %v3961 = vpack.c.b16 %v3946, %v3943
        %v3962 = vpack.c.b16 %v3947, %v3944
        %v3963 = vpack.c.b16 %v3951, %v3948
        %v3964 = vpack.c.b16 %v3952, %v3949
        %v3965 = vpack.c.b16 %v3953, %v3950
        %v4026 = vunpack.c.l.b16 %v3882
        %v4027 = vunpack.c.l.b16 %v3883
        %v4028 = vunpack.c.l.b16 %v3884
        %v4029 = vunpack.c.l.b16 %v3885
        %v4030 = vunpack.c.l.b16 %v3886
        %v4031 = vunpack.c.l.b16 %v3887
        %v4032 = vunpack.c.l.b16 %v3888
        %v4033 = vunpack.c.l.b16 %v3889
        %v4034 = vunpack.c.l.b16 %v3890
        %v4035 = vunpack.c.l.b16 %v3891
        %v4036 = vunpack.c.l.b16 %v3892
        %v4037 = vunpack.c.l.b16 %v3893
        %v4038 = vunpack.c.l.b16 %v3894
        %v4039 = vunpack.c.l.b16 %v3895
        %v4040 = vunpack.c.l.b16 %v3896
        %v4041 = vunpack.c.l.b16 %v3897
        %v4042 = vunpack.c.l.b16 %v3898
        %v4043 = vunpack.c.l.b16 %v3899
        %v4044 = vunpack.c.l.b16 %v3900
        %v4045 = vunpack.c.l.b16 %v3901
        %v4046 = vunpack.c.l.b16 %v3902
        %v4047 = vunpack.c.l.b16 %v3903
        %v4048 = vunpack.c.l.b16 %v3904
        %v4049 = vunpack.c.l.b16 %v3905
        %v4050 = vunpack.c.l.b16 %v3906
        %v4051 = vunpack.c.l.b16 %v3907
        %v4052 = vunpack.c.l.b16 %v3908
        %v4053 = vunpack.c.l.b16 %v3909
        %v4054 = vunpack.c.l.b16 %v3910
        %v4055 = vunpack.c.l.b16 %v3911
        %v4056 = vunpack.c.l.b16 %v3912
        %v4057 = vunpack.c.l.b16 %v3913
        %v4058 = vunpack.c.l.b16 %v3914
        %v4059 = vunpack.c.l.b16 %v3915
        %v4060 = vunpack.c.l.b16 %v3916
        %v4061 = vunpack.c.l.b16 %v3917
        %v4062 = vunpack.c.l.b16 %v3918
        %v4063 = vunpack.c.l.b16 %v3919
        %v4064 = vunpack.c.l.b16 %v3920
        %v4065 = vunpack.c.l.b16 %v3921
        %v4066 = vunpack.c.l.b16 %v3922
        %v4067 = vunpack.c.l.b16 %v3923
        %v4068 = vunpack.c.l.b16 %v3924
        %v4069 = vunpack.c.l.b16 %v3925
        %v4070 = vunpack.c.l.b16 %v3926
        %v4071 = vunpack.c.l.b16 %v3927
        %v4072 = vunpack.c.l.b16 %v3928
        %v4073 = vunpack.c.l.b16 %v3929
        %v4074 = vpack.c.b16 %v4027, %v4026
        %v4075 = vpack.c.b16 %v4029, %v4028
        %v4076 = vpack.c.b16 %v4031, %v4030
        %v4077 = vpack.c.b16 %v4033, %v4032
        %v4078 = vpack.c.b16 %v4035, %v4034
        %v4079 = vpack.c.b16 %v4037, %v4036
        %v4080 = vpack.c.b16 %v4039, %v4038
        %v4081 = vpack.c.b16 %v4041, %v4040
        %v4082 = vpack.c.b16 %v4043, %v4042
        %v4083 = vpack.c.b16 %v4045, %v4044
        %v4084 = vpack.c.b16 %v4047, %v4046
        %v4085 = vpack.c.b16 %v4049, %v4048
        %v4086 = vpack.c.b16 %v4051, %v4050
        %v4087 = vpack.c.b16 %v4053, %v4052
        %v4088 = vpack.c.b16 %v4055, %v4054
        %v4089 = vpack.c.b16 %v4057, %v4056
        %v4090 = vpack.c.b16 %v4059, %v4058
        %v4091 = vpack.c.b16 %v4061, %v4060
        %v4092 = vpack.c.b16 %v4063, %v4062
        %v4093 = vpack.c.b16 %v4065, %v4064
        %v4094 = vpack.c.b16 %v4067, %v4066
        %v4095 = vpack.c.b16 %v4069, %v4068
        %v4096 = vpack.c.b16 %v4071, %v4070
        %v4097 = vpack.c.b16 %v4073, %v4072
        %4122 = vmatprep.subr.bf16.mxu0 0
        %4123 = vmatpush1.bf16.msra.mxu0 %v4074
        %4124 = vmatprep.subr.bf16.mxu0 0
        %4125 = vmatpush1.bf16.msra.mxu0 %v4075
        %4126 = vmatprep.subr.bf16.mxu0 0
        %4127 = vmatpush1.bf16.msra.mxu0 %v4076
        %4128 = vmatprep.subr.bf16.mxu0 0
        %4129 = vmatpush1.bf16.msra.mxu0 %v4077
        %4130 = vmatprep.subr.bf16.mxu0 0
        %4131 = vmatpush1.bf16.msra.mxu0 %v4078
        %4132 = vmatprep.subr.bf16.mxu0 0
        %4133 = vmatpush1.bf16.msra.mxu0 %v4079
        %4134 = vmatprep.subr.bf16.mxu0 0
        %4135 = vmatpush1.bf16.msra.mxu0 %v4080
        %4136 = vmatprep.subr.bf16.mxu0 0
        %4137 = vmatpush1.bf16.msra.mxu0 %v4081
        %4138 = vmatprep.subr.bf16.mxu0 0
        %4139 = vmatpush1.bf16.msra.mxu0 %v4082
        %4140 = vmatprep.subr.bf16.mxu0 0
        %4141 = vmatpush1.bf16.msra.mxu0 %v4083
        %4142 = vmatprep.subr.bf16.mxu0 0
        %4143 = vmatpush1.bf16.msra.mxu0 %v4084
        %4144 = vmatprep.subr.bf16.mxu0 0
        %4145 = vmatpush1.bf16.msra.mxu0 %v4085
        %4146 = vmatprep.subr.bf16.mxu0 0
        %4147 = vmatpush1.bf16.msra.mxu0 %v4086
        %4148 = vmatprep.subr.bf16.mxu0 0
        %4149 = vmatpush1.bf16.msra.mxu0 %v4087
        %4150 = vmatprep.subr.bf16.mxu0 0
        %4151 = vmatpush1.bf16.msra.mxu0 %v4088
        %4152 = vmatprep.subr.bf16.mxu0 0
        %4153 = vmatpush1.bf16.msra.mxu0 %v4089
        %4154 = vmatprep.mubr.bf16.mxu0 %v3955
        %4155 = vmatmul.mubr.bf16.gmra.mrb[0].mxu0 %v3954
        %v4156 = vpop.f32.mrb[0].mxu0
        %v4157 = vadd.f32 0.0, %v4156
        %v4158 = vpop.f32.mrb[0].mxu0
        %v4159 = vpop.f32.mrb[0].mxu0
        %v4160 = vadd.f32 0.0, %v4159
        %v4161 = vpop.f32.mrb[0].mxu0
        %4162 = vmatprep.mubr.bf16.mxu0 %v3958
        %4163 = vmatmul.mubr.bf16.gmra.mrb[0].mxu0 %v3957
        %v4164 = vpop.f32.mrb[0].mxu0
        %v4165 = vadd.f32 0.0, %v4164
        %v4166 = vpop.f32.mrb[0].mxu0
        %v4167 = vpop.f32.mrb[0].mxu0
        %v4168 = vadd.f32 0.0, %v4167
        %v4169 = vpop.f32.mrb[0].mxu0
        %4170 = vmatprep.mubr.bf16.mxu0 %v3961
        %4171 = vmatmul.mubr.bf16.gmra.mrb[0].mxu0 %v3960
        %v4172 = vpop.f32.mrb[0].mxu0
        %v4173 = vadd.f32 0.0, %v4172
        %v4174 = vpop.f32.mrb[0].mxu0
        %v4175 = vpop.f32.mrb[0].mxu0
        %v4176 = vadd.f32 0.0, %v4175
        %v4177 = vpop.f32.mrb[0].mxu0
        %4178 = vmatprep.mubr.bf16.mxu0 %v3964
        %4179 = vmatmul.mubr.bf16.gmra.mrb[0].mxu0 %v3963
        %v4180 = vpop.f32.mrb[0].mxu0
        %v4181 = vadd.f32 0.0, %v4180
        %v4182 = vpop.f32.mrb[0].mxu0
        %v4183 = vpop.f32.mrb[0].mxu0
        %v4184 = vadd.f32 0.0, %v4183
        %v4185 = vpop.f32.mrb[0].mxu0
        %4186 = vdwg.mxu0
        %4187 = vmatprep.subr.bf16.mxu0 0
        %4188 = vmatpush1.bf16.msra.mxu0 %v4090
        %4189 = vmatprep.subr.bf16.mxu0 0
        %4190 = vmatpush1.bf16.msra.mxu0 %v4091
        %4191 = vmatprep.subr.bf16.mxu0 0
        %4192 = vmatpush1.bf16.msra.mxu0 %v4092
        %4193 = vmatprep.subr.bf16.mxu0 0
        %4194 = vmatpush1.bf16.msra.mxu0 %v4093
        %4195 = vmatprep.subr.bf16.mxu0 0
        %4196 = vmatpush1.bf16.msra.mxu0 %v4094
        %4197 = vmatprep.subr.bf16.mxu0 0
        %4198 = vmatpush1.bf16.msra.mxu0 %v4095
        %4199 = vmatprep.subr.bf16.mxu0 0
        %4200 = vmatpush1.bf16.msra.mxu0 %v4096
        %4201 = vmatprep.subr.bf16.mxu0 0
        %4202 = vmatpush1.bf16.msra.mxu0 %v4097
        %4203 = vmatprep.subr.bf16.mxu0 0
        %4204 = vmatpush1.bf16.msra.mxu0 0
        %4205 = vmatprep.subr.bf16.mxu0 0
        %4206 = vmatpush1.bf16.msra.mxu0 0
        %4207 = vmatprep.subr.bf16.mxu0 0
        %4208 = vmatpush1.bf16.msra.mxu0 0
        %4209 = vmatprep.subr.bf16.mxu0 0
        %4210 = vmatpush1.bf16.msra.mxu0 0
        %4211 = vmatprep.subr.bf16.mxu0 0
        %4212 = vmatpush1.bf16.msra.mxu0 0
        %4213 = vmatprep.subr.bf16.mxu0 0
        %4214 = vmatpush1.bf16.msra.mxu0 0
        %4215 = vmatprep.subr.bf16.mxu0 0
        %4216 = vmatpush1.bf16.msra.mxu0 0
        %4217 = vmatprep.subr.bf16.mxu0 0
        %4218 = vmatpush1.bf16.msra.mxu0 0
        %4219 = vmatprep.mubr.bf16.mxu0 0
        %4220 = vmatmul.mubr.bf16.gmra.mrb[0].mxu0 %v3956
        %v4221 = vpop.f32.mrb[0].mxu0
        %v4222 = vadd.f32 %v4157, %v4221
        %v4223 = vpop.f32.mrb[0].mxu0
        %v4224 = vpop.f32.mrb[0].mxu0
        %v4225 = vadd.f32 %v4160, %v4224
        %v4226 = vpop.f32.mrb[0].mxu0
        %4227 = vmatprep.mubr.bf16.mxu0 0
        %4228 = vmatmul.mubr.bf16.gmra.mrb[0].mxu0 %v3959
        %v4229 = vpop.f32.mrb[0].mxu0
        %v4230 = vadd.f32 %v4165, %v4229
        %v4231 = vpop.f32.mrb[0].mxu0
        %v4232 = vpop.f32.mrb[0].mxu0
        %v4233 = vadd.f32 %v4168, %v4232
        %v4234 = vpop.f32.mrb[0].mxu0
        %4235 = vmatprep.mubr.bf16.mxu0 0
        %4236 = vmatmul.mubr.bf16.gmra.mrb[0].mxu0 %v3962
        %v4237 = vpop.f32.mrb[0].mxu0
        %v4238 = vadd.f32 %v4173, %v4237
        %v4239 = vpop.f32.mrb[0].mxu0
        %v4240 = vpop.f32.mrb[0].mxu0
        %v4241 = vadd.f32 %v4176, %v4240
        %v4242 = vpop.f32.mrb[0].mxu0
        %4243 = vmatprep.mubr.bf16.mxu0 0
        %4244 = vmatmul.mubr.bf16.gmra.mrb[0].mxu0 %v3965
        %v4245 = vpop.f32.mrb[0].mxu0
        %v4246 = vadd.f32 %v4181, %v4245
        %v4247 = vpop.f32.mrb[0].mxu0
        %v4248 = vpop.f32.mrb[0].mxu0
        %v4249 = vadd.f32 %v4184, %v4248
        %v4250 = vpop.f32.mrb[0].mxu0
        %4251 = vdwg.mxu0
        %v4252 = vadd.f32 %v3535, %v4222
        %v4253 = vadd.f32 %v3538, %v4225
        %v4254 = vadd.f32 %v3543, %v4230
        %v4255 = vadd.f32 %v3546, %v4233
        %v4256 = vadd.f32 %v3551, %v4238
        %v4257 = vadd.f32 %v3554, %v4241
        %v4258 = vadd.f32 %v3559, %v4246
        %v4259 = vadd.f32 %v3562, %v4249
        %v4260 = vld [vmem:[%s6] sm:$0x1]
        %v4262 = vlaneseq
        %v4263 = vshrl.u32 %v4262, 7
        %v4264 = vsub.s32 0, %v4263
        %v4265 = vrot.slane %v4260, %v4264
        %v4267 = vadd.f32 %v4252, %v4265
        %v4268 = vadd.f32 %v4253, %v4265
        %v4269 = vadd.f32 %v4254, %v4265
        %v4270 = vadd.f32 %v4255, %v4265
        %v4271 = vadd.f32 %v4256, %v4265
        %v4272 = vadd.f32 %v4257, %v4265
        %v4273 = vadd.f32 %v4258, %v4265
        %v4274 = vadd.f32 %v4259, %v4265
        %v4275 = vmax.f32 %v4267, 0.0
        %v4276 = vmax.f32 %v4268, 0.0
        %v4277 = vmax.f32 %v4269, 0.0
        %v4278 = vmax.f32 %v4270, 0.0
        %v4279 = vmax.f32 %v4271, 0.0
        %v4280 = vmax.f32 %v4272, 0.0
        %v4281 = vmax.f32 %v4273, 0.0
        %v4282 = vmax.f32 %v4274, 0.0
        %v4283 = vpack.c.bf16 %v4275, %v4275
        %v4284 = vpack.c.bf16 %v4276, %v4276
        %v4285 = vpack.c.bf16 %v4277, %v4277
        %v4286 = vpack.c.bf16 %v4278, %v4278
        %v4287 = vpack.c.bf16 %v4279, %v4279
        %v4288 = vpack.c.bf16 %v4280, %v4280
        %v4289 = vpack.c.bf16 %v4281, %v4281
        %v4290 = vpack.c.bf16 %v4282, %v4282
        %4291 = vst [vmem:[%s379] sm:$0xf] %v4283
        %4292 = vst [vmem:[%s379 + $0x4] sm:$0xf] %v4284
        %4293 = vst [vmem:[%s379 + $0x8] sm:$0xf] %v4285
        %4294 = vst [vmem:[%s379 + $0xc] sm:$0xf] %v4286
        %4295 = vst [vmem:[%s379 + $0x10] sm:$0xf] %v4287
        %4296 = vst [vmem:[%s379 + $0x14] sm:$0xf] %v4288
        %4297 = vst [vmem:[%s379 + $0x18] sm:$0xf] %v4289
        %4298 = vst [vmem:[%s379 + $0x1c] sm:$0xf] %v4290
        %s4299 = sand.u32 %s193, 1
        %s4300 = scalar_lea.sflag [#allocation5], %s4299
        %s4301 = sand.u32 %s193, 1
        %s4302 = smul.addr %s4301, 32
        %s4303 = scalar_lea.vmem [#allocation12], %s4302
        // Predicated region
        $region69: #{tpu_custom_call.1} parent=47 // pred_check
          %p4304 = pneg %p203
        $region70: #{tpu_custom_call.1} parent=47 // pred_check_branch
          %4306 = sbr.rel (%p4304) target = $region72
        $region71: #{tpu_custom_call.1} parent=47 // pred_region
          %s4308 = ssub.s32 512, 512
          %4309 = vsyncadd %s4300, %s4308
          %s4310 = smul.addr %s28, 8
          %s4311 = smul.addr %s4310, 64
          %s4312 = scalar_lea.hbm %s7, %s4311
          %s4313 = sshll.u32 %s4303, 4
          %s4314 = int_to_ptr.vmem [resolvable:$true] %s4313
          %4319 = dma.vmem_to_hbm [thread:$0]  %s4314, 512, %s4312, %s4300, 64, 64, 4
        $region72: #{tpu_custom_call.1} parent=47 // pred_fallthru
          _
      $region48: #{tpu_custom_call.1} parent=5 // pred_fallthru
        _
      %p4320 = scmp.le.s32.totalorder 2, %s23
      // Predicated region
      $region73: #{tpu_custom_call.1} parent=5 // pred_check
        %p4321 = pneg %p4320
      $region74: #{tpu_custom_call.1} parent=5 // pred_check_branch
        %4323 = sbr.rel (%p4321) target = $region76
      $region75: #{tpu_custom_call.1} parent=5 // pred_region
        %s4324 = ssub.s32 %s23, 2
        // Predicated region
        $region77: #{tpu_custom_call.1} parent=75 // pred_check
          %p4325 = pneg %p209
        $region78: #{tpu_custom_call.1} parent=75 // pred_check_branch
          %4327 = sbr.rel (%p4325) target = $region80
        $region79: #{tpu_custom_call.1} parent=75 // pred_region
          %s4328 = sand.u32 %s194, 1
          %s4329 = scalar_lea.sflag [#allocation5], %s4328
          %s4330 = sand.u32 %s194, 1
          %s4331 = smul.addr %s4330, 32
          %s4332 = scalar_lea.vmem [#allocation12], %s4331
          %4333 = dma.done %s4329, 512
        $region80: #{tpu_custom_call.1} parent=75 // pred_fallthru
          _
      $region76: #{tpu_custom_call.1} parent=5 // pred_fallthru
        _
    $region6: #{tpu_custom_call.1} parent=1 // loop_footer
      %s27 = sadd.s32 1, %s23
    $region7: #{tpu_custom_call.1} parent=1 // loop_footer_branch
      %22 = sbr.rel target = $region3
    $region8: #{tpu_custom_call.1} parent=1 // loop_exit
      _
    %4334 = vsyncpa [#allocation4], 1
    %s4335 = scalar_lea.sflag [#allocation4], 1
    %4336 = vsyncpa %s4335, 1
    %4337 = vsyncpa [#allocation7], 1
    %s4338 = scalar_lea.sflag [#allocation7], 1
    %4339 = vsyncpa %s4338, 1
    %4340 = vsyncpa [#allocation10], 1
    %4341 = vsyncpa [#allocation5], 1
    %s4342 = scalar_lea.sflag [#allocation5], 1
    %4343 = vsyncpa %s4342, 1

// kernel: tpu_custom_call.1
$region0: #{tpu_custom_call.1}
  #allocation0 [shape = 'u32[]', space=smem, size = 0x4, offset = 0x4, fixed_abs, tag = 'smem constant byte address 0x4 - core index']
  #allocation1 [shape = 'u32[144,128]{1,0:T(1,128)}', space=vmem, size = 0x12000, scoped, tag = 'internal scratch']
  #allocation2 [shape = 'bf16[10,17,128]{2,1,0:T(8,128)(2,1)}', space=vmem, size = 0xf000, scoped, tag = 'scratch operand']
  %s0 = inlined_call_operand.hbm [shape: bf16[2,8,8,8], index: 0, kind: input, shape index: {}]
  %s1 = inlined_call_operand.hbm [shape: s8[2,8,8,8], index: 1, kind: input, shape index: {}]
  %s2 = inlined_call_operand.hbm [shape: bf16[32,128], index: 2, kind: input, shape index: {}]
  %s3 = inlined_call_operand.hbm [shape: bf16[3,384,128], index: 3, kind: input, shape index: {}]
  %s4 = inlined_call_operand.vmem [shape: f32[1,128], index: 4, kind: input, shape index: {}]
  %s5 = inlined_call_operand.hbm [shape: bf16[3,384,128], index: 5, kind: input, shape index: {}]
  %s6 = inlined_call_operand.vmem [shape: f32[1,128], index: 6, kind: input, shape index: {}]
  %s7 = inlined_call_operand.hbm [shape: bf16[2,8,8,128], index: 7, kind: output, shape index: {}]
  %s8 = sld [smem:[#allocation0]]
  $region81: #{tpu_custom_call.1} parent=0
    _
  %s10 = ssub.s32 1, %s8
  %s11 = scalar_select 0, %s10, %s8
  $region1: #{tpu_custom_call.1} parent=0
    #allocation3 [shape = 'u8[32768]{0}', space=vmem, size = 0x8000, scoped, tag = 'input window, operand 0']
    #allocation4 [shape = 's32[2]{0}', space=sflag, size = 0x8, scoped, tag = 'scoped memory for tpu_custom_call.1']
    #allocation5 [shape = 's32[2]{0}', space=sflag, size = 0x8, scoped, tag = 'scoped memory for tpu_custom_call.1']
    #allocation6 [shape = 'u8[16384]{0}', space=vmem, size = 0x4000, scoped, tag = 'input window, operand 1']
    #allocation7 [shape = 's32[2]{0}', space=sflag, size = 0x8, scoped, tag = 'scoped memory for tpu_custom_call.1']
    #allocation8 [shape = 'u8[8192]{0}', space=vmem, size = 0x2000, scoped, tag = 'input window, operand 2, single buffered']
    #allocation9 [shape = 'u8[294912]{0}', space=vmem, size = 0x48000, scoped, tag = 'input window, operand 3, single buffered']
    #allocation10 [shape = 's32[1]{0}', space=sflag, size = 0x4, scoped, tag = 'scoped memory for tpu_custom_call.1']
    #allocation11 [shape = 'u8[294912]{0}', space=vmem, size = 0x48000, scoped, tag = 'input window, operand 5, single buffered']
    #allocation12 [shape = 'u8[32768]{0}', space=vmem, size = 0x8000, scoped, tag = 'output window, operand 0']
    %12 = vsyncpa [#allocation4], 0
    %s13 = scalar_lea.sflag [#allocation4], 1
    %14 = vsyncpa %s13, 0
    %15 = vsyncpa [#allocation7], 0
    %s16 = scalar_lea.sflag [#allocation7], 1
    %17 = vsyncpa %s16, 0
    %18 = vsyncpa [#allocation10], 0
    %19 = vsyncpa [#allocation5], 0
    %s20 = scalar_lea.sflag [#allocation5], 1
    %21 = vsyncpa %s20, 0
    loop: start=0, step=1, limit=4
    $region2: #{tpu_custom_call.1} parent=1 // loop_pre_header
      _
    $region3: #{tpu_custom_call.1} parent=1 // loop_header
      %s23 = sphi 0, %s27
      %p24 = scmp.ge.s32.totalorder %s23, 4
      %s33 = sphi 0, %s35
      %s36 = sphi 0, %s33
      %s37 = sphi 0, %s36
      %s53 = sphi 0, %s37
      %s59 = sphi 0, %s61
      %s62 = sphi 0, %s59
      %s63 = sphi 0, %s62
      %s79 = sphi 0, %s63
      %s83 = sphi 0, %s83
      %s85 = sphi 0, %s83
      %s86 = sphi 0, %s85
      %s100 = sphi 0, %s86
      %s104 = sphi 0, %s104
      %s106 = sphi 0, %s104
      %s107 = sphi 0, %s106
      %s121 = sphi 0, %s107
      %s125 = sphi 0, %s125
      %s127 = sphi 0, %s125
      %s128 = sphi 0, %s127
      %s142 = sphi 0, %s128
      %s146 = sphi 0, %s146
      %s148 = sphi 0, %s146
      %s149 = sphi 0, %s148
      %s163 = sphi 0, %s149
      %s167 = sphi 0, %s167
      %s169 = sphi 0, %s167
      %s170 = sphi 0, %s169
      %s184 = sphi 0, %s170
      %s190 = sphi 0, %s192
      %s193 = sphi 0, %s190
      %s194 = sphi 0, %s193
      %s210 = sphi 0, %s194
    $region4: #{tpu_custom_call.1} parent=1 // loop_header_branch
      %26 = sbr.rel (%p24) target = $region8
    $region5: #{tpu_custom_call.1} parent=1 // loop_body
      %s28 = ssub.s32 %s23, 1
      %s29 = ssub.s32 %s23, 2
      %s30 = sadd.s32 %s23, 1
      %s31 = ssub.s32 %s23, %s30
      %p32 = scmp.eq.s32.totalorder %s31, 0
      %s34 = sadd.s32 %s33, 1
      %s35 = scalar_select %p32, %s33, %s34
      %p38 = pneg %p32
      %p39 = scmp.eq.s32.totalorder %s23, 1
      %p40 = por %p38, %p39
      %p41 = scmp.ne.s32.totalorder %s33, %s36
      %p42 = scmp.eq.s32.totalorder %s23, 0
      %p43 = por %p41, %p42
      %p44 = scmp.ne.s32.totalorder %s33, %s36
      %p45 = scmp.eq.s32.totalorder %s28, 1
      %p46 = por %p44, %p45
      %p47 = scmp.ne.s32.totalorder %s36, %s37
      %p48 = scmp.eq.s32.totalorder %s28, 0
      %p49 = por %p47, %p48
      %p50 = scmp.ne.s32.totalorder %s36, %s37
      %p51 = scmp.eq.s32.totalorder %s29, 1
      %p52 = por %p50, %p51
      %p54 = scmp.ne.s32.totalorder %s37, %s53
      %p55 = scmp.eq.s32.totalorder %s29, 0
      %p56 = por %p54, %p55
      %s57 = ssub.s32 %s23, %s30
      %p58 = scmp.eq.s32.totalorder %s57, 0
      %s60 = sadd.s32 %s59, 1
      %s61 = scalar_select %p58, %s59, %s60
      %p64 = pneg %p58
      %p65 = scmp.eq.s32.totalorder %s23, 1
      %p66 = por %p64, %p65
      %p67 = scmp.ne.s32.totalorder %s59, %s62
      %p68 = scmp.eq.s32.totalorder %s23, 0
      %p69 = por %p67, %p68
      %p70 = scmp.ne.s32.totalorder %s59, %s62
      %p71 = scmp.eq.s32.totalorder %s28, 1
      %p72 = por %p70, %p71
      %p73 = scmp.ne.s32.totalorder %s62, %s63
      %p74 = scmp.eq.s32.totalorder %s28, 0
      %p75 = por %p73, %p74
      %p76 = scmp.ne.s32.totalorder %s62, %s63
      %p77 = scmp.eq.s32.totalorder %s29, 1
      %p78 = por %p76, %p77
      %p80 = scmp.ne.s32.totalorder %s63, %s79
      %p81 = scmp.eq.s32.totalorder %s29, 0
      %p82 = por %p80, %p81
      %s84 = sadd.s32 %s83, 1
      %p87 = scmp.eq.s32.totalorder %s23, 1
      %p88 = scmp.ne.s32.totalorder %s83, %s85
      %p89 = scmp.eq.s32.totalorder %s23, 0
      %p90 = por %p88, %p89
      %p91 = scmp.ne.s32.totalorder %s83, %s85
      %p92 = scmp.eq.s32.totalorder %s28, 1
      %p93 = por %p91, %p92
      %p94 = scmp.ne.s32.totalorder %s85, %s86
      %p95 = scmp.eq.s32.totalorder %s28, 0
      %p96 = por %p94, %p95
      %p97 = scmp.ne.s32.totalorder %s85, %s86
      %p98 = scmp.eq.s32.totalorder %s29, 1
      %p99 = por %p97, %p98
      %p101 = scmp.ne.s32.totalorder %s86, %s100
      %p102 = scmp.eq.s32.totalorder %s29, 0
      %p103 = por %p101, %p102
      %s105 = sadd.s32 %s104, 1
      %p108 = scmp.eq.s32.totalorder %s23, 1
      %p109 = scmp.ne.s32.totalorder %s104, %s106
      %p110 = scmp.eq.s32.totalorder %s23, 0
      %p111 = por %p109, %p110
      %p112 = scmp.ne.s32.totalorder %s104, %s106
      %p113 = scmp.eq.s32.totalorder %s28, 1
      %p114 = por %p112, %p113
      %p115 = scmp.ne.s32.totalorder %s106, %s107
      %p116 = scmp.eq.s32.totalorder %s28, 0
      %p117 = por %p115, %p116
      %p118 = scmp.ne.s32.totalorder %s106, %s107
      %p119 = scmp.eq.s32.totalorder %s29, 1
      %p120 = por %p118, %p119
      %p122 = scmp.ne.s32.totalorder %s107, %s121
      %p123 = scmp.eq.s32.totalorder %s29, 0
      %p124 = por %p122, %p123
      %s126 = sadd.s32 %s125, 1
      %p129 = scmp.eq.s32.totalorder %s23, 1
      %p130 = scmp.ne.s32.totalorder %s125, %s127
      %p131 = scmp.eq.s32.totalorder %s23, 0
      %p132 = por %p130, %p131
      %p133 = scmp.ne.s32.totalorder %s125, %s127
      %p134 = scmp.eq.s32.totalorder %s28, 1
      %p135 = por %p133, %p134
      %p136 = scmp.ne.s32.totalorder %s127, %s128
      %p137 = scmp.eq.s32.totalorder %s28, 0
      %p138 = por %p136, %p137
      %p139 = scmp.ne.s32.totalorder %s127, %s128
      %p140 = scmp.eq.s32.totalorder %s29, 1
      %p141 = por %p139, %p140
      %p143 = scmp.ne.s32.totalorder %s128, %s142
      %p144 = scmp.eq.s32.totalorder %s29, 0
      %p145 = por %p143, %p144
      %s147 = sadd.s32 %s146, 1
      %p150 = scmp.eq.s32.totalorder %s23, 1
      %p151 = scmp.ne.s32.totalorder %s146, %s148
      %p152 = scmp.eq.s32.totalorder %s23, 0
      %p153 = por %p151, %p152
      %p154 = scmp.ne.s32.totalorder %s146, %s148
      %p155 = scmp.eq.s32.totalorder %s28, 1
      %p156 = por %p154, %p155
      %p157 = scmp.ne.s32.totalorder %s148, %s149
      %p158 = scmp.eq.s32.totalorder %s28, 0
      %p159 = por %p157, %p158
      %p160 = scmp.ne.s32.totalorder %s148, %s149
      %p161 = scmp.eq.s32.totalorder %s29, 1
      %p162 = por %p160, %p161
      %p164 = scmp.ne.s32.totalorder %s149, %s163
      %p165 = scmp.eq.s32.totalorder %s29, 0
      %p166 = por %p164, %p165
      %s168 = sadd.s32 %s167, 1
      %p171 = scmp.eq.s32.totalorder %s23, 1
      %p172 = scmp.ne.s32.totalorder %s167, %s169
      %p173 = scmp.eq.s32.totalorder %s23, 0
      %p174 = por %p172, %p173
      %p175 = scmp.ne.s32.totalorder %s167, %s169
      %p176 = scmp.eq.s32.totalorder %s28, 1
      %p177 = por %p175, %p176
      %p178 = scmp.ne.s32.totalorder %s169, %s170
      %p179 = scmp.eq.s32.totalorder %s28, 0
      %p180 = por %p178, %p179
      %p181 = scmp.ne.s32.totalorder %s169, %s170
      %p182 = scmp.eq.s32.totalorder %s29, 1
      %p183 = por %p181, %p182
      %p185 = scmp.ne.s32.totalorder %s170, %s184
      %p186 = scmp.eq.s32.totalorder %s29, 0
      %p187 = por %p185, %p186
      %s188 = ssub.s32 %s23, %s30
      %p189 = scmp.eq.s32.totalorder %s188, 0
      %s191 = sadd.s32 %s190, 1
      %s192 = scalar_select %p189, %s190, %s191
      %p195 = pneg %p189
      %p196 = scmp.eq.s32.totalorder %s23, 1
      %p197 = por %p195, %p196
      %p198 = scmp.ne.s32.totalorder %s190, %s193
      %p199 = scmp.eq.s32.totalorder %s23, 0
      %p200 = por %p198, %p199
      %p201 = scmp.ne.s32.totalorder %s190, %s193
      %p202 = scmp.eq.s32.totalorder %s28, 1
      %p203 = por %p201, %p202
      %p204 = scmp.ne.s32.totalorder %s193, %s194
      %p205 = scmp.eq.s32.totalorder %s28, 0
      %p206 = por %p204, %p205
      %p207 = scmp.ne.s32.totalorder %s193, %s194
      %p208 = scmp.eq.s32.totalorder %s29, 1
      %p209 = por %p207, %p208
      %p211 = scmp.ne.s32.totalorder %s194, %s210
      %p212 = scmp.eq.s32.totalorder %s29, 0
      %p213 = por %p211, %p212
      %p214 = scmp.le.s32.totalorder 1, %s23
      %p215 = scmp.lt.s32.totalorder %s23, 3
      %p216 = pnand %p214, %p215
      %p217 = pneg %p216
      // Predicated region
      $region9: #{tpu_custom_call.1} parent=5 // pred_check
        _
      $region10: #{tpu_custom_call.1} parent=5 // pred_check_branch
        %219 = sbr.rel (%p216) target = $region12
      $region11: #{tpu_custom_call.1} parent=5 // pred_region
        %s220 = ssub.s32 %s23, 1
        // Predicated region
        $region13: #{tpu_custom_call.1} parent=11 // pred_check
          %p221 = pneg %p96
        $region14: #{tpu_custom_call.1} parent=11 // pred_check_branch
          %223 = sbr.rel (%p221) target = $region16
        $region15: #{tpu_custom_call.1} parent=11 // pred_region
          %s225 = ssub.s32 256, 256
          %226 = vsyncadd [#allocation7], %s225
          %s227 = sshll.u32 [#allocation8], 4
          %s228 = int_to_ptr.vmem [resolvable:$true] %s227
          %233 = dma.hbm_to_vmem [thread:$0]  %s2, 256, %s228, [#allocation7], 64, 64, 4
        $region16: #{tpu_custom_call.1} parent=11 // pred_fallthru
          _
        // Predicated region
        $region17: #{tpu_custom_call.1} parent=11 // pred_check
          %p234 = pneg %p117
        $region18: #{tpu_custom_call.1} parent=11 // pred_check_branch
          %236 = sbr.rel (%p234) target = $region20
        $region19: #{tpu_custom_call.1} parent=11 // pred_region
          %s238 = ssub.s32 9216, 9216
          %239 = vsyncadd [#allocation10], %s238
          %s240 = sshll.u32 [#allocation9], 4
          %s241 = int_to_ptr.vmem [resolvable:$true] %s240
          %246 = dma.hbm_to_vmem [thread:$0]  %s3, 9216, %s241, [#allocation10], 64, 64, 4
        $region20: #{tpu_custom_call.1} parent=11 // pred_fallthru
          _
        // Predicated region
        $region21: #{tpu_custom_call.1} parent=11 // pred_check
          %p247 = pneg %p138
        $region22: #{tpu_custom_call.1} parent=11 // pred_check_branch
          %249 = sbr.rel (%p247) target = $region24
        $region23: #{tpu_custom_call.1} parent=11 // pred_region
          _
        $region24: #{tpu_custom_call.1} parent=11 // pred_fallthru
          _
        // Predicated region
        $region25: #{tpu_custom_call.1} parent=11 // pred_check
          %p250 = pneg %p159
        $region26: #{tpu_custom_call.1} parent=11 // pred_check_branch
          %252 = sbr.rel (%p250) target = $region28
        $region27: #{tpu_custom_call.1} parent=11 // pred_region
          %s254 = ssub.s32 9216, 9216
          %255 = vsyncadd [#allocation10], %s254
          %s256 = sshll.u32 [#allocation11], 4
          %s257 = int_to_ptr.vmem [resolvable:$true] %s256
          %262 = dma.hbm_to_vmem [thread:$0]  %s5, 9216, %s257, [#allocation10], 64, 64, 4
        $region28: #{tpu_custom_call.1} parent=11 // pred_fallthru
          _
        // Predicated region
        $region29: #{tpu_custom_call.1} parent=11 // pred_check
          %p263 = pneg %p180
        $region30: #{tpu_custom_call.1} parent=11 // pred_check_branch
          %265 = sbr.rel (%p263) target = $region32
        $region31: #{tpu_custom_call.1} parent=11 // pred_region
          _
        $region32: #{tpu_custom_call.1} parent=11 // pred_fallthru
          _
      $region12: #{tpu_custom_call.1} parent=5 // pred_fallthru
        _
      %p266 = scmp.lt.s32.totalorder %s23, 2
      // Predicated region
      $region33: #{tpu_custom_call.1} parent=5 // pred_check
        %p267 = pneg %p266
      $region34: #{tpu_custom_call.1} parent=5 // pred_check_branch
        %269 = sbr.rel (%p267) target = $region36
      $region35: #{tpu_custom_call.1} parent=5 // pred_region
        // Predicated region
        $region37: #{tpu_custom_call.1} parent=35 // pred_check
          %p270 = pneg %p43
        $region38: #{tpu_custom_call.1} parent=35 // pred_check_branch
          %272 = sbr.rel (%p270) target = $region40
        $region39: #{tpu_custom_call.1} parent=35 // pred_region
          %s273 = sand.u32 %s33, 1
          %s274 = scalar_lea.sflag [#allocation4], %s273
          %s275 = sand.u32 %s33, 1
          %s276 = smul.addr %s275, 32
          %s277 = scalar_lea.vmem [#allocation3], %s276
          %s279 = ssub.s32 512, 512
          %280 = vsyncadd %s274, %s279
          %s281 = smul.addr %s23, 8
          %s282 = smul.addr %s281, 64
          %s283 = scalar_lea.hbm %s0, %s282
          %s284 = sshll.u32 %s277, 4
          %s285 = int_to_ptr.vmem [resolvable:$true] %s284
          %290 = dma.hbm_to_vmem [thread:$0]  %s283, 512, %s285, %s274, 64, 64, 4
        $region40: #{tpu_custom_call.1} parent=35 // pred_fallthru
          _
        // Predicated region
        $region41: #{tpu_custom_call.1} parent=35 // pred_check
          %p291 = pneg %p69
        $region42: #{tpu_custom_call.1} parent=35 // pred_check_branch
          %293 = sbr.rel (%p291) target = $region44
        $region43: #{tpu_custom_call.1} parent=35 // pred_region
          %s294 = sand.u32 %s23, 1
          %s295 = scalar_lea.sflag [#allocation7], %s294
          %s296 = sand.u32 %s59, 1
          %s297 = smul.addr %s296, 16
          %s298 = scalar_lea.vmem [#allocation6], %s297
          %s300 = ssub.s32 256, 256
          %301 = vsyncadd %s295, %s300
          %s302 = smul.addr %s23, 8
          %s303 = smul.addr %s302, 32
          %s304 = scalar_lea.hbm %s1, %s303
          %s305 = sshll.u32 %s298, 4
          %s306 = int_to_ptr.vmem [resolvable:$true] %s305
          %311 = dma.hbm_to_vmem [thread:$0]  %s304, 256, %s306, %s295, 32, 32, 2
        $region44: #{tpu_custom_call.1} parent=35 // pred_fallthru
          _
      $region36: #{tpu_custom_call.1} parent=5 // pred_fallthru
        _
      %p312 = scmp.le.s32.totalorder 1, %s23
      %p313 = scmp.lt.s32.totalorder %s23, 3
      %p314 = pnand %p312, %p313
      %p315 = pneg %p314
      // Predicated region
      $region45: #{tpu_custom_call.1} parent=5 // pred_check
        _
      $region46: #{tpu_custom_call.1} parent=5 // pred_check_branch
        %317 = sbr.rel (%p314) target = $region48
      $region47: #{tpu_custom_call.1} parent=5 // pred_region
        %s318 = ssub.s32 %s23, 1
        %s319 = sand.u32 %s36, 1
        %s320 = scalar_lea.sflag [#allocation4], %s319
        %s321 = sand.u32 %s36, 1
        %s322 = smul.addr %s321, 32
        %s323 = scalar_lea.vmem [#allocation3], %s322
        // Predicated region
        $region49: #{tpu_custom_call.1} parent=47 // pred_check
          %p324 = pneg %p49
        $region50: #{tpu_custom_call.1} parent=47 // pred_check_branch
          %326 = sbr.rel (%p324) target = $region52
        $region51: #{tpu_custom_call.1} parent=47 // pred_region
          %327 = dma.done %s320, 512
        $region52: #{tpu_custom_call.1} parent=47 // pred_fallthru
          _
        %s328 = sand.u32 %s28, 1
        %s329 = scalar_lea.sflag [#allocation7], %s328
        %s330 = sand.u32 %s62, 1
        %s331 = smul.addr %s330, 16
        %s332 = scalar_lea.vmem [#allocation6], %s331
        // Predicated region
        $region53: #{tpu_custom_call.1} parent=47 // pred_check
          %p333 = pneg %p75
        $region54: #{tpu_custom_call.1} parent=47 // pred_check_branch
          %335 = sbr.rel (%p333) target = $region56
        $region55: #{tpu_custom_call.1} parent=47 // pred_region
          %336 = dma.done %s329, 256
        $region56: #{tpu_custom_call.1} parent=47 // pred_fallthru
          _
        // Predicated region
        $region57: #{tpu_custom_call.1} parent=47 // pred_check
          %p337 = pneg %p96
        $region58: #{tpu_custom_call.1} parent=47 // pred_check_branch
          %339 = sbr.rel (%p337) target = $region60
        $region59: #{tpu_custom_call.1} parent=47 // pred_region
          %340 = dma.done [#allocation7], 256
        $region60: #{tpu_custom_call.1} parent=47 // pred_fallthru
          _
        // Predicated region
        $region61: #{tpu_custom_call.1} parent=47 // pred_check
          %p341 = pneg %p117
        $region62: #{tpu_custom_call.1} parent=47 // pred_check_branch
          %343 = sbr.rel (%p341) target = $region64
        $region63: #{tpu_custom_call.1} parent=47 // pred_region
          %344 = dma.done [#allocation10], 9216
        $region64: #{tpu_custom_call.1} parent=47 // pred_fallthru
          _
        // Predicated region
        $region65: #{tpu_custom_call.1} parent=47 // pred_check
          %p345 = pneg %p159
        $region66: #{tpu_custom_call.1} parent=47 // pred_check_branch
          %347 = sbr.rel (%p345) target = $region68
        $region67: #{tpu_custom_call.1} parent=47 // pred_region
          %348 = dma.done [#allocation10], 9216
        $region68: #{tpu_custom_call.1} parent=47 // pred_fallthru
          _
        %s349 = sand.u32 %s36, 1
        %s350 = scalar_lea.sflag [#allocation4], %s349
        %s351 = sand.u32 %s36, 1
        %s352 = smul.addr %s351, 32
        %s353 = scalar_lea.vmem [#allocation3], %s352
        %p354 = pneg %p49
        %p355 = pneg %p46
        %s356 = sand.u32 %s28, 1
        %s357 = scalar_lea.sflag [#allocation7], %s356
        %s358 = sand.u32 %s62, 1
        %s359 = smul.addr %s358, 16
        %s360 = scalar_lea.vmem [#allocation6], %s359
        %p361 = pneg %p75
        %p362 = pneg %p72
        %p363 = pneg %p96
        %p364 = pneg %p93
        %p365 = pneg %p117
        %p366 = pneg %p114
        %p367 = pneg %p138
        %p368 = pneg %p135
        %p369 = pneg %p159
        %p370 = pneg %p156
        %p371 = pneg %p180
        %p372 = pneg %p177
        %p373 = pneg %p206
        %p374 = pneg %p203
        %s375 = sand.u32 %s193, 1
        %s376 = scalar_lea.sflag [#allocation5], %s375
        %s377 = sand.u32 %s193, 1
        %s378 = smul.addr %s377, 32
        %s379 = scalar_lea.vmem [#allocation12], %s378
        %381 = vst [vmem:[#allocation2] sm:$0xf] 0
        %382 = vst [vmem:[#allocation2 + $0x4] sm:$0xf] 0
        %vm383 = vcmask 1040384
        %vm384 = vsmask.f32 256
        %vm385 = vmand %vm383, %vm384
        %v386 = vld [vmem:[#allocation2 + $0x8] sm:$0x1]
        %v387 = vsel %vm385, 0, %v386
        %388 = vst [vmem:[#allocation2 + $0x8] sm:$0x1] %v387
        %s389 = scalar_lea.vmem [#allocation2], 108
        %390 = vst [vmem:[%s389] sm:$0xf] 0
        %391 = vst [vmem:[%s389 + $0x4] sm:$0xf] 0
        %v392 = vld [vmem:[%s389 + $0x8] sm:$0x1]
        %v393 = vsel %vm385, 0, %v392
        %394 = vst [vmem:[%s389 + $0x8] sm:$0x1] %v393
        %vm395 = vcmask 1043459
        %vm396 = vsmask.f32 7950
        %vm397 = vmand %vm395, %vm396
        %v398 = vld [vmem:[#allocation2] sm:$0x8]
        %v399 = vsel %vm397, 0, %v398
        %400 = vst [vmem:[#allocation2] sm:$0x8] %v399
        %v401 = vld [vmem:[#allocation2 + $0xc] sm:$0x8]
        %v402 = vsel %vm397, 0, %v401
        %403 = vst [vmem:[#allocation2 + $0xc] sm:$0x8] %v402
        %v404 = vld [vmem:[#allocation2 + $0x18] sm:$0x8]
        %v405 = vsel %vm397, 0, %v404
        %406 = vst [vmem:[#allocation2 + $0x18] sm:$0x8] %v405
        %v407 = vld [vmem:[#allocation2 + $0x24] sm:$0x8]
        %v408 = vsel %vm397, 0, %v407
        %409 = vst [vmem:[#allocation2 + $0x24] sm:$0x8] %v408
        %v410 = vld [vmem:[#allocation2 + $0x30] sm:$0x8]
        %v411 = vsel %vm397, 0, %v410
        %412 = vst [vmem:[#allocation2 + $0x30] sm:$0x8] %v411
        %v413 = vld [vmem:[#allocation2 + $0x3c] sm:$0x8]
        %v414 = vsel %vm397, 0, %v413
        %415 = vst [vmem:[#allocation2 + $0x3c] sm:$0x8] %v414
        %v416 = vld [vmem:[#allocation2 + $0x48] sm:$0x8]
        %v417 = vsel %vm397, 0, %v416
        %418 = vst [vmem:[#allocation2 + $0x48] sm:$0x8] %v417
        %v419 = vld [vmem:[#allocation2 + $0x54] sm:$0x8]
        %v420 = vsel %vm397, 0, %v419
        %421 = vst [vmem:[#allocation2 + $0x54] sm:$0x8] %v420
        %v422 = vld [vmem:[#allocation2 + $0x60] sm:$0x8]
        %v423 = vsel %vm397, 0, %v422
        %424 = vst [vmem:[#allocation2 + $0x60] sm:$0x8] %v423
        %v425 = vld [vmem:[#allocation2 + $0x6c] sm:$0x8]
        %v426 = vsel %vm397, 0, %v425
        %427 = vst [vmem:[#allocation2 + $0x6c] sm:$0x8] %v426
        %v428 = vld [vmem:[#allocation2 + $0x8] sm:$0x1]
        %v429 = vsel %vm385, 0, %v428
        %430 = vst [vmem:[#allocation2 + $0x8] sm:$0x1] %v429
        %v431 = vld [vmem:[#allocation2 + $0x14] sm:$0x1]
        %v432 = vsel %vm385, 0, %v431
        %433 = vst [vmem:[#allocation2 + $0x14] sm:$0x1] %v432
        %v434 = vld [vmem:[#allocation2 + $0x20] sm:$0x1]
        %v435 = vsel %vm385, 0, %v434
        %436 = vst [vmem:[#allocation2 + $0x20] sm:$0x1] %v435
        %v437 = vld [vmem:[#allocation2 + $0x2c] sm:$0x1]
        %v438 = vsel %vm385, 0, %v437
        %439 = vst [vmem:[#allocation2 + $0x2c] sm:$0x1] %v438
        %v440 = vld [vmem:[#allocation2 + $0x38] sm:$0x1]
        %v441 = vsel %vm385, 0, %v440
        %442 = vst [vmem:[#allocation2 + $0x38] sm:$0x1] %v441
        %v443 = vld [vmem:[#allocation2 + $0x44] sm:$0x1]
        %v444 = vsel %vm385, 0, %v443
        %445 = vst [vmem:[#allocation2 + $0x44] sm:$0x1] %v444
        %v446 = vld [vmem:[#allocation2 + $0x50] sm:$0x1]
        %v447 = vsel %vm385, 0, %v446
        %448 = vst [vmem:[#allocation2 + $0x50] sm:$0x1] %v447
        %v449 = vld [vmem:[#allocation2 + $0x5c] sm:$0x1]
        %v450 = vsel %vm385, 0, %v449
        %451 = vst [vmem:[#allocation2 + $0x5c] sm:$0x1] %v450
        %v452 = vld [vmem:[#allocation2 + $0x68] sm:$0x1]
        %v453 = vsel %vm385, 0, %v452
        %454 = vst [vmem:[#allocation2 + $0x68] sm:$0x1] %v453
        %v455 = vld [vmem:[#allocation2 + $0x74] sm:$0x1]
        %v456 = vsel %vm385, 0, %v455
        %457 = vst [vmem:[#allocation2 + $0x74] sm:$0x1] %v456
        %v458 = vld [vmem:[%s323] sm:$0xf]
        %v459 = vld [vmem:[%s323 + $0x4] sm:$0xf]
        %v460 = vld [vmem:[%s323 + $0x8] sm:$0xf]
        %v461 = vld [vmem:[%s323 + $0xc] sm:$0xf]
        %v462 = vld [vmem:[%s323 + $0x10] sm:$0xf]
        %v463 = vld [vmem:[%s323 + $0x14] sm:$0xf]
        %v464 = vld [vmem:[%s323 + $0x18] sm:$0xf]
        %v465 = vld [vmem:[%s323 + $0x1c] sm:$0xf]
        %v466 = vld [vmem:[%s332] sm:$0x3]
        %v467 = vld [vmem:[%s332 + $0x2] sm:$0x3]
        %v468 = vld [vmem:[%s332 + $0x4] sm:$0x3]
        %v469 = vld [vmem:[%s332 + $0x6] sm:$0x3]
        %v470 = vld [vmem:[%s332 + $0x8] sm:$0x3]
        %v471 = vld [vmem:[%s332 + $0xa] sm:$0x3]
        %v472 = vld [vmem:[%s332 + $0xc] sm:$0x3]
        %v473 = vld [vmem:[%s332 + $0xe] sm:$0x3]
        %v474 = vunpack.c.0.s8 %v466
        %v475 = vunpack.c.0.s8 %v467
        %v476 = vunpack.c.0.s8 %v468
        %v477 = vunpack.c.0.s8 %v469
        %v478 = vunpack.c.0.s8 %v470
        %v479 = vunpack.c.0.s8 %v471
        %v480 = vunpack.c.0.s8 %v472
        %v481 = vunpack.c.0.s8 %v473
        %vm482 = vcmp.eq.s32.totalorder %v474, 0
        %vm483 = vcmp.eq.s32.totalorder %v475, 0
        %vm484 = vcmp.eq.s32.totalorder %v476, 0
        %vm485 = vcmp.eq.s32.totalorder %v477, 0
        %vm486 = vcmp.eq.s32.totalorder %v478, 0
        %vm487 = vcmp.eq.s32.totalorder %v479, 0
        %vm488 = vcmp.eq.s32.totalorder %v480, 0
        %vm489 = vcmp.eq.s32.totalorder %v481, 0
        %vm490 = vmpackc.low %vm482, %vm482
        %vm491 = vmpackc.low %vm483, %vm483
        %vm492 = vmpackc.low %vm484, %vm484
        %vm493 = vmpackc.low %vm485, %vm485
        %vm494 = vmpackc.low %vm486, %vm486
        %vm495 = vmpackc.low %vm487, %vm487
        %vm496 = vmpackc.low %vm488, %vm488
        %vm497 = vmpackc.low %vm489, %vm489
        %v498 = vsel %vm490, %v458, 0
        %v499 = vsel %vm491, %v459, 0
        %v500 = vsel %vm492, %v460, 0
        %v501 = vsel %vm493, %v461, 0
        %v502 = vsel %vm494, %v462, 0
        %v503 = vsel %vm495, %v463, 0
        %v504 = vsel %vm496, %v464, 0
        %v505 = vsel %vm497, %v465, 0
        %vm506 = vcmp.eq.s32.totalorder %v474, 1
        %vm507 = vcmp.eq.s32.totalorder %v475, 1
        %vm508 = vcmp.eq.s32.totalorder %v476, 1
        %vm509 = vcmp.eq.s32.totalorder %v477, 1
        %vm510 = vcmp.eq.s32.totalorder %v478, 1
        %vm511 = vcmp.eq.s32.totalorder %v479, 1
        %vm512 = vcmp.eq.s32.totalorder %v480, 1
        %vm513 = vcmp.eq.s32.totalorder %v481, 1
        %vm514 = vmpackc.low %vm506, %vm506
        %vm515 = vmpackc.low %vm507, %vm507
        %vm516 = vmpackc.low %vm508, %vm508
        %vm517 = vmpackc.low %vm509, %vm509
        %vm518 = vmpackc.low %vm510, %vm510
        %vm519 = vmpackc.low %vm511, %vm511
        %vm520 = vmpackc.low %vm512, %vm512
        %vm521 = vmpackc.low %vm513, %vm513
        %v522 = vsel %vm514, %v458, 0
        %v523 = vsel %vm515, %v459, 0
        %v524 = vsel %vm516, %v460, 0
        %v525 = vsel %vm517, %v461, 0
        %v526 = vsel %vm518, %v462, 0
        %v527 = vsel %vm519, %v463, 0
        %v528 = vsel %vm520, %v464, 0
        %v529 = vsel %vm521, %v465, 0
        %vm530 = vcmp.eq.s32.totalorder %v474, 2
        %vm531 = vcmp.eq.s32.totalorder %v475, 2
        %vm532 = vcmp.eq.s32.totalorder %v476, 2
        %vm533 = vcmp.eq.s32.totalorder %v477, 2
        %vm534 = vcmp.eq.s32.totalorder %v478, 2
        %vm535 = vcmp.eq.s32.totalorder %v479, 2
        %vm536 = vcmp.eq.s32.totalorder %v480, 2
        %vm537 = vcmp.eq.s32.totalorder %v481, 2
        %vm538 = vmpackc.low %vm530, %vm530
        %vm539 = vmpackc.low %vm531, %vm531
        %vm540 = vmpackc.low %vm532, %vm532
        %vm541 = vmpackc.low %vm533, %vm533
        %vm542 = vmpackc.low %vm534, %vm534
        %vm543 = vmpackc.low %vm535, %vm535
        %vm544 = vmpackc.low %vm536, %vm536
        %vm545 = vmpackc.low %vm537, %vm537
        %v546 = vsel %vm538, %v458, 0
        %v547 = vsel %vm539, %v459, 0
        %v548 = vsel %vm540, %v460, 0
        %v549 = vsel %vm541, %v461, 0
        %v550 = vsel %vm542, %v462, 0
        %v551 = vsel %vm543, %v463, 0
        %v552 = vsel %vm544, %v464, 0
        %v553 = vsel %vm545, %v465, 0
        %vm554 = vcmp.eq.s32.totalorder %v474, 3
        %vm555 = vcmp.eq.s32.totalorder %v475, 3
        %vm556 = vcmp.eq.s32.totalorder %v476, 3
        %vm557 = vcmp.eq.s32.totalorder %v477, 3
        %vm558 = vcmp.eq.s32.totalorder %v478, 3
        %vm559 = vcmp.eq.s32.totalorder %v479, 3
        %vm560 = vcmp.eq.s32.totalorder %v480, 3
        %vm561 = vcmp.eq.s32.totalorder %v481, 3
        %vm562 = vmpackc.low %vm554, %vm554
        %vm563 = vmpackc.low %vm555, %vm555
        %vm564 = vmpackc.low %vm556, %vm556
        %vm565 = vmpackc.low %vm557, %vm557
        %vm566 = vmpackc.low %vm558, %vm558
        %vm567 = vmpackc.low %vm559, %vm559
        %vm568 = vmpackc.low %vm560, %vm560
        %vm569 = vmpackc.low %vm561, %vm561
        %v570 = vsel %vm562, %v458, 0
        %v571 = vsel %vm563, %v459, 0
        %v572 = vsel %vm564, %v460, 0
        %v573 = vsel %vm565, %v461, 0
        %v574 = vsel %vm566, %v462, 0
        %v575 = vsel %vm567, %v463, 0
        %v576 = vsel %vm568, %v464, 0
        %v577 = vsel %vm569, %v465, 0
        %v586 = vunpack.c.l.b16 %v498
        %v587 = vunpack.c.l.b16 %v499
        %v588 = vunpack.c.l.b16 %v500
        %v589 = vunpack.c.l.b16 %v501
        %v590 = vunpack.c.l.b16 %v502
        %v591 = vunpack.c.l.b16 %v503
        %v592 = vunpack.c.l.b16 %v504
        %v593 = vunpack.c.l.b16 %v505
        %v594 = vpack.c.b16 %v587, %v586
        %v595 = vpack.c.b16 %v589, %v588
        %v596 = vpack.c.b16 %v591, %v590
        %v597 = vpack.c.b16 %v593, %v592
        %v606 = vunpack.c.l.b16 %v522
        %v607 = vunpack.c.l.b16 %v523
        %v608 = vunpack.c.l.b16 %v524
        %v609 = vunpack.c.l.b16 %v525
        %v610 = vunpack.c.l.b16 %v526
        %v611 = vunpack.c.l.b16 %v527
        %v612 = vunpack.c.l.b16 %v528
        %v613 = vunpack.c.l.b16 %v529
        %v614 = vpack.c.b16 %v607, %v606
        %v615 = vpack.c.b16 %v609, %v608
        %v616 = vpack.c.b16 %v611, %v610
        %v617 = vpack.c.b16 %v613, %v612
        %618 = vrot.lane.b32.xlu0 %v614, 8
        %v619 = vpop.permute.xlu0 %618
        %620 = vrot.lane.b32.xlu0 %v615, 8
        %v621 = vpop.permute.xlu0 %620
        %622 = vrot.lane.b32.xlu0 %v616, 8
        %v623 = vpop.permute.xlu0 %622
        %624 = vrot.lane.b32.xlu0 %v617, 8
        %v625 = vpop.permute.xlu0 %624
        %v634 = vunpack.c.l.b16 %v546
        %v635 = vunpack.c.l.b16 %v547
        %v636 = vunpack.c.l.b16 %v548
        %v637 = vunpack.c.l.b16 %v549
        %v638 = vunpack.c.l.b16 %v550
        %v639 = vunpack.c.l.b16 %v551
        %v640 = vunpack.c.l.b16 %v552
        %v641 = vunpack.c.l.b16 %v553
        %v642 = vpack.c.b16 %v635, %v634
        %v643 = vpack.c.b16 %v637, %v636
        %v644 = vpack.c.b16 %v639, %v638
        %v645 = vpack.c.b16 %v641, %v640
        %646 = vrot.lane.b32.xlu0 %v642, 16
        %v647 = vpop.permute.xlu0 %646
        %648 = vrot.lane.b32.xlu0 %v643, 16
        %v649 = vpop.permute.xlu0 %648
        %650 = vrot.lane.b32.xlu0 %v644, 16
        %v651 = vpop.permute.xlu0 %650
        %652 = vrot.lane.b32.xlu0 %v645, 16
        %v653 = vpop.permute.xlu0 %652
        %v662 = vunpack.c.l.b16 %v570
        %v663 = vunpack.c.l.b16 %v571
        %v664 = vunpack.c.l.b16 %v572
        %v665 = vunpack.c.l.b16 %v573
        %v666 = vunpack.c.l.b16 %v574
        %v667 = vunpack.c.l.b16 %v575
        %v668 = vunpack.c.l.b16 %v576
        %v669 = vunpack.c.l.b16 %v577
        %v670 = vpack.c.b16 %v663, %v662
        %v671 = vpack.c.b16 %v665, %v664
        %v672 = vpack.c.b16 %v667, %v666
        %v673 = vpack.c.b16 %v669, %v668
        %674 = vrot.lane.b32.xlu0 %v670, 24
        %v675 = vpop.permute.xlu0 %674
        %676 = vrot.lane.b32.xlu0 %v671, 24
        %v677 = vpop.permute.xlu0 %676
        %678 = vrot.lane.b32.xlu0 %v672, 24
        %v679 = vpop.permute.xlu0 %678
        %680 = vrot.lane.b32.xlu0 %v673, 24
        %v681 = vpop.permute.xlu0 %680
        %vm682 = vcmask 64512
        %v685 = vsel %vm682, %v594, %v619
        %v688 = vsel %vm682, %v595, %v621
        %v691 = vsel %vm682, %v596, %v623
        %v694 = vsel %vm682, %v597, %v625
        %vm695 = vcmask 130048
        %v697 = vsel %vm695, %v685, %v647
        %v699 = vsel %vm695, %v688, %v649
        %v701 = vsel %vm695, %v691, %v651
        %v703 = vsel %vm695, %v694, %v653
        %vm704 = vcmask 195584
        %v706 = vsel %vm704, %v697, %v675
        %v708 = vsel %vm704, %v699, %v677
        %v710 = vsel %vm704, %v701, %v679
        %v712 = vsel %vm704, %v703, %v681
        %v713 = vld [vmem:[#allocation8] sm:$0xf]
        %v714 = vld [vmem:[#allocation8 + $0x4] sm:$0xf]
        %v715 = vld [vmem:[#allocation8 + $0x8] sm:$0xf]
        %v716 = vld [vmem:[#allocation8 + $0xc] sm:$0xf]
        %v721 = vunpack.c.l.b16 %v713
        %v722 = vunpack.c.l.b16 %v714
        %v723 = vunpack.c.l.b16 %v715
        %v724 = vunpack.c.l.b16 %v716
        %v725 = vpack.c.b16 %v722, %v721
        %v726 = vpack.c.b16 %v724, %v723
        %vm729 = vcmask 261120
        %v730 = vsel %vm729, %v706, 0
        %v732 = vsel %vm729, %v708, 0
        %v734 = vsel %vm729, %v710, 0
        %v736 = vsel %vm729, %v712, 0
        %738 = vmatprep.subr.bf16.mxu0 0
        %739 = vmatpush1.bf16.msra.mxu0 %v725
        %740 = vmatprep.subr.bf16.mxu0 0
        %741 = vmatpush1.bf16.msra.mxu0 %v726
        %742 = vmatprep.subr.bf16.mxu0 0
        %743 = vmatpush1.bf16.msra.mxu0 0
        %744 = vmatprep.subr.bf16.mxu0 0
        %745 = vmatpush1.bf16.msra.mxu0 0
        %746 = vmatprep.subr.bf16.mxu0 0
        %747 = vmatpush1.bf16.msra.mxu0 0
        %748 = vmatprep.subr.bf16.mxu0 0
        %749 = vmatpush1.bf16.msra.mxu0 0
        %750 = vmatprep.subr.bf16.mxu0 0
        %751 = vmatpush1.bf16.msra.mxu0 0
        %752 = vmatprep.subr.bf16.mxu0 0
        %753 = vmatpush1.bf16.msra.mxu0 0
        %754 = vmatprep.subr.bf16.mxu0 0
        %755 = vmatpush1.bf16.msra.mxu0 0
        %756 = vmatprep.subr.bf16.mxu0 0
        %757 = vmatpush1.bf16.msra.mxu0 0
        %758 = vmatprep.subr.bf16.mxu0 0
        %759 = vmatpush1.bf16.msra.mxu0 0
        %760 = vmatprep.subr.bf16.mxu0 0
        %761 = vmatpush1.bf16.msra.mxu0 0
        %762 = vmatprep.subr.bf16.mxu0 0
        %763 = vmatpush1.bf16.msra.mxu0 0
        %764 = vmatprep.subr.bf16.mxu0 0
        %765 = vmatpush1.bf16.msra.mxu0 0
        %766 = vmatprep.subr.bf16.mxu0 0
        %767 = vmatpush1.bf16.msra.mxu0 0
        %768 = vmatprep.subr.bf16.mxu0 0
        %769 = vmatpush1.bf16.msra.mxu0 0
        %770 = vmatprep.mubr.bf16.mxu0 0
        %771 = vmatmul.mubr.bf16.gmra.mrb[0].mxu0 %v730
        %v772 = vpop.f32.mrb[0].mxu0
        %v773 = vadd.f32 0.0, %v772
        %v774 = vpop.f32.mrb[0].mxu0
        %v775 = vpop.f32.mrb[0].mxu0
        %v776 = vadd.f32 0.0, %v775
        %v777 = vpop.f32.mrb[0].mxu0
        %778 = vmatprep.mubr.bf16.mxu0 0
        %779 = vmatmul.mubr.bf16.gmra.mrb[0].mxu0 %v732
        %v780 = vpop.f32.mrb[0].mxu0
        %v781 = vadd.f32 0.0, %v780
        %v782 = vpop.f32.mrb[0].mxu0
        %v783 = vpop.f32.mrb[0].mxu0
        %v784 = vadd.f32 0.0, %v783
        %v785 = vpop.f32.mrb[0].mxu0
        %786 = vmatprep.mubr.bf16.mxu0 0
        %787 = vmatmul.mubr.bf16.gmra.mrb[0].mxu0 %v734
        %v788 = vpop.f32.mrb[0].mxu0
        %v789 = vadd.f32 0.0, %v788
        %v790 = vpop.f32.mrb[0].mxu0
        %v791 = vpop.f32.mrb[0].mxu0
        %v792 = vadd.f32 0.0, %v791
        %v793 = vpop.f32.mrb[0].mxu0
        %794 = vmatprep.mubr.bf16.mxu0 0
        %795 = vmatmul.mubr.bf16.gmra.mrb[0].mxu0 %v736
        %v796 = vpop.f32.mrb[0].mxu0
        %v797 = vadd.f32 0.0, %v796
        %v798 = vpop.f32.mrb[0].mxu0
        %v799 = vpop.f32.mrb[0].mxu0
        %v800 = vadd.f32 0.0, %v799
        %v801 = vpop.f32.mrb[0].mxu0
        %802 = vdwg.mxu0
        %v803 = vpack.c.bf16 %v773, %v773
        %v804 = vpack.c.bf16 %v776, %v776
        %v805 = vpack.c.bf16 %v781, %v781
        %v806 = vpack.c.bf16 %v784, %v784
        %v807 = vpack.c.bf16 %v789, %v789
        %v808 = vpack.c.bf16 %v792, %v792
        %v809 = vpack.c.bf16 %v797, %v797
        %v810 = vpack.c.bf16 %v800, %v800
        %s811 = scalar_lea.vmem [#allocation2], 12
        %812 = vst [vmem:[%s811 + $0x4] sm:$0xf] %v803
        %813 = vst [vmem:[%s811 + $0x10] sm:$0xf] %v804
        %814 = vst [vmem:[%s811 + $0x1c] sm:$0xf] %v805
        %815 = vst [vmem:[%s811 + $0x28] sm:$0xf] %v806
        %816 = vst [vmem:[%s811 + $0x34] sm:$0xf] %v807
        %817 = vst [vmem:[%s811 + $0x40] sm:$0xf] %v808
        %818 = vst [vmem:[%s811 + $0x4c] sm:$0xf] %v809
        %819 = vst [vmem:[%s811 + $0x58] sm:$0xf] %v810
        %v820 = vld [vmem:[#allocation2] sm:$0x8]
        %v821 = vld [vmem:[#allocation2 + $0x4] sm:$0xf]
        %v822 = vld [vmem:[#allocation2 + $0xc] sm:$0x8]
        %v823 = vld [vmem:[#allocation2 + $0x10] sm:$0xf]
        %v824 = vld [vmem:[#allocation2 + $0x18] sm:$0x8]
        %v825 = vld [vmem:[#allocation2 + $0x1c] sm:$0xf]
        %v826 = vld [vmem:[#allocation2 + $0x24] sm:$0x8]
        %v827 = vld [vmem:[#allocation2 + $0x28] sm:$0xf]
        %v828 = vld [vmem:[#allocation2 + $0x30] sm:$0x8]
        %v829 = vld [vmem:[#allocation2 + $0x34] sm:$0xf]
        %v830 = vld [vmem:[#allocation2 + $0x3c] sm:$0x8]
        %v831 = vld [vmem:[#allocation2 + $0x40] sm:$0xf]
        %v832 = vld [vmem:[#allocation2 + $0x48] sm:$0x8]
        %v833 = vld [vmem:[#allocation2 + $0x4c] sm:$0xf]
        %v834 = vld [vmem:[#allocation2 + $0x54] sm:$0x8]
        %v835 = vld [vmem:[#allocation2 + $0x58] sm:$0xf]
        %v836 = vld [vmem:[#allocation2 + $0x60] sm:$0x8]
        %v837 = vld [vmem:[#allocation2 + $0x64] sm:$0xf]
        %v838 = vld [vmem:[#allocation2 + $0x6c] sm:$0x8]
        %v839 = vld [vmem:[#allocation2 + $0x70] sm:$0xf]
        %v856 = vunpack.c.l.b16 %v820
        %v857 = vunpack.c.l.b16 %v821
        %v858 = vunpack.c.l.b16 %v822
        %v859 = vunpack.c.l.b16 %v823
        %v860 = vunpack.c.l.b16 %v824
        %v861 = vunpack.c.l.b16 %v825
        %v862 = vunpack.c.l.b16 %v826
        %v863 = vunpack.c.l.b16 %v827
        %v864 = vunpack.c.l.b16 %v828
        %v865 = vunpack.c.l.b16 %v829
        %v866 = vunpack.c.l.b16 %v830
        %v867 = vunpack.c.l.b16 %v831
        %v868 = vunpack.c.l.b16 %v832
        %v869 = vunpack.c.l.b16 %v833
        %v870 = vunpack.c.l.b16 %v834
        %v871 = vunpack.c.l.b16 %v835
        %v874 = vunpack.c.l.b16 %v836
        %v875 = vunpack.c.l.b16 %v837
        %v878 = vunpack.c.l.b16 %v838
        %v879 = vunpack.c.l.b16 %v839
        %v880 = vpack.c.b16 %v858, %v856
        %v881 = vpack.c.b16 %v860, %v860
        %v882 = vpack.c.b16 %v859, %v857
        %v883 = vpack.c.b16 %v861, %v861
        %v884 = vpack.c.b16 %v860, %v858
        %v885 = vpack.c.b16 %v862, %v862
        %v886 = vpack.c.b16 %v861, %v859
        %v887 = vpack.c.b16 %v863, %v863
        %v888 = vpack.c.b16 %v862, %v860
        %v889 = vpack.c.b16 %v864, %v864
        %v890 = vpack.c.b16 %v863, %v861
        %v891 = vpack.c.b16 %v865, %v865
        %v892 = vpack.c.b16 %v864, %v862
        %v893 = vpack.c.b16 %v866, %v866
        %v894 = vpack.c.b16 %v865, %v863
        %v895 = vpack.c.b16 %v867, %v867
        %v896 = vpack.c.b16 %v866, %v864
        %v897 = vpack.c.b16 %v868, %v868
        %v898 = vpack.c.b16 %v867, %v865
        %v899 = vpack.c.b16 %v869, %v869
        %v900 = vpack.c.b16 %v868, %v866
        %v901 = vpack.c.b16 %v870, %v870
        %v902 = vpack.c.b16 %v869, %v867
        %v903 = vpack.c.b16 %v871, %v871
        %v904 = vpack.c.b16 %v870, %v868
        %v905 = vpack.c.b16 %v874, %v874
        %v906 = vpack.c.b16 %v871, %v869
        %v907 = vpack.c.b16 %v875, %v875
        %v908 = vpack.c.b16 %v874, %v870
        %v909 = vpack.c.b16 %v878, %v878
        %v910 = vpack.c.b16 %v875, %v871
        %v911 = vpack.c.b16 %v879, %v879
        %vm912 = vsmask.f32 4368
        %vm913 = vmor %vm384, %vm912
        %v915 = vshrl.u32 %v880, 16
        %v917 = vrot.slane %v915, 7
        %v918 = vrot.slane %v917, 4
        %v920 = vshrl.u32 %v882, 16
        %v922 = vrot.slane %v920, 7
        %v923 = vshll.u32 %v882, 16
        %v925 = vor.u32 %v922, %v923
        %v926 = vsel %vm913, %v918, %v925
        %v928 = vshrl.u32 %v881, 16
        %v930 = vrot.slane %v928, 7
        %v931 = vrot.slane %v930, 4
        %v933 = vshrl.u32 %v883, 16
        %v935 = vrot.slane %v933, 7
        %v936 = vshll.u32 %v883, 16
        %v938 = vor.u32 %v935, %v936
        %v939 = vsel %vm913, %v931, %v938
        %v941 = vshrl.u32 %v884, 16
        %v943 = vrot.slane %v941, 7
        %v944 = vrot.slane %v943, 4
        %v946 = vshrl.u32 %v886, 16
        %v948 = vrot.slane %v946, 7
        %v949 = vshll.u32 %v886, 16
        %v951 = vor.u32 %v948, %v949
        %v952 = vsel %vm913, %v944, %v951
        %v954 = vshrl.u32 %v885, 16
        %v956 = vrot.slane %v954, 7
        %v957 = vrot.slane %v956, 4
        %v959 = vshrl.u32 %v887, 16
        %v961 = vrot.slane %v959, 7
        %v962 = vshll.u32 %v887, 16
        %v964 = vor.u32 %v961, %v962
        %v965 = vsel %vm913, %v957, %v964
        %v967 = vshrl.u32 %v888, 16
        %v969 = vrot.slane %v967, 7
        %v970 = vrot.slane %v969, 4
        %v972 = vshrl.u32 %v890, 16
        %v974 = vrot.slane %v972, 7
        %v975 = vshll.u32 %v890, 16
        %v977 = vor.u32 %v974, %v975
        %v978 = vsel %vm913, %v970, %v977
        %v980 = vshrl.u32 %v889, 16
        %v982 = vrot.slane %v980, 7
        %v983 = vrot.slane %v982, 4
        %v985 = vshrl.u32 %v891, 16
        %v987 = vrot.slane %v985, 7
        %v988 = vshll.u32 %v891, 16
        %v990 = vor.u32 %v987, %v988
        %v991 = vsel %vm913, %v983, %v990
        %v993 = vshrl.u32 %v892, 16
        %v995 = vrot.slane %v993, 7
        %v996 = vrot.slane %v995, 4
        %v998 = vshrl.u32 %v894, 16
        %v1000 = vrot.slane %v998, 7
        %v1001 = vshll.u32 %v894, 16
        %v1003 = vor.u32 %v1000, %v1001
        %v1004 = vsel %vm913, %v996, %v1003
        %v1006 = vshrl.u32 %v893, 16
        %v1008 = vrot.slane %v1006, 7
        %v1009 = vrot.slane %v1008, 4
        %v1011 = vshrl.u32 %v895, 16
        %v1013 = vrot.slane %v1011, 7
        %v1014 = vshll.u32 %v895, 16
        %v1016 = vor.u32 %v1013, %v1014
        %v1017 = vsel %vm913, %v1009, %v1016
        %v1019 = vshrl.u32 %v896, 16
        %v1021 = vrot.slane %v1019, 7
        %v1022 = vrot.slane %v1021, 4
        %v1024 = vshrl.u32 %v898, 16
        %v1026 = vrot.slane %v1024, 7
        %v1027 = vshll.u32 %v898, 16
        %v1029 = vor.u32 %v1026, %v1027
        %v1030 = vsel %vm913, %v1022, %v1029
        %v1032 = vshrl.u32 %v897, 16
        %v1034 = vrot.slane %v1032, 7
        %v1035 = vrot.slane %v1034, 4
        %v1037 = vshrl.u32 %v899, 16
        %v1039 = vrot.slane %v1037, 7
        %v1040 = vshll.u32 %v899, 16
        %v1042 = vor.u32 %v1039, %v1040
        %v1043 = vsel %vm913, %v1035, %v1042
        %v1045 = vshrl.u32 %v900, 16
        %v1047 = vrot.slane %v1045, 7
        %v1048 = vrot.slane %v1047, 4
        %v1050 = vshrl.u32 %v902, 16
        %v1052 = vrot.slane %v1050, 7
        %v1053 = vshll.u32 %v902, 16
        %v1055 = vor.u32 %v1052, %v1053
        %v1056 = vsel %vm913, %v1048, %v1055
        %v1058 = vshrl.u32 %v901, 16
        %v1060 = vrot.slane %v1058, 7
        %v1061 = vrot.slane %v1060, 4
        %v1063 = vshrl.u32 %v903, 16
        %v1065 = vrot.slane %v1063, 7
        %v1066 = vshll.u32 %v903, 16
        %v1068 = vor.u32 %v1065, %v1066
        %v1069 = vsel %vm913, %v1061, %v1068
        %v1071 = vshrl.u32 %v904, 16
        %v1073 = vrot.slane %v1071, 7
        %v1074 = vrot.slane %v1073, 4
        %v1076 = vshrl.u32 %v906, 16
        %v1078 = vrot.slane %v1076, 7
        %v1079 = vshll.u32 %v906, 16
        %v1081 = vor.u32 %v1078, %v1079
        %v1082 = vsel %vm913, %v1074, %v1081
        %v1084 = vshrl.u32 %v905, 16
        %v1086 = vrot.slane %v1084, 7
        %v1087 = vrot.slane %v1086, 4
        %v1089 = vshrl.u32 %v907, 16
        %v1091 = vrot.slane %v1089, 7
        %v1092 = vshll.u32 %v907, 16
        %v1094 = vor.u32 %v1091, %v1092
        %v1095 = vsel %vm913, %v1087, %v1094
        %v1097 = vshrl.u32 %v908, 16
        %v1099 = vrot.slane %v1097, 7
        %v1100 = vrot.slane %v1099, 4
        %v1102 = vshrl.u32 %v910, 16
        %v1104 = vrot.slane %v1102, 7
        %v1105 = vshll.u32 %v910, 16
        %v1107 = vor.u32 %v1104, %v1105
        %v1108 = vsel %vm913, %v1100, %v1107
        %v1110 = vshrl.u32 %v909, 16
        %v1112 = vrot.slane %v1110, 7
        %v1113 = vrot.slane %v1112, 4
        %v1115 = vshrl.u32 %v911, 16
        %v1117 = vrot.slane %v1115, 7
        %v1118 = vshll.u32 %v911, 16
        %v1120 = vor.u32 %v1117, %v1118
        %v1121 = vsel %vm913, %v1113, %v1120
        %v1122 = vld [vmem:[#allocation9] sm:$0xf]
        %v1123 = vld [vmem:[#allocation9 + $0x4] sm:$0xf]
        %v1124 = vld [vmem:[#allocation9 + $0x8] sm:$0xf]
        %v1125 = vld [vmem:[#allocation9 + $0xc] sm:$0xf]
        %v1126 = vld [vmem:[#allocation9 + $0x10] sm:$0xf]
        %v1127 = vld [vmem:[#allocation9 + $0x14] sm:$0xf]
        %v1128 = vld [vmem:[#allocation9 + $0x18] sm:$0xf]
        %v1129 = vld [vmem:[#allocation9 + $0x1c] sm:$0xf]
        %v1130 = vld [vmem:[#allocation9 + $0x20] sm:$0xf]
        %v1131 = vld [vmem:[#allocation9 + $0x24] sm:$0xf]
        %v1132 = vld [vmem:[#allocation9 + $0x28] sm:$0xf]
        %v1133 = vld [vmem:[#allocation9 + $0x2c] sm:$0xf]
        %v1134 = vld [vmem:[#allocation9 + $0x30] sm:$0xf]
        %v1135 = vld [vmem:[#allocation9 + $0x34] sm:$0xf]
        %v1136 = vld [vmem:[#allocation9 + $0x38] sm:$0xf]
        %v1137 = vld [vmem:[#allocation9 + $0x3c] sm:$0xf]
        %v1138 = vld [vmem:[#allocation9 + $0x40] sm:$0xf]
        %v1139 = vld [vmem:[#allocation9 + $0x44] sm:$0xf]
        %v1140 = vld [vmem:[#allocation9 + $0x48] sm:$0xf]
        %v1141 = vld [vmem:[#allocation9 + $0x4c] sm:$0xf]
        %v1142 = vld [vmem:[#allocation9 + $0x50] sm:$0xf]
        %v1143 = vld [vmem:[#allocation9 + $0x54] sm:$0xf]
        %v1144 = vld [vmem:[#allocation9 + $0x58] sm:$0xf]
        %v1145 = vld [vmem:[#allocation9 + $0x5c] sm:$0xf]
        %v1146 = vld [vmem:[#allocation9 + $0x60] sm:$0xf]
        %v1147 = vld [vmem:[#allocation9 + $0x64] sm:$0xf]
        %v1148 = vld [vmem:[#allocation9 + $0x68] sm:$0xf]
        %v1149 = vld [vmem:[#allocation9 + $0x6c] sm:$0xf]
        %v1150 = vld [vmem:[#allocation9 + $0x70] sm:$0xf]
        %v1151 = vld [vmem:[#allocation9 + $0x74] sm:$0xf]
        %v1152 = vld [vmem:[#allocation9 + $0x78] sm:$0xf]
        %v1153 = vld [vmem:[#allocation9 + $0x7c] sm:$0xf]
        %v1154 = vld [vmem:[#allocation9 + $0x80] sm:$0xf]
        %v1155 = vld [vmem:[#allocation9 + $0x84] sm:$0xf]
        %v1156 = vld [vmem:[#allocation9 + $0x88] sm:$0xf]
        %v1157 = vld [vmem:[#allocation9 + $0x8c] sm:$0xf]
        %v1158 = vld [vmem:[#allocation9 + $0x90] sm:$0xf]
        %v1159 = vld [vmem:[#allocation9 + $0x94] sm:$0xf]
        %v1160 = vld [vmem:[#allocation9 + $0x98] sm:$0xf]
        %v1161 = vld [vmem:[#allocation9 + $0x9c] sm:$0xf]
        %v1162 = vld [vmem:[#allocation9 + $0xa0] sm:$0xf]
        %v1163 = vld [vmem:[#allocation9 + $0xa4] sm:$0xf]
        %v1164 = vld [vmem:[#allocation9 + $0xa8] sm:$0xf]
        %v1165 = vld [vmem:[#allocation9 + $0xac] sm:$0xf]
        %v1166 = vld [vmem:[#allocation9 + $0xb0] sm:$0xf]
        %v1167 = vld [vmem:[#allocation9 + $0xb4] sm:$0xf]
        %v1168 = vld [vmem:[#allocation9 + $0xb8] sm:$0xf]
        %v1169 = vld [vmem:[#allocation9 + $0xbc] sm:$0xf]
        %s1170 = scalar_lea.vmem [#allocation9], 192
        %v1171 = vld [vmem:[%s1170] sm:$0xf]
        %v1172 = vld [vmem:[%s1170 + $0x4] sm:$0xf]
        %v1173 = vld [vmem:[%s1170 + $0x8] sm:$0xf]
        %v1174 = vld [vmem:[%s1170 + $0xc] sm:$0xf]
        %v1175 = vld [vmem:[%s1170 + $0x10] sm:$0xf]
        %v1176 = vld [vmem:[%s1170 + $0x14] sm:$0xf]
        %v1177 = vld [vmem:[%s1170 + $0x18] sm:$0xf]
        %v1178 = vld [vmem:[%s1170 + $0x1c] sm:$0xf]
        %v1179 = vld [vmem:[%s1170 + $0x20] sm:$0xf]
        %v1180 = vld [vmem:[%s1170 + $0x24] sm:$0xf]
        %v1181 = vld [vmem:[%s1170 + $0x28] sm:$0xf]
        %v1182 = vld [vmem:[%s1170 + $0x2c] sm:$0xf]
        %v1183 = vld [vmem:[%s1170 + $0x30] sm:$0xf]
        %v1184 = vld [vmem:[%s1170 + $0x34] sm:$0xf]
        %v1185 = vld [vmem:[%s1170 + $0x38] sm:$0xf]
        %v1186 = vld [vmem:[%s1170 + $0x3c] sm:$0xf]
        %v1187 = vld [vmem:[%s1170 + $0x40] sm:$0xf]
        %v1188 = vld [vmem:[%s1170 + $0x44] sm:$0xf]
        %v1189 = vld [vmem:[%s1170 + $0x48] sm:$0xf]
        %v1190 = vld [vmem:[%s1170 + $0x4c] sm:$0xf]
        %v1191 = vld [vmem:[%s1170 + $0x50] sm:$0xf]
        %v1192 = vld [vmem:[%s1170 + $0x54] sm:$0xf]
        %v1193 = vld [vmem:[%s1170 + $0x58] sm:$0xf]
        %v1194 = vld [vmem:[%s1170 + $0x5c] sm:$0xf]
        %v1195 = vld [vmem:[%s1170 + $0x60] sm:$0xf]
        %v1196 = vld [vmem:[%s1170 + $0x64] sm:$0xf]
        %v1197 = vld [vmem:[%s1170 + $0x68] sm:$0xf]
        %v1198 = vld [vmem:[%s1170 + $0x6c] sm:$0xf]
        %v1199 = vld [vmem:[%s1170 + $0x70] sm:$0xf]
        %v1200 = vld [vmem:[%s1170 + $0x74] sm:$0xf]
        %v1201 = vld [vmem:[%s1170 + $0x78] sm:$0xf]
        %v1202 = vld [vmem:[%s1170 + $0x7c] sm:$0xf]
        %v1203 = vld [vmem:[%s1170 + $0x80] sm:$0xf]
        %v1204 = vld [vmem:[%s1170 + $0x84] sm:$0xf]
        %v1205 = vld [vmem:[%s1170 + $0x88] sm:$0xf]
        %v1206 = vld [vmem:[%s1170 + $0x8c] sm:$0xf]
        %v1207 = vld [vmem:[%s1170 + $0x90] sm:$0xf]
        %v1208 = vld [vmem:[%s1170 + $0x94] sm:$0xf]
        %v1209 = vld [vmem:[%s1170 + $0x98] sm:$0xf]
        %v1210 = vld [vmem:[%s1170 + $0x9c] sm:$0xf]
        %v1211 = vld [vmem:[%s1170 + $0xa0] sm:$0xf]
        %v1212 = vld [vmem:[%s1170 + $0xa4] sm:$0xf]
        %v1213 = vld [vmem:[%s1170 + $0xa8] sm:$0xf]
        %v1214 = vld [vmem:[%s1170 + $0xac] sm:$0xf]
        %v1215 = vld [vmem:[%s1170 + $0xb0] sm:$0xf]
        %v1216 = vld [vmem:[%s1170 + $0xb4] sm:$0xf]
        %v1217 = vld [vmem:[%s1170 + $0xb8] sm:$0xf]
        %v1218 = vld [vmem:[%s1170 + $0xbc] sm:$0xf]
        %v1219 = vpack.c.b16 %v879, %v875
        %v1277 = vunpack.c.l.b16 %v1171
        %v1278 = vunpack.c.l.b16 %v1172
        %v1279 = vunpack.c.l.b16 %v1173
        %v1280 = vunpack.c.l.b16 %v1174
        %v1281 = vunpack.c.l.b16 %v1175
        %v1282 = vunpack.c.l.b16 %v1176
        %v1283 = vunpack.c.l.b16 %v1177
        %v1284 = vunpack.c.l.b16 %v1178
        %v1285 = vunpack.c.l.b16 %v1179
        %v1286 = vunpack.c.l.b16 %v1180
        %v1287 = vunpack.c.l.b16 %v1181
        %v1288 = vunpack.c.l.b16 %v1182
        %v1289 = vunpack.c.l.b16 %v1183
        %v1290 = vunpack.c.l.b16 %v1184
        %v1291 = vunpack.c.l.b16 %v1185
        %v1292 = vunpack.c.l.b16 %v1186
        %v1293 = vunpack.c.l.b16 %v1187
        %v1294 = vunpack.c.l.b16 %v1188
        %v1295 = vunpack.c.l.b16 %v1189
        %v1296 = vunpack.c.l.b16 %v1190
        %v1297 = vunpack.c.l.b16 %v1191
        %v1298 = vunpack.c.l.b16 %v1192
        %v1299 = vunpack.c.l.b16 %v1193
        %v1300 = vunpack.c.l.b16 %v1194
        %v1301 = vunpack.c.l.b16 %v1195
        %v1302 = vunpack.c.l.b16 %v1196
        %v1303 = vunpack.c.l.b16 %v1197
        %v1304 = vunpack.c.l.b16 %v1198
        %v1305 = vunpack.c.l.b16 %v1199
        %v1306 = vunpack.c.l.b16 %v1200
        %v1307 = vunpack.c.l.b16 %v1201
        %v1308 = vunpack.c.l.b16 %v1202
        %v1309 = vunpack.c.l.b16 %v1203
        %v1310 = vunpack.c.l.b16 %v1204
        %v1311 = vunpack.c.l.b16 %v1205
        %v1312 = vunpack.c.l.b16 %v1206
        %v1313 = vunpack.c.l.b16 %v1207
        %v1314 = vunpack.c.l.b16 %v1208
        %v1315 = vunpack.c.l.b16 %v1209
        %v1316 = vunpack.c.l.b16 %v1210
        %v1317 = vunpack.c.l.b16 %v1211
        %v1318 = vunpack.c.l.b16 %v1212
        %v1319 = vunpack.c.l.b16 %v1213
        %v1320 = vunpack.c.l.b16 %v1214
        %v1321 = vunpack.c.l.b16 %v1215
        %v1322 = vunpack.c.l.b16 %v1216
        %v1323 = vunpack.c.l.b16 %v1217
        %v1324 = vunpack.c.l.b16 %v1218
        %v1325 = vpack.c.b16 %v1278, %v1277
        %v1326 = vpack.c.b16 %v1280, %v1279
        %v1327 = vpack.c.b16 %v1282, %v1281
        %v1328 = vpack.c.b16 %v1284, %v1283
        %v1329 = vpack.c.b16 %v1286, %v1285
        %v1330 = vpack.c.b16 %v1288, %v1287
        %v1331 = vpack.c.b16 %v1290, %v1289
        %v1332 = vpack.c.b16 %v1292, %v1291
        %v1333 = vpack.c.b16 %v1294, %v1293
        %v1334 = vpack.c.b16 %v1296, %v1295
        %v1335 = vpack.c.b16 %v1298, %v1297
        %v1336 = vpack.c.b16 %v1300, %v1299
        %v1337 = vpack.c.b16 %v1302, %v1301
        %v1338 = vpack.c.b16 %v1304, %v1303
        %v1339 = vpack.c.b16 %v1306, %v1305
        %v1340 = vpack.c.b16 %v1308, %v1307
        %v1341 = vpack.c.b16 %v1310, %v1309
        %v1342 = vpack.c.b16 %v1312, %v1311
        %v1343 = vpack.c.b16 %v1314, %v1313
        %v1344 = vpack.c.b16 %v1316, %v1315
        %v1345 = vpack.c.b16 %v1318, %v1317
        %v1346 = vpack.c.b16 %v1320, %v1319
        %v1347 = vpack.c.b16 %v1322, %v1321
        %v1348 = vpack.c.b16 %v1324, %v1323
        %1373 = vmatprep.subr.bf16.mxu0 0
        %1374 = vmatpush1.bf16.msra.mxu0 %v1325
        %1375 = vmatprep.subr.bf16.mxu0 0
        %1376 = vmatpush1.bf16.msra.mxu0 %v1326
        %1377 = vmatprep.subr.bf16.mxu0 0
        %1378 = vmatpush1.bf16.msra.mxu0 %v1327
        %1379 = vmatprep.subr.bf16.mxu0 0
        %1380 = vmatpush1.bf16.msra.mxu0 %v1328
        %1381 = vmatprep.subr.bf16.mxu0 0
        %1382 = vmatpush1.bf16.msra.mxu0 %v1329
        %1383 = vmatprep.subr.bf16.mxu0 0
        %1384 = vmatpush1.bf16.msra.mxu0 %v1330
        %1385 = vmatprep.subr.bf16.mxu0 0
        %1386 = vmatpush1.bf16.msra.mxu0 %v1331
        %1387 = vmatprep.subr.bf16.mxu0 0
        %1388 = vmatpush1.bf16.msra.mxu0 %v1332
        %1389 = vmatprep.subr.bf16.mxu0 0
        %1390 = vmatpush1.bf16.msra.mxu0 %v1333
        %1391 = vmatprep.subr.bf16.mxu0 0
        %1392 = vmatpush1.bf16.msra.mxu0 %v1334
        %1393 = vmatprep.subr.bf16.mxu0 0
        %1394 = vmatpush1.bf16.msra.mxu0 %v1335
        %1395 = vmatprep.subr.bf16.mxu0 0
        %1396 = vmatpush1.bf16.msra.mxu0 %v1336
        %1397 = vmatprep.subr.bf16.mxu0 0
        %1398 = vmatpush1.bf16.msra.mxu0 %v1337
        %1399 = vmatprep.subr.bf16.mxu0 0
        %1400 = vmatpush1.bf16.msra.mxu0 %v1338
        %1401 = vmatprep.subr.bf16.mxu0 0
        %1402 = vmatpush1.bf16.msra.mxu0 %v1339
        %1403 = vmatprep.subr.bf16.mxu0 0
        %1404 = vmatpush1.bf16.msra.mxu0 %v1340
        %1405 = vmatprep.mubr.bf16.mxu0 %v886
        %1406 = vmatmul.mubr.bf16.gmra.mrb[0].mxu0 %v882
        %v1407 = vpop.f32.mrb[0].mxu0
        %v1408 = vadd.f32 0.0, %v1407
        %v1409 = vpop.f32.mrb[0].mxu0
        %v1410 = vpop.f32.mrb[0].mxu0
        %v1411 = vadd.f32 0.0, %v1410
        %v1412 = vpop.f32.mrb[0].mxu0
        %1413 = vmatprep.mubr.bf16.mxu0 %v894
        %1414 = vmatmul.mubr.bf16.gmra.mrb[0].mxu0 %v890
        %v1415 = vpop.f32.mrb[0].mxu0
        %v1416 = vadd.f32 0.0, %v1415
        %v1417 = vpop.f32.mrb[0].mxu0
        %v1418 = vpop.f32.mrb[0].mxu0
        %v1419 = vadd.f32 0.0, %v1418
        %v1420 = vpop.f32.mrb[0].mxu0
        %1421 = vmatprep.mubr.bf16.mxu0 %v902
        %1422 = vmatmul.mubr.bf16.gmra.mrb[0].mxu0 %v898
        %v1423 = vpop.f32.mrb[0].mxu0
        %v1424 = vadd.f32 0.0, %v1423
        %v1425 = vpop.f32.mrb[0].mxu0
        %v1426 = vpop.f32.mrb[0].mxu0
        %v1427 = vadd.f32 0.0, %v1426
        %v1428 = vpop.f32.mrb[0].mxu0
        %1429 = vmatprep.mubr.bf16.mxu0 %v910
        %1430 = vmatmul.mubr.bf16.gmra.mrb[0].mxu0 %v906
        %v1431 = vpop.f32.mrb[0].mxu0
        %v1432 = vadd.f32 0.0, %v1431
        %v1433 = vpop.f32.mrb[0].mxu0
        %v1434 = vpop.f32.mrb[0].mxu0
        %v1435 = vadd.f32 0.0, %v1434
        %v1436 = vpop.f32.mrb[0].mxu0
        %1437 = vdwg.mxu0
        %1438 = vmatprep.subr.bf16.mxu0 0
        %1439 = vmatpush1.bf16.msra.mxu0 %v1341
        %1440 = vmatprep.subr.bf16.mxu0 0
        %1441 = vmatpush1.bf16.msra.mxu0 %v1342
        %1442 = vmatprep.subr.bf16.mxu0 0
        %1443 = vmatpush1.bf16.msra.mxu0 %v1343
        %1444 = vmatprep.subr.bf16.mxu0 0
        %1445 = vmatpush1.bf16.msra.mxu0 %v1344
        %1446 = vmatprep.subr.bf16.mxu0 0
        %1447 = vmatpush1.bf16.msra.mxu0 %v1345
        %1448 = vmatprep.subr.bf16.mxu0 0
        %1449 = vmatpush1.bf16.msra.mxu0 %v1346
        %1450 = vmatprep.subr.bf16.mxu0 0
        %1451 = vmatpush1.bf16.msra.mxu0 %v1347
        %1452 = vmatprep.subr.bf16.mxu0 0
        %1453 = vmatpush1.bf16.msra.mxu0 %v1348
        %1454 = vmatprep.subr.bf16.mxu0 0
        %1455 = vmatpush1.bf16.msra.mxu0 0
        %1456 = vmatprep.subr.bf16.mxu0 0
        %1457 = vmatpush1.bf16.msra.mxu0 0
        %1458 = vmatprep.subr.bf16.mxu0 0
        %1459 = vmatpush1.bf16.msra.mxu0 0
        %1460 = vmatprep.subr.bf16.mxu0 0
        %1461 = vmatpush1.bf16.msra.mxu0 0
        %1462 = vmatprep.subr.bf16.mxu0 0
        %1463 = vmatpush1.bf16.msra.mxu0 0
        %1464 = vmatprep.subr.bf16.mxu0 0
        %1465 = vmatpush1.bf16.msra.mxu0 0
        %1466 = vmatprep.subr.bf16.mxu0 0
        %1467 = vmatpush1.bf16.msra.mxu0 0
        %1468 = vmatprep.subr.bf16.mxu0 0
        %1469 = vmatpush1.bf16.msra.mxu0 0
        %1470 = vmatprep.mubr.bf16.mxu0 0
        %1471 = vmatmul.mubr.bf16.gmra.mrb[0].mxu0 %v890
        %v1472 = vpop.f32.mrb[0].mxu0
        %v1473 = vadd.f32 %v1408, %v1472
        %v1474 = vpop.f32.mrb[0].mxu0
        %v1475 = vpop.f32.mrb[0].mxu0
        %v1476 = vadd.f32 %v1411, %v1475
        %v1477 = vpop.f32.mrb[0].mxu0
        %1478 = vmatprep.mubr.bf16.mxu0 0
        %1479 = vmatmul.mubr.bf16.gmra.mrb[0].mxu0 %v898
        %v1480 = vpop.f32.mrb[0].mxu0
        %v1481 = vadd.f32 %v1416, %v1480
        %v1482 = vpop.f32.mrb[0].mxu0
        %v1483 = vpop.f32.mrb[0].mxu0
        %v1484 = vadd.f32 %v1419, %v1483
        %v1485 = vpop.f32.mrb[0].mxu0
        %1486 = vmatprep.mubr.bf16.mxu0 0
        %1487 = vmatmul.mubr.bf16.gmra.mrb[0].mxu0 %v906
        %v1488 = vpop.f32.mrb[0].mxu0
        %v1489 = vadd.f32 %v1424, %v1488
        %v1490 = vpop.f32.mrb[0].mxu0
        %v1491 = vpop.f32.mrb[0].mxu0
        %v1492 = vadd.f32 %v1427, %v1491
        %v1493 = vpop.f32.mrb[0].mxu0
        %1494 = vmatprep.mubr.bf16.mxu0 0
        %1495 = vmatmul.mubr.bf16.gmra.mrb[0].mxu0 %v1219
        %v1496 = vpop.f32.mrb[0].mxu0
        %v1497 = vadd.f32 %v1432, %v1496
        %v1498 = vpop.f32.mrb[0].mxu0
        %v1499 = vpop.f32.mrb[0].mxu0
        %v1500 = vadd.f32 %v1435, %v1499
        %v1501 = vpop.f32.mrb[0].mxu0
        %1502 = vdwg.mxu0
        %v1503 = vunpack.c.l.b16 %v926
        %v1504 = vunpack.c.h.b16 %v926
        %v1505 = vunpack.c.l.b16 %v939
        %v1506 = vunpack.c.l.b16 %v952
        %v1507 = vunpack.c.h.b16 %v952
        %v1508 = vunpack.c.l.b16 %v965
        %v1509 = vunpack.c.l.b16 %v978
        %v1510 = vunpack.c.h.b16 %v978
        %v1511 = vunpack.c.l.b16 %v991
        %v1512 = vunpack.c.l.b16 %v1004
        %v1513 = vunpack.c.h.b16 %v1004
        %v1514 = vunpack.c.l.b16 %v1017
        %v1515 = vunpack.c.l.b16 %v1030
        %v1516 = vunpack.c.h.b16 %v1030
        %v1517 = vunpack.c.l.b16 %v1043
        %v1518 = vunpack.c.l.b16 %v1056
        %v1519 = vunpack.c.h.b16 %v1056
        %v1520 = vunpack.c.l.b16 %v1069
        %v1521 = vunpack.c.l.b16 %v1082
        %v1522 = vunpack.c.h.b16 %v1082
        %v1523 = vunpack.c.l.b16 %v1095
        %v1524 = vunpack.c.l.b16 %v1108
        %v1525 = vunpack.c.h.b16 %v1108
        %v1526 = vunpack.c.l.b16 %v1121
        %v1527 = vpack.c.b16 %v1506, %v1503
        %v1528 = vpack.c.b16 %v1507, %v1504
        %v1529 = vpack.c.b16 %v1508, %v1505
        %v1530 = vpack.c.b16 %v1512, %v1509
        %v1531 = vpack.c.b16 %v1513, %v1510
        %v1532 = vpack.c.b16 %v1514, %v1511
        %v1533 = vpack.c.b16 %v1518, %v1515
        %v1534 = vpack.c.b16 %v1519, %v1516
        %v1535 = vpack.c.b16 %v1520, %v1517
        %v1536 = vpack.c.b16 %v1524, %v1521
        %v1537 = vpack.c.b16 %v1525, %v1522
        %v1538 = vpack.c.b16 %v1526, %v1523
        %v1599 = vunpack.c.l.b16 %v1122
        %v1600 = vunpack.c.l.b16 %v1123
        %v1601 = vunpack.c.l.b16 %v1124
        %v1602 = vunpack.c.l.b16 %v1125
        %v1603 = vunpack.c.l.b16 %v1126
        %v1604 = vunpack.c.l.b16 %v1127
        %v1605 = vunpack.c.l.b16 %v1128
        %v1606 = vunpack.c.l.b16 %v1129
        %v1607 = vunpack.c.l.b16 %v1130
        %v1608 = vunpack.c.l.b16 %v1131
        %v1609 = vunpack.c.l.b16 %v1132
        %v1610 = vunpack.c.l.b16 %v1133
        %v1611 = vunpack.c.l.b16 %v1134
        %v1612 = vunpack.c.l.b16 %v1135
        %v1613 = vunpack.c.l.b16 %v1136
        %v1614 = vunpack.c.l.b16 %v1137
        %v1615 = vunpack.c.l.b16 %v1138
        %v1616 = vunpack.c.l.b16 %v1139
        %v1617 = vunpack.c.l.b16 %v1140
        %v1618 = vunpack.c.l.b16 %v1141
        %v1619 = vunpack.c.l.b16 %v1142
        %v1620 = vunpack.c.l.b16 %v1143
        %v1621 = vunpack.c.l.b16 %v1144
        %v1622 = vunpack.c.l.b16 %v1145
        %v1623 = vunpack.c.l.b16 %v1146
        %v1624 = vunpack.c.l.b16 %v1147
        %v1625 = vunpack.c.l.b16 %v1148
        %v1626 = vunpack.c.l.b16 %v1149
        %v1627 = vunpack.c.l.b16 %v1150
        %v1628 = vunpack.c.l.b16 %v1151
        %v1629 = vunpack.c.l.b16 %v1152
        %v1630 = vunpack.c.l.b16 %v1153
        %v1631 = vunpack.c.l.b16 %v1154
        %v1632 = vunpack.c.l.b16 %v1155
        %v1633 = vunpack.c.l.b16 %v1156
        %v1634 = vunpack.c.l.b16 %v1157
        %v1635 = vunpack.c.l.b16 %v1158
        %v1636 = vunpack.c.l.b16 %v1159
        %v1637 = vunpack.c.l.b16 %v1160
        %v1638 = vunpack.c.l.b16 %v1161
        %v1639 = vunpack.c.l.b16 %v1162
        %v1640 = vunpack.c.l.b16 %v1163
        %v1641 = vunpack.c.l.b16 %v1164
        %v1642 = vunpack.c.l.b16 %v1165
        %v1643 = vunpack.c.l.b16 %v1166
        %v1644 = vunpack.c.l.b16 %v1167
        %v1645 = vunpack.c.l.b16 %v1168
        %v1646 = vunpack.c.l.b16 %v1169
        %v1647 = vpack.c.b16 %v1600, %v1599
        %v1648 = vpack.c.b16 %v1602, %v1601
        %v1649 = vpack.c.b16 %v1604, %v1603
        %v1650 = vpack.c.b16 %v1606, %v1605
        %v1651 = vpack.c.b16 %v1608, %v1607
        %v1652 = vpack.c.b16 %v1610, %v1609
        %v1653 = vpack.c.b16 %v1612, %v1611
        %v1654 = vpack.c.b16 %v1614, %v1613
        %v1655 = vpack.c.b16 %v1616, %v1615
        %v1656 = vpack.c.b16 %v1618, %v1617
        %v1657 = vpack.c.b16 %v1620, %v1619
        %v1658 = vpack.c.b16 %v1622, %v1621
        %v1659 = vpack.c.b16 %v1624, %v1623
        %v1660 = vpack.c.b16 %v1626, %v1625
        %v1661 = vpack.c.b16 %v1628, %v1627
        %v1662 = vpack.c.b16 %v1630, %v1629
        %v1663 = vpack.c.b16 %v1632, %v1631
        %v1664 = vpack.c.b16 %v1634, %v1633
        %v1665 = vpack.c.b16 %v1636, %v1635
        %v1666 = vpack.c.b16 %v1638, %v1637
        %v1667 = vpack.c.b16 %v1640, %v1639
        %v1668 = vpack.c.b16 %v1642, %v1641
        %v1669 = vpack.c.b16 %v1644, %v1643
        %v1670 = vpack.c.b16 %v1646, %v1645
        %1695 = vmatprep.subr.bf16.mxu0 0
        %1696 = vmatpush1.bf16.msra.mxu0 %v1647
        %1697 = vmatprep.subr.bf16.mxu0 0
        %1698 = vmatpush1.bf16.msra.mxu0 %v1648
        %1699 = vmatprep.subr.bf16.mxu0 0
        %1700 = vmatpush1.bf16.msra.mxu0 %v1649
        %1701 = vmatprep.subr.bf16.mxu0 0
        %1702 = vmatpush1.bf16.msra.mxu0 %v1650
        %1703 = vmatprep.subr.bf16.mxu0 0
        %1704 = vmatpush1.bf16.msra.mxu0 %v1651
        %1705 = vmatprep.subr.bf16.mxu0 0
        %1706 = vmatpush1.bf16.msra.mxu0 %v1652
        %1707 = vmatprep.subr.bf16.mxu0 0
        %1708 = vmatpush1.bf16.msra.mxu0 %v1653
        %1709 = vmatprep.subr.bf16.mxu0 0
        %1710 = vmatpush1.bf16.msra.mxu0 %v1654
        %1711 = vmatprep.subr.bf16.mxu0 0
        %1712 = vmatpush1.bf16.msra.mxu0 %v1655
        %1713 = vmatprep.subr.bf16.mxu0 0
        %1714 = vmatpush1.bf16.msra.mxu0 %v1656
        %1715 = vmatprep.subr.bf16.mxu0 0
        %1716 = vmatpush1.bf16.msra.mxu0 %v1657
        %1717 = vmatprep.subr.bf16.mxu0 0
        %1718 = vmatpush1.bf16.msra.mxu0 %v1658
        %1719 = vmatprep.subr.bf16.mxu0 0
        %1720 = vmatpush1.bf16.msra.mxu0 %v1659
        %1721 = vmatprep.subr.bf16.mxu0 0
        %1722 = vmatpush1.bf16.msra.mxu0 %v1660
        %1723 = vmatprep.subr.bf16.mxu0 0
        %1724 = vmatpush1.bf16.msra.mxu0 %v1661
        %1725 = vmatprep.subr.bf16.mxu0 0
        %1726 = vmatpush1.bf16.msra.mxu0 %v1662
        %1727 = vmatprep.mubr.bf16.mxu0 %v1528
        %1728 = vmatmul.mubr.bf16.gmra.mrb[0].mxu0 %v1527
        %v1729 = vpop.f32.mrb[0].mxu0
        %v1730 = vadd.f32 %v1473, %v1729
        %v1731 = vpop.f32.mrb[0].mxu0
        %v1732 = vpop.f32.mrb[0].mxu0
        %v1733 = vadd.f32 %v1476, %v1732
        %v1734 = vpop.f32.mrb[0].mxu0
        %1735 = vmatprep.mubr.bf16.mxu0 %v1531
        %1736 = vmatmul.mubr.bf16.gmra.mrb[0].mxu0 %v1530
        %v1737 = vpop.f32.mrb[0].mxu0
        %v1738 = vadd.f32 %v1481, %v1737
        %v1739 = vpop.f32.mrb[0].mxu0
        %v1740 = vpop.f32.mrb[0].mxu0
        %v1741 = vadd.f32 %v1484, %v1740
        %v1742 = vpop.f32.mrb[0].mxu0
        %1743 = vmatprep.mubr.bf16.mxu0 %v1534
        %1744 = vmatmul.mubr.bf16.gmra.mrb[0].mxu0 %v1533
        %v1745 = vpop.f32.mrb[0].mxu0
        %v1746 = vadd.f32 %v1489, %v1745
        %v1747 = vpop.f32.mrb[0].mxu0
        %v1748 = vpop.f32.mrb[0].mxu0
        %v1749 = vadd.f32 %v1492, %v1748
        %v1750 = vpop.f32.mrb[0].mxu0
        %1751 = vmatprep.mubr.bf16.mxu0 %v1537
        %1752 = vmatmul.mubr.bf16.gmra.mrb[0].mxu0 %v1536
        %v1753 = vpop.f32.mrb[0].mxu0
        %v1754 = vadd.f32 %v1497, %v1753
        %v1755 = vpop.f32.mrb[0].mxu0
        %v1756 = vpop.f32.mrb[0].mxu0
        %v1757 = vadd.f32 %v1500, %v1756
        %v1758 = vpop.f32.mrb[0].mxu0
        %1759 = vdwg.mxu0
        %1760 = vmatprep.subr.bf16.mxu0 0
        %1761 = vmatpush1.bf16.msra.mxu0 %v1663
        %1762 = vmatprep.subr.bf16.mxu0 0
        %1763 = vmatpush1.bf16.msra.mxu0 %v1664
        %1764 = vmatprep.subr.bf16.mxu0 0
        %1765 = vmatpush1.bf16.msra.mxu0 %v1665
        %1766 = vmatprep.subr.bf16.mxu0 0
        %1767 = vmatpush1.bf16.msra.mxu0 %v1666
        %1768 = vmatprep.subr.bf16.mxu0 0
        %1769 = vmatpush1.bf16.msra.mxu0 %v1667
        %1770 = vmatprep.subr.bf16.mxu0 0
        %1771 = vmatpush1.bf16.msra.mxu0 %v1668
        %1772 = vmatprep.subr.bf16.mxu0 0
        %1773 = vmatpush1.bf16.msra.mxu0 %v1669
        %1774 = vmatprep.subr.bf16.mxu0 0
        %1775 = vmatpush1.bf16.msra.mxu0 %v1670
        %1776 = vmatprep.subr.bf16.mxu0 0
        %1777 = vmatpush1.bf16.msra.mxu0 0
        %1778 = vmatprep.subr.bf16.mxu0 0
        %1779 = vmatpush1.bf16.msra.mxu0 0
        %1780 = vmatprep.subr.bf16.mxu0 0
        %1781 = vmatpush1.bf16.msra.mxu0 0
        %1782 = vmatprep.subr.bf16.mxu0 0
        %1783 = vmatpush1.bf16.msra.mxu0 0
        %1784 = vmatprep.subr.bf16.mxu0 0
        %1785 = vmatpush1.bf16.msra.mxu0 0
        %1786 = vmatprep.subr.bf16.mxu0 0
        %1787 = vmatpush1.bf16.msra.mxu0 0
        %1788 = vmatprep.subr.bf16.mxu0 0
        %1789 = vmatpush1.bf16.msra.mxu0 0
        %1790 = vmatprep.subr.bf16.mxu0 0
        %1791 = vmatpush1.bf16.msra.mxu0 0
        %1792 = vmatprep.mubr.bf16.mxu0 0
        %1793 = vmatmul.mubr.bf16.gmra.mrb[0].mxu0 %v1529
        %v1794 = vpop.f32.mrb[0].mxu0
        %v1795 = vadd.f32 %v1730, %v1794
        %v1796 = vpop.f32.mrb[0].mxu0
        %v1797 = vpop.f32.mrb[0].mxu0
        %v1798 = vadd.f32 %v1733, %v1797
        %v1799 = vpop.f32.mrb[0].mxu0
        %1800 = vmatprep.mubr.bf16.mxu0 0
        %1801 = vmatmul.mubr.bf16.gmra.mrb[0].mxu0 %v1532
        %v1802 = vpop.f32.mrb[0].mxu0
        %v1803 = vadd.f32 %v1738, %v1802
        %v1804 = vpop.f32.mrb[0].mxu0
        %v1805 = vpop.f32.mrb[0].mxu0
        %v1806 = vadd.f32 %v1741, %v1805
        %v1807 = vpop.f32.mrb[0].mxu0
        %1808 = vmatprep.mubr.bf16.mxu0 0
        %1809 = vmatmul.mubr.bf16.gmra.mrb[0].mxu0 %v1535
        %v1810 = vpop.f32.mrb[0].mxu0
        %v1811 = vadd.f32 %v1746, %v1810
        %v1812 = vpop.f32.mrb[0].mxu0
        %v1813 = vpop.f32.mrb[0].mxu0
        %v1814 = vadd.f32 %v1749, %v1813
        %v1815 = vpop.f32.mrb[0].mxu0
        %1816 = vmatprep.mubr.bf16.mxu0 0
        %1817 = vmatmul.mubr.bf16.gmra.mrb[0].mxu0 %v1538
        %v1818 = vpop.f32.mrb[0].mxu0
        %v1819 = vadd.f32 %v1754, %v1818
        %v1820 = vpop.f32.mrb[0].mxu0
        %v1821 = vpop.f32.mrb[0].mxu0
        %v1822 = vadd.f32 %v1757, %v1821
        %v1823 = vpop.f32.mrb[0].mxu0
        %1824 = vdwg.mxu0
        %v1825 = vld [vmem:[#allocation2 + $0x4] sm:$0xf]
        %v1826 = vld [vmem:[#allocation2 + $0x8] sm:$0x1]
        %v1827 = vld [vmem:[#allocation2 + $0x10] sm:$0xf]
        %v1828 = vld [vmem:[#allocation2 + $0x14] sm:$0x1]
        %v1829 = vld [vmem:[#allocation2 + $0x1c] sm:$0xf]
        %v1830 = vld [vmem:[#allocation2 + $0x20] sm:$0x1]
        %v1831 = vld [vmem:[#allocation2 + $0x28] sm:$0xf]
        %v1832 = vld [vmem:[#allocation2 + $0x2c] sm:$0x1]
        %v1833 = vld [vmem:[#allocation2 + $0x34] sm:$0xf]
        %v1834 = vld [vmem:[#allocation2 + $0x38] sm:$0x1]
        %v1835 = vld [vmem:[#allocation2 + $0x40] sm:$0xf]
        %v1836 = vld [vmem:[#allocation2 + $0x44] sm:$0x1]
        %v1837 = vld [vmem:[#allocation2 + $0x4c] sm:$0xf]
        %v1838 = vld [vmem:[#allocation2 + $0x50] sm:$0x1]
        %v1839 = vld [vmem:[#allocation2 + $0x58] sm:$0xf]
        %v1840 = vld [vmem:[#allocation2 + $0x5c] sm:$0x1]
        %v1841 = vld [vmem:[#allocation2 + $0x64] sm:$0xf]
        %v1842 = vld [vmem:[#allocation2 + $0x68] sm:$0x1]
        %v1843 = vld [vmem:[#allocation2 + $0x70] sm:$0xf]
        %v1844 = vld [vmem:[#allocation2 + $0x74] sm:$0x1]
        %v1861 = vunpack.c.l.b16 %v1825
        %v1862 = vunpack.c.l.b16 %v1826
        %v1863 = vunpack.c.l.b16 %v1827
        %v1864 = vunpack.c.l.b16 %v1828
        %v1865 = vunpack.c.l.b16 %v1829
        %v1866 = vunpack.c.l.b16 %v1830
        %v1867 = vunpack.c.l.b16 %v1831
        %v1868 = vunpack.c.l.b16 %v1832
        %v1869 = vunpack.c.l.b16 %v1833
        %v1870 = vunpack.c.l.b16 %v1834
        %v1871 = vunpack.c.l.b16 %v1835
        %v1872 = vunpack.c.l.b16 %v1836
        %v1873 = vunpack.c.l.b16 %v1837
        %v1874 = vunpack.c.l.b16 %v1838
        %v1875 = vunpack.c.l.b16 %v1839
        %v1876 = vunpack.c.l.b16 %v1840
        %v1879 = vunpack.c.l.b16 %v1841
        %v1880 = vunpack.c.l.b16 %v1842
        %v1883 = vunpack.c.l.b16 %v1843
        %v1884 = vunpack.c.l.b16 %v1844
        %v1885 = vpack.c.b16 %v1863, %v1861
        %v1886 = vpack.c.b16 %v1865, %v1865
        %v1887 = vpack.c.b16 %v1864, %v1862
        %v1888 = vpack.c.b16 %v1866, %v1866
        %v1889 = vpack.c.b16 %v1865, %v1863
        %v1890 = vpack.c.b16 %v1867, %v1867
        %v1891 = vpack.c.b16 %v1866, %v1864
        %v1892 = vpack.c.b16 %v1868, %v1868
        %v1893 = vpack.c.b16 %v1867, %v1865
        %v1894 = vpack.c.b16 %v1869, %v1869
        %v1895 = vpack.c.b16 %v1868, %v1866
        %v1896 = vpack.c.b16 %v1870, %v1870
        %v1897 = vpack.c.b16 %v1869, %v1867
        %v1898 = vpack.c.b16 %v1871, %v1871
        %v1899 = vpack.c.b16 %v1870, %v1868
        %v1900 = vpack.c.b16 %v1872, %v1872
        %v1901 = vpack.c.b16 %v1871, %v1869
        %v1902 = vpack.c.b16 %v1873, %v1873
        %v1903 = vpack.c.b16 %v1872, %v1870
        %v1904 = vpack.c.b16 %v1874, %v1874
        %v1905 = vpack.c.b16 %v1873, %v1871
        %v1906 = vpack.c.b16 %v1875, %v1875
        %v1907 = vpack.c.b16 %v1874, %v1872
        %v1908 = vpack.c.b16 %v1876, %v1876
        %v1909 = vpack.c.b16 %v1875, %v1873
        %v1910 = vpack.c.b16 %v1879, %v1879
        %v1911 = vpack.c.b16 %v1876, %v1874
        %v1912 = vpack.c.b16 %v1880, %v1880
        %v1913 = vpack.c.b16 %v1879, %v1875
        %v1914 = vpack.c.b16 %v1883, %v1883
        %v1915 = vpack.c.b16 %v1880, %v1876
        %v1916 = vpack.c.b16 %v1884, %v1884
        %vm1917 = vsmask.f32 3328
        %vm1918 = vsmask.f32 7440
        %vm1919 = vmor %vm1917, %vm1918
        %v1921 = vshrl.u32 %v1885, 16
        %v1923 = vrot.slane %v1921, 4
        %v1924 = vshll.u32 %v1885, 16
        %v1926 = vrot.slane %v1924, 5
        %v1927 = vor.u32 %v1923, %v1926
        %v1928 = vrot.slane %v1927, 4
        %v1930 = vshll.u32 %v1887, 16
        %v1932 = vrot.slane %v1930, 5
        %v1933 = vsel %vm1919, %v1928, %v1932
        %v1935 = vshrl.u32 %v1886, 16
        %v1937 = vrot.slane %v1935, 4
        %v1938 = vshll.u32 %v1886, 16
        %v1940 = vrot.slane %v1938, 5
        %v1941 = vor.u32 %v1937, %v1940
        %v1942 = vrot.slane %v1941, 4
        %v1944 = vshll.u32 %v1888, 16
        %v1946 = vrot.slane %v1944, 5
        %v1947 = vsel %vm1919, %v1942, %v1946
        %v1949 = vshrl.u32 %v1889, 16
        %v1951 = vrot.slane %v1949, 4
        %v1952 = vshll.u32 %v1889, 16
        %v1954 = vrot.slane %v1952, 5
        %v1955 = vor.u32 %v1951, %v1954
        %v1956 = vrot.slane %v1955, 4
        %v1958 = vshll.u32 %v1891, 16
        %v1960 = vrot.slane %v1958, 5
        %v1961 = vsel %vm1919, %v1956, %v1960
        %v1963 = vshrl.u32 %v1890, 16
        %v1965 = vrot.slane %v1963, 4
        %v1966 = vshll.u32 %v1890, 16
        %v1968 = vrot.slane %v1966, 5
        %v1969 = vor.u32 %v1965, %v1968
        %v1970 = vrot.slane %v1969, 4
        %v1972 = vshll.u32 %v1892, 16
        %v1974 = vrot.slane %v1972, 5
        %v1975 = vsel %vm1919, %v1970, %v1974
        %v1977 = vshrl.u32 %v1893, 16
        %v1979 = vrot.slane %v1977, 4
        %v1980 = vshll.u32 %v1893, 16
        %v1982 = vrot.slane %v1980, 5
        %v1983 = vor.u32 %v1979, %v1982
        %v1984 = vrot.slane %v1983, 4
        %v1986 = vshll.u32 %v1895, 16
        %v1988 = vrot.slane %v1986, 5
        %v1989 = vsel %vm1919, %v1984, %v1988
        %v1991 = vshrl.u32 %v1894, 16
        %v1993 = vrot.slane %v1991, 4
        %v1994 = vshll.u32 %v1894, 16
        %v1996 = vrot.slane %v1994, 5
        %v1997 = vor.u32 %v1993, %v1996
        %v1998 = vrot.slane %v1997, 4
        %v2000 = vshll.u32 %v1896, 16
        %v2002 = vrot.slane %v2000, 5
        %v2003 = vsel %vm1919, %v1998, %v2002
        %v2005 = vshrl.u32 %v1897, 16
        %v2007 = vrot.slane %v2005, 4
        %v2008 = vshll.u32 %v1897, 16
        %v2010 = vrot.slane %v2008, 5
        %v2011 = vor.u32 %v2007, %v2010
        %v2012 = vrot.slane %v2011, 4
        %v2014 = vshll.u32 %v1899, 16
        %v2016 = vrot.slane %v2014, 5
        %v2017 = vsel %vm1919, %v2012, %v2016
        %v2019 = vshrl.u32 %v1898, 16
        %v2021 = vrot.slane %v2019, 4
        %v2022 = vshll.u32 %v1898, 16
        %v2024 = vrot.slane %v2022, 5
        %v2025 = vor.u32 %v2021, %v2024
        %v2026 = vrot.slane %v2025, 4
        %v2028 = vshll.u32 %v1900, 16
        %v2030 = vrot.slane %v2028, 5
        %v2031 = vsel %vm1919, %v2026, %v2030
        %v2033 = vshrl.u32 %v1901, 16
        %v2035 = vrot.slane %v2033, 4
        %v2036 = vshll.u32 %v1901, 16
        %v2038 = vrot.slane %v2036, 5
        %v2039 = vor.u32 %v2035, %v2038
        %v2040 = vrot.slane %v2039, 4
        %v2042 = vshll.u32 %v1903, 16
        %v2044 = vrot.slane %v2042, 5
        %v2045 = vsel %vm1919, %v2040, %v2044
        %v2047 = vshrl.u32 %v1902, 16
        %v2049 = vrot.slane %v2047, 4
        %v2050 = vshll.u32 %v1902, 16
        %v2052 = vrot.slane %v2050, 5
        %v2053 = vor.u32 %v2049, %v2052
        %v2054 = vrot.slane %v2053, 4
        %v2056 = vshll.u32 %v1904, 16
        %v2058 = vrot.slane %v2056, 5
        %v2059 = vsel %vm1919, %v2054, %v2058
        %v2061 = vshrl.u32 %v1905, 16
        %v2063 = vrot.slane %v2061, 4
        %v2064 = vshll.u32 %v1905, 16
        %v2066 = vrot.slane %v2064, 5
        %v2067 = vor.u32 %v2063, %v2066
        %v2068 = vrot.slane %v2067, 4
        %v2070 = vshll.u32 %v1907, 16
        %v2072 = vrot.slane %v2070, 5
        %v2073 = vsel %vm1919, %v2068, %v2072
        %v2075 = vshrl.u32 %v1906, 16
        %v2077 = vrot.slane %v2075, 4
        %v2078 = vshll.u32 %v1906, 16
        %v2080 = vrot.slane %v2078, 5
        %v2081 = vor.u32 %v2077, %v2080
        %v2082 = vrot.slane %v2081, 4
        %v2084 = vshll.u32 %v1908, 16
        %v2086 = vrot.slane %v2084, 5
        %v2087 = vsel %vm1919, %v2082, %v2086
        %v2089 = vshrl.u32 %v1909, 16
        %v2091 = vrot.slane %v2089, 4
        %v2092 = vshll.u32 %v1909, 16
        %v2094 = vrot.slane %v2092, 5
        %v2095 = vor.u32 %v2091, %v2094
        %v2096 = vrot.slane %v2095, 4
        %v2098 = vshll.u32 %v1911, 16
        %v2100 = vrot.slane %v2098, 5
        %v2101 = vsel %vm1919, %v2096, %v2100
        %v2103 = vshrl.u32 %v1910, 16
        %v2105 = vrot.slane %v2103, 4
        %v2106 = vshll.u32 %v1910, 16
        %v2108 = vrot.slane %v2106, 5
        %v2109 = vor.u32 %v2105, %v2108
        %v2110 = vrot.slane %v2109, 4
        %v2112 = vshll.u32 %v1912, 16
        %v2114 = vrot.slane %v2112, 5
        %v2115 = vsel %vm1919, %v2110, %v2114
        %v2117 = vshrl.u32 %v1913, 16
        %v2119 = vrot.slane %v2117, 4
        %v2120 = vshll.u32 %v1913, 16
        %v2122 = vrot.slane %v2120, 5
        %v2123 = vor.u32 %v2119, %v2122
        %v2124 = vrot.slane %v2123, 4
        %v2126 = vshll.u32 %v1915, 16
        %v2128 = vrot.slane %v2126, 5
        %v2129 = vsel %vm1919, %v2124, %v2128
        %v2131 = vshrl.u32 %v1914, 16
        %v2133 = vrot.slane %v2131, 4
        %v2134 = vshll.u32 %v1914, 16
        %v2136 = vrot.slane %v2134, 5
        %v2137 = vor.u32 %v2133, %v2136
        %v2138 = vrot.slane %v2137, 4
        %v2140 = vshll.u32 %v1916, 16
        %v2142 = vrot.slane %v2140, 5
        %v2143 = vsel %vm1919, %v2138, %v2142
        %s2144 = scalar_lea.vmem [#allocation9], 384
        %v2145 = vld [vmem:[%s2144] sm:$0xf]
        %v2146 = vld [vmem:[%s2144 + $0x4] sm:$0xf]
        %v2147 = vld [vmem:[%s2144 + $0x8] sm:$0xf]
        %v2148 = vld [vmem:[%s2144 + $0xc] sm:$0xf]
        %v2149 = vld [vmem:[%s2144 + $0x10] sm:$0xf]
        %v2150 = vld [vmem:[%s2144 + $0x14] sm:$0xf]
        %v2151 = vld [vmem:[%s2144 + $0x18] sm:$0xf]
        %v2152 = vld [vmem:[%s2144 + $0x1c] sm:$0xf]
        %v2153 = vld [vmem:[%s2144 + $0x20] sm:$0xf]
        %v2154 = vld [vmem:[%s2144 + $0x24] sm:$0xf]
        %v2155 = vld [vmem:[%s2144 + $0x28] sm:$0xf]
        %v2156 = vld [vmem:[%s2144 + $0x2c] sm:$0xf]
        %v2157 = vld [vmem:[%s2144 + $0x30] sm:$0xf]
        %v2158 = vld [vmem:[%s2144 + $0x34] sm:$0xf]
        %v2159 = vld [vmem:[%s2144 + $0x38] sm:$0xf]
        %v2160 = vld [vmem:[%s2144 + $0x3c] sm:$0xf]
        %v2161 = vld [vmem:[%s2144 + $0x40] sm:$0xf]
        %v2162 = vld [vmem:[%s2144 + $0x44] sm:$0xf]
        %v2163 = vld [vmem:[%s2144 + $0x48] sm:$0xf]
        %v2164 = vld [vmem:[%s2144 + $0x4c] sm:$0xf]
        %v2165 = vld [vmem:[%s2144 + $0x50] sm:$0xf]
        %v2166 = vld [vmem:[%s2144 + $0x54] sm:$0xf]
        %v2167 = vld [vmem:[%s2144 + $0x58] sm:$0xf]
        %v2168 = vld [vmem:[%s2144 + $0x5c] sm:$0xf]
        %v2169 = vld [vmem:[%s2144 + $0x60] sm:$0xf]
        %v2170 = vld [vmem:[%s2144 + $0x64] sm:$0xf]
        %v2171 = vld [vmem:[%s2144 + $0x68] sm:$0xf]
        %v2172 = vld [vmem:[%s2144 + $0x6c] sm:$0xf]
        %v2173 = vld [vmem:[%s2144 + $0x70] sm:$0xf]
        %v2174 = vld [vmem:[%s2144 + $0x74] sm:$0xf]
        %v2175 = vld [vmem:[%s2144 + $0x78] sm:$0xf]
        %v2176 = vld [vmem:[%s2144 + $0x7c] sm:$0xf]
        %v2177 = vld [vmem:[%s2144 + $0x80] sm:$0xf]
        %v2178 = vld [vmem:[%s2144 + $0x84] sm:$0xf]
        %v2179 = vld [vmem:[%s2144 + $0x88] sm:$0xf]
        %v2180 = vld [vmem:[%s2144 + $0x8c] sm:$0xf]
        %v2181 = vld [vmem:[%s2144 + $0x90] sm:$0xf]
        %v2182 = vld [vmem:[%s2144 + $0x94] sm:$0xf]
        %v2183 = vld [vmem:[%s2144 + $0x98] sm:$0xf]
        %v2184 = vld [vmem:[%s2144 + $0x9c] sm:$0xf]
        %v2185 = vld [vmem:[%s2144 + $0xa0] sm:$0xf]
        %v2186 = vld [vmem:[%s2144 + $0xa4] sm:$0xf]
        %v2187 = vld [vmem:[%s2144 + $0xa8] sm:$0xf]
        %v2188 = vld [vmem:[%s2144 + $0xac] sm:$0xf]
        %v2189 = vld [vmem:[%s2144 + $0xb0] sm:$0xf]
        %v2190 = vld [vmem:[%s2144 + $0xb4] sm:$0xf]
        %v2191 = vld [vmem:[%s2144 + $0xb8] sm:$0xf]
        %v2192 = vld [vmem:[%s2144 + $0xbc] sm:$0xf]
        %v2193 = vunpack.c.l.b16 %v1933
        %v2194 = vunpack.c.h.b16 %v1933
        %v2195 = vunpack.c.l.b16 %v1947
        %v2196 = vunpack.c.l.b16 %v1961
        %v2197 = vunpack.c.h.b16 %v1961
        %v2198 = vunpack.c.l.b16 %v1975
        %v2199 = vunpack.c.l.b16 %v1989
        %v2200 = vunpack.c.h.b16 %v1989
        %v2201 = vunpack.c.l.b16 %v2003
        %v2202 = vunpack.c.l.b16 %v2017
        %v2203 = vunpack.c.h.b16 %v2017
        %v2204 = vunpack.c.l.b16 %v2031
        %v2205 = vunpack.c.l.b16 %v2045
        %v2206 = vunpack.c.h.b16 %v2045
        %v2207 = vunpack.c.l.b16 %v2059
        %v2208 = vunpack.c.l.b16 %v2073
        %v2209 = vunpack.c.h.b16 %v2073
        %v2210 = vunpack.c.l.b16 %v2087
        %v2211 = vunpack.c.l.b16 %v2101
        %v2212 = vunpack.c.h.b16 %v2101
        %v2213 = vunpack.c.l.b16 %v2115
        %v2214 = vunpack.c.l.b16 %v2129
        %v2215 = vunpack.c.h.b16 %v2129
        %v2216 = vunpack.c.l.b16 %v2143
        %v2217 = vpack.c.b16 %v2196, %v2193
        %v2218 = vpack.c.b16 %v2197, %v2194
        %v2219 = vpack.c.b16 %v2198, %v2195
        %v2220 = vpack.c.b16 %v2202, %v2199
        %v2221 = vpack.c.b16 %v2203, %v2200
        %v2222 = vpack.c.b16 %v2204, %v2201
        %v2223 = vpack.c.b16 %v2208, %v2205
        %v2224 = vpack.c.b16 %v2209, %v2206
        %v2225 = vpack.c.b16 %v2210, %v2207
        %v2226 = vpack.c.b16 %v2214, %v2211
        %v2227 = vpack.c.b16 %v2215, %v2212
        %v2228 = vpack.c.b16 %v2216, %v2213
        %v2289 = vunpack.c.l.b16 %v2145
        %v2290 = vunpack.c.l.b16 %v2146
        %v2291 = vunpack.c.l.b16 %v2147
        %v2292 = vunpack.c.l.b16 %v2148
        %v2293 = vunpack.c.l.b16 %v2149
        %v2294 = vunpack.c.l.b16 %v2150
        %v2295 = vunpack.c.l.b16 %v2151
        %v2296 = vunpack.c.l.b16 %v2152
        %v2297 = vunpack.c.l.b16 %v2153
        %v2298 = vunpack.c.l.b16 %v2154
        %v2299 = vunpack.c.l.b16 %v2155
        %v2300 = vunpack.c.l.b16 %v2156
        %v2301 = vunpack.c.l.b16 %v2157
        %v2302 = vunpack.c.l.b16 %v2158
        %v2303 = vunpack.c.l.b16 %v2159
        %v2304 = vunpack.c.l.b16 %v2160
        %v2305 = vunpack.c.l.b16 %v2161
        %v2306 = vunpack.c.l.b16 %v2162
        %v2307 = vunpack.c.l.b16 %v2163
        %v2308 = vunpack.c.l.b16 %v2164
        %v2309 = vunpack.c.l.b16 %v2165
        %v2310 = vunpack.c.l.b16 %v2166
        %v2311 = vunpack.c.l.b16 %v2167
        %v2312 = vunpack.c.l.b16 %v2168
        %v2313 = vunpack.c.l.b16 %v2169
        %v2314 = vunpack.c.l.b16 %v2170
        %v2315 = vunpack.c.l.b16 %v2171
        %v2316 = vunpack.c.l.b16 %v2172
        %v2317 = vunpack.c.l.b16 %v2173
        %v2318 = vunpack.c.l.b16 %v2174
        %v2319 = vunpack.c.l.b16 %v2175
        %v2320 = vunpack.c.l.b16 %v2176
        %v2321 = vunpack.c.l.b16 %v2177
        %v2322 = vunpack.c.l.b16 %v2178
        %v2323 = vunpack.c.l.b16 %v2179
        %v2324 = vunpack.c.l.b16 %v2180
        %v2325 = vunpack.c.l.b16 %v2181
        %v2326 = vunpack.c.l.b16 %v2182
        %v2327 = vunpack.c.l.b16 %v2183
        %v2328 = vunpack.c.l.b16 %v2184
        %v2329 = vunpack.c.l.b16 %v2185
        %v2330 = vunpack.c.l.b16 %v2186
        %v2331 = vunpack.c.l.b16 %v2187
        %v2332 = vunpack.c.l.b16 %v2188
        %v2333 = vunpack.c.l.b16 %v2189
        %v2334 = vunpack.c.l.b16 %v2190
        %v2335 = vunpack.c.l.b16 %v2191
        %v2336 = vunpack.c.l.b16 %v2192
        %v2337 = vpack.c.b16 %v2290, %v2289
        %v2338 = vpack.c.b16 %v2292, %v2291
        %v2339 = vpack.c.b16 %v2294, %v2293
        %v2340 = vpack.c.b16 %v2296, %v2295
        %v2341 = vpack.c.b16 %v2298, %v2297
        %v2342 = vpack.c.b16 %v2300, %v2299
        %v2343 = vpack.c.b16 %v2302, %v2301
        %v2344 = vpack.c.b16 %v2304, %v2303
        %v2345 = vpack.c.b16 %v2306, %v2305
        %v2346 = vpack.c.b16 %v2308, %v2307
        %v2347 = vpack.c.b16 %v2310, %v2309
        %v2348 = vpack.c.b16 %v2312, %v2311
        %v2349 = vpack.c.b16 %v2314, %v2313
        %v2350 = vpack.c.b16 %v2316, %v2315
        %v2351 = vpack.c.b16 %v2318, %v2317
        %v2352 = vpack.c.b16 %v2320, %v2319
        %v2353 = vpack.c.b16 %v2322, %v2321
        %v2354 = vpack.c.b16 %v2324, %v2323
        %v2355 = vpack.c.b16 %v2326, %v2325
        %v2356 = vpack.c.b16 %v2328, %v2327
        %v2357 = vpack.c.b16 %v2330, %v2329
        %v2358 = vpack.c.b16 %v2332, %v2331
        %v2359 = vpack.c.b16 %v2334, %v2333
        %v2360 = vpack.c.b16 %v2336, %v2335
        %2385 = vmatprep.subr.bf16.mxu0 0
        %2386 = vmatpush1.bf16.msra.mxu0 %v2337
        %2387 = vmatprep.subr.bf16.mxu0 0
        %2388 = vmatpush1.bf16.msra.mxu0 %v2338
        %2389 = vmatprep.subr.bf16.mxu0 0
        %2390 = vmatpush1.bf16.msra.mxu0 %v2339
        %2391 = vmatprep.subr.bf16.mxu0 0
        %2392 = vmatpush1.bf16.msra.mxu0 %v2340
        %2393 = vmatprep.subr.bf16.mxu0 0
        %2394 = vmatpush1.bf16.msra.mxu0 %v2341
        %2395 = vmatprep.subr.bf16.mxu0 0
        %2396 = vmatpush1.bf16.msra.mxu0 %v2342
        %2397 = vmatprep.subr.bf16.mxu0 0
        %2398 = vmatpush1.bf16.msra.mxu0 %v2343
        %2399 = vmatprep.subr.bf16.mxu0 0
        %2400 = vmatpush1.bf16.msra.mxu0 %v2344
        %2401 = vmatprep.subr.bf16.mxu0 0
        %2402 = vmatpush1.bf16.msra.mxu0 %v2345
        %2403 = vmatprep.subr.bf16.mxu0 0
        %2404 = vmatpush1.bf16.msra.mxu0 %v2346
        %2405 = vmatprep.subr.bf16.mxu0 0
        %2406 = vmatpush1.bf16.msra.mxu0 %v2347
        %2407 = vmatprep.subr.bf16.mxu0 0
        %2408 = vmatpush1.bf16.msra.mxu0 %v2348
        %2409 = vmatprep.subr.bf16.mxu0 0
        %2410 = vmatpush1.bf16.msra.mxu0 %v2349
        %2411 = vmatprep.subr.bf16.mxu0 0
        %2412 = vmatpush1.bf16.msra.mxu0 %v2350
        %2413 = vmatprep.subr.bf16.mxu0 0
        %2414 = vmatpush1.bf16.msra.mxu0 %v2351
        %2415 = vmatprep.subr.bf16.mxu0 0
        %2416 = vmatpush1.bf16.msra.mxu0 %v2352
        %2417 = vmatprep.mubr.bf16.mxu0 %v2218
        %2418 = vmatmul.mubr.bf16.gmra.mrb[0].mxu0 %v2217
        %v2419 = vpop.f32.mrb[0].mxu0
        %v2420 = vadd.f32 0.0, %v2419
        %v2421 = vpop.f32.mrb[0].mxu0
        %v2422 = vpop.f32.mrb[0].mxu0
        %v2423 = vadd.f32 0.0, %v2422
        %v2424 = vpop.f32.mrb[0].mxu0
        %2425 = vmatprep.mubr.bf16.mxu0 %v2221
        %2426 = vmatmul.mubr.bf16.gmra.mrb[0].mxu0 %v2220
        %v2427 = vpop.f32.mrb[0].mxu0
        %v2428 = vadd.f32 0.0, %v2427
        %v2429 = vpop.f32.mrb[0].mxu0
        %v2430 = vpop.f32.mrb[0].mxu0
        %v2431 = vadd.f32 0.0, %v2430
        %v2432 = vpop.f32.mrb[0].mxu0
        %2433 = vmatprep.mubr.bf16.mxu0 %v2224
        %2434 = vmatmul.mubr.bf16.gmra.mrb[0].mxu0 %v2223
        %v2435 = vpop.f32.mrb[0].mxu0
        %v2436 = vadd.f32 0.0, %v2435
        %v2437 = vpop.f32.mrb[0].mxu0
        %v2438 = vpop.f32.mrb[0].mxu0
        %v2439 = vadd.f32 0.0, %v2438
        %v2440 = vpop.f32.mrb[0].mxu0
        %2441 = vmatprep.mubr.bf16.mxu0 %v2227
        %2442 = vmatmul.mubr.bf16.gmra.mrb[0].mxu0 %v2226
        %v2443 = vpop.f32.mrb[0].mxu0
        %v2444 = vadd.f32 0.0, %v2443
        %v2445 = vpop.f32.mrb[0].mxu0
        %v2446 = vpop.f32.mrb[0].mxu0
        %v2447 = vadd.f32 0.0, %v2446
        %v2448 = vpop.f32.mrb[0].mxu0
        %2449 = vdwg.mxu0
        %2450 = vmatprep.subr.bf16.mxu0 0
        %2451 = vmatpush1.bf16.msra.mxu0 %v2353
        %2452 = vmatprep.subr.bf16.mxu0 0
        %2453 = vmatpush1.bf16.msra.mxu0 %v2354
        %2454 = vmatprep.subr.bf16.mxu0 0
        %2455 = vmatpush1.bf16.msra.mxu0 %v2355
        %2456 = vmatprep.subr.bf16.mxu0 0
        %2457 = vmatpush1.bf16.msra.mxu0 %v2356
        %2458 = vmatprep.subr.bf16.mxu0 0
        %2459 = vmatpush1.bf16.msra.mxu0 %v2357
        %2460 = vmatprep.subr.bf16.mxu0 0
        %2461 = vmatpush1.bf16.msra.mxu0 %v2358
        %2462 = vmatprep.subr.bf16.mxu0 0
        %2463 = vmatpush1.bf16.msra.mxu0 %v2359
        %2464 = vmatprep.subr.bf16.mxu0 0
        %2465 = vmatpush1.bf16.msra.mxu0 %v2360
        %2466 = vmatprep.subr.bf16.mxu0 0
        %2467 = vmatpush1.bf16.msra.mxu0 0
        %2468 = vmatprep.subr.bf16.mxu0 0
        %2469 = vmatpush1.bf16.msra.mxu0 0
        %2470 = vmatprep.subr.bf16.mxu0 0
        %2471 = vmatpush1.bf16.msra.mxu0 0
        %2472 = vmatprep.subr.bf16.mxu0 0
        %2473 = vmatpush1.bf16.msra.mxu0 0
        %2474 = vmatprep.subr.bf16.mxu0 0
        %2475 = vmatpush1.bf16.msra.mxu0 0
        %2476 = vmatprep.subr.bf16.mxu0 0
        %2477 = vmatpush1.bf16.msra.mxu0 0
        %2478 = vmatprep.subr.bf16.mxu0 0
        %2479 = vmatpush1.bf16.msra.mxu0 0
        %2480 = vmatprep.subr.bf16.mxu0 0
        %2481 = vmatpush1.bf16.msra.mxu0 0
        %2482 = vmatprep.mubr.bf16.mxu0 0
        %2483 = vmatmul.mubr.bf16.gmra.mrb[0].mxu0 %v2219
        %v2484 = vpop.f32.mrb[0].mxu0
        %v2485 = vadd.f32 %v2420, %v2484
        %v2486 = vpop.f32.mrb[0].mxu0
        %v2487 = vpop.f32.mrb[0].mxu0
        %v2488 = vadd.f32 %v2423, %v2487
        %v2489 = vpop.f32.mrb[0].mxu0
        %2490 = vmatprep.mubr.bf16.mxu0 0
        %2491 = vmatmul.mubr.bf16.gmra.mrb[0].mxu0 %v2222
        %v2492 = vpop.f32.mrb[0].mxu0
        %v2493 = vadd.f32 %v2428, %v2492
        %v2494 = vpop.f32.mrb[0].mxu0
        %v2495 = vpop.f32.mrb[0].mxu0
        %v2496 = vadd.f32 %v2431, %v2495
        %v2497 = vpop.f32.mrb[0].mxu0
        %2498 = vmatprep.mubr.bf16.mxu0 0
        %2499 = vmatmul.mubr.bf16.gmra.mrb[0].mxu0 %v2225
        %v2500 = vpop.f32.mrb[0].mxu0
        %v2501 = vadd.f32 %v2436, %v2500
        %v2502 = vpop.f32.mrb[0].mxu0
        %v2503 = vpop.f32.mrb[0].mxu0
        %v2504 = vadd.f32 %v2439, %v2503
        %v2505 = vpop.f32.mrb[0].mxu0
        %2506 = vmatprep.mubr.bf16.mxu0 0
        %2507 = vmatmul.mubr.bf16.gmra.mrb[0].mxu0 %v2228
        %v2508 = vpop.f32.mrb[0].mxu0
        %v2509 = vadd.f32 %v2444, %v2508
        %v2510 = vpop.f32.mrb[0].mxu0
        %v2511 = vpop.f32.mrb[0].mxu0
        %v2512 = vadd.f32 %v2447, %v2511
        %v2513 = vpop.f32.mrb[0].mxu0
        %2514 = vdwg.mxu0
        %v2515 = vadd.f32 %v1795, %v2485
        %v2516 = vadd.f32 %v1798, %v2488
        %v2517 = vadd.f32 %v1803, %v2493
        %v2518 = vadd.f32 %v1806, %v2496
        %v2519 = vadd.f32 %v1811, %v2501
        %v2520 = vadd.f32 %v1814, %v2504
        %v2521 = vadd.f32 %v1819, %v2509
        %v2522 = vadd.f32 %v1822, %v2512
        %v2523 = vld [vmem:[%s4] sm:$0x1]
        %v2525 = vlaneseq
        %v2526 = vshrl.u32 %v2525, 7
        %v2527 = vsub.s32 0, %v2526
        %v2528 = vrot.slane %v2523, %v2527
        %v2530 = vadd.f32 %v2515, %v2528
        %v2531 = vadd.f32 %v2516, %v2528
        %v2532 = vadd.f32 %v2517, %v2528
        %v2533 = vadd.f32 %v2518, %v2528
        %v2534 = vadd.f32 %v2519, %v2528
        %v2535 = vadd.f32 %v2520, %v2528
        %v2536 = vadd.f32 %v2521, %v2528
        %v2537 = vadd.f32 %v2522, %v2528
        %v2538 = vmax.f32 %v2530, 0.0
        %v2539 = vmax.f32 %v2531, 0.0
        %v2540 = vmax.f32 %v2532, 0.0
        %v2541 = vmax.f32 %v2533, 0.0
        %v2542 = vmax.f32 %v2534, 0.0
        %v2543 = vmax.f32 %v2535, 0.0
        %v2544 = vmax.f32 %v2536, 0.0
        %v2545 = vmax.f32 %v2537, 0.0
        %v2546 = vpack.c.bf16 %v2538, %v2538
        %v2547 = vpack.c.bf16 %v2539, %v2539
        %v2548 = vpack.c.bf16 %v2540, %v2540
        %v2549 = vpack.c.bf16 %v2541, %v2541
        %v2550 = vpack.c.bf16 %v2542, %v2542
        %v2551 = vpack.c.bf16 %v2543, %v2543
        %v2552 = vpack.c.bf16 %v2544, %v2544
        %v2553 = vpack.c.bf16 %v2545, %v2545
        %2554 = vst [vmem:[%s811 + $0x4] sm:$0xf] %v2546
        %2555 = vst [vmem:[%s811 + $0x10] sm:$0xf] %v2547
        %2556 = vst [vmem:[%s811 + $0x1c] sm:$0xf] %v2548
        %2557 = vst [vmem:[%s811 + $0x28] sm:$0xf] %v2549
        %2558 = vst [vmem:[%s811 + $0x34] sm:$0xf] %v2550
        %2559 = vst [vmem:[%s811 + $0x40] sm:$0xf] %v2551
        %2560 = vst [vmem:[%s811 + $0x4c] sm:$0xf] %v2552
        %2561 = vst [vmem:[%s811 + $0x58] sm:$0xf] %v2553
        %v2562 = vld [vmem:[#allocation2] sm:$0x8]
        %v2563 = vld [vmem:[#allocation2 + $0x4] sm:$0xf]
        %v2564 = vld [vmem:[#allocation2 + $0xc] sm:$0x8]
        %v2565 = vld [vmem:[#allocation2 + $0x10] sm:$0xf]
        %v2566 = vld [vmem:[#allocation2 + $0x18] sm:$0x8]
        %v2567 = vld [vmem:[#allocation2 + $0x1c] sm:$0xf]
        %v2568 = vld [vmem:[#allocation2 + $0x24] sm:$0x8]
        %v2569 = vld [vmem:[#allocation2 + $0x28] sm:$0xf]
        %v2570 = vld [vmem:[#allocation2 + $0x30] sm:$0x8]
        %v2571 = vld [vmem:[#allocation2 + $0x34] sm:$0xf]
        %v2572 = vld [vmem:[#allocation2 + $0x3c] sm:$0x8]
        %v2573 = vld [vmem:[#allocation2 + $0x40] sm:$0xf]
        %v2574 = vld [vmem:[#allocation2 + $0x48] sm:$0x8]
        %v2575 = vld [vmem:[#allocation2 + $0x4c] sm:$0xf]
        %v2576 = vld [vmem:[#allocation2 + $0x54] sm:$0x8]
        %v2577 = vld [vmem:[#allocation2 + $0x58] sm:$0xf]
        %v2578 = vld [vmem:[#allocation2 + $0x60] sm:$0x8]
        %v2579 = vld [vmem:[#allocation2 + $0x64] sm:$0xf]
        %v2580 = vld [vmem:[#allocation2 + $0x6c] sm:$0x8]
        %v2581 = vld [vmem:[#allocation2 + $0x70] sm:$0xf]
        %v2598 = vunpack.c.l.b16 %v2562
        %v2599 = vunpack.c.l.b16 %v2563
        %v2600 = vunpack.c.l.b16 %v2564
        %v2601 = vunpack.c.l.b16 %v2565
        %v2602 = vunpack.c.l.b16 %v2566
        %v2603 = vunpack.c.l.b16 %v2567
        %v2604 = vunpack.c.l.b16 %v2568
        %v2605 = vunpack.c.l.b16 %v2569
        %v2606 = vunpack.c.l.b16 %v2570
        %v2607 = vunpack.c.l.b16 %v2571
        %v2608 = vunpack.c.l.b16 %v2572
        %v2609 = vunpack.c.l.b16 %v2573
        %v2610 = vunpack.c.l.b16 %v2574
        %v2611 = vunpack.c.l.b16 %v2575
        %v2612 = vunpack.c.l.b16 %v2576
        %v2613 = vunpack.c.l.b16 %v2577
        %v2616 = vunpack.c.l.b16 %v2578
        %v2617 = vunpack.c.l.b16 %v2579
        %v2620 = vunpack.c.l.b16 %v2580
        %v2621 = vunpack.c.l.b16 %v2581
        %v2622 = vpack.c.b16 %v2600, %v2598
        %v2623 = vpack.c.b16 %v2602, %v2602
        %v2624 = vpack.c.b16 %v2601, %v2599
        %v2625 = vpack.c.b16 %v2603, %v2603
        %v2626 = vpack.c.b16 %v2602, %v2600
        %v2627 = vpack.c.b16 %v2604, %v2604
        %v2628 = vpack.c.b16 %v2603, %v2601
        %v2629 = vpack.c.b16 %v2605, %v2605
        %v2630 = vpack.c.b16 %v2604, %v2602
        %v2631 = vpack.c.b16 %v2606, %v2606
        %v2632 = vpack.c.b16 %v2605, %v2603
        %v2633 = vpack.c.b16 %v2607, %v2607
        %v2634 = vpack.c.b16 %v2606, %v2604
        %v2635 = vpack.c.b16 %v2608, %v2608
        %v2636 = vpack.c.b16 %v2607, %v2605
        %v2637 = vpack.c.b16 %v2609, %v2609
        %v2638 = vpack.c.b16 %v2608, %v2606
        %v2639 = vpack.c.b16 %v2610, %v2610
        %v2640 = vpack.c.b16 %v2609, %v2607
        %v2641 = vpack.c.b16 %v2611, %v2611
        %v2642 = vpack.c.b16 %v2610, %v2608
        %v2643 = vpack.c.b16 %v2612, %v2612
        %v2644 = vpack.c.b16 %v2611, %v2609
        %v2645 = vpack.c.b16 %v2613, %v2613
        %v2646 = vpack.c.b16 %v2612, %v2610
        %v2647 = vpack.c.b16 %v2616, %v2616
        %v2648 = vpack.c.b16 %v2613, %v2611
        %v2649 = vpack.c.b16 %v2617, %v2617
        %v2650 = vpack.c.b16 %v2616, %v2612
        %v2651 = vpack.c.b16 %v2620, %v2620
        %v2652 = vpack.c.b16 %v2617, %v2613
        %v2653 = vpack.c.b16 %v2621, %v2621
        %v2655 = vshrl.u32 %v2622, 16
        %v2657 = vrot.slane %v2655, 7
        %v2658 = vrot.slane %v2657, 4
        %v2660 = vshrl.u32 %v2624, 16
        %v2662 = vrot.slane %v2660, 7
        %v2663 = vshll.u32 %v2624, 16
        %v2665 = vor.u32 %v2662, %v2663
        %v2666 = vsel %vm913, %v2658, %v2665
        %v2668 = vshrl.u32 %v2623, 16
        %v2670 = vrot.slane %v2668, 7
        %v2671 = vrot.slane %v2670, 4
        %v2673 = vshrl.u32 %v2625, 16
        %v2675 = vrot.slane %v2673, 7
        %v2676 = vshll.u32 %v2625, 16
        %v2678 = vor.u32 %v2675, %v2676
        %v2679 = vsel %vm913, %v2671, %v2678
        %v2681 = vshrl.u32 %v2626, 16
        %v2683 = vrot.slane %v2681, 7
        %v2684 = vrot.slane %v2683, 4
        %v2686 = vshrl.u32 %v2628, 16
        %v2688 = vrot.slane %v2686, 7
        %v2689 = vshll.u32 %v2628, 16
        %v2691 = vor.u32 %v2688, %v2689
        %v2692 = vsel %vm913, %v2684, %v2691
        %v2694 = vshrl.u32 %v2627, 16
        %v2696 = vrot.slane %v2694, 7
        %v2697 = vrot.slane %v2696, 4
        %v2699 = vshrl.u32 %v2629, 16
        %v2701 = vrot.slane %v2699, 7
        %v2702 = vshll.u32 %v2629, 16
        %v2704 = vor.u32 %v2701, %v2702
        %v2705 = vsel %vm913, %v2697, %v2704
        %v2707 = vshrl.u32 %v2630, 16
        %v2709 = vrot.slane %v2707, 7
        %v2710 = vrot.slane %v2709, 4
        %v2712 = vshrl.u32 %v2632, 16
        %v2714 = vrot.slane %v2712, 7
        %v2715 = vshll.u32 %v2632, 16
        %v2717 = vor.u32 %v2714, %v2715
        %v2718 = vsel %vm913, %v2710, %v2717
        %v2720 = vshrl.u32 %v2631, 16
        %v2722 = vrot.slane %v2720, 7
        %v2723 = vrot.slane %v2722, 4
        %v2725 = vshrl.u32 %v2633, 16
        %v2727 = vrot.slane %v2725, 7
        %v2728 = vshll.u32 %v2633, 16
        %v2730 = vor.u32 %v2727, %v2728
        %v2731 = vsel %vm913, %v2723, %v2730
        %v2733 = vshrl.u32 %v2634, 16
        %v2735 = vrot.slane %v2733, 7
        %v2736 = vrot.slane %v2735, 4
        %v2738 = vshrl.u32 %v2636, 16
        %v2740 = vrot.slane %v2738, 7
        %v2741 = vshll.u32 %v2636, 16
        %v2743 = vor.u32 %v2740, %v2741
        %v2744 = vsel %vm913, %v2736, %v2743
        %v2746 = vshrl.u32 %v2635, 16
        %v2748 = vrot.slane %v2746, 7
        %v2749 = vrot.slane %v2748, 4
        %v2751 = vshrl.u32 %v2637, 16
        %v2753 = vrot.slane %v2751, 7
        %v2754 = vshll.u32 %v2637, 16
        %v2756 = vor.u32 %v2753, %v2754
        %v2757 = vsel %vm913, %v2749, %v2756
        %v2759 = vshrl.u32 %v2638, 16
        %v2761 = vrot.slane %v2759, 7
        %v2762 = vrot.slane %v2761, 4
        %v2764 = vshrl.u32 %v2640, 16
        %v2766 = vrot.slane %v2764, 7
        %v2767 = vshll.u32 %v2640, 16
        %v2769 = vor.u32 %v2766, %v2767
        %v2770 = vsel %vm913, %v2762, %v2769
        %v2772 = vshrl.u32 %v2639, 16
        %v2774 = vrot.slane %v2772, 7
        %v2775 = vrot.slane %v2774, 4
        %v2777 = vshrl.u32 %v2641, 16
        %v2779 = vrot.slane %v2777, 7
        %v2780 = vshll.u32 %v2641, 16
        %v2782 = vor.u32 %v2779, %v2780
        %v2783 = vsel %vm913, %v2775, %v2782
        %v2785 = vshrl.u32 %v2642, 16
        %v2787 = vrot.slane %v2785, 7
        %v2788 = vrot.slane %v2787, 4
        %v2790 = vshrl.u32 %v2644, 16
        %v2792 = vrot.slane %v2790, 7
        %v2793 = vshll.u32 %v2644, 16
        %v2795 = vor.u32 %v2792, %v2793
        %v2796 = vsel %vm913, %v2788, %v2795
        %v2798 = vshrl.u32 %v2643, 16
        %v2800 = vrot.slane %v2798, 7
        %v2801 = vrot.slane %v2800, 4
        %v2803 = vshrl.u32 %v2645, 16
        %v2805 = vrot.slane %v2803, 7
        %v2806 = vshll.u32 %v2645, 16
        %v2808 = vor.u32 %v2805, %v2806
        %v2809 = vsel %vm913, %v2801, %v2808
        %v2811 = vshrl.u32 %v2646, 16
        %v2813 = vrot.slane %v2811, 7
        %v2814 = vrot.slane %v2813, 4
        %v2816 = vshrl.u32 %v2648, 16
        %v2818 = vrot.slane %v2816, 7
        %v2819 = vshll.u32 %v2648, 16
        %v2821 = vor.u32 %v2818, %v2819
        %v2822 = vsel %vm913, %v2814, %v2821
        %v2824 = vshrl.u32 %v2647, 16
        %v2826 = vrot.slane %v2824, 7
        %v2827 = vrot.slane %v2826, 4
        %v2829 = vshrl.u32 %v2649, 16
        %v2831 = vrot.slane %v2829, 7
        %v2832 = vshll.u32 %v2649, 16
        %v2834 = vor.u32 %v2831, %v2832
        %v2835 = vsel %vm913, %v2827, %v2834
        %v2837 = vshrl.u32 %v2650, 16
        %v2839 = vrot.slane %v2837, 7
        %v2840 = vrot.slane %v2839, 4
        %v2842 = vshrl.u32 %v2652, 16
        %v2844 = vrot.slane %v2842, 7
        %v2845 = vshll.u32 %v2652, 16
        %v2847 = vor.u32 %v2844, %v2845
        %v2848 = vsel %vm913, %v2840, %v2847
        %v2850 = vshrl.u32 %v2651, 16
        %v2852 = vrot.slane %v2850, 7
        %v2853 = vrot.slane %v2852, 4
        %v2855 = vshrl.u32 %v2653, 16
        %v2857 = vrot.slane %v2855, 7
        %v2858 = vshll.u32 %v2653, 16
        %v2860 = vor.u32 %v2857, %v2858
        %v2861 = vsel %vm913, %v2853, %v2860
        %v2862 = vld [vmem:[#allocation11] sm:$0xf]
        %v2863 = vld [vmem:[#allocation11 + $0x4] sm:$0xf]
        %v2864 = vld [vmem:[#allocation11 + $0x8] sm:$0xf]
        %v2865 = vld [vmem:[#allocation11 + $0xc] sm:$0xf]
        %v2866 = vld [vmem:[#allocation11 + $0x10] sm:$0xf]
        %v2867 = vld [vmem:[#allocation11 + $0x14] sm:$0xf]
        %v2868 = vld [vmem:[#allocation11 + $0x18] sm:$0xf]
        %v2869 = vld [vmem:[#allocation11 + $0x1c] sm:$0xf]
        %v2870 = vld [vmem:[#allocation11 + $0x20] sm:$0xf]
        %v2871 = vld [vmem:[#allocation11 + $0x24] sm:$0xf]
        %v2872 = vld [vmem:[#allocation11 + $0x28] sm:$0xf]
        %v2873 = vld [vmem:[#allocation11 + $0x2c] sm:$0xf]
        %v2874 = vld [vmem:[#allocation11 + $0x30] sm:$0xf]
        %v2875 = vld [vmem:[#allocation11 + $0x34] sm:$0xf]
        %v2876 = vld [vmem:[#allocation11 + $0x38] sm:$0xf]
        %v2877 = vld [vmem:[#allocation11 + $0x3c] sm:$0xf]
        %v2878 = vld [vmem:[#allocation11 + $0x40] sm:$0xf]
        %v2879 = vld [vmem:[#allocation11 + $0x44] sm:$0xf]
        %v2880 = vld [vmem:[#allocation11 + $0x48] sm:$0xf]
        %v2881 = vld [vmem:[#allocation11 + $0x4c] sm:$0xf]
        %v2882 = vld [vmem:[#allocation11 + $0x50] sm:$0xf]
        %v2883 = vld [vmem:[#allocation11 + $0x54] sm:$0xf]
        %v2884 = vld [vmem:[#allocation11 + $0x58] sm:$0xf]
        %v2885 = vld [vmem:[#allocation11 + $0x5c] sm:$0xf]
        %v2886 = vld [vmem:[#allocation11 + $0x60] sm:$0xf]
        %v2887 = vld [vmem:[#allocation11 + $0x64] sm:$0xf]
        %v2888 = vld [vmem:[#allocation11 + $0x68] sm:$0xf]
        %v2889 = vld [vmem:[#allocation11 + $0x6c] sm:$0xf]
        %v2890 = vld [vmem:[#allocation11 + $0x70] sm:$0xf]
        %v2891 = vld [vmem:[#allocation11 + $0x74] sm:$0xf]
        %v2892 = vld [vmem:[#allocation11 + $0x78] sm:$0xf]
        %v2893 = vld [vmem:[#allocation11 + $0x7c] sm:$0xf]
        %v2894 = vld [vmem:[#allocation11 + $0x80] sm:$0xf]
        %v2895 = vld [vmem:[#allocation11 + $0x84] sm:$0xf]
        %v2896 = vld [vmem:[#allocation11 + $0x88] sm:$0xf]
        %v2897 = vld [vmem:[#allocation11 + $0x8c] sm:$0xf]
        %v2898 = vld [vmem:[#allocation11 + $0x90] sm:$0xf]
        %v2899 = vld [vmem:[#allocation11 + $0x94] sm:$0xf]
        %v2900 = vld [vmem:[#allocation11 + $0x98] sm:$0xf]
        %v2901 = vld [vmem:[#allocation11 + $0x9c] sm:$0xf]
        %v2902 = vld [vmem:[#allocation11 + $0xa0] sm:$0xf]
        %v2903 = vld [vmem:[#allocation11 + $0xa4] sm:$0xf]
        %v2904 = vld [vmem:[#allocation11 + $0xa8] sm:$0xf]
        %v2905 = vld [vmem:[#allocation11 + $0xac] sm:$0xf]
        %v2906 = vld [vmem:[#allocation11 + $0xb0] sm:$0xf]
        %v2907 = vld [vmem:[#allocation11 + $0xb4] sm:$0xf]
        %v2908 = vld [vmem:[#allocation11 + $0xb8] sm:$0xf]
        %v2909 = vld [vmem:[#allocation11 + $0xbc] sm:$0xf]
        %s2910 = scalar_lea.vmem [#allocation11], 192
        %v2911 = vld [vmem:[%s2910] sm:$0xf]
        %v2912 = vld [vmem:[%s2910 + $0x4] sm:$0xf]
        %v2913 = vld [vmem:[%s2910 + $0x8] sm:$0xf]
        %v2914 = vld [vmem:[%s2910 + $0xc] sm:$0xf]
        %v2915 = vld [vmem:[%s2910 + $0x10] sm:$0xf]
        %v2916 = vld [vmem:[%s2910 + $0x14] sm:$0xf]
        %v2917 = vld [vmem:[%s2910 + $0x18] sm:$0xf]
        %v2918 = vld [vmem:[%s2910 + $0x1c] sm:$0xf]
        %v2919 = vld [vmem:[%s2910 + $0x20] sm:$0xf]
        %v2920 = vld [vmem:[%s2910 + $0x24] sm:$0xf]
        %v2921 = vld [vmem:[%s2910 + $0x28] sm:$0xf]
        %v2922 = vld [vmem:[%s2910 + $0x2c] sm:$0xf]
        %v2923 = vld [vmem:[%s2910 + $0x30] sm:$0xf]
        %v2924 = vld [vmem:[%s2910 + $0x34] sm:$0xf]
        %v2925 = vld [vmem:[%s2910 + $0x38] sm:$0xf]
        %v2926 = vld [vmem:[%s2910 + $0x3c] sm:$0xf]
        %v2927 = vld [vmem:[%s2910 + $0x40] sm:$0xf]
        %v2928 = vld [vmem:[%s2910 + $0x44] sm:$0xf]
        %v2929 = vld [vmem:[%s2910 + $0x48] sm:$0xf]
        %v2930 = vld [vmem:[%s2910 + $0x4c] sm:$0xf]
        %v2931 = vld [vmem:[%s2910 + $0x50] sm:$0xf]
        %v2932 = vld [vmem:[%s2910 + $0x54] sm:$0xf]
        %v2933 = vld [vmem:[%s2910 + $0x58] sm:$0xf]
        %v2934 = vld [vmem:[%s2910 + $0x5c] sm:$0xf]
        %v2935 = vld [vmem:[%s2910 + $0x60] sm:$0xf]
        %v2936 = vld [vmem:[%s2910 + $0x64] sm:$0xf]
        %v2937 = vld [vmem:[%s2910 + $0x68] sm:$0xf]
        %v2938 = vld [vmem:[%s2910 + $0x6c] sm:$0xf]
        %v2939 = vld [vmem:[%s2910 + $0x70] sm:$0xf]
        %v2940 = vld [vmem:[%s2910 + $0x74] sm:$0xf]
        %v2941 = vld [vmem:[%s2910 + $0x78] sm:$0xf]
        %v2942 = vld [vmem:[%s2910 + $0x7c] sm:$0xf]
        %v2943 = vld [vmem:[%s2910 + $0x80] sm:$0xf]
        %v2944 = vld [vmem:[%s2910 + $0x84] sm:$0xf]
        %v2945 = vld [vmem:[%s2910 + $0x88] sm:$0xf]
        %v2946 = vld [vmem:[%s2910 + $0x8c] sm:$0xf]
        %v2947 = vld [vmem:[%s2910 + $0x90] sm:$0xf]
        %v2948 = vld [vmem:[%s2910 + $0x94] sm:$0xf]
        %v2949 = vld [vmem:[%s2910 + $0x98] sm:$0xf]
        %v2950 = vld [vmem:[%s2910 + $0x9c] sm:$0xf]
        %v2951 = vld [vmem:[%s2910 + $0xa0] sm:$0xf]
        %v2952 = vld [vmem:[%s2910 + $0xa4] sm:$0xf]
        %v2953 = vld [vmem:[%s2910 + $0xa8] sm:$0xf]
        %v2954 = vld [vmem:[%s2910 + $0xac] sm:$0xf]
        %v2955 = vld [vmem:[%s2910 + $0xb0] sm:$0xf]
        %v2956 = vld [vmem:[%s2910 + $0xb4] sm:$0xf]
        %v2957 = vld [vmem:[%s2910 + $0xb8] sm:$0xf]
        %v2958 = vld [vmem:[%s2910 + $0xbc] sm:$0xf]
        %v2959 = vpack.c.b16 %v2621, %v2617
        %v3017 = vunpack.c.l.b16 %v2911
        %v3018 = vunpack.c.l.b16 %v2912
        %v3019 = vunpack.c.l.b16 %v2913
        %v3020 = vunpack.c.l.b16 %v2914
        %v3021 = vunpack.c.l.b16 %v2915
        %v3022 = vunpack.c.l.b16 %v2916
        %v3023 = vunpack.c.l.b16 %v2917
        %v3024 = vunpack.c.l.b16 %v2918
        %v3025 = vunpack.c.l.b16 %v2919
        %v3026 = vunpack.c.l.b16 %v2920
        %v3027 = vunpack.c.l.b16 %v2921
        %v3028 = vunpack.c.l.b16 %v2922
        %v3029 = vunpack.c.l.b16 %v2923
        %v3030 = vunpack.c.l.b16 %v2924
        %v3031 = vunpack.c.l.b16 %v2925
        %v3032 = vunpack.c.l.b16 %v2926
        %v3033 = vunpack.c.l.b16 %v2927
        %v3034 = vunpack.c.l.b16 %v2928
        %v3035 = vunpack.c.l.b16 %v2929
        %v3036 = vunpack.c.l.b16 %v2930
        %v3037 = vunpack.c.l.b16 %v2931
        %v3038 = vunpack.c.l.b16 %v2932
        %v3039 = vunpack.c.l.b16 %v2933
        %v3040 = vunpack.c.l.b16 %v2934
        %v3041 = vunpack.c.l.b16 %v2935
        %v3042 = vunpack.c.l.b16 %v2936
        %v3043 = vunpack.c.l.b16 %v2937
        %v3044 = vunpack.c.l.b16 %v2938
        %v3045 = vunpack.c.l.b16 %v2939
        %v3046 = vunpack.c.l.b16 %v2940
        %v3047 = vunpack.c.l.b16 %v2941
        %v3048 = vunpack.c.l.b16 %v2942
        %v3049 = vunpack.c.l.b16 %v2943
        %v3050 = vunpack.c.l.b16 %v2944
        %v3051 = vunpack.c.l.b16 %v2945
        %v3052 = vunpack.c.l.b16 %v2946
        %v3053 = vunpack.c.l.b16 %v2947
        %v3054 = vunpack.c.l.b16 %v2948
        %v3055 = vunpack.c.l.b16 %v2949
        %v3056 = vunpack.c.l.b16 %v2950
        %v3057 = vunpack.c.l.b16 %v2951
        %v3058 = vunpack.c.l.b16 %v2952
        %v3059 = vunpack.c.l.b16 %v2953
        %v3060 = vunpack.c.l.b16 %v2954
        %v3061 = vunpack.c.l.b16 %v2955
        %v3062 = vunpack.c.l.b16 %v2956
        %v3063 = vunpack.c.l.b16 %v2957
        %v3064 = vunpack.c.l.b16 %v2958
        %v3065 = vpack.c.b16 %v3018, %v3017
        %v3066 = vpack.c.b16 %v3020, %v3019
        %v3067 = vpack.c.b16 %v3022, %v3021
        %v3068 = vpack.c.b16 %v3024, %v3023
        %v3069 = vpack.c.b16 %v3026, %v3025
        %v3070 = vpack.c.b16 %v3028, %v3027
        %v3071 = vpack.c.b16 %v3030, %v3029
        %v3072 = vpack.c.b16 %v3032, %v3031
        %v3073 = vpack.c.b16 %v3034, %v3033
        %v3074 = vpack.c.b16 %v3036, %v3035
        %v3075 = vpack.c.b16 %v3038, %v3037
        %v3076 = vpack.c.b16 %v3040, %v3039
        %v3077 = vpack.c.b16 %v3042, %v3041
        %v3078 = vpack.c.b16 %v3044, %v3043
        %v3079 = vpack.c.b16 %v3046, %v3045
        %v3080 = vpack.c.b16 %v3048, %v3047
        %v3081 = vpack.c.b16 %v3050, %v3049
        %v3082 = vpack.c.b16 %v3052, %v3051
        %v3083 = vpack.c.b16 %v3054, %v3053
        %v3084 = vpack.c.b16 %v3056, %v3055
        %v3085 = vpack.c.b16 %v3058, %v3057
        %v3086 = vpack.c.b16 %v3060, %v3059
        %v3087 = vpack.c.b16 %v3062, %v3061
        %v3088 = vpack.c.b16 %v3064, %v3063
        %3113 = vmatprep.subr.bf16.mxu0 0
        %3114 = vmatpush1.bf16.msra.mxu0 %v3065
        %3115 = vmatprep.subr.bf16.mxu0 0
        %3116 = vmatpush1.bf16.msra.mxu0 %v3066
        %3117 = vmatprep.subr.bf16.mxu0 0
        %3118 = vmatpush1.bf16.msra.mxu0 %v3067
        %3119 = vmatprep.subr.bf16.mxu0 0
        %3120 = vmatpush1.bf16.msra.mxu0 %v3068
        %3121 = vmatprep.subr.bf16.mxu0 0
        %3122 = vmatpush1.bf16.msra.mxu0 %v3069
        %3123 = vmatprep.subr.bf16.mxu0 0
        %3124 = vmatpush1.bf16.msra.mxu0 %v3070
        %3125 = vmatprep.subr.bf16.mxu0 0
        %3126 = vmatpush1.bf16.msra.mxu0 %v3071
        %3127 = vmatprep.subr.bf16.mxu0 0
        %3128 = vmatpush1.bf16.msra.mxu0 %v3072
        %3129 = vmatprep.subr.bf16.mxu0 0
        %3130 = vmatpush1.bf16.msra.mxu0 %v3073
        %3131 = vmatprep.subr.bf16.mxu0 0
        %3132 = vmatpush1.bf16.msra.mxu0 %v3074
        %3133 = vmatprep.subr.bf16.mxu0 0
        %3134 = vmatpush1.bf16.msra.mxu0 %v3075
        %3135 = vmatprep.subr.bf16.mxu0 0
        %3136 = vmatpush1.bf16.msra.mxu0 %v3076
        %3137 = vmatprep.subr.bf16.mxu0 0
        %3138 = vmatpush1.bf16.msra.mxu0 %v3077
        %3139 = vmatprep.subr.bf16.mxu0 0
        %3140 = vmatpush1.bf16.msra.mxu0 %v3078
        %3141 = vmatprep.subr.bf16.mxu0 0
        %3142 = vmatpush1.bf16.msra.mxu0 %v3079
        %3143 = vmatprep.subr.bf16.mxu0 0
        %3144 = vmatpush1.bf16.msra.mxu0 %v3080
        %3145 = vmatprep.mubr.bf16.mxu0 %v2628
        %3146 = vmatmul.mubr.bf16.gmra.mrb[0].mxu0 %v2624
        %v3147 = vpop.f32.mrb[0].mxu0
        %v3148 = vadd.f32 0.0, %v3147
        %v3149 = vpop.f32.mrb[0].mxu0
        %v3150 = vpop.f32.mrb[0].mxu0
        %v3151 = vadd.f32 0.0, %v3150
        %v3152 = vpop.f32.mrb[0].mxu0
        %3153 = vmatprep.mubr.bf16.mxu0 %v2636
        %3154 = vmatmul.mubr.bf16.gmra.mrb[0].mxu0 %v2632
        %v3155 = vpop.f32.mrb[0].mxu0
        %v3156 = vadd.f32 0.0, %v3155
        %v3157 = vpop.f32.mrb[0].mxu0
        %v3158 = vpop.f32.mrb[0].mxu0
        %v3159 = vadd.f32 0.0, %v3158
        %v3160 = vpop.f32.mrb[0].mxu0
        %3161 = vmatprep.mubr.bf16.mxu0 %v2644
        %3162 = vmatmul.mubr.bf16.gmra.mrb[0].mxu0 %v2640
        %v3163 = vpop.f32.mrb[0].mxu0
        %v3164 = vadd.f32 0.0, %v3163
        %v3165 = vpop.f32.mrb[0].mxu0
        %v3166 = vpop.f32.mrb[0].mxu0
        %v3167 = vadd.f32 0.0, %v3166
        %v3168 = vpop.f32.mrb[0].mxu0
        %3169 = vmatprep.mubr.bf16.mxu0 %v2652
        %3170 = vmatmul.mubr.bf16.gmra.mrb[0].mxu0 %v2648
        %v3171 = vpop.f32.mrb[0].mxu0
        %v3172 = vadd.f32 0.0, %v3171
        %v3173 = vpop.f32.mrb[0].mxu0
        %v3174 = vpop.f32.mrb[0].mxu0
        %v3175 = vadd.f32 0.0, %v3174
        %v3176 = vpop.f32.mrb[0].mxu0
        %3177 = vdwg.mxu0
        %3178 = vmatprep.subr.bf16.mxu0 0
        %3179 = vmatpush1.bf16.msra.mxu0 %v3081
        %3180 = vmatprep.subr.bf16.mxu0 0
        %3181 = vmatpush1.bf16.msra.mxu0 %v3082
        %3182 = vmatprep.subr.bf16.mxu0 0
        %3183 = vmatpush1.bf16.msra.mxu0 %v3083
        %3184 = vmatprep.subr.bf16.mxu0 0
        %3185 = vmatpush1.bf16.msra.mxu0 %v3084
        %3186 = vmatprep.subr.bf16.mxu0 0
        %3187 = vmatpush1.bf16.msra.mxu0 %v3085
        %3188 = vmatprep.subr.bf16.mxu0 0
        %3189 = vmatpush1.bf16.msra.mxu0 %v3086
        %3190 = vmatprep.subr.bf16.mxu0 0
        %3191 = vmatpush1.bf16.msra.mxu0 %v3087
        %3192 = vmatprep.subr.bf16.mxu0 0
        %3193 = vmatpush1.bf16.msra.mxu0 %v3088
        %3194 = vmatprep.subr.bf16.mxu0 0
        %3195 = vmatpush1.bf16.msra.mxu0 0
        %3196 = vmatprep.subr.bf16.mxu0 0
        %3197 = vmatpush1.bf16.msra.mxu0 0
        %3198 = vmatprep.subr.bf16.mxu0 0
        %3199 = vmatpush1.bf16.msra.mxu0 0
        %3200 = vmatprep.subr.bf16.mxu0 0
        %3201 = vmatpush1.bf16.msra.mxu0 0
        %3202 = vmatprep.subr.bf16.mxu0 0
        %3203 = vmatpush1.bf16.msra.mxu0 0
        %3204 = vmatprep.subr.bf16.mxu0 0
        %3205 = vmatpush1.bf16.msra.mxu0 0
        %3206 = vmatprep.subr.bf16.mxu0 0
        %3207 = vmatpush1.bf16.msra.mxu0 0
        %3208 = vmatprep.subr.bf16.mxu0 0
        %3209 = vmatpush1.bf16.msra.mxu0 0
        %3210 = vmatprep.mubr.bf16.mxu0 0
        %3211 = vmatmul.mubr.bf16.gmra.mrb[0].mxu0 %v2632
        %v3212 = vpop.f32.mrb[0].mxu0
        %v3213 = vadd.f32 %v3148, %v3212
        %v3214 = vpop.f32.mrb[0].mxu0
        %v3215 = vpop.f32.mrb[0].mxu0
        %v3216 = vadd.f32 %v3151, %v3215
        %v3217 = vpop.f32.mrb[0].mxu0
        %3218 = vmatprep.mubr.bf16.mxu0 0
        %3219 = vmatmul.mubr.bf16.gmra.mrb[0].mxu0 %v2640
        %v3220 = vpop.f32.mrb[0].mxu0
        %v3221 = vadd.f32 %v3156, %v3220
        %v3222 = vpop.f32.mrb[0].mxu0
        %v3223 = vpop.f32.mrb[0].mxu0
        %v3224 = vadd.f32 %v3159, %v3223
        %v3225 = vpop.f32.mrb[0].mxu0
        %3226 = vmatprep.mubr.bf16.mxu0 0
        %3227 = vmatmul.mubr.bf16.gmra.mrb[0].mxu0 %v2648
        %v3228 = vpop.f32.mrb[0].mxu0
        %v3229 = vadd.f32 %v3164, %v3228
        %v3230 = vpop.f32.mrb[0].mxu0
        %v3231 = vpop.f32.mrb[0].mxu0
        %v3232 = vadd.f32 %v3167, %v3231
        %v3233 = vpop.f32.mrb[0].mxu0
        %3234 = vmatprep.mubr.bf16.mxu0 0
        %3235 = vmatmul.mubr.bf16.gmra.mrb[0].mxu0 %v2959
        %v3236 = vpop.f32.mrb[0].mxu0
        %v3237 = vadd.f32 %v3172, %v3236
        %v3238 = vpop.f32.mrb[0].mxu0
        %v3239 = vpop.f32.mrb[0].mxu0
        %v3240 = vadd.f32 %v3175, %v3239
        %v3241 = vpop.f32.mrb[0].mxu0
        %3242 = vdwg.mxu0
        %v3243 = vunpack.c.l.b16 %v2666
        %v3244 = vunpack.c.h.b16 %v2666
        %v3245 = vunpack.c.l.b16 %v2679
        %v3246 = vunpack.c.l.b16 %v2692
        %v3247 = vunpack.c.h.b16 %v2692
        %v3248 = vunpack.c.l.b16 %v2705
        %v3249 = vunpack.c.l.b16 %v2718
        %v3250 = vunpack.c.h.b16 %v2718
        %v3251 = vunpack.c.l.b16 %v2731
        %v3252 = vunpack.c.l.b16 %v2744
        %v3253 = vunpack.c.h.b16 %v2744
        %v3254 = vunpack.c.l.b16 %v2757
        %v3255 = vunpack.c.l.b16 %v2770
        %v3256 = vunpack.c.h.b16 %v2770
        %v3257 = vunpack.c.l.b16 %v2783
        %v3258 = vunpack.c.l.b16 %v2796
        %v3259 = vunpack.c.h.b16 %v2796
        %v3260 = vunpack.c.l.b16 %v2809
        %v3261 = vunpack.c.l.b16 %v2822
        %v3262 = vunpack.c.h.b16 %v2822
        %v3263 = vunpack.c.l.b16 %v2835
        %v3264 = vunpack.c.l.b16 %v2848
        %v3265 = vunpack.c.h.b16 %v2848
        %v3266 = vunpack.c.l.b16 %v2861
        %v3267 = vpack.c.b16 %v3246, %v3243
        %v3268 = vpack.c.b16 %v3247, %v3244
        %v3269 = vpack.c.b16 %v3248, %v3245
        %v3270 = vpack.c.b16 %v3252, %v3249
        %v3271 = vpack.c.b16 %v3253, %v3250
        %v3272 = vpack.c.b16 %v3254, %v3251
        %v3273 = vpack.c.b16 %v3258, %v3255
        %v3274 = vpack.c.b16 %v3259, %v3256
        %v3275 = vpack.c.b16 %v3260, %v3257
        %v3276 = vpack.c.b16 %v3264, %v3261
        %v3277 = vpack.c.b16 %v3265, %v3262
        %v3278 = vpack.c.b16 %v3266, %v3263
        %v3339 = vunpack.c.l.b16 %v2862
        %v3340 = vunpack.c.l.b16 %v2863
        %v3341 = vunpack.c.l.b16 %v2864
        %v3342 = vunpack.c.l.b16 %v2865
        %v3343 = vunpack.c.l.b16 %v2866
        %v3344 = vunpack.c.l.b16 %v2867
        %v3345 = vunpack.c.l.b16 %v2868
        %v3346 = vunpack.c.l.b16 %v2869
        %v3347 = vunpack.c.l.b16 %v2870
        %v3348 = vunpack.c.l.b16 %v2871
        %v3349 = vunpack.c.l.b16 %v2872
        %v3350 = vunpack.c.l.b16 %v2873
        %v3351 = vunpack.c.l.b16 %v2874
        %v3352 = vunpack.c.l.b16 %v2875
        %v3353 = vunpack.c.l.b16 %v2876
        %v3354 = vunpack.c.l.b16 %v2877
        %v3355 = vunpack.c.l.b16 %v2878
        %v3356 = vunpack.c.l.b16 %v2879
        %v3357 = vunpack.c.l.b16 %v2880
        %v3358 = vunpack.c.l.b16 %v2881
        %v3359 = vunpack.c.l.b16 %v2882
        %v3360 = vunpack.c.l.b16 %v2883
        %v3361 = vunpack.c.l.b16 %v2884
        %v3362 = vunpack.c.l.b16 %v2885
        %v3363 = vunpack.c.l.b16 %v2886
        %v3364 = vunpack.c.l.b16 %v2887
        %v3365 = vunpack.c.l.b16 %v2888
        %v3366 = vunpack.c.l.b16 %v2889
        %v3367 = vunpack.c.l.b16 %v2890
        %v3368 = vunpack.c.l.b16 %v2891
        %v3369 = vunpack.c.l.b16 %v2892
        %v3370 = vunpack.c.l.b16 %v2893
        %v3371 = vunpack.c.l.b16 %v2894
        %v3372 = vunpack.c.l.b16 %v2895
        %v3373 = vunpack.c.l.b16 %v2896
        %v3374 = vunpack.c.l.b16 %v2897
        %v3375 = vunpack.c.l.b16 %v2898
        %v3376 = vunpack.c.l.b16 %v2899
        %v3377 = vunpack.c.l.b16 %v2900
        %v3378 = vunpack.c.l.b16 %v2901
        %v3379 = vunpack.c.l.b16 %v2902
        %v3380 = vunpack.c.l.b16 %v2903
        %v3381 = vunpack.c.l.b16 %v2904
        %v3382 = vunpack.c.l.b16 %v2905
        %v3383 = vunpack.c.l.b16 %v2906
        %v3384 = vunpack.c.l.b16 %v2907
        %v3385 = vunpack.c.l.b16 %v2908
        %v3386 = vunpack.c.l.b16 %v2909
        %v3387 = vpack.c.b16 %v3340, %v3339
        %v3388 = vpack.c.b16 %v3342, %v3341
        %v3389 = vpack.c.b16 %v3344, %v3343
        %v3390 = vpack.c.b16 %v3346, %v3345
        %v3391 = vpack.c.b16 %v3348, %v3347
        %v3392 = vpack.c.b16 %v3350, %v3349
        %v3393 = vpack.c.b16 %v3352, %v3351
        %v3394 = vpack.c.b16 %v3354, %v3353
        %v3395 = vpack.c.b16 %v3356, %v3355
        %v3396 = vpack.c.b16 %v3358, %v3357
        %v3397 = vpack.c.b16 %v3360, %v3359
        %v3398 = vpack.c.b16 %v3362, %v3361
        %v3399 = vpack.c.b16 %v3364, %v3363
        %v3400 = vpack.c.b16 %v3366, %v3365
        %v3401 = vpack.c.b16 %v3368, %v3367
        %v3402 = vpack.c.b16 %v3370, %v3369
        %v3403 = vpack.c.b16 %v3372, %v3371
        %v3404 = vpack.c.b16 %v3374, %v3373
        %v3405 = vpack.c.b16 %v3376, %v3375
        %v3406 = vpack.c.b16 %v3378, %v3377
        %v3407 = vpack.c.b16 %v3380, %v3379
        %v3408 = vpack.c.b16 %v3382, %v3381
        %v3409 = vpack.c.b16 %v3384, %v3383
        %v3410 = vpack.c.b16 %v3386, %v3385
        %3435 = vmatprep.subr.bf16.mxu0 0
        %3436 = vmatpush1.bf16.msra.mxu0 %v3387
        %3437 = vmatprep.subr.bf16.mxu0 0
        %3438 = vmatpush1.bf16.msra.mxu0 %v3388
        %3439 = vmatprep.subr.bf16.mxu0 0
        %3440 = vmatpush1.bf16.msra.mxu0 %v3389
        %3441 = vmatprep.subr.bf16.mxu0 0
        %3442 = vmatpush1.bf16.msra.mxu0 %v3390
        %3443 = vmatprep.subr.bf16.mxu0 0
        %3444 = vmatpush1.bf16.msra.mxu0 %v3391
        %3445 = vmatprep.subr.bf16.mxu0 0
        %3446 = vmatpush1.bf16.msra.mxu0 %v3392
        %3447 = vmatprep.subr.bf16.mxu0 0
        %3448 = vmatpush1.bf16.msra.mxu0 %v3393
        %3449 = vmatprep.subr.bf16.mxu0 0
        %3450 = vmatpush1.bf16.msra.mxu0 %v3394
        %3451 = vmatprep.subr.bf16.mxu0 0
        %3452 = vmatpush1.bf16.msra.mxu0 %v3395
        %3453 = vmatprep.subr.bf16.mxu0 0
        %3454 = vmatpush1.bf16.msra.mxu0 %v3396
        %3455 = vmatprep.subr.bf16.mxu0 0
        %3456 = vmatpush1.bf16.msra.mxu0 %v3397
        %3457 = vmatprep.subr.bf16.mxu0 0
        %3458 = vmatpush1.bf16.msra.mxu0 %v3398
        %3459 = vmatprep.subr.bf16.mxu0 0
        %3460 = vmatpush1.bf16.msra.mxu0 %v3399
        %3461 = vmatprep.subr.bf16.mxu0 0
        %3462 = vmatpush1.bf16.msra.mxu0 %v3400
        %3463 = vmatprep.subr.bf16.mxu0 0
        %3464 = vmatpush1.bf16.msra.mxu0 %v3401
        %3465 = vmatprep.subr.bf16.mxu0 0
        %3466 = vmatpush1.bf16.msra.mxu0 %v3402
        %3467 = vmatprep.mubr.bf16.mxu0 %v3268
        %3468 = vmatmul.mubr.bf16.gmra.mrb[0].mxu0 %v3267
        %v3469 = vpop.f32.mrb[0].mxu0
        %v3470 = vadd.f32 %v3213, %v3469
        %v3471 = vpop.f32.mrb[0].mxu0
        %v3472 = vpop.f32.mrb[0].mxu0
        %v3473 = vadd.f32 %v3216, %v3472
        %v3474 = vpop.f32.mrb[0].mxu0
        %3475 = vmatprep.mubr.bf16.mxu0 %v3271
        %3476 = vmatmul.mubr.bf16.gmra.mrb[0].mxu0 %v3270
        %v3477 = vpop.f32.mrb[0].mxu0
        %v3478 = vadd.f32 %v3221, %v3477
        %v3479 = vpop.f32.mrb[0].mxu0
        %v3480 = vpop.f32.mrb[0].mxu0
        %v3481 = vadd.f32 %v3224, %v3480
        %v3482 = vpop.f32.mrb[0].mxu0
        %3483 = vmatprep.mubr.bf16.mxu0 %v3274
        %3484 = vmatmul.mubr.bf16.gmra.mrb[0].mxu0 %v3273
        %v3485 = vpop.f32.mrb[0].mxu0
        %v3486 = vadd.f32 %v3229, %v3485
        %v3487 = vpop.f32.mrb[0].mxu0
        %v3488 = vpop.f32.mrb[0].mxu0
        %v3489 = vadd.f32 %v3232, %v3488
        %v3490 = vpop.f32.mrb[0].mxu0
        %3491 = vmatprep.mubr.bf16.mxu0 %v3277
        %3492 = vmatmul.mubr.bf16.gmra.mrb[0].mxu0 %v3276
        %v3493 = vpop.f32.mrb[0].mxu0
        %v3494 = vadd.f32 %v3237, %v3493
        %v3495 = vpop.f32.mrb[0].mxu0
        %v3496 = vpop.f32.mrb[0].mxu0
        %v3497 = vadd.f32 %v3240, %v3496
        %v3498 = vpop.f32.mrb[0].mxu0
        %3499 = vdwg.mxu0
        %3500 = vmatprep.subr.bf16.mxu0 0
        %3501 = vmatpush1.bf16.msra.mxu0 %v3403
        %3502 = vmatprep.subr.bf16.mxu0 0
        %3503 = vmatpush1.bf16.msra.mxu0 %v3404
        %3504 = vmatprep.subr.bf16.mxu0 0
        %3505 = vmatpush1.bf16.msra.mxu0 %v3405
        %3506 = vmatprep.subr.bf16.mxu0 0
        %3507 = vmatpush1.bf16.msra.mxu0 %v3406
        %3508 = vmatprep.subr.bf16.mxu0 0
        %3509 = vmatpush1.bf16.msra.mxu0 %v3407
        %3510 = vmatprep.subr.bf16.mxu0 0
        %3511 = vmatpush1.bf16.msra.mxu0 %v3408
        %3512 = vmatprep.subr.bf16.mxu0 0
        %3513 = vmatpush1.bf16.msra.mxu0 %v3409
        %3514 = vmatprep.subr.bf16.mxu0 0
        %3515 = vmatpush1.bf16.msra.mxu0 %v3410
        %3516 = vmatprep.subr.bf16.mxu0 0
        %3517 = vmatpush1.bf16.msra.mxu0 0
        %3518 = vmatprep.subr.bf16.mxu0 0
        %3519 = vmatpush1.bf16.msra.mxu0 0
        %3520 = vmatprep.subr.bf16.mxu0 0
        %3521 = vmatpush1.bf16.msra.mxu0 0
        %3522 = vmatprep.subr.bf16.mxu0 0
        %3523 = vmatpush1.bf16.msra.mxu0 0
        %3524 = vmatprep.subr.bf16.mxu0 0
        %3525 = vmatpush1.bf16.msra.mxu0 0
        %3526 = vmatprep.subr.bf16.mxu0 0
        %3527 = vmatpush1.bf16.msra.mxu0 0
        %3528 = vmatprep.subr.bf16.mxu0 0
        %3529 = vmatpush1.bf16.msra.mxu0 0
        %3530 = vmatprep.subr.bf16.mxu0 0
        %3531 = vmatpush1.bf16.msra.mxu0 0
        %3532 = vmatprep.mubr.bf16.mxu0 0
        %3533 = vmatmul.mubr.bf16.gmra.mrb[0].mxu0 %v3269
        %v3534 = vpop.f32.mrb[0].mxu0
        %v3535 = vadd.f32 %v3470, %v3534
        %v3536 = vpop.f32.mrb[0].mxu0
        %v3537 = vpop.f32.mrb[0].mxu0
        %v3538 = vadd.f32 %v3473, %v3537
        %v3539 = vpop.f32.mrb[0].mxu0
        %3540 = vmatprep.mubr.bf16.mxu0 0
        %3541 = vmatmul.mubr.bf16.gmra.mrb[0].mxu0 %v3272
        %v3542 = vpop.f32.mrb[0].mxu0
        %v3543 = vadd.f32 %v3478, %v3542
        %v3544 = vpop.f32.mrb[0].mxu0
        %v3545 = vpop.f32.mrb[0].mxu0
        %v3546 = vadd.f32 %v3481, %v3545
        %v3547 = vpop.f32.mrb[0].mxu0
        %3548 = vmatprep.mubr.bf16.mxu0 0
        %3549 = vmatmul.mubr.bf16.gmra.mrb[0].mxu0 %v3275
        %v3550 = vpop.f32.mrb[0].mxu0
        %v3551 = vadd.f32 %v3486, %v3550
        %v3552 = vpop.f32.mrb[0].mxu0
        %v3553 = vpop.f32.mrb[0].mxu0
        %v3554 = vadd.f32 %v3489, %v3553
        %v3555 = vpop.f32.mrb[0].mxu0
        %3556 = vmatprep.mubr.bf16.mxu0 0
        %3557 = vmatmul.mubr.bf16.gmra.mrb[0].mxu0 %v3278
        %v3558 = vpop.f32.mrb[0].mxu0
        %v3559 = vadd.f32 %v3494, %v3558
        %v3560 = vpop.f32.mrb[0].mxu0
        %v3561 = vpop.f32.mrb[0].mxu0
        %v3562 = vadd.f32 %v3497, %v3561
        %v3563 = vpop.f32.mrb[0].mxu0
        %3564 = vdwg.mxu0
        %v3565 = vld [vmem:[#allocation2 + $0x4] sm:$0xf]
        %v3566 = vld [vmem:[#allocation2 + $0x8] sm:$0x1]
        %v3567 = vld [vmem:[#allocation2 + $0x10] sm:$0xf]
        %v3568 = vld [vmem:[#allocation2 + $0x14] sm:$0x1]
        %v3569 = vld [vmem:[#allocation2 + $0x1c] sm:$0xf]
        %v3570 = vld [vmem:[#allocation2 + $0x20] sm:$0x1]
        %v3571 = vld [vmem:[#allocation2 + $0x28] sm:$0xf]
        %v3572 = vld [vmem:[#allocation2 + $0x2c] sm:$0x1]
        %v3573 = vld [vmem:[#allocation2 + $0x34] sm:$0xf]
        %v3574 = vld [vmem:[#allocation2 + $0x38] sm:$0x1]
        %v3575 = vld [vmem:[#allocation2 + $0x40] sm:$0xf]
        %v3576 = vld [vmem:[#allocation2 + $0x44] sm:$0x1]
        %v3577 = vld [vmem:[#allocation2 + $0x4c] sm:$0xf]
        %v3578 = vld [vmem:[#allocation2 + $0x50] sm:$0x1]
        %v3579 = vld [vmem:[#allocation2 + $0x58] sm:$0xf]
        %v3580 = vld [vmem:[#allocation2 + $0x5c] sm:$0x1]
        %v3581 = vld [vmem:[#allocation2 + $0x64] sm:$0xf]
        %v3582 = vld [vmem:[#allocation2 + $0x68] sm:$0x1]
        %v3583 = vld [vmem:[#allocation2 + $0x70] sm:$0xf]
        %v3584 = vld [vmem:[#allocation2 + $0x74] sm:$0x1]
        %v3601 = vunpack.c.l.b16 %v3565
        %v3602 = vunpack.c.l.b16 %v3566
        %v3603 = vunpack.c.l.b16 %v3567
        %v3604 = vunpack.c.l.b16 %v3568
        %v3605 = vunpack.c.l.b16 %v3569
        %v3606 = vunpack.c.l.b16 %v3570
        %v3607 = vunpack.c.l.b16 %v3571
        %v3608 = vunpack.c.l.b16 %v3572
        %v3609 = vunpack.c.l.b16 %v3573
        %v3610 = vunpack.c.l.b16 %v3574
        %v3611 = vunpack.c.l.b16 %v3575
        %v3612 = vunpack.c.l.b16 %v3576
        %v3613 = vunpack.c.l.b16 %v3577
        %v3614 = vunpack.c.l.b16 %v3578
        %v3615 = vunpack.c.l.b16 %v3579
        %v3616 = vunpack.c.l.b16 %v3580
        %v3619 = vunpack.c.l.b16 %v3581
        %v3620 = vunpack.c.l.b16 %v3582
        %v3623 = vunpack.c.l.b16 %v3583
        %v3624 = vunpack.c.l.b16 %v3584
        %v3625 = vpack.c.b16 %v3603, %v3601
        %v3626 = vpack.c.b16 %v3605, %v3605
        %v3627 = vpack.c.b16 %v3604, %v3602
        %v3628 = vpack.c.b16 %v3606, %v3606
        %v3629 = vpack.c.b16 %v3605, %v3603
        %v3630 = vpack.c.b16 %v3607, %v3607
        %v3631 = vpack.c.b16 %v3606, %v3604
        %v3632 = vpack.c.b16 %v3608, %v3608
        %v3633 = vpack.c.b16 %v3607, %v3605
        %v3634 = vpack.c.b16 %v3609, %v3609
        %v3635 = vpack.c.b16 %v3608, %v3606
        %v3636 = vpack.c.b16 %v3610, %v3610
        %v3637 = vpack.c.b16 %v3609, %v3607
        %v3638 = vpack.c.b16 %v3611, %v3611
        %v3639 = vpack.c.b16 %v3610, %v3608
        %v3640 = vpack.c.b16 %v3612, %v3612
        %v3641 = vpack.c.b16 %v3611, %v3609
        %v3642 = vpack.c.b16 %v3613, %v3613
        %v3643 = vpack.c.b16 %v3612, %v3610
        %v3644 = vpack.c.b16 %v3614, %v3614
        %v3645 = vpack.c.b16 %v3613, %v3611
        %v3646 = vpack.c.b16 %v3615, %v3615
        %v3647 = vpack.c.b16 %v3614, %v3612
        %v3648 = vpack.c.b16 %v3616, %v3616
        %v3649 = vpack.c.b16 %v3615, %v3613
        %v3650 = vpack.c.b16 %v3619, %v3619
        %v3651 = vpack.c.b16 %v3616, %v3614
        %v3652 = vpack.c.b16 %v3620, %v3620
        %v3653 = vpack.c.b16 %v3619, %v3615
        %v3654 = vpack.c.b16 %v3623, %v3623
        %v3655 = vpack.c.b16 %v3620, %v3616
        %v3656 = vpack.c.b16 %v3624, %v3624
        %v3658 = vshrl.u32 %v3625, 16
        %v3660 = vrot.slane %v3658, 4
        %v3661 = vshll.u32 %v3625, 16
        %v3663 = vrot.slane %v3661, 5
        %v3664 = vor.u32 %v3660, %v3663
        %v3665 = vrot.slane %v3664, 4
        %v3667 = vshll.u32 %v3627, 16
        %v3669 = vrot.slane %v3667, 5
        %v3670 = vsel %vm1919, %v3665, %v3669
        %v3672 = vshrl.u32 %v3626, 16
        %v3674 = vrot.slane %v3672, 4
        %v3675 = vshll.u32 %v3626, 16
        %v3677 = vrot.slane %v3675, 5
        %v3678 = vor.u32 %v3674, %v3677
        %v3679 = vrot.slane %v3678, 4
        %v3681 = vshll.u32 %v3628, 16
        %v3683 = vrot.slane %v3681, 5
        %v3684 = vsel %vm1919, %v3679, %v3683
        %v3686 = vshrl.u32 %v3629, 16
        %v3688 = vrot.slane %v3686, 4
        %v3689 = vshll.u32 %v3629, 16
        %v3691 = vrot.slane %v3689, 5
        %v3692 = vor.u32 %v3688, %v3691
        %v3693 = vrot.slane %v3692, 4
        %v3695 = vshll.u32 %v3631, 16
        %v3697 = vrot.slane %v3695, 5
        %v3698 = vsel %vm1919, %v3693, %v3697
        %v3700 = vshrl.u32 %v3630, 16
        %v3702 = vrot.slane %v3700, 4
        %v3703 = vshll.u32 %v3630, 16
        %v3705 = vrot.slane %v3703, 5
        %v3706 = vor.u32 %v3702, %v3705
        %v3707 = vrot.slane %v3706, 4
        %v3709 = vshll.u32 %v3632, 16
        %v3711 = vrot.slane %v3709, 5
        %v3712 = vsel %vm1919, %v3707, %v3711
        %v3714 = vshrl.u32 %v3633, 16
        %v3716 = vrot.slane %v3714, 4
        %v3717 = vshll.u32 %v3633, 16
        %v3719 = vrot.slane %v3717, 5
        %v3720 = vor.u32 %v3716, %v3719
        %v3721 = vrot.slane %v3720, 4
        %v3723 = vshll.u32 %v3635, 16
        %v3725 = vrot.slane %v3723, 5
        %v3726 = vsel %vm1919, %v3721, %v3725
        %v3728 = vshrl.u32 %v3634, 16
        %v3730 = vrot.slane %v3728, 4
        %v3731 = vshll.u32 %v3634, 16
        %v3733 = vrot.slane %v3731, 5
        %v3734 = vor.u32 %v3730, %v3733
        %v3735 = vrot.slane %v3734, 4
        %v3737 = vshll.u32 %v3636, 16
        %v3739 = vrot.slane %v3737, 5
        %v3740 = vsel %vm1919, %v3735, %v3739
        %v3742 = vshrl.u32 %v3637, 16
        %v3744 = vrot.slane %v3742, 4
        %v3745 = vshll.u32 %v3637, 16
        %v3747 = vrot.slane %v3745, 5
        %v3748 = vor.u32 %v3744, %v3747
        %v3749 = vrot.slane %v3748, 4
        %v3751 = vshll.u32 %v3639, 16
        %v3753 = vrot.slane %v3751, 5
        %v3754 = vsel %vm1919, %v3749, %v3753
        %v3756 = vshrl.u32 %v3638, 16
        %v3758 = vrot.slane %v3756, 4
        %v3759 = vshll.u32 %v3638, 16
        %v3761 = vrot.slane %v3759, 5
        %v3762 = vor.u32 %v3758, %v3761
        %v3763 = vrot.slane %v3762, 4
        %v3765 = vshll.u32 %v3640, 16
        %v3767 = vrot.slane %v3765, 5
        %v3768 = vsel %vm1919, %v3763, %v3767
        %v3770 = vshrl.u32 %v3641, 16
        %v3772 = vrot.slane %v3770, 4
        %v3773 = vshll.u32 %v3641, 16
        %v3775 = vrot.slane %v3773, 5
        %v3776 = vor.u32 %v3772, %v3775
        %v3777 = vrot.slane %v3776, 4
        %v3779 = vshll.u32 %v3643, 16
        %v3781 = vrot.slane %v3779, 5
        %v3782 = vsel %vm1919, %v3777, %v3781
        %v3784 = vshrl.u32 %v3642, 16
        %v3786 = vrot.slane %v3784, 4
        %v3787 = vshll.u32 %v3642, 16
        %v3789 = vrot.slane %v3787, 5
        %v3790 = vor.u32 %v3786, %v3789
        %v3791 = vrot.slane %v3790, 4
        %v3793 = vshll.u32 %v3644, 16
        %v3795 = vrot.slane %v3793, 5
        %v3796 = vsel %vm1919, %v3791, %v3795
        %v3798 = vshrl.u32 %v3645, 16
        %v3800 = vrot.slane %v3798, 4
        %v3801 = vshll.u32 %v3645, 16
        %v3803 = vrot.slane %v3801, 5
        %v3804 = vor.u32 %v3800, %v3803
        %v3805 = vrot.slane %v3804, 4
        %v3807 = vshll.u32 %v3647, 16
        %v3809 = vrot.slane %v3807, 5
        %v3810 = vsel %vm1919, %v3805, %v3809
        %v3812 = vshrl.u32 %v3646, 16
        %v3814 = vrot.slane %v3812, 4
        %v3815 = vshll.u32 %v3646, 16
        %v3817 = vrot.slane %v3815, 5
        %v3818 = vor.u32 %v3814, %v3817
        %v3819 = vrot.slane %v3818, 4
        %v3821 = vshll.u32 %v3648, 16
        %v3823 = vrot.slane %v3821, 5
        %v3824 = vsel %vm1919, %v3819, %v3823
        %v3826 = vshrl.u32 %v3649, 16
        %v3828 = vrot.slane %v3826, 4
        %v3829 = vshll.u32 %v3649, 16
        %v3831 = vrot.slane %v3829, 5
        %v3832 = vor.u32 %v3828, %v3831
        %v3833 = vrot.slane %v3832, 4
        %v3835 = vshll.u32 %v3651, 16
        %v3837 = vrot.slane %v3835, 5
        %v3838 = vsel %vm1919, %v3833, %v3837
        %v3840 = vshrl.u32 %v3650, 16
        %v3842 = vrot.slane %v3840, 4
        %v3843 = vshll.u32 %v3650, 16
        %v3845 = vrot.slane %v3843, 5
        %v3846 = vor.u32 %v3842, %v3845
        %v3847 = vrot.slane %v3846, 4
        %v3849 = vshll.u32 %v3652, 16
        %v3851 = vrot.slane %v3849, 5
        %v3852 = vsel %vm1919, %v3847, %v3851
        %v3854 = vshrl.u32 %v3653, 16
        %v3856 = vrot.slane %v3854, 4
        %v3857 = vshll.u32 %v3653, 16
        %v3859 = vrot.slane %v3857, 5
        %v3860 = vor.u32 %v3856, %v3859
        %v3861 = vrot.slane %v3860, 4
        %v3863 = vshll.u32 %v3655, 16
        %v3865 = vrot.slane %v3863, 5
        %v3866 = vsel %vm1919, %v3861, %v3865
        %v3868 = vshrl.u32 %v3654, 16
        %v3870 = vrot.slane %v3868, 4
        %v3871 = vshll.u32 %v3654, 16
        %v3873 = vrot.slane %v3871, 5
        %v3874 = vor.u32 %v3870, %v3873
        %v3875 = vrot.slane %v3874, 4
        %v3877 = vshll.u32 %v3656, 16
        %v3879 = vrot.slane %v3877, 5
        %v3880 = vsel %vm1919, %v3875, %v3879
        %s3881 = scalar_lea.vmem [#allocation11], 384
        %v3882 = vld [vmem:[%s3881] sm:$0xf]
        %v3883 = vld [vmem:[%s3881 + $0x4] sm:$0xf]
        %v3884 = vld [vmem:[%s3881 + $0x8] sm:$0xf]
        %v3885 = vld [vmem:[%s3881 + $0xc] sm:$0xf]
        %v3886 = vld [vmem:[%s3881 + $0x10] sm:$0xf]
        %v3887 = vld [vmem:[%s3881 + $0x14] sm:$0xf]
        %v3888 = vld [vmem:[%s3881 + $0x18] sm:$0xf]
        %v3889 = vld [vmem:[%s3881 + $0x1c] sm:$0xf]
        %v3890 = vld [vmem:[%s3881 + $0x20] sm:$0xf]
        %v3891 = vld [vmem:[%s3881 + $0x24] sm:$0xf]
        %v3892 = vld [vmem:[%s3881 + $0x28] sm:$0xf]
        %v3893 = vld [vmem:[%s3881 + $0x2c] sm:$0xf]
        %v3894 = vld [vmem:[%s3881 + $0x30] sm:$0xf]
        %v3895 = vld [vmem:[%s3881 + $0x34] sm:$0xf]
        %v3896 = vld [vmem:[%s3881 + $0x38] sm:$0xf]
        %v3897 = vld [vmem:[%s3881 + $0x3c] sm:$0xf]
        %v3898 = vld [vmem:[%s3881 + $0x40] sm:$0xf]
        %v3899 = vld [vmem:[%s3881 + $0x44] sm:$0xf]
        %v3900 = vld [vmem:[%s3881 + $0x48] sm:$0xf]
        %v3901 = vld [vmem:[%s3881 + $0x4c] sm:$0xf]
        %v3902 = vld [vmem:[%s3881 + $0x50] sm:$0xf]
        %v3903 = vld [vmem:[%s3881 + $0x54] sm:$0xf]
        %v3904 = vld [vmem:[%s3881 + $0x58] sm:$0xf]
        %v3905 = vld [vmem:[%s3881 + $0x5c] sm:$0xf]
        %v3906 = vld [vmem:[%s3881 + $0x60] sm:$0xf]
        %v3907 = vld [vmem:[%s3881 + $0x64] sm:$0xf]
        %v3908 = vld [vmem:[%s3881 + $0x68] sm:$0xf]
        %v3909 = vld [vmem:[%s3881 + $0x6c] sm:$0xf]
        %v3910 = vld [vmem:[%s3881 + $0x70] sm:$0xf]
        %v3911 = vld [vmem:[%s3881 + $0x74] sm:$0xf]
        %v3912 = vld [vmem:[%s3881 + $0x78] sm:$0xf]
        %v3913 = vld [vmem:[%s3881 + $0x7c] sm:$0xf]
        %v3914 = vld [vmem:[%s3881 + $0x80] sm:$0xf]
        %v3915 = vld [vmem:[%s3881 + $0x84] sm:$0xf]
        %v3916 = vld [vmem:[%s3881 + $0x88] sm:$0xf]
        %v3917 = vld [vmem:[%s3881 + $0x8c] sm:$0xf]
        %v3918 = vld [vmem:[%s3881 + $0x90] sm:$0xf]
        %v3919 = vld [vmem:[%s3881 + $0x94] sm:$0xf]
        %v3920 = vld [vmem:[%s3881 + $0x98] sm:$0xf]
        %v3921 = vld [vmem:[%s3881 + $0x9c] sm:$0xf]
        %v3922 = vld [vmem:[%s3881 + $0xa0] sm:$0xf]
        %v3923 = vld [vmem:[%s3881 + $0xa4] sm:$0xf]
        %v3924 = vld [vmem:[%s3881 + $0xa8] sm:$0xf]
        %v3925 = vld [vmem:[%s3881 + $0xac] sm:$0xf]
        %v3926 = vld [vmem:[%s3881 + $0xb0] sm:$0xf]
        %v3927 = vld [vmem:[%s3881 + $0xb4] sm:$0xf]
        %v3928 = vld [vmem:[%s3881 + $0xb8] sm:$0xf]
        %v3929 = vld [vmem:[%s3881 + $0xbc] sm:$0xf]
        %v3930 = vunpack.c.l.b16 %v3670
        %v3931 = vunpack.c.h.b16 %v3670
        %v3932 = vunpack.c.l.b16 %v3684
        %v3933 = vunpack.c.l.b16 %v3698
        %v3934 = vunpack.c.h.b16 %v3698
        %v3935 = vunpack.c.l.b16 %v3712
        %v3936 = vunpack.c.l.b16 %v3726
        %v3937 = vunpack.c.h.b16 %v3726
        %v3938 = vunpack.c.l.b16 %v3740
        %v3939 = vunpack.c.l.b16 %v3754
        %v3940 = vunpack.c.h.b16 %v3754
        %v3941 = vunpack.c.l.b16 %v3768
        %v3942 = vunpack.c.l.b16 %v3782
        %v3943 = vunpack.c.h.b16 %v3782
        %v3944 = vunpack.c.l.b16 %v3796
        %v3945 = vunpack.c.l.b16 %v3810
        %v3946 = vunpack.c.h.b16 %v3810
        %v3947 = vunpack.c.l.b16 %v3824
        %v3948 = vunpack.c.l.b16 %v3838
        %v3949 = vunpack.c.h.b16 %v3838
        %v3950 = vunpack.c.l.b16 %v3852
        %v3951 = vunpack.c.l.b16 %v3866
        %v3952 = vunpack.c.h.b16 %v3866
        %v3953 = vunpack.c.l.b16 %v3880
        %v3954 = vpack.c.b16 %v3933, %v3930
        %v3955 = vpack.c.b16 %v3934, %v3931
        %v3956 = vpack.c.b16 %v3935, %v3932
        %v3957 = vpack.c.b16 %v3939, %v3936
        %v3958 = vpack.c.b16 %v3940, %v3937
        %v3959 = vpack.c.b16 %v3941, %v3938
        %v3960 = vpack.c.b16 %v3945, %v3942
        %v3961 = vpack.c.b16 %v3946, %v3943
        %v3962 = vpack.c.b16 %v3947, %v3944
        %v3963 = vpack.c.b16 %v3951, %v3948
        %v3964 = vpack.c.b16 %v3952, %v3949
        %v3965 = vpack.c.b16 %v3953, %v3950
        %v4026 = vunpack.c.l.b16 %v3882
        %v4027 = vunpack.c.l.b16 %v3883
        %v4028 = vunpack.c.l.b16 %v3884
        %v4029 = vunpack.c.l.b16 %v3885
        %v4030 = vunpack.c.l.b16 %v3886
        %v4031 = vunpack.c.l.b16 %v3887
        %v4032 = vunpack.c.l.b16 %v3888
        %v4033 = vunpack.c.l.b16 %v3889
        %v4034 = vunpack.c.l.b16 %v3890
        %v4035 = vunpack.c.l.b16 %v3891
        %v4036 = vunpack.c.l.b16 %v3892
        %v4037 = vunpack.c.l.b16 %v3893
        %v4038 = vunpack.c.l.b16 %v3894
        %v4039 = vunpack.c.l.b16 %v3895
        %v4040 = vunpack.c.l.b16 %v3896
        %v4041 = vunpack.c.l.b16 %v3897
        %v4042 = vunpack.c.l.b16 %v3898
        %v4043 = vunpack.c.l.b16 %v3899
        %v4044 = vunpack.c.l.b16 %v3900
        %v4045 = vunpack.c.l.b16 %v3901
        %v4046 = vunpack.c.l.b16 %v3902
        %v4047 = vunpack.c.l.b16 %v3903
        %v4048 = vunpack.c.l.b16 %v3904
        %v4049 = vunpack.c.l.b16 %v3905
        %v4050 = vunpack.c.l.b16 %v3906
        %v4051 = vunpack.c.l.b16 %v3907
        %v4052 = vunpack.c.l.b16 %v3908
        %v4053 = vunpack.c.l.b16 %v3909
        %v4054 = vunpack.c.l.b16 %v3910
        %v4055 = vunpack.c.l.b16 %v3911
        %v4056 = vunpack.c.l.b16 %v3912
        %v4057 = vunpack.c.l.b16 %v3913
        %v4058 = vunpack.c.l.b16 %v3914
        %v4059 = vunpack.c.l.b16 %v3915
        %v4060 = vunpack.c.l.b16 %v3916
        %v4061 = vunpack.c.l.b16 %v3917
        %v4062 = vunpack.c.l.b16 %v3918
        %v4063 = vunpack.c.l.b16 %v3919
        %v4064 = vunpack.c.l.b16 %v3920
        %v4065 = vunpack.c.l.b16 %v3921
        %v4066 = vunpack.c.l.b16 %v3922
        %v4067 = vunpack.c.l.b16 %v3923
        %v4068 = vunpack.c.l.b16 %v3924
        %v4069 = vunpack.c.l.b16 %v3925
        %v4070 = vunpack.c.l.b16 %v3926
        %v4071 = vunpack.c.l.b16 %v3927
        %v4072 = vunpack.c.l.b16 %v3928
        %v4073 = vunpack.c.l.b16 %v3929
        %v4074 = vpack.c.b16 %v4027, %v4026
        %v4075 = vpack.c.b16 %v4029, %v4028
        %v4076 = vpack.c.b16 %v4031, %v4030
        %v4077 = vpack.c.b16 %v4033, %v4032
        %v4078 = vpack.c.b16 %v4035, %v4034
        %v4079 = vpack.c.b16 %v4037, %v4036
        %v4080 = vpack.c.b16 %v4039, %v4038
        %v4081 = vpack.c.b16 %v4041, %v4040
        %v4082 = vpack.c.b16 %v4043, %v4042
        %v4083 = vpack.c.b16 %v4045, %v4044
        %v4084 = vpack.c.b16 %v4047, %v4046
        %v4085 = vpack.c.b16 %v4049, %v4048
        %v4086 = vpack.c.b16 %v4051, %v4050
        %v4087 = vpack.c.b16 %v4053, %v4052
        %v4088 = vpack.c.b16 %v4055, %v4054
        %v4089 = vpack.c.b16 %v4057, %v4056
        %v4090 = vpack.c.b16 %v4059, %v4058
        %v4091 = vpack.c.b16 %v4061, %v4060
        %v4092 = vpack.c.b16 %v4063, %v4062
        %v4093 = vpack.c.b16 %v4065, %v4064
        %v4094 = vpack.c.b16 %v4067, %v4066
        %v4095 = vpack.c.b16 %v4069, %v4068
        %v4096 = vpack.c.b16 %v4071, %v4070
        %v4097 = vpack.c.b16 %v4073, %v4072
        %4122 = vmatprep.subr.bf16.mxu0 0
        %4123 = vmatpush1.bf16.msra.mxu0 %v4074
        %4124 = vmatprep.subr.bf16.mxu0 0
        %4125 = vmatpush1.bf16.msra.mxu0 %v4075
        %4126 = vmatprep.subr.bf16.mxu0 0
        %4127 = vmatpush1.bf16.msra.mxu0 %v4076
        %4128 = vmatprep.subr.bf16.mxu0 0
        %4129 = vmatpush1.bf16.msra.mxu0 %v4077
        %4130 = vmatprep.subr.bf16.mxu0 0
        %4131 = vmatpush1.bf16.msra.mxu0 %v4078
        %4132 = vmatprep.subr.bf16.mxu0 0
        %4133 = vmatpush1.bf16.msra.mxu0 %v4079
        %4134 = vmatprep.subr.bf16.mxu0 0
        %4135 = vmatpush1.bf16.msra.mxu0 %v4080
        %4136 = vmatprep.subr.bf16.mxu0 0
        %4137 = vmatpush1.bf16.msra.mxu0 %v4081
        %4138 = vmatprep.subr.bf16.mxu0 0
        %4139 = vmatpush1.bf16.msra.mxu0 %v4082
        %4140 = vmatprep.subr.bf16.mxu0 0
        %4141 = vmatpush1.bf16.msra.mxu0 %v4083
        %4142 = vmatprep.subr.bf16.mxu0 0
        %4143 = vmatpush1.bf16.msra.mxu0 %v4084
        %4144 = vmatprep.subr.bf16.mxu0 0
        %4145 = vmatpush1.bf16.msra.mxu0 %v4085
        %4146 = vmatprep.subr.bf16.mxu0 0
        %4147 = vmatpush1.bf16.msra.mxu0 %v4086
        %4148 = vmatprep.subr.bf16.mxu0 0
        %4149 = vmatpush1.bf16.msra.mxu0 %v4087
        %4150 = vmatprep.subr.bf16.mxu0 0
        %4151 = vmatpush1.bf16.msra.mxu0 %v4088
        %4152 = vmatprep.subr.bf16.mxu0 0
        %4153 = vmatpush1.bf16.msra.mxu0 %v4089
        %4154 = vmatprep.mubr.bf16.mxu0 %v3955
        %4155 = vmatmul.mubr.bf16.gmra.mrb[0].mxu0 %v3954
        %v4156 = vpop.f32.mrb[0].mxu0
        %v4157 = vadd.f32 0.0, %v4156
        %v4158 = vpop.f32.mrb[0].mxu0
        %v4159 = vpop.f32.mrb[0].mxu0
        %v4160 = vadd.f32 0.0, %v4159
        %v4161 = vpop.f32.mrb[0].mxu0
        %4162 = vmatprep.mubr.bf16.mxu0 %v3958
        %4163 = vmatmul.mubr.bf16.gmra.mrb[0].mxu0 %v3957
        %v4164 = vpop.f32.mrb[0].mxu0
        %v4165 = vadd.f32 0.0, %v4164
        %v4166 = vpop.f32.mrb[0].mxu0
        %v4167 = vpop.f32.mrb[0].mxu0
        %v4168 = vadd.f32 0.0, %v4167
        %v4169 = vpop.f32.mrb[0].mxu0
        %4170 = vmatprep.mubr.bf16.mxu0 %v3961
        %4171 = vmatmul.mubr.bf16.gmra.mrb[0].mxu0 %v3960
        %v4172 = vpop.f32.mrb[0].mxu0
        %v4173 = vadd.f32 0.0, %v4172
        %v4174 = vpop.f32.mrb[0].mxu0
        %v4175 = vpop.f32.mrb[0].mxu0
        %v4176 = vadd.f32 0.0, %v4175
        %v4177 = vpop.f32.mrb[0].mxu0
        %4178 = vmatprep.mubr.bf16.mxu0 %v3964
        %4179 = vmatmul.mubr.bf16.gmra.mrb[0].mxu0 %v3963
        %v4180 = vpop.f32.mrb[0].mxu0
        %v4181 = vadd.f32 0.0, %v4180
        %v4182 = vpop.f32.mrb[0].mxu0
        %v4183 = vpop.f32.mrb[0].mxu0
        %v4184 = vadd.f32 0.0, %v4183
        %v4185 = vpop.f32.mrb[0].mxu0
        %4186 = vdwg.mxu0
        %4187 = vmatprep.subr.bf16.mxu0 0
        %4188 = vmatpush1.bf16.msra.mxu0 %v4090
        %4189 = vmatprep.subr.bf16.mxu0 0
        %4190 = vmatpush1.bf16.msra.mxu0 %v4091
        %4191 = vmatprep.subr.bf16.mxu0 0
        %4192 = vmatpush1.bf16.msra.mxu0 %v4092
        %4193 = vmatprep.subr.bf16.mxu0 0
        %4194 = vmatpush1.bf16.msra.mxu0 %v4093
        %4195 = vmatprep.subr.bf16.mxu0 0
        %4196 = vmatpush1.bf16.msra.mxu0 %v4094
        %4197 = vmatprep.subr.bf16.mxu0 0
        %4198 = vmatpush1.bf16.msra.mxu0 %v4095
        %4199 = vmatprep.subr.bf16.mxu0 0
        %4200 = vmatpush1.bf16.msra.mxu0 %v4096
        %4201 = vmatprep.subr.bf16.mxu0 0
        %4202 = vmatpush1.bf16.msra.mxu0 %v4097
        %4203 = vmatprep.subr.bf16.mxu0 0
        %4204 = vmatpush1.bf16.msra.mxu0 0
        %4205 = vmatprep.subr.bf16.mxu0 0
        %4206 = vmatpush1.bf16.msra.mxu0 0
        %4207 = vmatprep.subr.bf16.mxu0 0
        %4208 = vmatpush1.bf16.msra.mxu0 0
        %4209 = vmatprep.subr.bf16.mxu0 0
        %4210 = vmatpush1.bf16.msra.mxu0 0
        %4211 = vmatprep.subr.bf16.mxu0 0
        %4212 = vmatpush1.bf16.msra.mxu0 0
        %4213 = vmatprep.subr.bf16.mxu0 0
        %4214 = vmatpush1.bf16.msra.mxu0 0
        %4215 = vmatprep.subr.bf16.mxu0 0
        %4216 = vmatpush1.bf16.msra.mxu0 0
        %4217 = vmatprep.subr.bf16.mxu0 0
        %4218 = vmatpush1.bf16.msra.mxu0 0
        %4219 = vmatprep.mubr.bf16.mxu0 0
        %4220 = vmatmul.mubr.bf16.gmra.mrb[0].mxu0 %v3956
        %v4221 = vpop.f32.mrb[0].mxu0
        %v4222 = vadd.f32 %v4157, %v4221
        %v4223 = vpop.f32.mrb[0].mxu0
        %v4224 = vpop.f32.mrb[0].mxu0
        %v4225 = vadd.f32 %v4160, %v4224
        %v4226 = vpop.f32.mrb[0].mxu0
        %4227 = vmatprep.mubr.bf16.mxu0 0
        %4228 = vmatmul.mubr.bf16.gmra.mrb[0].mxu0 %v3959
        %v4229 = vpop.f32.mrb[0].mxu0
        %v4230 = vadd.f32 %v4165, %v4229
        %v4231 = vpop.f32.mrb[0].mxu0
        %v4232 = vpop.f32.mrb[0].mxu0
        %v4233 = vadd.f32 %v4168, %v4232
        %v4234 = vpop.f32.mrb[0].mxu0
        %4235 = vmatprep.mubr.bf16.mxu0 0
        %4236 = vmatmul.mubr.bf16.gmra.mrb[0].mxu0 %v3962
        %v4237 = vpop.f32.mrb[0].mxu0
        %v4238 = vadd.f32 %v4173, %v4237
        %v4239 = vpop.f32.mrb[0].mxu0
        %v4240 = vpop.f32.mrb[0].mxu0
        %v4241 = vadd.f32 %v4176, %v4240
        %v4242 = vpop.f32.mrb[0].mxu0
        %4243 = vmatprep.mubr.bf16.mxu0 0
        %4244 = vmatmul.mubr.bf16.gmra.mrb[0].mxu0 %v3965
        %v4245 = vpop.f32.mrb[0].mxu0
        %v4246 = vadd.f32 %v4181, %v4245
        %v4247 = vpop.f32.mrb[0].mxu0
        %v4248 = vpop.f32.mrb[0].mxu0
        %v4249 = vadd.f32 %v4184, %v4248
        %v4250 = vpop.f32.mrb[0].mxu0
        %4251 = vdwg.mxu0
        %v4252 = vadd.f32 %v3535, %v4222
        %v4253 = vadd.f32 %v3538, %v4225
        %v4254 = vadd.f32 %v3543, %v4230
        %v4255 = vadd.f32 %v3546, %v4233
        %v4256 = vadd.f32 %v3551, %v4238
        %v4257 = vadd.f32 %v3554, %v4241
        %v4258 = vadd.f32 %v3559, %v4246
        %v4259 = vadd.f32 %v3562, %v4249
        %v4260 = vld [vmem:[%s6] sm:$0x1]
        %v4262 = vlaneseq
        %v4263 = vshrl.u32 %v4262, 7
        %v4264 = vsub.s32 0, %v4263
        %v4265 = vrot.slane %v4260, %v4264
        %v4267 = vadd.f32 %v4252, %v4265
        %v4268 = vadd.f32 %v4253, %v4265
        %v4269 = vadd.f32 %v4254, %v4265
        %v4270 = vadd.f32 %v4255, %v4265
        %v4271 = vadd.f32 %v4256, %v4265
        %v4272 = vadd.f32 %v4257, %v4265
        %v4273 = vadd.f32 %v4258, %v4265
        %v4274 = vadd.f32 %v4259, %v4265
        %v4275 = vmax.f32 %v4267, 0.0
        %v4276 = vmax.f32 %v4268, 0.0
        %v4277 = vmax.f32 %v4269, 0.0
        %v4278 = vmax.f32 %v4270, 0.0
        %v4279 = vmax.f32 %v4271, 0.0
        %v4280 = vmax.f32 %v4272, 0.0
        %v4281 = vmax.f32 %v4273, 0.0
        %v4282 = vmax.f32 %v4274, 0.0
        %v4283 = vpack.c.bf16 %v4275, %v4275
        %v4284 = vpack.c.bf16 %v4276, %v4276
        %v4285 = vpack.c.bf16 %v4277, %v4277
        %v4286 = vpack.c.bf16 %v4278, %v4278
        %v4287 = vpack.c.bf16 %v4279, %v4279
        %v4288 = vpack.c.bf16 %v4280, %v4280
        %v4289 = vpack.c.bf16 %v4281, %v4281
        %v4290 = vpack.c.bf16 %v4282, %v4282
        %4291 = vst [vmem:[%s379] sm:$0xf] %v4283
        %4292 = vst [vmem:[%s379 + $0x4] sm:$0xf] %v4284
        %4293 = vst [vmem:[%s379 + $0x8] sm:$0xf] %v4285
        %4294 = vst [vmem:[%s379 + $0xc] sm:$0xf] %v4286
        %4295 = vst [vmem:[%s379 + $0x10] sm:$0xf] %v4287
        %4296 = vst [vmem:[%s379 + $0x14] sm:$0xf] %v4288
        %4297 = vst [vmem:[%s379 + $0x18] sm:$0xf] %v4289
        %4298 = vst [vmem:[%s379 + $0x1c] sm:$0xf] %v4290
        %s4299 = sand.u32 %s193, 1
        %s4300 = scalar_lea.sflag [#allocation5], %s4299
        %s4301 = sand.u32 %s193, 1
        %s4302 = smul.addr %s4301, 32
        %s4303 = scalar_lea.vmem [#allocation12], %s4302
        // Predicated region
        $region69: #{tpu_custom_call.1} parent=47 // pred_check
          %p4304 = pneg %p203
        $region70: #{tpu_custom_call.1} parent=47 // pred_check_branch
          %4306 = sbr.rel (%p4304) target = $region72
        $region71: #{tpu_custom_call.1} parent=47 // pred_region
          %s4308 = ssub.s32 512, 512
          %4309 = vsyncadd %s4300, %s4308
          %s4310 = smul.addr %s28, 8
          %s4311 = smul.addr %s4310, 64
          %s4312 = scalar_lea.hbm %s7, %s4311
          %s4313 = sshll.u32 %s4303, 4
          %s4314 = int_to_ptr.vmem [resolvable:$true] %s4313
          %4319 = dma.vmem_to_hbm [thread:$0]  %s4314, 512, %s4312, %s4300, 64, 64, 4
        $region72: #{tpu_custom_call.1} parent=47 // pred_fallthru
          _
      $region48: #{tpu_custom_call.1} parent=5 // pred_fallthru
        _
      %p4320 = scmp.le.s32.totalorder 2, %s23
      // Predicated region
      $region73: #{tpu_custom_call.1} parent=5 // pred_check
        %p4321 = pneg %p4320
      $region74: #{tpu_custom_call.1} parent=5 // pred_check_branch
        %4323 = sbr.rel (%p4321) target = $region76
      $region75: #{tpu_custom_call.1} parent=5 // pred_region
        %s4324 = ssub.s32 %s23, 2
        // Predicated region
        $region77: #{tpu_custom_call.1} parent=75 // pred_check
          %p4325 = pneg %p209
        $region78: #{tpu_custom_call.1} parent=75 // pred_check_branch
          %4327 = sbr.rel (%p4325) target = $region80
        $region79: #{tpu_custom_call.1} parent=75 // pred_region
          %s4328 = sand.u32 %s194, 1
          %s4329 = scalar_lea.sflag [#allocation5], %s4328
          %s4330 = sand.u32 %s194, 1
          %s4331 = smul.addr %s4330, 32
          %s4332 = scalar_lea.vmem [#allocation12], %s4331
          %4333 = dma.done %s4329, 512
        $region80: #{tpu_custom_call.1} parent=75 // pred_fallthru
          _
      $region76: #{tpu_custom_call.1} parent=5 // pred_fallthru
        _
    $region6: #{tpu_custom_call.1} parent=1 // loop_footer
      %s27 = sadd.s32 1, %s23
    $region7: #{tpu_custom_call.1} parent=1 // loop_footer_branch
      %22 = sbr.rel target = $region3
    $region8: #{tpu_custom_call.1} parent=1 // loop_exit
      _
    %4334 = vsyncpa [#allocation4], 1
    %s4335 = scalar_lea.sflag [#allocation4], 1
    %4336 = vsyncpa %s4335, 1
    %4337 = vsyncpa [#allocation7], 1
    %s4338 = scalar_lea.sflag [#allocation7], 1
    %4339 = vsyncpa %s4338, 1
    %4340 = vsyncpa [#allocation10], 1
    %4341 = vsyncpa [#allocation5], 1
    %s4342 = scalar_lea.sflag [#allocation5], 1
    %4343 = vsyncpa %s4342, 1

</llo_original>
